<compile_context>
chip_gen: v5e
topology: v5e:2x2
jax: 0.10.0
libtpu: 0.0.40
codegen_flags: <defaults>
</compile_context>

<pallas_src>
import functools

import jax
import jax.numpy as jnp
from jax.experimental import pallas as pl
from jax.experimental.pallas import tpu as pltpu


def _round_up(x, m):
    return (x + m - 1) // m * m


def _pick_row_block(H, row_block):
    """Largest divisor of H <= row_block; prefer nb >= 2 (megacore) when a
    reasonable proper divisor exists."""
    divisors = [d for d in range(1, H + 1) if H % d == 0]
    th = max([d for d in divisors if d <= row_block] or [H])
    if th == H:
        proper = [d for d in divisors if d < H and d >= 4]
        if proper:
            th = max(proper)
    return th


def basic_block_kernel(x_ref, w1_ref, w2_ref, b1_ref, b2_ref, out_ref,
                       *, TH, H, W, W2, Cin, C):
    # x_ref : (1, TH+4, Wp, Cin) bf16  input row block, 2-px spatial zero-pad
    # w1_ref: (9, Cin, C)        bf16  conv1 weights (BN1 scale folded in)
    # w2_ref: (9, C, C)          bf16  conv2 weights (BN2 scale folded in)
    # b1/b2 : (1, C)             f32   folded BN biases
    # out   : (1, TH*W, C)       bf16
    r = pl.program_id(1)
    R1 = (TH + 2) * W2
    R2 = TH * W

    # ---- conv1 + bn1 over the 1-px halo region: 9 accumulated MXU matmuls,
    #      bf16 operands sliced directly from the ref, f32 accumulation.
    acc1 = None
    for k in range(9):
        dy, dx = divmod(k, 3)
        tap = x_ref[0, dy:dy + TH + 2, dx:dx + W2, :].reshape(R1, Cin)
        p = jnp.dot(tap, w1_ref[k], preferred_element_type=jnp.float32)
        acc1 = p if acc1 is None else acc1 + p

    # Border mask computed in-kernel (global out row = r*TH - 1 + i, col = j-1),
    # fused with bias + ReLU into one select. Interior row-block boundaries keep
    # the real conv1 values from the overlapping halo rows.
    row = jax.lax.broadcasted_iota(jnp.int32, (TH + 2, W2, 1), 0) + (r * TH - 1)
    col = jax.lax.broadcasted_iota(jnp.int32, (TH + 2, W2, 1), 1)
    inside = (row >= 0) & (row < H) & (col >= 1) & (col < W + 1)
    z1 = (acc1 + b1_ref[...]).reshape(TH + 2, W2, C)
    y1 = jnp.where(inside, jnp.maximum(z1, 0.0), 0.0).astype(jnp.bfloat16)

    # ---- conv2 + bn2: 9 accumulated MXU matmuls on the masked bf16 halo ----
    acc2 = None
    for k in range(9):
        dy, dx = divmod(k, 3)
        tap = y1[dy:dy + TH, dx:dx + W, :].reshape(R2, C)
        p = jnp.dot(tap, w2_ref[k], preferred_element_type=jnp.float32)
        acc2 = p if acc2 is None else acc2 + p

    # ---- residual (interior of the resident input block) + relu, bf16 out ----
    res = x_ref[0, 2:TH + 2, 2:W + 2, :].reshape(R2, Cin).astype(jnp.float32)
    out_ref[0] = jnp.maximum(acc2 + b2_ref[...] + res, 0.0).astype(out_ref.dtype)


def basic_block(x_nchw, w1, w2, bn1, bn2, eps=1e-5, row_block=16):
    """x_nchw: (B, Cin, H, W); w1: (C, Cin, 3, 3); w2: (C, C, 3, 3);
    bn*: (gamma, beta, running_mean, running_var), each (C,)."""
    B, Cin, H, W = x_nchw.shape
    C = w1.shape[0]
    assert Cin == C, "downsample=None requires inplanes == planes"

    TH = _pick_row_block(H, row_block)
    nb = H // TH
    W2 = _round_up(W + 2, 8)      # conv1 halo-output width
    Wp = W2 + 2                   # padded input width

    # Fold eval-mode BN into the conv weights (scale) + a per-channel bias.
    def fold(bn):
        g, b, m, v = bn
        s = g / jnp.sqrt(v + eps)
        return s, b - m * s

    s1, b1 = fold(bn1)
    s2, b2 = fold(bn2)

    # OIHW -> (3,3,Cin,C) -> (9, Cin, C) per-tap weight blocks, scale folded.
    w1_f = (jnp.transpose(w1, (2, 3, 1, 0)) * s1).reshape(9, Cin, C)
    w2_f = (jnp.transpose(w2, (2, 3, 1, 0)) * s2).reshape(9, C, C)
    w1_f = w1_f.astype(jnp.bfloat16)
    w2_f = w2_f.astype(jnp.bfloat16)
    b1 = b1.reshape(1, C).astype(jnp.float32)
    b2 = b2.reshape(1, C).astype(jnp.float32)

    # NCHW -> NHWC bf16 (cast first, half the bytes for pad/gather), zero-pad
    # 2 rows top/bottom, 2 cols left, W2-W cols right, then overlapping
    # (TH+4)-row blocks for the fused-conv halo.
    # TODO(synk): replace this host-side overlapping-block gather with an
    # in-kernel manual overlapping DMA (memory_space=pl.ANY + make_async_copy)
    # to drop the extra ~(TH+4)/TH x HBM pass.
    x = jnp.transpose(x_nchw, (0, 2, 3, 1)).astype(jnp.bfloat16)
    xpad = jnp.pad(x, ((0, 0), (2, 2), (2, Wp - W - 2), (0, 0)))
    row_idx = jnp.arange(nb)[:, None] * TH + jnp.arange(TH + 4)[None, :]
    xblk = xpad[:, row_idx].reshape(B * nb, TH + 4, Wp, Cin)

    kernel = functools.partial(basic_block_kernel,
                               TH=TH, H=H, W=W, W2=W2, Cin=Cin, C=C)

    def call(single_buffer_consts):
        # Constant-index blocks (weights/biases) never change across the grid;
        # single-buffering halves their VMEM footprint (matters at 256-512 ch).
        ckw = {"pipeline_mode": pl.Buffered(1)} if single_buffer_consts else {}
        in_specs = [
            pl.BlockSpec((1, TH + 4, Wp, Cin),
                         lambda b, r: (b * nb + r, 0, 0, 0)),
            pl.BlockSpec((9, Cin, C), lambda b, r: (0, 0, 0), **ckw),
            pl.BlockSpec((9, C, C), lambda b, r: (0, 0, 0), **ckw),
            pl.BlockSpec((1, C), lambda b, r: (0, 0), **ckw),
            pl.BlockSpec((1, C), lambda b, r: (0, 0), **ckw),
        ]
        return pl.pallas_call(
            kernel,
            out_shape=jax.ShapeDtypeStruct((B * nb, TH * W, C), jnp.bfloat16),
            grid_spec=pltpu.PrefetchScalarGridSpec(
                num_scalar_prefetch=0,
                grid=(B, nb),
                in_specs=in_specs,
                out_specs=pl.BlockSpec((1, TH * W, C),
                                       lambda b, r: (b * nb + r, 0, 0)),
            ),
            compiler_params=pltpu.CompilerParams(
                dimension_semantics=("parallel", "parallel")),
        )(xblk, w1_f, w2_f, b1, b2)

    try:
        out = call(True)
    except Exception:  # pragma: no cover — jax without BlockSpec pipeline_mode
        out = call(False)

    # Kernel-native output is lane-packed NHWC bf16; convert back to the
    # module's NCHW f32 layout only for drop-in parity with PyTorch forward.
    out = out.reshape(B, nb, TH, W, C).reshape(B, H, W, C)
    return jnp.transpose(out, (0, 3, 1, 2)).astype(jnp.float32)


def basic_block_reference(x, w1, w2, bn1, bn2, eps=1e-5):
    """Pure-JAX fp32 reference in NCHW, matching PyTorch eval-mode semantics."""
    def conv(a, w):
        return jax.lax.conv_general_dilated(
            a, w, window_strides=(1, 1), padding=((1, 1), (1, 1)),
            dimension_numbers=("NCHW", "OIHW", "NCHW"))

    def bn(a, p):
        g, b, m, v = p
        g, b, m, v = (t[None, :, None, None] for t in (g, b, m, v))
        return (a - m) / jnp.sqrt(v + eps) * g + b

    out = jax.nn.relu(bn(conv(x, w1), bn1))
    out = bn(conv(out, w2), bn2)
    return jax.nn.relu(out + x)


if __name__ == "__main__":
    # Small shapes consistent with the module: inplanes = planes = 4
    B, C, H, W = 2, 4, 16, 16

    key = jax.random.PRNGKey(0)
    ks = jax.random.split(key, 10)
    x = jax.random.normal(ks[0], (B, C, H, W), jnp.float32)
    w1 = 0.1 * jax.random.normal(ks[1], (C, C, 3, 3), jnp.float32)
    w2 = 0.1 * jax.random.normal(ks[2], (C, C, 3, 3), jnp.float32)
    bn1 = (1.0 + 0.1 * jax.random.normal(ks[3], (C,), jnp.float32),     # gamma
           0.1 * jax.random.normal(ks[4], (C,), jnp.float32),           # beta
           0.05 * jax.random.normal(ks[5], (C,), jnp.float32),          # mean
           0.5 + jnp.abs(jax.random.normal(ks[6], (C,), jnp.float32)))  # var
    bn2 = (1.0 + 0.1 * jax.random.normal(ks[7], (C,), jnp.float32),
           0.1 * jax.random.normal(ks[8], (C,), jnp.float32),
           0.05 * jax.random.normal(ks[9], (C,), jnp.float32),
           0.5 + jnp.abs(jax.random.normal(ks[0], (C,), jnp.float32)))

    out = basic_block(x, w1, w2, bn1, bn2)
    out = jax.block_until_ready(out)

    ref = basic_block_reference(x, w1, w2, bn1, bn2)
    assert out.shape == (B, C, H, W), out.shape
    # bf16 matmul operands + bf16 output (f32 accumulation) -> bf16-level tolerance
    rel = jnp.linalg.norm(out - ref) / jnp.linalg.norm(ref)
    assert rel < 3e-2, float(rel)
    assert jnp.allclose(out, ref, atol=1e-1, rtol=1e-1), \
        float(jnp.max(jnp.abs(out - ref)))

    print("KERNEL_OK")
</pallas_src>

<mosaic_0001>
module attributes {stable_mosaic.version = 11 : i64} {
  func.func @basic_block_kernel(%arg0: i32, %arg1: i32, %arg2: memref<1x12x26x4xbf16, #tpu.memory_space<vmem>>, %arg3: memref<9x4x4xbf16, #tpu.memory_space<vmem>>, %arg4: memref<9x4x4xbf16, #tpu.memory_space<vmem>>, %arg5: memref<1x4xf32, #tpu.memory_space<vmem>>, %arg6: memref<1x4xf32, #tpu.memory_space<vmem>>, %arg7: memref<1x128x4xbf16, #tpu.memory_space<vmem>>) attributes {dimension_semantics = [#tpu.dimension_semantics<parallel>, #tpu.dimension_semantics<parallel>], iteration_bounds = array<i64: 2, 2>, scalar_prefetch = 0 : i64, scratch_operands = 0 : i64, tpu.core_type = #tpu.core_type<tc>, window_params = [{transform_indices = @transform_0, window_bounds = array<i64: 1, 12, 26, 4>}, {pipeline_mode = #tpu.pipeline_mode<synchronous>, transform_indices = @transform_1, window_bounds = array<i64: 9, 4, 4>}, {pipeline_mode = #tpu.pipeline_mode<synchronous>, transform_indices = @transform_2, window_bounds = array<i64: 9, 4, 4>}, {pipeline_mode = #tpu.pipeline_mode<synchronous>, transform_indices = @transform_3, window_bounds = array<i64: 1, 4>}, {pipeline_mode = #tpu.pipeline_mode<synchronous>, transform_indices = @transform_4, window_bounds = array<i64: 1, 4>}, {transform_indices = @transform_5, window_bounds = array<i64: 1, 128, 4>}]} {
    %c0 = arith.constant 0 : index
    %c0_0 = arith.constant 0 : index
    %c0_1 = arith.constant 0 : index
    %c0_2 = arith.constant 0 : index
    %0 = vector.load %arg2[%c0, %c0_0, %c0_1, %c0_2] : memref<1x12x26x4xbf16, #tpu.memory_space<vmem>>, vector<1x10x24x4xbf16>
    %1 = vector.shape_cast %0 : vector<1x10x24x4xbf16> to vector<10x24x4xbf16>
    %2 = vector.shape_cast %1 : vector<10x24x4xbf16> to vector<240x4xbf16>
    %c0_3 = arith.constant 0 : index
    %c0_4 = arith.constant 0 : index
    %c0_5 = arith.constant 0 : index
    %3 = vector.load %arg3[%c0_3, %c0_4, %c0_5] : memref<9x4x4xbf16, #tpu.memory_space<vmem>>, vector<1x4x4xbf16>
    %4 = vector.shape_cast %3 : vector<1x4x4xbf16> to vector<4x4xbf16>
    %cst = arith.constant dense<0.000000e+00> : vector<240x4xf32>
    %5 = tpu.matmul %2, %4, %cst {dimension_numbers = #tpu.dot_dimension_numbers<[1], [0], [0], [1], [0, 0, 1, 1], [], []>} : vector<240x4xbf16>, vector<4x4xbf16>, vector<240x4xf32> -> vector<240x4xf32>
    %c0_6 = arith.constant 0 : index
    %c0_7 = arith.constant 0 : index
    %c1 = arith.constant 1 : index
    %c0_8 = arith.constant 0 : index
    %6 = vector.load %arg2[%c0_6, %c0_7, %c1, %c0_8] : memref<1x12x26x4xbf16, #tpu.memory_space<vmem>>, vector<1x10x24x4xbf16>
    %7 = vector.shape_cast %6 : vector<1x10x24x4xbf16> to vector<10x24x4xbf16>
    %8 = vector.shape_cast %7 : vector<10x24x4xbf16> to vector<240x4xbf16>
    %c1_9 = arith.constant 1 : index
    %c0_10 = arith.constant 0 : index
    %c0_11 = arith.constant 0 : index
    %9 = vector.load %arg3[%c1_9, %c0_10, %c0_11] : memref<9x4x4xbf16, #tpu.memory_space<vmem>>, vector<1x4x4xbf16>
    %10 = vector.shape_cast %9 : vector<1x4x4xbf16> to vector<4x4xbf16>
    %cst_12 = arith.constant dense<0.000000e+00> : vector<240x4xf32>
    %11 = tpu.matmul %8, %10, %cst_12 {dimension_numbers = #tpu.dot_dimension_numbers<[1], [0], [0], [1], [0, 0, 1, 1], [], []>} : vector<240x4xbf16>, vector<4x4xbf16>, vector<240x4xf32> -> vector<240x4xf32>
    %12 = arith.addf %5, %11 : vector<240x4xf32>
    %c0_13 = arith.constant 0 : index
    %c0_14 = arith.constant 0 : index
    %c2 = arith.constant 2 : index
    %c0_15 = arith.constant 0 : index
    %13 = vector.load %arg2[%c0_13, %c0_14, %c2, %c0_15] : memref<1x12x26x4xbf16, #tpu.memory_space<vmem>>, vector<1x10x24x4xbf16>
    %14 = vector.shape_cast %13 : vector<1x10x24x4xbf16> to vector<10x24x4xbf16>
    %15 = vector.shape_cast %14 : vector<10x24x4xbf16> to vector<240x4xbf16>
    %c2_16 = arith.constant 2 : index
    %c0_17 = arith.constant 0 : index
    %c0_18 = arith.constant 0 : index
    %16 = vector.load %arg3[%c2_16, %c0_17, %c0_18] : memref<9x4x4xbf16, #tpu.memory_space<vmem>>, vector<1x4x4xbf16>
    %17 = vector.shape_cast %16 : vector<1x4x4xbf16> to vector<4x4xbf16>
    %cst_19 = arith.constant dense<0.000000e+00> : vector<240x4xf32>
    %18 = tpu.matmul %15, %17, %cst_19 {dimension_numbers = #tpu.dot_dimension_numbers<[1], [0], [0], [1], [0, 0, 1, 1], [], []>} : vector<240x4xbf16>, vector<4x4xbf16>, vector<240x4xf32> -> vector<240x4xf32>
    %19 = arith.addf %12, %18 : vector<240x4xf32>
    %c0_20 = arith.constant 0 : index
    %c1_21 = arith.constant 1 : index
    %c0_22 = arith.constant 0 : index
    %c0_23 = arith.constant 0 : index
    %20 = vector.load %arg2[%c0_20, %c1_21, %c0_22, %c0_23] : memref<1x12x26x4xbf16, #tpu.memory_space<vmem>>, vector<1x10x24x4xbf16>
    %21 = vector.shape_cast %20 : vector<1x10x24x4xbf16> to vector<10x24x4xbf16>
    %22 = vector.shape_cast %21 : vector<10x24x4xbf16> to vector<240x4xbf16>
    %c3 = arith.constant 3 : index
    %c0_24 = arith.constant 0 : index
    %c0_25 = arith.constant 0 : index
    %23 = vector.load %arg3[%c3, %c0_24, %c0_25] : memref<9x4x4xbf16, #tpu.memory_space<vmem>>, vector<1x4x4xbf16>
    %24 = vector.shape_cast %23 : vector<1x4x4xbf16> to vector<4x4xbf16>
    %cst_26 = arith.constant dense<0.000000e+00> : vector<240x4xf32>
    %25 = tpu.matmul %22, %24, %cst_26 {dimension_numbers = #tpu.dot_dimension_numbers<[1], [0], [0], [1], [0, 0, 1, 1], [], []>} : vector<240x4xbf16>, vector<4x4xbf16>, vector<240x4xf32> -> vector<240x4xf32>
    %26 = arith.addf %19, %25 : vector<240x4xf32>
    %c0_27 = arith.constant 0 : index
    %c1_28 = arith.constant 1 : index
    %c1_29 = arith.constant 1 : index
    %c0_30 = arith.constant 0 : index
    %27 = vector.load %arg2[%c0_27, %c1_28, %c1_29, %c0_30] : memref<1x12x26x4xbf16, #tpu.memory_space<vmem>>, vector<1x10x24x4xbf16>
    %28 = vector.shape_cast %27 : vector<1x10x24x4xbf16> to vector<10x24x4xbf16>
    %29 = vector.shape_cast %28 : vector<10x24x4xbf16> to vector<240x4xbf16>
    %c4 = arith.constant 4 : index
    %c0_31 = arith.constant 0 : index
    %c0_32 = arith.constant 0 : index
    %30 = vector.load %arg3[%c4, %c0_31, %c0_32] : memref<9x4x4xbf16, #tpu.memory_space<vmem>>, vector<1x4x4xbf16>
    %31 = vector.shape_cast %30 : vector<1x4x4xbf16> to vector<4x4xbf16>
    %cst_33 = arith.constant dense<0.000000e+00> : vector<240x4xf32>
    %32 = tpu.matmul %29, %31, %cst_33 {dimension_numbers = #tpu.dot_dimension_numbers<[1], [0], [0], [1], [0, 0, 1, 1], [], []>} : vector<240x4xbf16>, vector<4x4xbf16>, vector<240x4xf32> -> vector<240x4xf32>
    %33 = arith.addf %26, %32 : vector<240x4xf32>
    %c0_34 = arith.constant 0 : index
    %c1_35 = arith.constant 1 : index
    %c2_36 = arith.constant 2 : index
    %c0_37 = arith.constant 0 : index
    %34 = vector.load %arg2[%c0_34, %c1_35, %c2_36, %c0_37] : memref<1x12x26x4xbf16, #tpu.memory_space<vmem>>, vector<1x10x24x4xbf16>
    %35 = vector.shape_cast %34 : vector<1x10x24x4xbf16> to vector<10x24x4xbf16>
    %36 = vector.shape_cast %35 : vector<10x24x4xbf16> to vector<240x4xbf16>
    %c5 = arith.constant 5 : index
    %c0_38 = arith.constant 0 : index
    %c0_39 = arith.constant 0 : index
    %37 = vector.load %arg3[%c5, %c0_38, %c0_39] : memref<9x4x4xbf16, #tpu.memory_space<vmem>>, vector<1x4x4xbf16>
    %38 = vector.shape_cast %37 : vector<1x4x4xbf16> to vector<4x4xbf16>
    %cst_40 = arith.constant dense<0.000000e+00> : vector<240x4xf32>
    %39 = tpu.matmul %36, %38, %cst_40 {dimension_numbers = #tpu.dot_dimension_numbers<[1], [0], [0], [1], [0, 0, 1, 1], [], []>} : vector<240x4xbf16>, vector<4x4xbf16>, vector<240x4xf32> -> vector<240x4xf32>
    %40 = arith.addf %33, %39 : vector<240x4xf32>
    %c0_41 = arith.constant 0 : index
    %c2_42 = arith.constant 2 : index
    %c0_43 = arith.constant 0 : index
    %c0_44 = arith.constant 0 : index
    %41 = vector.load %arg2[%c0_41, %c2_42, %c0_43, %c0_44] : memref<1x12x26x4xbf16, #tpu.memory_space<vmem>>, vector<1x10x24x4xbf16>
    %42 = vector.shape_cast %41 : vector<1x10x24x4xbf16> to vector<10x24x4xbf16>
    %43 = vector.shape_cast %42 : vector<10x24x4xbf16> to vector<240x4xbf16>
    %c6 = arith.constant 6 : index
    %c0_45 = arith.constant 0 : index
    %c0_46 = arith.constant 0 : index
    %44 = vector.load %arg3[%c6, %c0_45, %c0_46] : memref<9x4x4xbf16, #tpu.memory_space<vmem>>, vector<1x4x4xbf16>
    %45 = vector.shape_cast %44 : vector<1x4x4xbf16> to vector<4x4xbf16>
    %cst_47 = arith.constant dense<0.000000e+00> : vector<240x4xf32>
    %46 = tpu.matmul %43, %45, %cst_47 {dimension_numbers = #tpu.dot_dimension_numbers<[1], [0], [0], [1], [0, 0, 1, 1], [], []>} : vector<240x4xbf16>, vector<4x4xbf16>, vector<240x4xf32> -> vector<240x4xf32>
    %47 = arith.addf %40, %46 : vector<240x4xf32>
    %c0_48 = arith.constant 0 : index
    %c2_49 = arith.constant 2 : index
    %c1_50 = arith.constant 1 : index
    %c0_51 = arith.constant 0 : index
    %48 = vector.load %arg2[%c0_48, %c2_49, %c1_50, %c0_51] : memref<1x12x26x4xbf16, #tpu.memory_space<vmem>>, vector<1x10x24x4xbf16>
    %49 = vector.shape_cast %48 : vector<1x10x24x4xbf16> to vector<10x24x4xbf16>
    %50 = vector.shape_cast %49 : vector<10x24x4xbf16> to vector<240x4xbf16>
    %c7 = arith.constant 7 : index
    %c0_52 = arith.constant 0 : index
    %c0_53 = arith.constant 0 : index
    %51 = vector.load %arg3[%c7, %c0_52, %c0_53] : memref<9x4x4xbf16, #tpu.memory_space<vmem>>, vector<1x4x4xbf16>
    %52 = vector.shape_cast %51 : vector<1x4x4xbf16> to vector<4x4xbf16>
    %cst_54 = arith.constant dense<0.000000e+00> : vector<240x4xf32>
    %53 = tpu.matmul %50, %52, %cst_54 {dimension_numbers = #tpu.dot_dimension_numbers<[1], [0], [0], [1], [0, 0, 1, 1], [], []>} : vector<240x4xbf16>, vector<4x4xbf16>, vector<240x4xf32> -> vector<240x4xf32>
    %54 = arith.addf %47, %53 : vector<240x4xf32>
    %c0_55 = arith.constant 0 : index
    %c2_56 = arith.constant 2 : index
    %c2_57 = arith.constant 2 : index
    %c0_58 = arith.constant 0 : index
    %55 = vector.load %arg2[%c0_55, %c2_56, %c2_57, %c0_58] : memref<1x12x26x4xbf16, #tpu.memory_space<vmem>>, vector<1x10x24x4xbf16>
    %56 = vector.shape_cast %55 : vector<1x10x24x4xbf16> to vector<10x24x4xbf16>
    %57 = vector.shape_cast %56 : vector<10x24x4xbf16> to vector<240x4xbf16>
    %c8 = arith.constant 8 : index
    %c0_59 = arith.constant 0 : index
    %c0_60 = arith.constant 0 : index
    %58 = vector.load %arg3[%c8, %c0_59, %c0_60] : memref<9x4x4xbf16, #tpu.memory_space<vmem>>, vector<1x4x4xbf16>
    %59 = vector.shape_cast %58 : vector<1x4x4xbf16> to vector<4x4xbf16>
    %cst_61 = arith.constant dense<0.000000e+00> : vector<240x4xf32>
    %60 = tpu.matmul %57, %59, %cst_61 {dimension_numbers = #tpu.dot_dimension_numbers<[1], [0], [0], [1], [0, 0, 1, 1], [], []>} : vector<240x4xbf16>, vector<4x4xbf16>, vector<240x4xf32> -> vector<240x4xf32>
    %61 = arith.addf %54, %60 : vector<240x4xf32>
    %62 = tpu.iota {dimensions = array<i32: 0>} : vector<10x24x1xi32>
    %c8_i32 = arith.constant 8 : i32
    %63 = arith.muli %arg1, %c8_i32 : i32
    %c1_i32 = arith.constant 1 : i32
    %64 = arith.subi %63, %c1_i32 : i32
    %65 = vector.broadcast %64 : i32 to vector<10x24x1xi32>
    %66 = arith.addi %62, %65 : vector<10x24x1xi32>
    %67 = tpu.iota {dimensions = array<i32: 1>} : vector<10x24x1xi32>
    %c0_i32 = arith.constant 0 : i32
    %68 = vector.broadcast %c0_i32 : i32 to vector<10x24x1xi32>
    %69 = arith.cmpi sge, %66, %68 : vector<10x24x1xi32>
    %c16_i32 = arith.constant 16 : i32
    %70 = vector.broadcast %c16_i32 : i32 to vector<10x24x1xi32>
    %71 = arith.cmpi slt, %66, %70 : vector<10x24x1xi32>
    %72 = arith.andi %69, %71 : vector<10x24x1xi1>
    %c1_i32_62 = arith.constant 1 : i32
    %73 = vector.broadcast %c1_i32_62 : i32 to vector<10x24x1xi32>
    %74 = arith.cmpi sge, %67, %73 : vector<10x24x1xi32>
    %75 = arith.andi %72, %74 : vector<10x24x1xi1>
    %c17_i32 = arith.constant 17 : i32
    %76 = vector.broadcast %c17_i32 : i32 to vector<10x24x1xi32>
    %77 = arith.cmpi slt, %67, %76 : vector<10x24x1xi32>
    %78 = arith.andi %75, %77 : vector<10x24x1xi1>
    %c0_63 = arith.constant 0 : index
    %c0_64 = arith.constant 0 : index
    %79 = vector.load %arg5[%c0_63, %c0_64] : memref<1x4xf32, #tpu.memory_space<vmem>>, vector<1x4xf32>
    %80 = vector.broadcast %79 : vector<1x4xf32> to vector<240x4xf32>
    %81 = arith.addf %61, %80 : vector<240x4xf32>
    %82 = vector.shape_cast %81 : vector<240x4xf32> to vector<10x24x4xf32>
    %cst_65 = arith.constant 0.000000e+00 : f32
    %83 = vector.broadcast %cst_65 : f32 to vector<10x24x4xf32>
    %84 = arith.maximumf %82, %83 : vector<10x24x4xf32>
    %cst_66 = arith.constant 0.000000e+00 : f32
    %85 = vector.shape_cast %78 : vector<10x24x1xi1> to vector<10x24x1xi1>
    %86 = vector.broadcast %85 : vector<10x24x1xi1> to vector<10x24x4xi1>
    %87 = vector.broadcast %cst_66 : f32 to vector<10x24x4xf32>
    %88 = arith.select %86, %84, %87 : vector<10x24x4xi1>, vector<10x24x4xf32>
    %89 = arith.truncf %88 : vector<10x24x4xf32> to vector<10x24x4xbf16>
    %90 = vector.extract_strided_slice %89 {offsets = [0, 0, 0], sizes = [8, 16, 4], strides = [1, 1, 1]} : vector<10x24x4xbf16> to vector<8x16x4xbf16>
    %91 = vector.shape_cast %90 : vector<8x16x4xbf16> to vector<128x4xbf16>
    %c0_67 = arith.constant 0 : index
    %c0_68 = arith.constant 0 : index
    %c0_69 = arith.constant 0 : index
    %92 = vector.load %arg4[%c0_67, %c0_68, %c0_69] : memref<9x4x4xbf16, #tpu.memory_space<vmem>>, vector<1x4x4xbf16>
    %93 = vector.shape_cast %92 : vector<1x4x4xbf16> to vector<4x4xbf16>
    %cst_70 = arith.constant dense<0.000000e+00> : vector<128x4xf32>
    %94 = tpu.matmul %91, %93, %cst_70 {dimension_numbers = #tpu.dot_dimension_numbers<[1], [0], [0], [1], [0, 0, 1, 1], [], []>} : vector<128x4xbf16>, vector<4x4xbf16>, vector<128x4xf32> -> vector<128x4xf32>
    %95 = vector.extract_strided_slice %89 {offsets = [0, 1, 0], sizes = [8, 16, 4], strides = [1, 1, 1]} : vector<10x24x4xbf16> to vector<8x16x4xbf16>
    %96 = vector.shape_cast %95 : vector<8x16x4xbf16> to vector<128x4xbf16>
    %c1_71 = arith.constant 1 : index
    %c0_72 = arith.constant 0 : index
    %c0_73 = arith.constant 0 : index
    %97 = vector.load %arg4[%c1_71, %c0_72, %c0_73] : memref<9x4x4xbf16, #tpu.memory_space<vmem>>, vector<1x4x4xbf16>
    %98 = vector.shape_cast %97 : vector<1x4x4xbf16> to vector<4x4xbf16>
    %cst_74 = arith.constant dense<0.000000e+00> : vector<128x4xf32>
    %99 = tpu.matmul %96, %98, %cst_74 {dimension_numbers = #tpu.dot_dimension_numbers<[1], [0], [0], [1], [0, 0, 1, 1], [], []>} : vector<128x4xbf16>, vector<4x4xbf16>, vector<128x4xf32> -> vector<128x4xf32>
    %100 = arith.addf %94, %99 : vector<128x4xf32>
    %101 = vector.extract_strided_slice %89 {offsets = [0, 2, 0], sizes = [8, 16, 4], strides = [1, 1, 1]} : vector<10x24x4xbf16> to vector<8x16x4xbf16>
    %102 = vector.shape_cast %101 : vector<8x16x4xbf16> to vector<128x4xbf16>
    %c2_75 = arith.constant 2 : index
    %c0_76 = arith.constant 0 : index
    %c0_77 = arith.constant 0 : index
    %103 = vector.load %arg4[%c2_75, %c0_76, %c0_77] : memref<9x4x4xbf16, #tpu.memory_space<vmem>>, vector<1x4x4xbf16>
    %104 = vector.shape_cast %103 : vector<1x4x4xbf16> to vector<4x4xbf16>
    %cst_78 = arith.constant dense<0.000000e+00> : vector<128x4xf32>
    %105 = tpu.matmul %102, %104, %cst_78 {dimension_numbers = #tpu.dot_dimension_numbers<[1], [0], [0], [1], [0, 0, 1, 1], [], []>} : vector<128x4xbf16>, vector<4x4xbf16>, vector<128x4xf32> -> vector<128x4xf32>
    %106 = arith.addf %100, %105 : vector<128x4xf32>
    %107 = vector.extract_strided_slice %89 {offsets = [1, 0, 0], sizes = [8, 16, 4], strides = [1, 1, 1]} : vector<10x24x4xbf16> to vector<8x16x4xbf16>
    %108 = vector.shape_cast %107 : vector<8x16x4xbf16> to vector<128x4xbf16>
    %c3_79 = arith.constant 3 : index
    %c0_80 = arith.constant 0 : index
    %c0_81 = arith.constant 0 : index
    %109 = vector.load %arg4[%c3_79, %c0_80, %c0_81] : memref<9x4x4xbf16, #tpu.memory_space<vmem>>, vector<1x4x4xbf16>
    %110 = vector.shape_cast %109 : vector<1x4x4xbf16> to vector<4x4xbf16>
    %cst_82 = arith.constant dense<0.000000e+00> : vector<128x4xf32>
    %111 = tpu.matmul %108, %110, %cst_82 {dimension_numbers = #tpu.dot_dimension_numbers<[1], [0], [0], [1], [0, 0, 1, 1], [], []>} : vector<128x4xbf16>, vector<4x4xbf16>, vector<128x4xf32> -> vector<128x4xf32>
    %112 = arith.addf %106, %111 : vector<128x4xf32>
    %113 = vector.extract_strided_slice %89 {offsets = [1, 1, 0], sizes = [8, 16, 4], strides = [1, 1, 1]} : vector<10x24x4xbf16> to vector<8x16x4xbf16>
    %114 = vector.shape_cast %113 : vector<8x16x4xbf16> to vector<128x4xbf16>
    %c4_83 = arith.constant 4 : index
    %c0_84 = arith.constant 0 : index
    %c0_85 = arith.constant 0 : index
    %115 = vector.load %arg4[%c4_83, %c0_84, %c0_85] : memref<9x4x4xbf16, #tpu.memory_space<vmem>>, vector<1x4x4xbf16>
    %116 = vector.shape_cast %115 : vector<1x4x4xbf16> to vector<4x4xbf16>
    %cst_86 = arith.constant dense<0.000000e+00> : vector<128x4xf32>
    %117 = tpu.matmul %114, %116, %cst_86 {dimension_numbers = #tpu.dot_dimension_numbers<[1], [0], [0], [1], [0, 0, 1, 1], [], []>} : vector<128x4xbf16>, vector<4x4xbf16>, vector<128x4xf32> -> vector<128x4xf32>
    %118 = arith.addf %112, %117 : vector<128x4xf32>
    %119 = vector.extract_strided_slice %89 {offsets = [1, 2, 0], sizes = [8, 16, 4], strides = [1, 1, 1]} : vector<10x24x4xbf16> to vector<8x16x4xbf16>
    %120 = vector.shape_cast %119 : vector<8x16x4xbf16> to vector<128x4xbf16>
    %c5_87 = arith.constant 5 : index
    %c0_88 = arith.constant 0 : index
    %c0_89 = arith.constant 0 : index
    %121 = vector.load %arg4[%c5_87, %c0_88, %c0_89] : memref<9x4x4xbf16, #tpu.memory_space<vmem>>, vector<1x4x4xbf16>
    %122 = vector.shape_cast %121 : vector<1x4x4xbf16> to vector<4x4xbf16>
    %cst_90 = arith.constant dense<0.000000e+00> : vector<128x4xf32>
    %123 = tpu.matmul %120, %122, %cst_90 {dimension_numbers = #tpu.dot_dimension_numbers<[1], [0], [0], [1], [0, 0, 1, 1], [], []>} : vector<128x4xbf16>, vector<4x4xbf16>, vector<128x4xf32> -> vector<128x4xf32>
    %124 = arith.addf %118, %123 : vector<128x4xf32>
    %125 = vector.extract_strided_slice %89 {offsets = [2, 0, 0], sizes = [8, 16, 4], strides = [1, 1, 1]} : vector<10x24x4xbf16> to vector<8x16x4xbf16>
    %126 = vector.shape_cast %125 : vector<8x16x4xbf16> to vector<128x4xbf16>
    %c6_91 = arith.constant 6 : index
    %c0_92 = arith.constant 0 : index
    %c0_93 = arith.constant 0 : index
    %127 = vector.load %arg4[%c6_91, %c0_92, %c0_93] : memref<9x4x4xbf16, #tpu.memory_space<vmem>>, vector<1x4x4xbf16>
    %128 = vector.shape_cast %127 : vector<1x4x4xbf16> to vector<4x4xbf16>
    %cst_94 = arith.constant dense<0.000000e+00> : vector<128x4xf32>
    %129 = tpu.matmul %126, %128, %cst_94 {dimension_numbers = #tpu.dot_dimension_numbers<[1], [0], [0], [1], [0, 0, 1, 1], [], []>} : vector<128x4xbf16>, vector<4x4xbf16>, vector<128x4xf32> -> vector<128x4xf32>
    %130 = arith.addf %124, %129 : vector<128x4xf32>
    %131 = vector.extract_strided_slice %89 {offsets = [2, 1, 0], sizes = [8, 16, 4], strides = [1, 1, 1]} : vector<10x24x4xbf16> to vector<8x16x4xbf16>
    %132 = vector.shape_cast %131 : vector<8x16x4xbf16> to vector<128x4xbf16>
    %c7_95 = arith.constant 7 : index
    %c0_96 = arith.constant 0 : index
    %c0_97 = arith.constant 0 : index
    %133 = vector.load %arg4[%c7_95, %c0_96, %c0_97] : memref<9x4x4xbf16, #tpu.memory_space<vmem>>, vector<1x4x4xbf16>
    %134 = vector.shape_cast %133 : vector<1x4x4xbf16> to vector<4x4xbf16>
    %cst_98 = arith.constant dense<0.000000e+00> : vector<128x4xf32>
    %135 = tpu.matmul %132, %134, %cst_98 {dimension_numbers = #tpu.dot_dimension_numbers<[1], [0], [0], [1], [0, 0, 1, 1], [], []>} : vector<128x4xbf16>, vector<4x4xbf16>, vector<128x4xf32> -> vector<128x4xf32>
    %136 = arith.addf %130, %135 : vector<128x4xf32>
    %137 = vector.extract_strided_slice %89 {offsets = [2, 2, 0], sizes = [8, 16, 4], strides = [1, 1, 1]} : vector<10x24x4xbf16> to vector<8x16x4xbf16>
    %138 = vector.shape_cast %137 : vector<8x16x4xbf16> to vector<128x4xbf16>
    %c8_99 = arith.constant 8 : index
    %c0_100 = arith.constant 0 : index
    %c0_101 = arith.constant 0 : index
    %139 = vector.load %arg4[%c8_99, %c0_100, %c0_101] : memref<9x4x4xbf16, #tpu.memory_space<vmem>>, vector<1x4x4xbf16>
    %140 = vector.shape_cast %139 : vector<1x4x4xbf16> to vector<4x4xbf16>
    %cst_102 = arith.constant dense<0.000000e+00> : vector<128x4xf32>
    %141 = tpu.matmul %138, %140, %cst_102 {dimension_numbers = #tpu.dot_dimension_numbers<[1], [0], [0], [1], [0, 0, 1, 1], [], []>} : vector<128x4xbf16>, vector<4x4xbf16>, vector<128x4xf32> -> vector<128x4xf32>
    %142 = arith.addf %136, %141 : vector<128x4xf32>
    %c0_103 = arith.constant 0 : index
    %c2_104 = arith.constant 2 : index
    %c2_105 = arith.constant 2 : index
    %c0_106 = arith.constant 0 : index
    %143 = vector.load %arg2[%c0_103, %c2_104, %c2_105, %c0_106] : memref<1x12x26x4xbf16, #tpu.memory_space<vmem>>, vector<1x8x16x4xbf16>
    %144 = vector.shape_cast %143 : vector<1x8x16x4xbf16> to vector<8x16x4xbf16>
    %145 = vector.shape_cast %144 : vector<8x16x4xbf16> to vector<128x4xbf16>
    %146 = arith.extf %145 : vector<128x4xbf16> to vector<128x4xf32>
    %c0_107 = arith.constant 0 : index
    %c0_108 = arith.constant 0 : index
    %147 = vector.load %arg6[%c0_107, %c0_108] : memref<1x4xf32, #tpu.memory_space<vmem>>, vector<1x4xf32>
    %148 = vector.broadcast %147 : vector<1x4xf32> to vector<128x4xf32>
    %149 = arith.addf %142, %148 : vector<128x4xf32>
    %150 = arith.addf %149, %146 : vector<128x4xf32>
    %cst_109 = arith.constant 0.000000e+00 : f32
    %151 = vector.broadcast %cst_109 : f32 to vector<128x4xf32>
    %152 = arith.maximumf %150, %151 : vector<128x4xf32>
    %153 = arith.truncf %152 : vector<128x4xf32> to vector<128x4xbf16>
    %c0_110 = arith.constant 0 : index
    %c0_111 = arith.constant 0 : index
    %c0_112 = arith.constant 0 : index
    %154 = vector.load %arg7[%c0_110, %c0_111, %c0_112] : memref<1x128x4xbf16, #tpu.memory_space<vmem>>, vector<1x128x4xbf16>
    %155 = vector.shape_cast %154 : vector<1x128x4xbf16> to vector<128x4xbf16>
    %156 = vector.shape_cast %153 : vector<128x4xbf16> to vector<1x128x4xbf16>
    tpu.vector_store %arg7[%c0_110, %c0_111, %c0_112], %156 {strides = array<i32>} : memref<1x128x4xbf16, #tpu.memory_space<vmem>>, vector<1x128x4xbf16>,
    return
  }
  func.func @transform_0(%arg0: i32, %arg1: i32) -> (i32, i32, i32, i32) {
    %c2_i32 = arith.constant 2 : i32
    %0 = arith.muli %arg0, %c2_i32 : i32
    %1 = arith.addi %0, %arg1 : i32
    %c0_i32 = arith.constant 0 : i32
    %c0_i32_0 = arith.constant 0 : i32
    %c0_i32_1 = arith.constant 0 : i32
    %c0_i32_2 = arith.constant 0 : i32
    return %1, %c0_i32, %c0_i32_0, %c0_i32_1 : i32, i32, i32, i32
  }
  func.func @transform_1(%arg0: i32, %arg1: i32) -> (i32, i32, i32) {
    %c0_i32 = arith.constant 0 : i32
    %c0_i32_0 = arith.constant 0 : i32
    %c0_i32_1 = arith.constant 0 : i32
    %c0_i32_2 = arith.constant 0 : i32
    return %c0_i32, %c0_i32_0, %c0_i32_1 : i32, i32, i32
  }
  func.func @transform_2(%arg0: i32, %arg1: i32) -> (i32, i32, i32) {
    %c0_i32 = arith.constant 0 : i32
    %c0_i32_0 = arith.constant 0 : i32
    %c0_i32_1 = arith.constant 0 : i32
    %c0_i32_2 = arith.constant 0 : i32
    return %c0_i32, %c0_i32_0, %c0_i32_1 : i32, i32, i32
  }
  func.func @transform_3(%arg0: i32, %arg1: i32) -> (i32, i32) {
    %c0_i32 = arith.constant 0 : i32
    %c0_i32_0 = arith.constant 0 : i32
    %c0_i32_1 = arith.constant 0 : i32
    return %c0_i32, %c0_i32_0 : i32, i32
  }
  func.func @transform_4(%arg0: i32, %arg1: i32) -> (i32, i32) {
    %c0_i32 = arith.constant 0 : i32
    %c0_i32_0 = arith.constant 0 : i32
    %c0_i32_1 = arith.constant 0 : i32
    return %c0_i32, %c0_i32_0 : i32, i32
  }
  func.func @transform_5(%arg0: i32, %arg1: i32) -> (i32, i32, i32) {
    %c2_i32 = arith.constant 2 : i32
    %0 = arith.muli %arg0, %c2_i32 : i32
    %1 = arith.addi %0, %arg1 : i32
    %c0_i32 = arith.constant 0 : i32
    %c0_i32_0 = arith.constant 0 : i32
    %c0_i32_1 = arith.constant 0 : i32
    return %1, %c0_i32, %c0_i32_0 : i32, i32, i32
  }
}

module attributes {stable_mosaic.version = 11 : i64} {
  func.func @basic_block_kernel(%arg0: i32, %arg1: i32, %arg2: memref<1x12x26x4xbf16, #tpu.memory_space<vmem>>, %arg3: memref<9x4x4xbf16, #tpu.memory_space<vmem>>, %arg4: memref<9x4x4xbf16, #tpu.memory_space<vmem>>, %arg5: memref<1x4xf32, #tpu.memory_space<vmem>>, %arg6: memref<1x4xf32, #tpu.memory_space<vmem>>, %arg7: memref<1x128x4xbf16, #tpu.memory_space<vmem>>) attributes {dimension_semantics = [#tpu.dimension_semantics<parallel>, #tpu.dimension_semantics<parallel>], iteration_bounds = array<i64: 2, 2>, scalar_prefetch = 0 : i64, scratch_operands = 0 : i64, tpu.core_type = #tpu.core_type<tc>, window_params = [{transform_indices = @transform_0, window_bounds = array<i64: 1, 12, 26, 4>}, {pipeline_mode = #tpu.pipeline_mode<synchronous>, transform_indices = @transform_1, window_bounds = array<i64: 9, 4, 4>}, {pipeline_mode = #tpu.pipeline_mode<synchronous>, transform_indices = @transform_2, window_bounds = array<i64: 9, 4, 4>}, {pipeline_mode = #tpu.pipeline_mode<synchronous>, transform_indices = @transform_3, window_bounds = array<i64: 1, 4>}, {pipeline_mode = #tpu.pipeline_mode<synchronous>, transform_indices = @transform_4, window_bounds = array<i64: 1, 4>}, {transform_indices = @transform_5, window_bounds = array<i64: 1, 128, 4>}]} {
    %c0 = arith.constant 0 : index
    %c0_0 = arith.constant 0 : index
    %c0_1 = arith.constant 0 : index
    %c0_2 = arith.constant 0 : index
    %0 = vector.load %arg2[%c0, %c0_0, %c0_1, %c0_2] : memref<1x12x26x4xbf16, #tpu.memory_space<vmem>>, vector<1x10x24x4xbf16>
    %1 = vector.shape_cast %0 : vector<1x10x24x4xbf16> to vector<10x24x4xbf16>
    %2 = vector.shape_cast %1 : vector<10x24x4xbf16> to vector<240x4xbf16>
    %c0_3 = arith.constant 0 : index
    %c0_4 = arith.constant 0 : index
    %c0_5 = arith.constant 0 : index
    %3 = vector.load %arg3[%c0_3, %c0_4, %c0_5] : memref<9x4x4xbf16, #tpu.memory_space<vmem>>, vector<1x4x4xbf16>
    %4 = vector.shape_cast %3 : vector<1x4x4xbf16> to vector<4x4xbf16>
    %cst = arith.constant dense<0.000000e+00> : vector<240x4xf32>
    %5 = tpu.matmul %2, %4, %cst {dimension_numbers = #tpu.dot_dimension_numbers<[1], [0], [0], [1], [0, 0, 1, 1], [], []>} : vector<240x4xbf16>, vector<4x4xbf16>, vector<240x4xf32> -> vector<240x4xf32>
    %c0_6 = arith.constant 0 : index
    %c0_7 = arith.constant 0 : index
    %c1 = arith.constant 1 : index
    %c0_8 = arith.constant 0 : index
    %6 = vector.load %arg2[%c0_6, %c0_7, %c1, %c0_8] : memref<1x12x26x4xbf16, #tpu.memory_space<vmem>>, vector<1x10x24x4xbf16>
    %7 = vector.shape_cast %6 : vector<1x10x24x4xbf16> to vector<10x24x4xbf16>
    %8 = vector.shape_cast %7 : vector<10x24x4xbf16> to vector<240x4xbf16>
    %c1_9 = arith.constant 1 : index
    %c0_10 = arith.constant 0 : index
    %c0_11 = arith.constant 0 : index
    %9 = vector.load %arg3[%c1_9, %c0_10, %c0_11] : memref<9x4x4xbf16, #tpu.memory_space<vmem>>, vector<1x4x4xbf16>
    %10 = vector.shape_cast %9 : vector<1x4x4xbf16> to vector<4x4xbf16>
    %cst_12 = arith.constant dense<0.000000e+00> : vector<240x4xf32>
    %11 = tpu.matmul %8, %10, %cst_12 {dimension_numbers = #tpu.dot_dimension_numbers<[1], [0], [0], [1], [0, 0, 1, 1], [], []>} : vector<240x4xbf16>, vector<4x4xbf16>, vector<240x4xf32> -> vector<240x4xf32>
    %12 = arith.addf %5, %11 : vector<240x4xf32>
    %c0_13 = arith.constant 0 : index
    %c0_14 = arith.constant 0 : index
    %c2 = arith.constant 2 : index
    %c0_15 = arith.constant 0 : index
    %13 = vector.load %arg2[%c0_13, %c0_14, %c2, %c0_15] : memref<1x12x26x4xbf16, #tpu.memory_space<vmem>>, vector<1x10x24x4xbf16>
    %14 = vector.shape_cast %13 : vector<1x10x24x4xbf16> to vector<10x24x4xbf16>
    %15 = vector.shape_cast %14 : vector<10x24x4xbf16> to vector<240x4xbf16>
    %c2_16 = arith.constant 2 : index
    %c0_17 = arith.constant 0 : index
    %c0_18 = arith.constant 0 : index
    %16 = vector.load %arg3[%c2_16, %c0_17, %c0_18] : memref<9x4x4xbf16, #tpu.memory_space<vmem>>, vector<1x4x4xbf16>
    %17 = vector.shape_cast %16 : vector<1x4x4xbf16> to vector<4x4xbf16>
    %cst_19 = arith.constant dense<0.000000e+00> : vector<240x4xf32>
    %18 = tpu.matmul %15, %17, %cst_19 {dimension_numbers = #tpu.dot_dimension_numbers<[1], [0], [0], [1], [0, 0, 1, 1], [], []>} : vector<240x4xbf16>, vector<4x4xbf16>, vector<240x4xf32> -> vector<240x4xf32>
    %19 = arith.addf %12, %18 : vector<240x4xf32>
    %c0_20 = arith.constant 0 : index
    %c1_21 = arith.constant 1 : index
    %c0_22 = arith.constant 0 : index
    %c0_23 = arith.constant 0 : index
    %20 = vector.load %arg2[%c0_20, %c1_21, %c0_22, %c0_23] : memref<1x12x26x4xbf16, #tpu.memory_space<vmem>>, vector<1x10x24x4xbf16>
    %21 = vector.shape_cast %20 : vector<1x10x24x4xbf16> to vector<10x24x4xbf16>
    %22 = vector.shape_cast %21 : vector<10x24x4xbf16> to vector<240x4xbf16>
    %c3 = arith.constant 3 : index
    %c0_24 = arith.constant 0 : index
    %c0_25 = arith.constant 0 : index
    %23 = vector.load %arg3[%c3, %c0_24, %c0_25] : memref<9x4x4xbf16, #tpu.memory_space<vmem>>, vector<1x4x4xbf16>
    %24 = vector.shape_cast %23 : vector<1x4x4xbf16> to vector<4x4xbf16>
    %cst_26 = arith.constant dense<0.000000e+00> : vector<240x4xf32>
    %25 = tpu.matmul %22, %24, %cst_26 {dimension_numbers = #tpu.dot_dimension_numbers<[1], [0], [0], [1], [0, 0, 1, 1], [], []>} : vector<240x4xbf16>, vector<4x4xbf16>, vector<240x4xf32> -> vector<240x4xf32>
    %26 = arith.addf %19, %25 : vector<240x4xf32>
    %c0_27 = arith.constant 0 : index
    %c1_28 = arith.constant 1 : index
    %c1_29 = arith.constant 1 : index
    %c0_30 = arith.constant 0 : index
    %27 = vector.load %arg2[%c0_27, %c1_28, %c1_29, %c0_30] : memref<1x12x26x4xbf16, #tpu.memory_space<vmem>>, vector<1x10x24x4xbf16>
    %28 = vector.shape_cast %27 : vector<1x10x24x4xbf16> to vector<10x24x4xbf16>
    %29 = vector.shape_cast %28 : vector<10x24x4xbf16> to vector<240x4xbf16>
    %c4 = arith.constant 4 : index
    %c0_31 = arith.constant 0 : index
    %c0_32 = arith.constant 0 : index
    %30 = vector.load %arg3[%c4, %c0_31, %c0_32] : memref<9x4x4xbf16, #tpu.memory_space<vmem>>, vector<1x4x4xbf16>
    %31 = vector.shape_cast %30 : vector<1x4x4xbf16> to vector<4x4xbf16>
    %cst_33 = arith.constant dense<0.000000e+00> : vector<240x4xf32>
    %32 = tpu.matmul %29, %31, %cst_33 {dimension_numbers = #tpu.dot_dimension_numbers<[1], [0], [0], [1], [0, 0, 1, 1], [], []>} : vector<240x4xbf16>, vector<4x4xbf16>, vector<240x4xf32> -> vector<240x4xf32>
    %33 = arith.addf %26, %32 : vector<240x4xf32>
    %c0_34 = arith.constant 0 : index
    %c1_35 = arith.constant 1 : index
    %c2_36 = arith.constant 2 : index
    %c0_37 = arith.constant 0 : index
    %34 = vector.load %arg2[%c0_34, %c1_35, %c2_36, %c0_37] : memref<1x12x26x4xbf16, #tpu.memory_space<vmem>>, vector<1x10x24x4xbf16>
    %35 = vector.shape_cast %34 : vector<1x10x24x4xbf16> to vector<10x24x4xbf16>
    %36 = vector.shape_cast %35 : vector<10x24x4xbf16> to vector<240x4xbf16>
    %c5 = arith.constant 5 : index
    %c0_38 = arith.constant 0 : index
    %c0_39 = arith.constant 0 : index
    %37 = vector.load %arg3[%c5, %c0_38, %c0_39] : memref<9x4x4xbf16, #tpu.memory_space<vmem>>, vector<1x4x4xbf16>
    %38 = vector.shape_cast %37 : vector<1x4x4xbf16> to vector<4x4xbf16>
    %cst_40 = arith.constant dense<0.000000e+00> : vector<240x4xf32>
    %39 = tpu.matmul %36, %38, %cst_40 {dimension_numbers = #tpu.dot_dimension_numbers<[1], [0], [0], [1], [0, 0, 1, 1], [], []>} : vector<240x4xbf16>, vector<4x4xbf16>, vector<240x4xf32> -> vector<240x4xf32>
    %40 = arith.addf %33, %39 : vector<240x4xf32>
    %c0_41 = arith.constant 0 : index
    %c2_42 = arith.constant 2 : index
    %c0_43 = arith.constant 0 : index
    %c0_44 = arith.constant 0 : index
    %41 = vector.load %arg2[%c0_41, %c2_42, %c0_43, %c0_44] : memref<1x12x26x4xbf16, #tpu.memory_space<vmem>>, vector<1x10x24x4xbf16>
    %42 = vector.shape_cast %41 : vector<1x10x24x4xbf16> to vector<10x24x4xbf16>
    %43 = vector.shape_cast %42 : vector<10x24x4xbf16> to vector<240x4xbf16>
    %c6 = arith.constant 6 : index
    %c0_45 = arith.constant 0 : index
    %c0_46 = arith.constant 0 : index
    %44 = vector.load %arg3[%c6, %c0_45, %c0_46] : memref<9x4x4xbf16, #tpu.memory_space<vmem>>, vector<1x4x4xbf16>
    %45 = vector.shape_cast %44 : vector<1x4x4xbf16> to vector<4x4xbf16>
    %cst_47 = arith.constant dense<0.000000e+00> : vector<240x4xf32>
    %46 = tpu.matmul %43, %45, %cst_47 {dimension_numbers = #tpu.dot_dimension_numbers<[1], [0], [0], [1], [0, 0, 1, 1], [], []>} : vector<240x4xbf16>, vector<4x4xbf16>, vector<240x4xf32> -> vector<240x4xf32>
    %47 = arith.addf %40, %46 : vector<240x4xf32>
    %c0_48 = arith.constant 0 : index
    %c2_49 = arith.constant 2 : index
    %c1_50 = arith.constant 1 : index
    %c0_51 = arith.constant 0 : index
    %48 = vector.load %arg2[%c0_48, %c2_49, %c1_50, %c0_51] : memref<1x12x26x4xbf16, #tpu.memory_space<vmem>>, vector<1x10x24x4xbf16>
    %49 = vector.shape_cast %48 : vector<1x10x24x4xbf16> to vector<10x24x4xbf16>
    %50 = vector.shape_cast %49 : vector<10x24x4xbf16> to vector<240x4xbf16>
    %c7 = arith.constant 7 : index
    %c0_52 = arith.constant 0 : index
    %c0_53 = arith.constant 0 : index
    %51 = vector.load %arg3[%c7, %c0_52, %c0_53] : memref<9x4x4xbf16, #tpu.memory_space<vmem>>, vector<1x4x4xbf16>
    %52 = vector.shape_cast %51 : vector<1x4x4xbf16> to vector<4x4xbf16>
    %cst_54 = arith.constant dense<0.000000e+00> : vector<240x4xf32>
    %53 = tpu.matmul %50, %52, %cst_54 {dimension_numbers = #tpu.dot_dimension_numbers<[1], [0], [0], [1], [0, 0, 1, 1], [], []>} : vector<240x4xbf16>, vector<4x4xbf16>, vector<240x4xf32> -> vector<240x4xf32>
    %54 = arith.addf %47, %53 : vector<240x4xf32>
    %c0_55 = arith.constant 0 : index
    %c2_56 = arith.constant 2 : index
    %c2_57 = arith.constant 2 : index
    %c0_58 = arith.constant 0 : index
    %55 = vector.load %arg2[%c0_55, %c2_56, %c2_57, %c0_58] : memref<1x12x26x4xbf16, #tpu.memory_space<vmem>>, vector<1x10x24x4xbf16>
    %56 = vector.shape_cast %55 : vector<1x10x24x4xbf16> to vector<10x24x4xbf16>
    %57 = vector.shape_cast %56 : vector<10x24x4xbf16> to vector<240x4xbf16>
    %c8 = arith.constant 8 : index
    %c0_59 = arith.constant 0 : index
    %c0_60 = arith.constant 0 : index
    %58 = vector.load %arg3[%c8, %c0_59, %c0_60] : memref<9x4x4xbf16, #tpu.memory_space<vmem>>, vector<1x4x4xbf16>
    %59 = vector.shape_cast %58 : vector<1x4x4xbf16> to vector<4x4xbf16>
    %cst_61 = arith.constant dense<0.000000e+00> : vector<240x4xf32>
    %60 = tpu.matmul %57, %59, %cst_61 {dimension_numbers = #tpu.dot_dimension_numbers<[1], [0], [0], [1], [0, 0, 1, 1], [], []>} : vector<240x4xbf16>, vector<4x4xbf16>, vector<240x4xf32> -> vector<240x4xf32>
    %61 = arith.addf %54, %60 : vector<240x4xf32>
    %62 = tpu.iota {dimensions = array<i32: 0>} : vector<10x24x1xi32>
    %c8_i32 = arith.constant 8 : i32
    %63 = arith.muli %arg1, %c8_i32 : i32
    %c1_i32 = arith.constant 1 : i32
    %64 = arith.subi %63, %c1_i32 : i32
    %65 = vector.broadcast %64 : i32 to vector<10x24x1xi32>
    %66 = arith.addi %62, %65 : vector<10x24x1xi32>
    %67 = tpu.iota {dimensions = array<i32: 1>} : vector<10x24x1xi32>
    %c0_i32 = arith.constant 0 : i32
    %68 = vector.broadcast %c0_i32 : i32 to vector<10x24x1xi32>
    %69 = arith.cmpi sge, %66, %68 : vector<10x24x1xi32>
    %c16_i32 = arith.constant 16 : i32
    %70 = vector.broadcast %c16_i32 : i32 to vector<10x24x1xi32>
    %71 = arith.cmpi slt, %66, %70 : vector<10x24x1xi32>
    %72 = arith.andi %69, %71 : vector<10x24x1xi1>
    %c1_i32_62 = arith.constant 1 : i32
    %73 = vector.broadcast %c1_i32_62 : i32 to vector<10x24x1xi32>
    %74 = arith.cmpi sge, %67, %73 : vector<10x24x1xi32>
    %75 = arith.andi %72, %74 : vector<10x24x1xi1>
    %c17_i32 = arith.constant 17 : i32
    %76 = vector.broadcast %c17_i32 : i32 to vector<10x24x1xi32>
    %77 = arith.cmpi slt, %67, %76 : vector<10x24x1xi32>
    %78 = arith.andi %75, %77 : vector<10x24x1xi1>
    %c0_63 = arith.constant 0 : index
    %c0_64 = arith.constant 0 : index
    %79 = vector.load %arg5[%c0_63, %c0_64] : memref<1x4xf32, #tpu.memory_space<vmem>>, vector<1x4xf32>
    %80 = vector.broadcast %79 : vector<1x4xf32> to vector<240x4xf32>
    %81 = arith.addf %61, %80 : vector<240x4xf32>
    %82 = vector.shape_cast %81 : vector<240x4xf32> to vector<10x24x4xf32>
    %cst_65 = arith.constant 0.000000e+00 : f32
    %83 = vector.broadcast %cst_65 : f32 to vector<10x24x4xf32>
    %84 = arith.maximumf %82, %83 : vector<10x24x4xf32>
    %cst_66 = arith.constant 0.000000e+00 : f32
    %85 = vector.shape_cast %78 : vector<10x24x1xi1> to vector<10x24x1xi1>
    %86 = vector.broadcast %85 : vector<10x24x1xi1> to vector<10x24x4xi1>
    %87 = vector.broadcast %cst_66 : f32 to vector<10x24x4xf32>
    %88 = arith.select %86, %84, %87 : vector<10x24x4xi1>, vector<10x24x4xf32>
    %89 = arith.truncf %88 : vector<10x24x4xf32> to vector<10x24x4xbf16>
    %90 = vector.extract_strided_slice %89 {offsets = [0, 0, 0], sizes = [8, 16, 4], strides = [1, 1, 1]} : vector<10x24x4xbf16> to vector<8x16x4xbf16>
    %91 = vector.shape_cast %90 : vector<8x16x4xbf16> to vector<128x4xbf16>
    %c0_67 = arith.constant 0 : index
    %c0_68 = arith.constant 0 : index
    %c0_69 = arith.constant 0 : index
    %92 = vector.load %arg4[%c0_67, %c0_68, %c0_69] : memref<9x4x4xbf16, #tpu.memory_space<vmem>>, vector<1x4x4xbf16>
    %93 = vector.shape_cast %92 : vector<1x4x4xbf16> to vector<4x4xbf16>
    %cst_70 = arith.constant dense<0.000000e+00> : vector<128x4xf32>
    %94 = tpu.matmul %91, %93, %cst_70 {dimension_numbers = #tpu.dot_dimension_numbers<[1], [0], [0], [1], [0, 0, 1, 1], [], []>} : vector<128x4xbf16>, vector<4x4xbf16>, vector<128x4xf32> -> vector<128x4xf32>
    %95 = vector.extract_strided_slice %89 {offsets = [0, 1, 0], sizes = [8, 16, 4], strides = [1, 1, 1]} : vector<10x24x4xbf16> to vector<8x16x4xbf16>
    %96 = vector.shape_cast %95 : vector<8x16x4xbf16> to vector<128x4xbf16>
    %c1_71 = arith.constant 1 : index
    %c0_72 = arith.constant 0 : index
    %c0_73 = arith.constant 0 : index
    %97 = vector.load %arg4[%c1_71, %c0_72, %c0_73] : memref<9x4x4xbf16, #tpu.memory_space<vmem>>, vector<1x4x4xbf16>
    %98 = vector.shape_cast %97 : vector<1x4x4xbf16> to vector<4x4xbf16>
    %cst_74 = arith.constant dense<0.000000e+00> : vector<128x4xf32>
    %99 = tpu.matmul %96, %98, %cst_74 {dimension_numbers = #tpu.dot_dimension_numbers<[1], [0], [0], [1], [0, 0, 1, 1], [], []>} : vector<128x4xbf16>, vector<4x4xbf16>, vector<128x4xf32> -> vector<128x4xf32>
    %100 = arith.addf %94, %99 : vector<128x4xf32>
    %101 = vector.extract_strided_slice %89 {offsets = [0, 2, 0], sizes = [8, 16, 4], strides = [1, 1, 1]} : vector<10x24x4xbf16> to vector<8x16x4xbf16>
    %102 = vector.shape_cast %101 : vector<8x16x4xbf16> to vector<128x4xbf16>
    %c2_75 = arith.constant 2 : index
    %c0_76 = arith.constant 0 : index
    %c0_77 = arith.constant 0 : index
    %103 = vector.load %arg4[%c2_75, %c0_76, %c0_77] : memref<9x4x4xbf16, #tpu.memory_space<vmem>>, vector<1x4x4xbf16>
    %104 = vector.shape_cast %103 : vector<1x4x4xbf16> to vector<4x4xbf16>
    %cst_78 = arith.constant dense<0.000000e+00> : vector<128x4xf32>
    %105 = tpu.matmul %102, %104, %cst_78 {dimension_numbers = #tpu.dot_dimension_numbers<[1], [0], [0], [1], [0, 0, 1, 1], [], []>} : vector<128x4xbf16>, vector<4x4xbf16>, vector<128x4xf32> -> vector<128x4xf32>
    %106 = arith.addf %100, %105 : vector<128x4xf32>
    %107 = vector.extract_strided_slice %89 {offsets = [1, 0, 0], sizes = [8, 16, 4], strides = [1, 1, 1]} : vector<10x24x4xbf16> to vector<8x16x4xbf16>
    %108 = vector.shape_cast %107 : vector<8x16x4xbf16> to vector<128x4xbf16>
    %c3_79 = arith.constant 3 : index
    %c0_80 = arith.constant 0 : index
    %c0_81 = arith.constant 0 : index
    %109 = vector.load %arg4[%c3_79, %c0_80, %c0_81] : memref<9x4x4xbf16, #tpu.memory_space<vmem>>, vector<1x4x4xbf16>
    %110 = vector.shape_cast %109 : vector<1x4x4xbf16> to vector<4x4xbf16>
    %cst_82 = arith.constant dense<0.000000e+00> : vector<128x4xf32>
    %111 = tpu.matmul %108, %110, %cst_82 {dimension_numbers = #tpu.dot_dimension_numbers<[1], [0], [0], [1], [0, 0, 1, 1], [], []>} : vector<128x4xbf16>, vector<4x4xbf16>, vector<128x4xf32> -> vector<128x4xf32>
    %112 = arith.addf %106, %111 : vector<128x4xf32>
    %113 = vector.extract_strided_slice %89 {offsets = [1, 1, 0], sizes = [8, 16, 4], strides = [1, 1, 1]} : vector<10x24x4xbf16> to vector<8x16x4xbf16>
    %114 = vector.shape_cast %113 : vector<8x16x4xbf16> to vector<128x4xbf16>
    %c4_83 = arith.constant 4 : index
    %c0_84 = arith.constant 0 : index
    %c0_85 = arith.constant 0 : index
    %115 = vector.load %arg4[%c4_83, %c0_84, %c0_85] : memref<9x4x4xbf16, #tpu.memory_space<vmem>>, vector<1x4x4xbf16>
    %116 = vector.shape_cast %115 : vector<1x4x4xbf16> to vector<4x4xbf16>
    %cst_86 = arith.constant dense<0.000000e+00> : vector<128x4xf32>
    %117 = tpu.matmul %114, %116, %cst_86 {dimension_numbers = #tpu.dot_dimension_numbers<[1], [0], [0], [1], [0, 0, 1, 1], [], []>} : vector<128x4xbf16>, vector<4x4xbf16>, vector<128x4xf32> -> vector<128x4xf32>
    %118 = arith.addf %112, %117 : vector<128x4xf32>
    %119 = vector.extract_strided_slice %89 {offsets = [1, 2, 0], sizes = [8, 16, 4], strides = [1, 1, 1]} : vector<10x24x4xbf16> to vector<8x16x4xbf16>
    %120 = vector.shape_cast %119 : vector<8x16x4xbf16> to vector<128x4xbf16>
    %c5_87 = arith.constant 5 : index
    %c0_88 = arith.constant 0 : index
    %c0_89 = arith.constant 0 : index
    %121 = vector.load %arg4[%c5_87, %c0_88, %c0_89] : memref<9x4x4xbf16, #tpu.memory_space<vmem>>, vector<1x4x4xbf16>
    %122 = vector.shape_cast %121 : vector<1x4x4xbf16> to vector<4x4xbf16>
    %cst_90 = arith.constant dense<0.000000e+00> : vector<128x4xf32>
    %123 = tpu.matmul %120, %122, %cst_90 {dimension_numbers = #tpu.dot_dimension_numbers<[1], [0], [0], [1], [0, 0, 1, 1], [], []>} : vector<128x4xbf16>, vector<4x4xbf16>, vector<128x4xf32> -> vector<128x4xf32>
    %124 = arith.addf %118, %123 : vector<128x4xf32>
    %125 = vector.extract_strided_slice %89 {offsets = [2, 0, 0], sizes = [8, 16, 4], strides = [1, 1, 1]} : vector<10x24x4xbf16> to vector<8x16x4xbf16>
    %126 = vector.shape_cast %125 : vector<8x16x4xbf16> to vector<128x4xbf16>
    %c6_91 = arith.constant 6 : index
    %c0_92 = arith.constant 0 : index
    %c0_93 = arith.constant 0 : index
    %127 = vector.load %arg4[%c6_91, %c0_92, %c0_93] : memref<9x4x4xbf16, #tpu.memory_space<vmem>>, vector<1x4x4xbf16>
    %128 = vector.shape_cast %127 : vector<1x4x4xbf16> to vector<4x4xbf16>
    %cst_94 = arith.constant dense<0.000000e+00> : vector<128x4xf32>
    %129 = tpu.matmul %126, %128, %cst_94 {dimension_numbers = #tpu.dot_dimension_numbers<[1], [0], [0], [1], [0, 0, 1, 1], [], []>} : vector<128x4xbf16>, vector<4x4xbf16>, vector<128x4xf32> -> vector<128x4xf32>
    %130 = arith.addf %124, %129 : vector<128x4xf32>
    %131 = vector.extract_strided_slice %89 {offsets = [2, 1, 0], sizes = [8, 16, 4], strides = [1, 1, 1]} : vector<10x24x4xbf16> to vector<8x16x4xbf16>
    %132 = vector.shape_cast %131 : vector<8x16x4xbf16> to vector<128x4xbf16>
    %c7_95 = arith.constant 7 : index
    %c0_96 = arith.constant 0 : index
    %c0_97 = arith.constant 0 : index
    %133 = vector.load %arg4[%c7_95, %c0_96, %c0_97] : memref<9x4x4xbf16, #tpu.memory_space<vmem>>, vector<1x4x4xbf16>
    %134 = vector.shape_cast %133 : vector<1x4x4xbf16> to vector<4x4xbf16>
    %cst_98 = arith.constant dense<0.000000e+00> : vector<128x4xf32>
    %135 = tpu.matmul %132, %134, %cst_98 {dimension_numbers = #tpu.dot_dimension_numbers<[1], [0], [0], [1], [0, 0, 1, 1], [], []>} : vector<128x4xbf16>, vector<4x4xbf16>, vector<128x4xf32> -> vector<128x4xf32>
    %136 = arith.addf %130, %135 : vector<128x4xf32>
    %137 = vector.extract_strided_slice %89 {offsets = [2, 2, 0], sizes = [8, 16, 4], strides = [1, 1, 1]} : vector<10x24x4xbf16> to vector<8x16x4xbf16>
    %138 = vector.shape_cast %137 : vector<8x16x4xbf16> to vector<128x4xbf16>
    %c8_99 = arith.constant 8 : index
    %c0_100 = arith.constant 0 : index
    %c0_101 = arith.constant 0 : index
    %139 = vector.load %arg4[%c8_99, %c0_100, %c0_101] : memref<9x4x4xbf16, #tpu.memory_space<vmem>>, vector<1x4x4xbf16>
    %140 = vector.shape_cast %139 : vector<1x4x4xbf16> to vector<4x4xbf16>
    %cst_102 = arith.constant dense<0.000000e+00> : vector<128x4xf32>
    %141 = tpu.matmul %138, %140, %cst_102 {dimension_numbers = #tpu.dot_dimension_numbers<[1], [0], [0], [1], [0, 0, 1, 1], [], []>} : vector<128x4xbf16>, vector<4x4xbf16>, vector<128x4xf32> -> vector<128x4xf32>
    %142 = arith.addf %136, %141 : vector<128x4xf32>
    %c0_103 = arith.constant 0 : index
    %c2_104 = arith.constant 2 : index
    %c2_105 = arith.constant 2 : index
    %c0_106 = arith.constant 0 : index
    %143 = vector.load %arg2[%c0_103, %c2_104, %c2_105, %c0_106] : memref<1x12x26x4xbf16, #tpu.memory_space<vmem>>, vector<1x8x16x4xbf16>
    %144 = vector.shape_cast %143 : vector<1x8x16x4xbf16> to vector<8x16x4xbf16>
    %145 = vector.shape_cast %144 : vector<8x16x4xbf16> to vector<128x4xbf16>
    %146 = arith.extf %145 : vector<128x4xbf16> to vector<128x4xf32>
    %c0_107 = arith.constant 0 : index
    %c0_108 = arith.constant 0 : index
    %147 = vector.load %arg6[%c0_107, %c0_108] : memref<1x4xf32, #tpu.memory_space<vmem>>, vector<1x4xf32>
    %148 = vector.broadcast %147 : vector<1x4xf32> to vector<128x4xf32>
    %149 = arith.addf %142, %148 : vector<128x4xf32>
    %150 = arith.addf %149, %146 : vector<128x4xf32>
    %cst_109 = arith.constant 0.000000e+00 : f32
    %151 = vector.broadcast %cst_109 : f32 to vector<128x4xf32>
    %152 = arith.maximumf %150, %151 : vector<128x4xf32>
    %153 = arith.truncf %152 : vector<128x4xf32> to vector<128x4xbf16>
    %c0_110 = arith.constant 0 : index
    %c0_111 = arith.constant 0 : index
    %c0_112 = arith.constant 0 : index
    %154 = vector.load %arg7[%c0_110, %c0_111, %c0_112] : memref<1x128x4xbf16, #tpu.memory_space<vmem>>, vector<1x128x4xbf16>
    %155 = vector.shape_cast %154 : vector<1x128x4xbf16> to vector<128x4xbf16>
    %156 = vector.shape_cast %153 : vector<128x4xbf16> to vector<1x128x4xbf16>
    tpu.vector_store %arg7[%c0_110, %c0_111, %c0_112], %156 {strides = array<i32>} : memref<1x128x4xbf16, #tpu.memory_space<vmem>>, vector<1x128x4xbf16>,
    return
  }
  func.func @transform_0(%arg0: i32, %arg1: i32) -> (i32, i32, i32, i32) {
    %c2_i32 = arith.constant 2 : i32
    %0 = arith.muli %arg0, %c2_i32 : i32
    %1 = arith.addi %0, %arg1 : i32
    %c0_i32 = arith.constant 0 : i32
    %c0_i32_0 = arith.constant 0 : i32
    %c0_i32_1 = arith.constant 0 : i32
    %c0_i32_2 = arith.constant 0 : i32
    return %1, %c0_i32, %c0_i32_0, %c0_i32_1 : i32, i32, i32, i32
  }
  func.func @transform_1(%arg0: i32, %arg1: i32) -> (i32, i32, i32) {
    %c0_i32 = arith.constant 0 : i32
    %c0_i32_0 = arith.constant 0 : i32
    %c0_i32_1 = arith.constant 0 : i32
    %c0_i32_2 = arith.constant 0 : i32
    return %c0_i32, %c0_i32_0, %c0_i32_1 : i32, i32, i32
  }
  func.func @transform_2(%arg0: i32, %arg1: i32) -> (i32, i32, i32) {
    %c0_i32 = arith.constant 0 : i32
    %c0_i32_0 = arith.constant 0 : i32
    %c0_i32_1 = arith.constant 0 : i32
    %c0_i32_2 = arith.constant 0 : i32
    return %c0_i32, %c0_i32_0, %c0_i32_1 : i32, i32, i32
  }
  func.func @transform_3(%arg0: i32, %arg1: i32) -> (i32, i32) {
    %c0_i32 = arith.constant 0 : i32
    %c0_i32_0 = arith.constant 0 : i32
    %c0_i32_1 = arith.constant 0 : i32
    return %c0_i32, %c0_i32_0 : i32, i32
  }
  func.func @transform_4(%arg0: i32, %arg1: i32) -> (i32, i32) {
    %c0_i32 = arith.constant 0 : i32
    %c0_i32_0 = arith.constant 0 : i32
    %c0_i32_1 = arith.constant 0 : i32
    return %c0_i32, %c0_i32_0 : i32, i32
  }
  func.func @transform_5(%arg0: i32, %arg1: i32) -> (i32, i32, i32) {
    %c2_i32 = arith.constant 2 : i32
    %0 = arith.muli %arg0, %c2_i32 : i32
    %1 = arith.addi %0, %arg1 : i32
    %c0_i32 = arith.constant 0 : i32
    %c0_i32_0 = arith.constant 0 : i32
    %c0_i32_1 = arith.constant 0 : i32
    return %1, %c0_i32, %c0_i32_0 : i32, i32, i32
  }
}

</mosaic_0001>

<llo_original>
// kernel: tpu_custom_call.1
$region0: #{tpu_custom_call.1}
  #allocation0 [shape = 'u32[]', space=smem, size = 0x4, offset = 0x4, fixed_abs, tag = 'smem constant byte address 0x4 - core index']
  #allocation1 [shape = 'u32[72,128]{1,0:T(1,128)}', space=vmem, size = 0x9000, scoped, tag = 'internal scratch']
  %s0 = inlined_call_operand.vmem [shape: bf16[4,12,26,4], index: 0, kind: input, shape index: {}]
  %s1 = inlined_call_operand.vmem [shape: bf16[9,4,4], index: 1, kind: input, shape index: {}]
  %s2 = inlined_call_operand.vmem [shape: bf16[9,4,4], index: 2, kind: input, shape index: {}]
  %s3 = inlined_call_operand.vmem [shape: f32[1,4], index: 3, kind: input, shape index: {}]
  %s4 = inlined_call_operand.vmem [shape: f32[1,4], index: 4, kind: input, shape index: {}]
  %s5 = inlined_call_operand.vmem [shape: bf16[4,128,4], index: 5, kind: output, shape index: {}]
  %s6 = sld [smem:[#allocation0]]
  $region53: #{tpu_custom_call.1} parent=0
    _
  %s8 = ssub.s32 1, %s6
  %s9 = scalar_select 0, %s8, %s6
  loop: start=0, step=1, limit=6
  $region2: #{tpu_custom_call.1} parent=0 // loop_pre_header
    _
  $region3: #{tpu_custom_call.1} parent=0 // loop_header
    %s11 = sphi 0, %s15
    %p12 = scmp.ge.s32.totalorder %s11, 6
    %s18 = sphi 0, %s30
    %s19 = sphi 0, %s26
    %s20 = sphi 0, %s18
    %s21 = sphi 0, %s19
    %s22 = sphi 0, %s20
    %s23 = sphi 0, %s21
    %s37 = sphi 0, %s39
    %s40 = sphi 0, %s37
    %s41 = sphi 0, %s40
    %s57 = sphi 0, %s41
    %s61 = sphi 0, %s61
    %s63 = sphi 0, %s61
    %s64 = sphi 0, %s63
    %s78 = sphi 0, %s64
    %s82 = sphi 0, %s82
    %s84 = sphi 0, %s82
    %s85 = sphi 0, %s84
    %s99 = sphi 0, %s85
    %s103 = sphi 0, %s103
    %s105 = sphi 0, %s103
    %s106 = sphi 0, %s105
    %s120 = sphi 0, %s106
    %s124 = sphi 0, %s124
    %s126 = sphi 0, %s124
    %s127 = sphi 0, %s126
    %s141 = sphi 0, %s127
    %s151 = sphi 0, %s153
    %s154 = sphi 0, %s151
    %s155 = sphi 0, %s154
    %s171 = sphi 0, %s155
  $region4: #{tpu_custom_call.1} parent=0 // loop_header_branch
    %14 = sbr.rel (%p12) target = $region8
  $region5: #{tpu_custom_call.1} parent=0 // loop_body
    %s16 = ssub.s32 %s11, 1
    %s17 = ssub.s32 %s11, 2
    %s24 = sadd.s32 1, %s19
    %p25 = scmp.ge.s32.totalorder %s24, 2
    %s26 = scalar_select %p25, 0, %s24
    %s27 = sadd.s32 1, %s18
    %s28 = scalar_select %p25, %s27, %s18
    %p29 = scmp.ge.s32.totalorder %s28, 2
    %s30 = scalar_select %p29, 0, %s28
    %s31 = smul.u32 %s18, 2
    %s32 = sadd.s32 %s31, %s19
    %s33 = smul.u32 %s30, 2
    %s34 = sadd.s32 %s33, %s26
    %s35 = ssub.s32 %s32, %s34
    %p36 = scmp.eq.s32.totalorder %s35, 0
    %s38 = sadd.s32 %s37, 1
    %s39 = scalar_select %p36, %s37, %s38
    %p42 = pneg %p36
    %p43 = scmp.eq.s32.totalorder %s11, 3
    %p44 = por %p42, %p43
    %p45 = scmp.ne.s32.totalorder %s37, %s40
    %p46 = scmp.eq.s32.totalorder %s11, 0
    %p47 = por %p45, %p46
    %p48 = scmp.ne.s32.totalorder %s37, %s40
    %p49 = scmp.eq.s32.totalorder %s16, 3
    %p50 = por %p48, %p49
    %p51 = scmp.ne.s32.totalorder %s40, %s41
    %p52 = scmp.eq.s32.totalorder %s16, 0
    %p53 = por %p51, %p52
    %p54 = scmp.ne.s32.totalorder %s40, %s41
    %p55 = scmp.eq.s32.totalorder %s17, 3
    %p56 = por %p54, %p55
    %p58 = scmp.ne.s32.totalorder %s41, %s57
    %p59 = scmp.eq.s32.totalorder %s17, 0
    %p60 = por %p58, %p59
    %s62 = sadd.s32 %s61, 1
    %p65 = scmp.eq.s32.totalorder %s11, 3
    %p66 = scmp.ne.s32.totalorder %s61, %s63
    %p67 = scmp.eq.s32.totalorder %s11, 0
    %p68 = por %p66, %p67
    %p69 = scmp.ne.s32.totalorder %s61, %s63
    %p70 = scmp.eq.s32.totalorder %s16, 3
    %p71 = por %p69, %p70
    %p72 = scmp.ne.s32.totalorder %s63, %s64
    %p73 = scmp.eq.s32.totalorder %s16, 0
    %p74 = por %p72, %p73
    %p75 = scmp.ne.s32.totalorder %s63, %s64
    %p76 = scmp.eq.s32.totalorder %s17, 3
    %p77 = por %p75, %p76
    %p79 = scmp.ne.s32.totalorder %s64, %s78
    %p80 = scmp.eq.s32.totalorder %s17, 0
    %p81 = por %p79, %p80
    %s83 = sadd.s32 %s82, 1
    %p86 = scmp.eq.s32.totalorder %s11, 3
    %p87 = scmp.ne.s32.totalorder %s82, %s84
    %p88 = scmp.eq.s32.totalorder %s11, 0
    %p89 = por %p87, %p88
    %p90 = scmp.ne.s32.totalorder %s82, %s84
    %p91 = scmp.eq.s32.totalorder %s16, 3
    %p92 = por %p90, %p91
    %p93 = scmp.ne.s32.totalorder %s84, %s85
    %p94 = scmp.eq.s32.totalorder %s16, 0
    %p95 = por %p93, %p94
    %p96 = scmp.ne.s32.totalorder %s84, %s85
    %p97 = scmp.eq.s32.totalorder %s17, 3
    %p98 = por %p96, %p97
    %p100 = scmp.ne.s32.totalorder %s85, %s99
    %p101 = scmp.eq.s32.totalorder %s17, 0
    %p102 = por %p100, %p101
    %s104 = sadd.s32 %s103, 1
    %p107 = scmp.eq.s32.totalorder %s11, 3
    %p108 = scmp.ne.s32.totalorder %s103, %s105
    %p109 = scmp.eq.s32.totalorder %s11, 0
    %p110 = por %p108, %p109
    %p111 = scmp.ne.s32.totalorder %s103, %s105
    %p112 = scmp.eq.s32.totalorder %s16, 3
    %p113 = por %p111, %p112
    %p114 = scmp.ne.s32.totalorder %s105, %s106
    %p115 = scmp.eq.s32.totalorder %s16, 0
    %p116 = por %p114, %p115
    %p117 = scmp.ne.s32.totalorder %s105, %s106
    %p118 = scmp.eq.s32.totalorder %s17, 3
    %p119 = por %p117, %p118
    %p121 = scmp.ne.s32.totalorder %s106, %s120
    %p122 = scmp.eq.s32.totalorder %s17, 0
    %p123 = por %p121, %p122
    %s125 = sadd.s32 %s124, 1
    %p128 = scmp.eq.s32.totalorder %s11, 3
    %p129 = scmp.ne.s32.totalorder %s124, %s126
    %p130 = scmp.eq.s32.totalorder %s11, 0
    %p131 = por %p129, %p130
    %p132 = scmp.ne.s32.totalorder %s124, %s126
    %p133 = scmp.eq.s32.totalorder %s16, 3
    %p134 = por %p132, %p133
    %p135 = scmp.ne.s32.totalorder %s126, %s127
    %p136 = scmp.eq.s32.totalorder %s16, 0
    %p137 = por %p135, %p136
    %p138 = scmp.ne.s32.totalorder %s126, %s127
    %p139 = scmp.eq.s32.totalorder %s17, 3
    %p140 = por %p138, %p139
    %p142 = scmp.ne.s32.totalorder %s127, %s141
    %p143 = scmp.eq.s32.totalorder %s17, 0
    %p144 = por %p142, %p143
    %s145 = smul.u32 %s18, 2
    %s146 = sadd.s32 %s145, %s19
    %s147 = smul.u32 %s30, 2
    %s148 = sadd.s32 %s147, %s26
    %s149 = ssub.s32 %s146, %s148
    %p150 = scmp.eq.s32.totalorder %s149, 0
    %s152 = sadd.s32 %s151, 1
    %s153 = scalar_select %p150, %s151, %s152
    %p156 = pneg %p150
    %p157 = scmp.eq.s32.totalorder %s11, 3
    %p158 = por %p156, %p157
    %p159 = scmp.ne.s32.totalorder %s151, %s154
    %p160 = scmp.eq.s32.totalorder %s11, 0
    %p161 = por %p159, %p160
    %p162 = scmp.ne.s32.totalorder %s151, %s154
    %p163 = scmp.eq.s32.totalorder %s16, 3
    %p164 = por %p162, %p163
    %p165 = scmp.ne.s32.totalorder %s154, %s155
    %p166 = scmp.eq.s32.totalorder %s16, 0
    %p167 = por %p165, %p166
    %p168 = scmp.ne.s32.totalorder %s154, %s155
    %p169 = scmp.eq.s32.totalorder %s17, 3
    %p170 = por %p168, %p169
    %p172 = scmp.ne.s32.totalorder %s155, %s171
    %p173 = scmp.eq.s32.totalorder %s17, 0
    %p174 = por %p172, %p173
    %p175 = scmp.le.s32.totalorder 1, %s11
    %p176 = scmp.lt.s32.totalorder %s11, 5
    %p177 = pnand %p175, %p176
    %p178 = pneg %p177
    // Predicated region
    $region9: #{tpu_custom_call.1} parent=5 // pred_check
      _
    $region10: #{tpu_custom_call.1} parent=5 // pred_check_branch
      %180 = sbr.rel (%p177) target = $region12
    $region11: #{tpu_custom_call.1} parent=5 // pred_region
      %s181 = ssub.s32 %s11, 1
      // Predicated region
      $region13: #{tpu_custom_call.1} parent=11 // pred_check
        %p182 = pneg %p74
      $region14: #{tpu_custom_call.1} parent=11 // pred_check_branch
        %184 = sbr.rel (%p182) target = $region16
      $region15: #{tpu_custom_call.1} parent=11 // pred_region
        _
      $region16: #{tpu_custom_call.1} parent=11 // pred_fallthru
        _
      // Predicated region
      $region17: #{tpu_custom_call.1} parent=11 // pred_check
        %p185 = pneg %p95
      $region18: #{tpu_custom_call.1} parent=11 // pred_check_branch
        %187 = sbr.rel (%p185) target = $region20
      $region19: #{tpu_custom_call.1} parent=11 // pred_region
        _
      $region20: #{tpu_custom_call.1} parent=11 // pred_fallthru
        _
      // Predicated region
      $region21: #{tpu_custom_call.1} parent=11 // pred_check
        %p188 = pneg %p116
      $region22: #{tpu_custom_call.1} parent=11 // pred_check_branch
        %190 = sbr.rel (%p188) target = $region24
      $region23: #{tpu_custom_call.1} parent=11 // pred_region
        _
      $region24: #{tpu_custom_call.1} parent=11 // pred_fallthru
        _
      // Predicated region
      $region25: #{tpu_custom_call.1} parent=11 // pred_check
        %p191 = pneg %p137
      $region26: #{tpu_custom_call.1} parent=11 // pred_check_branch
        %193 = sbr.rel (%p191) target = $region28
      $region27: #{tpu_custom_call.1} parent=11 // pred_region
        _
      $region28: #{tpu_custom_call.1} parent=11 // pred_fallthru
        _
    $region12: #{tpu_custom_call.1} parent=5 // pred_fallthru
      _
    %p194 = scmp.lt.s32.totalorder %s11, 4
    // Predicated region
    $region29: #{tpu_custom_call.1} parent=5 // pred_check
      %p195 = pneg %p194
    $region30: #{tpu_custom_call.1} parent=5 // pred_check_branch
      %197 = sbr.rel (%p195) target = $region32
    $region31: #{tpu_custom_call.1} parent=5 // pred_region
      // Predicated region
      $region33: #{tpu_custom_call.1} parent=31 // pred_check
        %p198 = pneg %p47
      $region34: #{tpu_custom_call.1} parent=31 // pred_check_branch
        %200 = sbr.rel (%p198) target = $region36
      $region35: #{tpu_custom_call.1} parent=31 // pred_region
        %s201 = smul.u32 %s18, 2
        %s202 = sadd.s32 %s201, %s19
        %p203 = scmp.lt.s32.totalorder %s202, 3
        %s204 = scalar_select %p203, %s202, 3
        %s205 = smul.addr %s204, 48
        %s206 = smul.addr %s205, 4
        %s207 = scalar_lea.vmem %s0, %s206
        %s208 = smul.u32 %s18, 2
        %s209 = sadd.s32 %s208, %s19
      $region36: #{tpu_custom_call.1} parent=31 // pred_fallthru
        _
    $region32: #{tpu_custom_call.1} parent=5 // pred_fallthru
      _
    %p210 = scmp.le.s32.totalorder 1, %s11
    %p211 = scmp.lt.s32.totalorder %s11, 5
    %p212 = pnand %p210, %p211
    %p213 = pneg %p212
    // Predicated region
    $region37: #{tpu_custom_call.1} parent=5 // pred_check
      _
    $region38: #{tpu_custom_call.1} parent=5 // pred_check_branch
      %215 = sbr.rel (%p212) target = $region40
    $region39: #{tpu_custom_call.1} parent=5 // pred_region
      %s216 = ssub.s32 %s11, 1
      %s217 = smul.u32 %s20, 2
      %s218 = sadd.s32 %s217, %s21
      %p219 = scmp.lt.s32.totalorder %s218, 3
      %s220 = scalar_select %p219, %s218, 3
      %s221 = smul.addr %s220, 48
      %s222 = smul.addr %s221, 4
      %s223 = scalar_lea.vmem %s0, %s222
      %p224 = pneg %p53
      %p225 = pneg %p50
      %p226 = pneg %p74
      %p227 = pneg %p71
      %p228 = pneg %p95
      %p229 = pneg %p92
      %p230 = pneg %p116
      %p231 = pneg %p113
      %p232 = pneg %p137
      %p233 = pneg %p134
      %p234 = pneg %p167
      %p235 = pneg %p164
      %s236 = smul.u32 %s20, 2
      %s237 = sadd.s32 %s236, %s21
      %p238 = scmp.lt.s32.totalorder %s237, 3
      %s239 = scalar_select %p238, %s237, 3
      %s240 = smul.addr %s239, 16
      %s241 = smul.addr %s240, 4
      %s242 = scalar_lea.vmem %s5, %s241
      %s243 = smul.u32 %s20, 2
      %s244 = sadd.s32 %s243, %s21
      %p245 = scmp.lt.s32.totalorder %s244, 3
      %s246 = scalar_select %p245, %s244, 3
      %s247 = smul.addr %s246, 48
      %s248 = smul.addr %s247, 4
      %s249 = scalar_lea.vmem %s0, %s248
      %s250 = smul.u32 %s20, 2
      %s251 = sadd.s32 %s250, %s21
      %s252 = smul.u32 %s20, 2
      %s253 = sadd.s32 %s252, %s21
      %p254 = scmp.lt.s32.totalorder %s253, 3
      %s255 = scalar_select %p254, %s253, 3
      %s256 = smul.addr %s255, 16
      %s257 = smul.addr %s256, 4
      %s258 = scalar_lea.vmem %s5, %s257
      %s259 = smul.u32 %s20, 2
      %s260 = sadd.s32 %s259, %s21
      %v262 = vld [vmem:[%s249] sm:$0xf]
      %v263 = vld [vmem:[%s249 + $0x4] sm:$0xf]
      %v264 = vld [vmem:[%s249 + $0x8] sm:$0xf]
      %v265 = vld [vmem:[%s249 + $0x10] sm:$0xf]
      %v266 = vld [vmem:[%s249 + $0x14] sm:$0xf]
      %v267 = vld [vmem:[%s249 + $0x18] sm:$0xf]
      %v268 = vld [vmem:[%s249 + $0x20] sm:$0xf]
      %v269 = vld [vmem:[%s249 + $0x24] sm:$0xf]
      %v270 = vld [vmem:[%s249 + $0x28] sm:$0xf]
      %v271 = vld [vmem:[%s249 + $0x30] sm:$0xf]
      %v272 = vld [vmem:[%s249 + $0x34] sm:$0xf]
      %v273 = vld [vmem:[%s249 + $0x38] sm:$0xf]
      %v274 = vld [vmem:[%s249 + $0x40] sm:$0xf]
      %v275 = vld [vmem:[%s249 + $0x44] sm:$0xf]
      %v276 = vld [vmem:[%s249 + $0x48] sm:$0xf]
      %v277 = vld [vmem:[%s249 + $0x50] sm:$0xf]
      %v278 = vld [vmem:[%s249 + $0x54] sm:$0xf]
      %v279 = vld [vmem:[%s249 + $0x58] sm:$0xf]
      %v280 = vld [vmem:[%s249 + $0x60] sm:$0xf]
      %v281 = vld [vmem:[%s249 + $0x64] sm:$0xf]
      %v282 = vld [vmem:[%s249 + $0x68] sm:$0xf]
      %v283 = vld [vmem:[%s249 + $0x70] sm:$0xf]
      %v284 = vld [vmem:[%s249 + $0x74] sm:$0xf]
      %v285 = vld [vmem:[%s249 + $0x78] sm:$0xf]
      %v286 = vld [vmem:[%s249 + $0x80] sm:$0xf]
      %v287 = vld [vmem:[%s249 + $0x84] sm:$0xf]
      %v288 = vld [vmem:[%s249 + $0x88] sm:$0xf]
      %v289 = vld [vmem:[%s249 + $0x90] sm:$0xf]
      %v290 = vld [vmem:[%s249 + $0x94] sm:$0xf]
      %v291 = vld [vmem:[%s249 + $0x98] sm:$0xf]
      %v292 = vld [vmem:[%s1] sm:$0x3]
      %v293 = vld [vmem:[%s249 + $0xc] sm:$0x1]
      %v294 = vld [vmem:[%s249 + $0x1c] sm:$0x1]
      %v295 = vld [vmem:[%s249 + $0x2c] sm:$0x1]
      %v296 = vld [vmem:[%s249 + $0x3c] sm:$0x1]
      %v297 = vld [vmem:[%s249 + $0x4c] sm:$0x1]
      %v298 = vld [vmem:[%s249 + $0x5c] sm:$0x1]
      %v299 = vld [vmem:[%s249 + $0x6c] sm:$0x1]
      %v300 = vld [vmem:[%s249 + $0x7c] sm:$0x1]
      %v301 = vld [vmem:[%s249 + $0x8c] sm:$0x1]
      %v302 = vld [vmem:[%s249 + $0x9c] sm:$0x1]
      %vm303 = vsmask.f32 3328
      %vm304 = vsmask.f32 7440
      %vm305 = vmor %vm303, %vm304
      %v307 = vshrl.u32 %v262, 16
      %v309 = vrot.slane %v307, 4
      %v310 = vshll.u32 %v262, 16
      %v312 = vrot.slane %v310, 5
      %v313 = vor.u32 %v309, %v312
      %v314 = vrot.slane %v313, 4
      %v316 = vshll.u32 %v263, 16
      %v318 = vrot.slane %v316, 5
      %v319 = vsel %vm305, %v314, %v318
      %v320 = vshrl.u32 %v263, 16
      %v322 = vrot.slane %v320, 4
      %v323 = vor.u32 %v322, %v318
      %v324 = vrot.slane %v323, 4
      %v326 = vshll.u32 %v264, 16
      %v328 = vrot.slane %v326, 5
      %v329 = vsel %vm305, %v324, %v328
      %v330 = vshrl.u32 %v264, 16
      %v332 = vrot.slane %v330, 4
      %v333 = vor.u32 %v332, %v328
      %v334 = vrot.slane %v333, 4
      %v336 = vshll.u32 %v293, 16
      %v338 = vrot.slane %v336, 5
      %v339 = vsel %vm305, %v334, %v338
      %v341 = vshrl.u32 %v265, 16
      %v343 = vrot.slane %v341, 4
      %v344 = vshll.u32 %v265, 16
      %v346 = vrot.slane %v344, 5
      %v347 = vor.u32 %v343, %v346
      %v348 = vrot.slane %v347, 4
      %v350 = vshll.u32 %v266, 16
      %v352 = vrot.slane %v350, 5
      %v353 = vsel %vm305, %v348, %v352
      %v354 = vshrl.u32 %v266, 16
      %v356 = vrot.slane %v354, 4
      %v357 = vor.u32 %v356, %v352
      %v358 = vrot.slane %v357, 4
      %v360 = vshll.u32 %v267, 16
      %v362 = vrot.slane %v360, 5
      %v363 = vsel %vm305, %v358, %v362
      %v364 = vshrl.u32 %v267, 16
      %v366 = vrot.slane %v364, 4
      %v367 = vor.u32 %v366, %v362
      %v368 = vrot.slane %v367, 4
      %v370 = vshll.u32 %v294, 16
      %v372 = vrot.slane %v370, 5
      %v373 = vsel %vm305, %v368, %v372
      %v375 = vshrl.u32 %v268, 16
      %v377 = vrot.slane %v375, 4
      %v378 = vshll.u32 %v268, 16
      %v380 = vrot.slane %v378, 5
      %v381 = vor.u32 %v377, %v380
      %v382 = vrot.slane %v381, 4
      %v384 = vshll.u32 %v269, 16
      %v386 = vrot.slane %v384, 5
      %v387 = vsel %vm305, %v382, %v386
      %v388 = vshrl.u32 %v269, 16
      %v390 = vrot.slane %v388, 4
      %v391 = vor.u32 %v390, %v386
      %v392 = vrot.slane %v391, 4
      %v394 = vshll.u32 %v270, 16
      %v396 = vrot.slane %v394, 5
      %v397 = vsel %vm305, %v392, %v396
      %v398 = vshrl.u32 %v270, 16
      %v400 = vrot.slane %v398, 4
      %v401 = vor.u32 %v400, %v396
      %v402 = vrot.slane %v401, 4
      %v404 = vshll.u32 %v295, 16
      %v406 = vrot.slane %v404, 5
      %v407 = vsel %vm305, %v402, %v406
      %v409 = vshrl.u32 %v271, 16
      %v411 = vrot.slane %v409, 4
      %v412 = vshll.u32 %v271, 16
      %v414 = vrot.slane %v412, 5
      %v415 = vor.u32 %v411, %v414
      %v416 = vrot.slane %v415, 4
      %v418 = vshll.u32 %v272, 16
      %v420 = vrot.slane %v418, 5
      %v421 = vsel %vm305, %v416, %v420
      %v422 = vshrl.u32 %v272, 16
      %v424 = vrot.slane %v422, 4
      %v425 = vor.u32 %v424, %v420
      %v426 = vrot.slane %v425, 4
      %v428 = vshll.u32 %v273, 16
      %v430 = vrot.slane %v428, 5
      %v431 = vsel %vm305, %v426, %v430
      %v432 = vshrl.u32 %v273, 16
      %v434 = vrot.slane %v432, 4
      %v435 = vor.u32 %v434, %v430
      %v436 = vrot.slane %v435, 4
      %v438 = vshll.u32 %v296, 16
      %v440 = vrot.slane %v438, 5
      %v441 = vsel %vm305, %v436, %v440
      %v443 = vshrl.u32 %v274, 16
      %v445 = vrot.slane %v443, 4
      %v446 = vshll.u32 %v274, 16
      %v448 = vrot.slane %v446, 5
      %v449 = vor.u32 %v445, %v448
      %v450 = vrot.slane %v449, 4
      %v452 = vshll.u32 %v275, 16
      %v454 = vrot.slane %v452, 5
      %v455 = vsel %vm305, %v450, %v454
      %v456 = vshrl.u32 %v275, 16
      %v458 = vrot.slane %v456, 4
      %v459 = vor.u32 %v458, %v454
      %v460 = vrot.slane %v459, 4
      %v462 = vshll.u32 %v276, 16
      %v464 = vrot.slane %v462, 5
      %v465 = vsel %vm305, %v460, %v464
      %v466 = vshrl.u32 %v276, 16
      %v468 = vrot.slane %v466, 4
      %v469 = vor.u32 %v468, %v464
      %v470 = vrot.slane %v469, 4
      %v472 = vshll.u32 %v297, 16
      %v474 = vrot.slane %v472, 5
      %v475 = vsel %vm305, %v470, %v474
      %v477 = vshrl.u32 %v277, 16
      %v479 = vrot.slane %v477, 4
      %v480 = vshll.u32 %v277, 16
      %v482 = vrot.slane %v480, 5
      %v483 = vor.u32 %v479, %v482
      %v484 = vrot.slane %v483, 4
      %v486 = vshll.u32 %v278, 16
      %v488 = vrot.slane %v486, 5
      %v489 = vsel %vm305, %v484, %v488
      %v490 = vshrl.u32 %v278, 16
      %v492 = vrot.slane %v490, 4
      %v493 = vor.u32 %v492, %v488
      %v494 = vrot.slane %v493, 4
      %v496 = vshll.u32 %v279, 16
      %v498 = vrot.slane %v496, 5
      %v499 = vsel %vm305, %v494, %v498
      %v500 = vshrl.u32 %v279, 16
      %v502 = vrot.slane %v500, 4
      %v503 = vor.u32 %v502, %v498
      %v504 = vrot.slane %v503, 4
      %v506 = vshll.u32 %v298, 16
      %v508 = vrot.slane %v506, 5
      %v509 = vsel %vm305, %v504, %v508
      %v511 = vshrl.u32 %v280, 16
      %v513 = vrot.slane %v511, 4
      %v514 = vshll.u32 %v280, 16
      %v516 = vrot.slane %v514, 5
      %v517 = vor.u32 %v513, %v516
      %v518 = vrot.slane %v517, 4
      %v520 = vshll.u32 %v281, 16
      %v522 = vrot.slane %v520, 5
      %v523 = vsel %vm305, %v518, %v522
      %v524 = vshrl.u32 %v281, 16
      %v526 = vrot.slane %v524, 4
      %v527 = vor.u32 %v526, %v522
      %v528 = vrot.slane %v527, 4
      %v530 = vshll.u32 %v282, 16
      %v532 = vrot.slane %v530, 5
      %v533 = vsel %vm305, %v528, %v532
      %v534 = vshrl.u32 %v282, 16
      %v536 = vrot.slane %v534, 4
      %v537 = vor.u32 %v536, %v532
      %v538 = vrot.slane %v537, 4
      %v540 = vshll.u32 %v299, 16
      %v542 = vrot.slane %v540, 5
      %v543 = vsel %vm305, %v538, %v542
      %v545 = vshrl.u32 %v283, 16
      %v547 = vrot.slane %v545, 4
      %v548 = vshll.u32 %v283, 16
      %v550 = vrot.slane %v548, 5
      %v551 = vor.u32 %v547, %v550
      %v552 = vrot.slane %v551, 4
      %v554 = vshll.u32 %v284, 16
      %v556 = vrot.slane %v554, 5
      %v557 = vsel %vm305, %v552, %v556
      %v558 = vshrl.u32 %v284, 16
      %v560 = vrot.slane %v558, 4
      %v561 = vor.u32 %v560, %v556
      %v562 = vrot.slane %v561, 4
      %v564 = vshll.u32 %v285, 16
      %v566 = vrot.slane %v564, 5
      %v567 = vsel %vm305, %v562, %v566
      %v568 = vshrl.u32 %v285, 16
      %v570 = vrot.slane %v568, 4
      %v571 = vor.u32 %v570, %v566
      %v572 = vrot.slane %v571, 4
      %v574 = vshll.u32 %v300, 16
      %v576 = vrot.slane %v574, 5
      %v577 = vsel %vm305, %v572, %v576
      %v579 = vshrl.u32 %v286, 16
      %v581 = vrot.slane %v579, 4
      %v582 = vshll.u32 %v286, 16
      %v584 = vrot.slane %v582, 5
      %v585 = vor.u32 %v581, %v584
      %v586 = vrot.slane %v585, 4
      %v588 = vshll.u32 %v287, 16
      %v590 = vrot.slane %v588, 5
      %v591 = vsel %vm305, %v586, %v590
      %v592 = vshrl.u32 %v287, 16
      %v594 = vrot.slane %v592, 4
      %v595 = vor.u32 %v594, %v590
      %v596 = vrot.slane %v595, 4
      %v598 = vshll.u32 %v288, 16
      %v600 = vrot.slane %v598, 5
      %v601 = vsel %vm305, %v596, %v600
      %v602 = vshrl.u32 %v288, 16
      %v604 = vrot.slane %v602, 4
      %v605 = vor.u32 %v604, %v600
      %v606 = vrot.slane %v605, 4
      %v608 = vshll.u32 %v301, 16
      %v610 = vrot.slane %v608, 5
      %v611 = vsel %vm305, %v606, %v610
      %v613 = vshrl.u32 %v289, 16
      %v615 = vrot.slane %v613, 4
      %v616 = vshll.u32 %v289, 16
      %v618 = vrot.slane %v616, 5
      %v619 = vor.u32 %v615, %v618
      %v620 = vrot.slane %v619, 4
      %v622 = vshll.u32 %v290, 16
      %v624 = vrot.slane %v622, 5
      %v625 = vsel %vm305, %v620, %v624
      %v626 = vshrl.u32 %v290, 16
      %v628 = vrot.slane %v626, 4
      %v629 = vor.u32 %v628, %v624
      %v630 = vrot.slane %v629, 4
      %v632 = vshll.u32 %v291, 16
      %v634 = vrot.slane %v632, 5
      %v635 = vsel %vm305, %v630, %v634
      %v636 = vshrl.u32 %v291, 16
      %v638 = vrot.slane %v636, 4
      %v639 = vor.u32 %v638, %v634
      %v640 = vrot.slane %v639, 4
      %v642 = vshll.u32 %v302, 16
      %v644 = vrot.slane %v642, 5
      %v645 = vsel %vm305, %v640, %v644
      %s646 = scalar_lea.vmem %s1, 2
      %v647 = vld [vmem:[%s646] sm:$0x3]
      %v648 = vunpack.c.l.b16 %v319
      %v649 = vunpack.c.l.b16 %v329
      %v650 = vunpack.c.l.b16 %v339
      %v651 = vunpack.c.l.b16 %v353
      %v652 = vunpack.c.l.b16 %v363
      %v653 = vunpack.c.l.b16 %v373
      %v654 = vunpack.c.l.b16 %v387
      %v655 = vunpack.c.l.b16 %v397
      %v656 = vunpack.c.l.b16 %v407
      %v657 = vunpack.c.l.b16 %v421
      %v658 = vunpack.c.l.b16 %v431
      %v659 = vunpack.c.l.b16 %v441
      %v660 = vunpack.c.l.b16 %v455
      %v661 = vunpack.c.l.b16 %v465
      %v662 = vunpack.c.l.b16 %v475
      %v663 = vunpack.c.l.b16 %v489
      %v664 = vunpack.c.l.b16 %v499
      %v665 = vunpack.c.l.b16 %v509
      %v666 = vunpack.c.l.b16 %v523
      %v667 = vunpack.c.l.b16 %v533
      %v668 = vunpack.c.l.b16 %v543
      %v669 = vunpack.c.l.b16 %v557
      %v670 = vunpack.c.l.b16 %v567
      %v671 = vunpack.c.l.b16 %v577
      %v672 = vunpack.c.l.b16 %v591
      %v673 = vunpack.c.l.b16 %v601
      %v674 = vunpack.c.l.b16 %v611
      %v675 = vunpack.c.l.b16 %v625
      %v676 = vunpack.c.l.b16 %v635
      %v677 = vunpack.c.l.b16 %v645
      %v678 = vpack.c.b16 %v649, %v648
      %v679 = vpack.c.b16 %v651, %v650
      %v680 = vpack.c.b16 %v653, %v652
      %v681 = vpack.c.b16 %v655, %v654
      %v682 = vpack.c.b16 %v657, %v656
      %v683 = vpack.c.b16 %v659, %v658
      %v684 = vpack.c.b16 %v661, %v660
      %v685 = vpack.c.b16 %v663, %v662
      %v686 = vpack.c.b16 %v665, %v664
      %v687 = vpack.c.b16 %v667, %v666
      %v688 = vpack.c.b16 %v669, %v668
      %v689 = vpack.c.b16 %v671, %v670
      %v690 = vpack.c.b16 %v673, %v672
      %v691 = vpack.c.b16 %v675, %v674
      %v692 = vpack.c.b16 %v677, %v676
      %vm693 = vcmask 31744
      %v695 = vsel %vm693, %v678, 0
      %v698 = vsel %vm693, %v679, 0
      %v701 = vsel %vm693, %v680, 0
      %v704 = vsel %vm693, %v681, 0
      %v707 = vsel %vm693, %v682, 0
      %v710 = vsel %vm693, %v683, 0
      %v713 = vsel %vm693, %v684, 0
      %v716 = vsel %vm693, %v685, 0
      %v719 = vsel %vm693, %v686, 0
      %v722 = vsel %vm693, %v687, 0
      %v725 = vsel %vm693, %v688, 0
      %v728 = vsel %vm693, %v689, 0
      %v731 = vsel %vm693, %v690, 0
      %v734 = vsel %vm693, %v691, 0
      %v737 = vsel %vm693, %v692, 0
      %vm739 = vcmask 1041408
      %v741 = vsel %vm739, %v647, 0
      %743 = vmatpush.bf16.msra.mxu0 0
      %744 = vmatpush.bf16.msra.mxu0 0
      %745 = vmatpush.bf16.msra.mxu0 0
      %746 = vmatpush.bf16.msra.mxu0 0
      %747 = vmatpush.bf16.msra.mxu0 0
      %748 = vmatpush.bf16.msra.mxu0 0
      %749 = vmatpush.bf16.msra.mxu0 0
      %750 = vmatpush.bf16.msra.mxu0 %v741
      %751 = vmatmul.bf16.gmra.mxu0 %v695
      %v752 = vpop.f32.mrf.mxu0
      %v753 = vadd.f32 0.0, %v752
      %v754 = vpop.f32.mrf.mxu0
      %v755 = vadd.f32 0.0, %v754
      %756 = vmatmul.bf16.gmra.mxu0 %v698
      %v757 = vpop.f32.mrf.mxu0
      %v758 = vadd.f32 0.0, %v757
      %v759 = vpop.f32.mrf.mxu0
      %v760 = vadd.f32 0.0, %v759
      %761 = vmatmul.bf16.gmra.mxu0 %v701
      %v762 = vpop.f32.mrf.mxu0
      %v763 = vadd.f32 0.0, %v762
      %v764 = vpop.f32.mrf.mxu0
      %v765 = vadd.f32 0.0, %v764
      %766 = vmatmul.bf16.gmra.mxu0 %v704
      %v767 = vpop.f32.mrf.mxu0
      %v768 = vadd.f32 0.0, %v767
      %v769 = vpop.f32.mrf.mxu0
      %v770 = vadd.f32 0.0, %v769
      %771 = vmatmul.bf16.gmra.mxu0 %v707
      %v772 = vpop.f32.mrf.mxu0
      %v773 = vadd.f32 0.0, %v772
      %v774 = vpop.f32.mrf.mxu0
      %v775 = vadd.f32 0.0, %v774
      %776 = vmatmul.bf16.gmra.mxu0 %v710
      %v777 = vpop.f32.mrf.mxu0
      %v778 = vadd.f32 0.0, %v777
      %v779 = vpop.f32.mrf.mxu0
      %v780 = vadd.f32 0.0, %v779
      %781 = vmatmul.bf16.gmra.mxu0 %v713
      %v782 = vpop.f32.mrf.mxu0
      %v783 = vadd.f32 0.0, %v782
      %v784 = vpop.f32.mrf.mxu0
      %v785 = vadd.f32 0.0, %v784
      %786 = vmatmul.bf16.gmra.mxu0 %v716
      %v787 = vpop.f32.mrf.mxu0
      %v788 = vadd.f32 0.0, %v787
      %v789 = vpop.f32.mrf.mxu0
      %v790 = vadd.f32 0.0, %v789
      %791 = vmatmul.bf16.gmra.mxu0 %v719
      %v792 = vpop.f32.mrf.mxu0
      %v793 = vadd.f32 0.0, %v792
      %v794 = vpop.f32.mrf.mxu0
      %v795 = vadd.f32 0.0, %v794
      %796 = vmatmul.bf16.gmra.mxu0 %v722
      %v797 = vpop.f32.mrf.mxu0
      %v798 = vadd.f32 0.0, %v797
      %v799 = vpop.f32.mrf.mxu0
      %v800 = vadd.f32 0.0, %v799
      %801 = vmatmul.bf16.gmra.mxu0 %v725
      %v802 = vpop.f32.mrf.mxu0
      %v803 = vadd.f32 0.0, %v802
      %v804 = vpop.f32.mrf.mxu0
      %v805 = vadd.f32 0.0, %v804
      %806 = vmatmul.bf16.gmra.mxu0 %v728
      %v807 = vpop.f32.mrf.mxu0
      %v808 = vadd.f32 0.0, %v807
      %v809 = vpop.f32.mrf.mxu0
      %v810 = vadd.f32 0.0, %v809
      %811 = vmatmul.bf16.gmra.mxu0 %v731
      %v812 = vpop.f32.mrf.mxu0
      %v813 = vadd.f32 0.0, %v812
      %v814 = vpop.f32.mrf.mxu0
      %v815 = vadd.f32 0.0, %v814
      %816 = vmatmul.bf16.gmra.mxu0 %v734
      %v817 = vpop.f32.mrf.mxu0
      %v818 = vadd.f32 0.0, %v817
      %v819 = vpop.f32.mrf.mxu0
      %v820 = vadd.f32 0.0, %v819
      %821 = vmatmul.bf16.gmra.mxu0 %v737
      %v822 = vpop.f32.mrf.mxu0
      %v823 = vadd.f32 0.0, %v822
      %v824 = vpop.f32.mrf.mxu0
      %v825 = vadd.f32 0.0, %v824
      %826 = vdwg.mxu0
      %v857 = vunpack.c.l.b16 %v262
      %v858 = vunpack.c.l.b16 %v263
      %v859 = vunpack.c.l.b16 %v264
      %v860 = vunpack.c.l.b16 %v265
      %v861 = vunpack.c.l.b16 %v266
      %v862 = vunpack.c.l.b16 %v267
      %v863 = vunpack.c.l.b16 %v268
      %v864 = vunpack.c.l.b16 %v269
      %v865 = vunpack.c.l.b16 %v270
      %v866 = vunpack.c.l.b16 %v271
      %v867 = vunpack.c.l.b16 %v272
      %v868 = vunpack.c.l.b16 %v273
      %v869 = vunpack.c.l.b16 %v274
      %v870 = vunpack.c.l.b16 %v275
      %v871 = vunpack.c.l.b16 %v276
      %v872 = vunpack.c.l.b16 %v277
      %v873 = vunpack.c.l.b16 %v278
      %v874 = vunpack.c.l.b16 %v279
      %v875 = vunpack.c.l.b16 %v280
      %v876 = vunpack.c.l.b16 %v281
      %v877 = vunpack.c.l.b16 %v282
      %v878 = vunpack.c.l.b16 %v283
      %v879 = vunpack.c.l.b16 %v284
      %v880 = vunpack.c.l.b16 %v285
      %v881 = vunpack.c.l.b16 %v286
      %v882 = vunpack.c.l.b16 %v287
      %v883 = vunpack.c.l.b16 %v288
      %v884 = vunpack.c.l.b16 %v289
      %v885 = vunpack.c.l.b16 %v290
      %v886 = vunpack.c.l.b16 %v291
      %v887 = vpack.c.b16 %v858, %v857
      %v888 = vpack.c.b16 %v860, %v859
      %v889 = vpack.c.b16 %v862, %v861
      %v890 = vpack.c.b16 %v864, %v863
      %v891 = vpack.c.b16 %v866, %v865
      %v892 = vpack.c.b16 %v868, %v867
      %v893 = vpack.c.b16 %v870, %v869
      %v894 = vpack.c.b16 %v872, %v871
      %v895 = vpack.c.b16 %v874, %v873
      %v896 = vpack.c.b16 %v876, %v875
      %v897 = vpack.c.b16 %v878, %v877
      %v898 = vpack.c.b16 %v880, %v879
      %v899 = vpack.c.b16 %v882, %v881
      %v900 = vpack.c.b16 %v884, %v883
      %v901 = vpack.c.b16 %v886, %v885
      %v903 = vsel %vm693, %v887, 0
      %v906 = vsel %vm693, %v888, 0
      %v909 = vsel %vm693, %v889, 0
      %v912 = vsel %vm693, %v890, 0
      %v915 = vsel %vm693, %v891, 0
      %v918 = vsel %vm693, %v892, 0
      %v921 = vsel %vm693, %v893, 0
      %v924 = vsel %vm693, %v894, 0
      %v927 = vsel %vm693, %v895, 0
      %v930 = vsel %vm693, %v896, 0
      %v933 = vsel %vm693, %v897, 0
      %v936 = vsel %vm693, %v898, 0
      %v939 = vsel %vm693, %v899, 0
      %v942 = vsel %vm693, %v900, 0
      %v945 = vsel %vm693, %v901, 0
      %v948 = vsel %vm739, %v292, 0
      %950 = vmatpush.bf16.msra.mxu0 0
      %951 = vmatpush.bf16.msra.mxu0 0
      %952 = vmatpush.bf16.msra.mxu0 0
      %953 = vmatpush.bf16.msra.mxu0 0
      %954 = vmatpush.bf16.msra.mxu0 0
      %955 = vmatpush.bf16.msra.mxu0 0
      %956 = vmatpush.bf16.msra.mxu0 0
      %957 = vmatpush.bf16.msra.mxu0 %v948
      %958 = vmatmul.bf16.gmra.mxu0 %v903
      %v959 = vpop.f32.mrf.mxu0
      %v960 = vadd.f32 %v753, %v959
      %v961 = vpop.f32.mrf.mxu0
      %v962 = vadd.f32 %v755, %v961
      %963 = vmatmul.bf16.gmra.mxu0 %v906
      %v964 = vpop.f32.mrf.mxu0
      %v965 = vadd.f32 %v758, %v964
      %v966 = vpop.f32.mrf.mxu0
      %v967 = vadd.f32 %v760, %v966
      %968 = vmatmul.bf16.gmra.mxu0 %v909
      %v969 = vpop.f32.mrf.mxu0
      %v970 = vadd.f32 %v763, %v969
      %v971 = vpop.f32.mrf.mxu0
      %v972 = vadd.f32 %v765, %v971
      %973 = vmatmul.bf16.gmra.mxu0 %v912
      %v974 = vpop.f32.mrf.mxu0
      %v975 = vadd.f32 %v768, %v974
      %v976 = vpop.f32.mrf.mxu0
      %v977 = vadd.f32 %v770, %v976
      %978 = vmatmul.bf16.gmra.mxu0 %v915
      %v979 = vpop.f32.mrf.mxu0
      %v980 = vadd.f32 %v773, %v979
      %v981 = vpop.f32.mrf.mxu0
      %v982 = vadd.f32 %v775, %v981
      %983 = vmatmul.bf16.gmra.mxu0 %v918
      %v984 = vpop.f32.mrf.mxu0
      %v985 = vadd.f32 %v778, %v984
      %v986 = vpop.f32.mrf.mxu0
      %v987 = vadd.f32 %v780, %v986
      %988 = vmatmul.bf16.gmra.mxu0 %v921
      %v989 = vpop.f32.mrf.mxu0
      %v990 = vadd.f32 %v783, %v989
      %v991 = vpop.f32.mrf.mxu0
      %v992 = vadd.f32 %v785, %v991
      %993 = vmatmul.bf16.gmra.mxu0 %v924
      %v994 = vpop.f32.mrf.mxu0
      %v995 = vadd.f32 %v788, %v994
      %v996 = vpop.f32.mrf.mxu0
      %v997 = vadd.f32 %v790, %v996
      %998 = vmatmul.bf16.gmra.mxu0 %v927
      %v999 = vpop.f32.mrf.mxu0
      %v1000 = vadd.f32 %v793, %v999
      %v1001 = vpop.f32.mrf.mxu0
      %v1002 = vadd.f32 %v795, %v1001
      %1003 = vmatmul.bf16.gmra.mxu0 %v930
      %v1004 = vpop.f32.mrf.mxu0
      %v1005 = vadd.f32 %v798, %v1004
      %v1006 = vpop.f32.mrf.mxu0
      %v1007 = vadd.f32 %v800, %v1006
      %1008 = vmatmul.bf16.gmra.mxu0 %v933
      %v1009 = vpop.f32.mrf.mxu0
      %v1010 = vadd.f32 %v803, %v1009
      %v1011 = vpop.f32.mrf.mxu0
      %v1012 = vadd.f32 %v805, %v1011
      %1013 = vmatmul.bf16.gmra.mxu0 %v936
      %v1014 = vpop.f32.mrf.mxu0
      %v1015 = vadd.f32 %v808, %v1014
      %v1016 = vpop.f32.mrf.mxu0
      %v1017 = vadd.f32 %v810, %v1016
      %1018 = vmatmul.bf16.gmra.mxu0 %v939
      %v1019 = vpop.f32.mrf.mxu0
      %v1020 = vadd.f32 %v813, %v1019
      %v1021 = vpop.f32.mrf.mxu0
      %v1022 = vadd.f32 %v815, %v1021
      %1023 = vmatmul.bf16.gmra.mxu0 %v942
      %v1024 = vpop.f32.mrf.mxu0
      %v1025 = vadd.f32 %v818, %v1024
      %v1026 = vpop.f32.mrf.mxu0
      %v1027 = vadd.f32 %v820, %v1026
      %1028 = vmatmul.bf16.gmra.mxu0 %v945
      %v1029 = vpop.f32.mrf.mxu0
      %v1030 = vadd.f32 %v823, %v1029
      %v1031 = vpop.f32.mrf.mxu0
      %v1032 = vadd.f32 %v825, %v1031
      %1033 = vdwg.mxu0
      %v1034 = vld [vmem:[%s249] sm:$0xe]
      %v1035 = vld [vmem:[%s249 + $0x10] sm:$0xe]
      %v1036 = vld [vmem:[%s249 + $0x20] sm:$0xe]
      %v1037 = vld [vmem:[%s249 + $0x30] sm:$0xe]
      %v1038 = vld [vmem:[%s249 + $0x40] sm:$0xe]
      %v1039 = vld [vmem:[%s249 + $0x50] sm:$0xe]
      %v1040 = vld [vmem:[%s249 + $0x60] sm:$0xe]
      %v1041 = vld [vmem:[%s249 + $0x70] sm:$0xe]
      %v1042 = vld [vmem:[%s249 + $0x80] sm:$0xe]
      %v1043 = vld [vmem:[%s249 + $0x90] sm:$0xe]
      %vm1064 = vcmask 1042432
      %vm1065 = vcmask 1046532
      %vm1066 = vmor %vm1064, %vm1065
      %v1067 = vrot.slane %v1034, 5
      %v1068 = vrot.slane %v1067, 4
      %v1069 = vrot.slane %v263, 5
      %v1070 = vsel %vm1066, %v1068, %v1069
      %v1071 = vrot.slane %v1069, 4
      %v1072 = vrot.slane %v264, 5
      %v1073 = vsel %vm1066, %v1071, %v1072
      %v1074 = vrot.slane %v1072, 4
      %v1075 = vrot.slane %v293, 5
      %v1076 = vsel %vm1066, %v1074, %v1075
      %v1077 = vrot.slane %v1035, 5
      %v1078 = vrot.slane %v1077, 4
      %v1079 = vrot.slane %v266, 5
      %v1080 = vsel %vm1066, %v1078, %v1079
      %v1081 = vrot.slane %v1079, 4
      %v1082 = vrot.slane %v267, 5
      %v1083 = vsel %vm1066, %v1081, %v1082
      %v1084 = vrot.slane %v1082, 4
      %v1085 = vrot.slane %v294, 5
      %v1086 = vsel %vm1066, %v1084, %v1085
      %v1087 = vrot.slane %v1036, 5
      %v1088 = vrot.slane %v1087, 4
      %v1089 = vrot.slane %v269, 5
      %v1090 = vsel %vm1066, %v1088, %v1089
      %v1091 = vrot.slane %v1089, 4
      %v1092 = vrot.slane %v270, 5
      %v1093 = vsel %vm1066, %v1091, %v1092
      %v1094 = vrot.slane %v1092, 4
      %v1095 = vrot.slane %v295, 5
      %v1096 = vsel %vm1066, %v1094, %v1095
      %v1097 = vrot.slane %v1037, 5
      %v1098 = vrot.slane %v1097, 4
      %v1099 = vrot.slane %v272, 5
      %v1100 = vsel %vm1066, %v1098, %v1099
      %v1101 = vrot.slane %v1099, 4
      %v1102 = vrot.slane %v273, 5
      %v1103 = vsel %vm1066, %v1101, %v1102
      %v1104 = vrot.slane %v1102, 4
      %v1105 = vrot.slane %v296, 5
      %v1106 = vsel %vm1066, %v1104, %v1105
      %v1107 = vrot.slane %v1038, 5
      %v1108 = vrot.slane %v1107, 4
      %v1109 = vrot.slane %v275, 5
      %v1110 = vsel %vm1066, %v1108, %v1109
      %v1111 = vrot.slane %v1109, 4
      %v1112 = vrot.slane %v276, 5
      %v1113 = vsel %vm1066, %v1111, %v1112
      %v1114 = vrot.slane %v1112, 4
      %v1115 = vrot.slane %v297, 5
      %v1116 = vsel %vm1066, %v1114, %v1115
      %v1117 = vrot.slane %v1039, 5
      %v1118 = vrot.slane %v1117, 4
      %v1119 = vrot.slane %v278, 5
      %v1120 = vsel %vm1066, %v1118, %v1119
      %v1121 = vrot.slane %v1119, 4
      %v1122 = vrot.slane %v279, 5
      %v1123 = vsel %vm1066, %v1121, %v1122
      %v1124 = vrot.slane %v1122, 4
      %v1125 = vrot.slane %v298, 5
      %v1126 = vsel %vm1066, %v1124, %v1125
      %v1127 = vrot.slane %v1040, 5
      %v1128 = vrot.slane %v1127, 4
      %v1129 = vrot.slane %v281, 5
      %v1130 = vsel %vm1066, %v1128, %v1129
      %v1131 = vrot.slane %v1129, 4
      %v1132 = vrot.slane %v282, 5
      %v1133 = vsel %vm1066, %v1131, %v1132
      %v1134 = vrot.slane %v1132, 4
      %v1135 = vrot.slane %v299, 5
      %v1136 = vsel %vm1066, %v1134, %v1135
      %v1137 = vrot.slane %v1041, 5
      %v1138 = vrot.slane %v1137, 4
      %v1139 = vrot.slane %v284, 5
      %v1140 = vsel %vm1066, %v1138, %v1139
      %v1141 = vrot.slane %v1139, 4
      %v1142 = vrot.slane %v285, 5
      %v1143 = vsel %vm1066, %v1141, %v1142
      %v1144 = vrot.slane %v1142, 4
      %v1145 = vrot.slane %v300, 5
      %v1146 = vsel %vm1066, %v1144, %v1145
      %v1147 = vrot.slane %v1042, 5
      %v1148 = vrot.slane %v1147, 4
      %v1149 = vrot.slane %v287, 5
      %v1150 = vsel %vm1066, %v1148, %v1149
      %v1151 = vrot.slane %v1149, 4
      %v1152 = vrot.slane %v288, 5
      %v1153 = vsel %vm1066, %v1151, %v1152
      %v1154 = vrot.slane %v1152, 4
      %v1155 = vrot.slane %v301, 5
      %v1156 = vsel %vm1066, %v1154, %v1155
      %v1157 = vrot.slane %v1043, 5
      %v1158 = vrot.slane %v1157, 4
      %v1159 = vrot.slane %v290, 5
      %v1160 = vsel %vm1066, %v1158, %v1159
      %v1161 = vrot.slane %v1159, 4
      %v1162 = vrot.slane %v291, 5
      %v1163 = vsel %vm1066, %v1161, %v1162
      %v1164 = vrot.slane %v1162, 4
      %v1165 = vrot.slane %v302, 5
      %v1166 = vsel %vm1066, %v1164, %v1165
      %s1167 = scalar_lea.vmem %s1, 4
      %v1168 = vld [vmem:[%s1167] sm:$0x3]
      %v1169 = vunpack.c.l.b16 %v1070
      %v1170 = vunpack.c.l.b16 %v1073
      %v1171 = vunpack.c.l.b16 %v1076
      %v1172 = vunpack.c.l.b16 %v1080
      %v1173 = vunpack.c.l.b16 %v1083
      %v1174 = vunpack.c.l.b16 %v1086
      %v1175 = vunpack.c.l.b16 %v1090
      %v1176 = vunpack.c.l.b16 %v1093
      %v1177 = vunpack.c.l.b16 %v1096
      %v1178 = vunpack.c.l.b16 %v1100
      %v1179 = vunpack.c.l.b16 %v1103
      %v1180 = vunpack.c.l.b16 %v1106
      %v1181 = vunpack.c.l.b16 %v1110
      %v1182 = vunpack.c.l.b16 %v1113
      %v1183 = vunpack.c.l.b16 %v1116
      %v1184 = vunpack.c.l.b16 %v1120
      %v1185 = vunpack.c.l.b16 %v1123
      %v1186 = vunpack.c.l.b16 %v1126
      %v1187 = vunpack.c.l.b16 %v1130
      %v1188 = vunpack.c.l.b16 %v1133
      %v1189 = vunpack.c.l.b16 %v1136
      %v1190 = vunpack.c.l.b16 %v1140
      %v1191 = vunpack.c.l.b16 %v1143
      %v1192 = vunpack.c.l.b16 %v1146
      %v1193 = vunpack.c.l.b16 %v1150
      %v1194 = vunpack.c.l.b16 %v1153
      %v1195 = vunpack.c.l.b16 %v1156
      %v1196 = vunpack.c.l.b16 %v1160
      %v1197 = vunpack.c.l.b16 %v1163
      %v1198 = vunpack.c.l.b16 %v1166
      %v1199 = vpack.c.b16 %v1170, %v1169
      %v1200 = vpack.c.b16 %v1172, %v1171
      %v1201 = vpack.c.b16 %v1174, %v1173
      %v1202 = vpack.c.b16 %v1176, %v1175
      %v1203 = vpack.c.b16 %v1178, %v1177
      %v1204 = vpack.c.b16 %v1180, %v1179
      %v1205 = vpack.c.b16 %v1182, %v1181
      %v1206 = vpack.c.b16 %v1184, %v1183
      %v1207 = vpack.c.b16 %v1186, %v1185
      %v1208 = vpack.c.b16 %v1188, %v1187
      %v1209 = vpack.c.b16 %v1190, %v1189
      %v1210 = vpack.c.b16 %v1192, %v1191
      %v1211 = vpack.c.b16 %v1194, %v1193
      %v1212 = vpack.c.b16 %v1196, %v1195
      %v1213 = vpack.c.b16 %v1198, %v1197
      %v1215 = vsel %vm693, %v1199, 0
      %v1218 = vsel %vm693, %v1200, 0
      %v1221 = vsel %vm693, %v1201, 0
      %v1224 = vsel %vm693, %v1202, 0
      %v1227 = vsel %vm693, %v1203, 0
      %v1230 = vsel %vm693, %v1204, 0
      %v1233 = vsel %vm693, %v1205, 0
      %v1236 = vsel %vm693, %v1206, 0
      %v1239 = vsel %vm693, %v1207, 0
      %v1242 = vsel %vm693, %v1208, 0
      %v1245 = vsel %vm693, %v1209, 0
      %v1248 = vsel %vm693, %v1210, 0
      %v1251 = vsel %vm693, %v1211, 0
      %v1254 = vsel %vm693, %v1212, 0
      %v1257 = vsel %vm693, %v1213, 0
      %v1260 = vsel %vm739, %v1168, 0
      %1262 = vmatpush.bf16.msra.mxu0 0
      %1263 = vmatpush.bf16.msra.mxu0 0
      %1264 = vmatpush.bf16.msra.mxu0 0
      %1265 = vmatpush.bf16.msra.mxu0 0
      %1266 = vmatpush.bf16.msra.mxu0 0
      %1267 = vmatpush.bf16.msra.mxu0 0
      %1268 = vmatpush.bf16.msra.mxu0 0
      %1269 = vmatpush.bf16.msra.mxu0 %v1260
      %1270 = vmatmul.bf16.gmra.mxu0 %v1215
      %v1271 = vpop.f32.mrf.mxu0
      %v1272 = vadd.f32 0.0, %v1271
      %v1273 = vpop.f32.mrf.mxu0
      %v1274 = vadd.f32 0.0, %v1273
      %1275 = vmatmul.bf16.gmra.mxu0 %v1218
      %v1276 = vpop.f32.mrf.mxu0
      %v1277 = vadd.f32 0.0, %v1276
      %v1278 = vpop.f32.mrf.mxu0
      %v1279 = vadd.f32 0.0, %v1278
      %1280 = vmatmul.bf16.gmra.mxu0 %v1221
      %v1281 = vpop.f32.mrf.mxu0
      %v1282 = vadd.f32 0.0, %v1281
      %v1283 = vpop.f32.mrf.mxu0
      %v1284 = vadd.f32 0.0, %v1283
      %1285 = vmatmul.bf16.gmra.mxu0 %v1224
      %v1286 = vpop.f32.mrf.mxu0
      %v1287 = vadd.f32 0.0, %v1286
      %v1288 = vpop.f32.mrf.mxu0
      %v1289 = vadd.f32 0.0, %v1288
      %1290 = vmatmul.bf16.gmra.mxu0 %v1227
      %v1291 = vpop.f32.mrf.mxu0
      %v1292 = vadd.f32 0.0, %v1291
      %v1293 = vpop.f32.mrf.mxu0
      %v1294 = vadd.f32 0.0, %v1293
      %1295 = vmatmul.bf16.gmra.mxu0 %v1230
      %v1296 = vpop.f32.mrf.mxu0
      %v1297 = vadd.f32 0.0, %v1296
      %v1298 = vpop.f32.mrf.mxu0
      %v1299 = vadd.f32 0.0, %v1298
      %1300 = vmatmul.bf16.gmra.mxu0 %v1233
      %v1301 = vpop.f32.mrf.mxu0
      %v1302 = vadd.f32 0.0, %v1301
      %v1303 = vpop.f32.mrf.mxu0
      %v1304 = vadd.f32 0.0, %v1303
      %1305 = vmatmul.bf16.gmra.mxu0 %v1236
      %v1306 = vpop.f32.mrf.mxu0
      %v1307 = vadd.f32 0.0, %v1306
      %v1308 = vpop.f32.mrf.mxu0
      %v1309 = vadd.f32 0.0, %v1308
      %1310 = vmatmul.bf16.gmra.mxu0 %v1239
      %v1311 = vpop.f32.mrf.mxu0
      %v1312 = vadd.f32 0.0, %v1311
      %v1313 = vpop.f32.mrf.mxu0
      %v1314 = vadd.f32 0.0, %v1313
      %1315 = vmatmul.bf16.gmra.mxu0 %v1242
      %v1316 = vpop.f32.mrf.mxu0
      %v1317 = vadd.f32 0.0, %v1316
      %v1318 = vpop.f32.mrf.mxu0
      %v1319 = vadd.f32 0.0, %v1318
      %1320 = vmatmul.bf16.gmra.mxu0 %v1245
      %v1321 = vpop.f32.mrf.mxu0
      %v1322 = vadd.f32 0.0, %v1321
      %v1323 = vpop.f32.mrf.mxu0
      %v1324 = vadd.f32 0.0, %v1323
      %1325 = vmatmul.bf16.gmra.mxu0 %v1248
      %v1326 = vpop.f32.mrf.mxu0
      %v1327 = vadd.f32 0.0, %v1326
      %v1328 = vpop.f32.mrf.mxu0
      %v1329 = vadd.f32 0.0, %v1328
      %1330 = vmatmul.bf16.gmra.mxu0 %v1251
      %v1331 = vpop.f32.mrf.mxu0
      %v1332 = vadd.f32 0.0, %v1331
      %v1333 = vpop.f32.mrf.mxu0
      %v1334 = vadd.f32 0.0, %v1333
      %1335 = vmatmul.bf16.gmra.mxu0 %v1254
      %v1336 = vpop.f32.mrf.mxu0
      %v1337 = vadd.f32 0.0, %v1336
      %v1338 = vpop.f32.mrf.mxu0
      %v1339 = vadd.f32 0.0, %v1338
      %1340 = vmatmul.bf16.gmra.mxu0 %v1257
      %v1341 = vpop.f32.mrf.mxu0
      %v1342 = vadd.f32 0.0, %v1341
      %v1343 = vpop.f32.mrf.mxu0
      %v1344 = vadd.f32 0.0, %v1343
      %1345 = vdwg.mxu0
      %v1346 = vadd.f32 %v960, %v1272
      %v1347 = vadd.f32 %v962, %v1274
      %v1348 = vadd.f32 %v965, %v1277
      %v1349 = vadd.f32 %v967, %v1279
      %v1350 = vadd.f32 %v970, %v1282
      %v1351 = vadd.f32 %v972, %v1284
      %v1352 = vadd.f32 %v975, %v1287
      %v1353 = vadd.f32 %v977, %v1289
      %v1354 = vadd.f32 %v980, %v1292
      %v1355 = vadd.f32 %v982, %v1294
      %v1356 = vadd.f32 %v985, %v1297
      %v1357 = vadd.f32 %v987, %v1299
      %v1358 = vadd.f32 %v990, %v1302
      %v1359 = vadd.f32 %v992, %v1304
      %v1360 = vadd.f32 %v995, %v1307
      %v1361 = vadd.f32 %v997, %v1309
      %v1362 = vadd.f32 %v1000, %v1312
      %v1363 = vadd.f32 %v1002, %v1314
      %v1364 = vadd.f32 %v1005, %v1317
      %v1365 = vadd.f32 %v1007, %v1319
      %v1366 = vadd.f32 %v1010, %v1322
      %v1367 = vadd.f32 %v1012, %v1324
      %v1368 = vadd.f32 %v1015, %v1327
      %v1369 = vadd.f32 %v1017, %v1329
      %v1370 = vadd.f32 %v1020, %v1332
      %v1371 = vadd.f32 %v1022, %v1334
      %v1372 = vadd.f32 %v1025, %v1337
      %v1373 = vadd.f32 %v1027, %v1339
      %v1374 = vadd.f32 %v1030, %v1342
      %v1375 = vadd.f32 %v1032, %v1344
      %s1376 = scalar_lea.vmem %s249, 16
      %v1377 = vld [vmem:[%s1376] sm:$0xf]
      %v1378 = vld [vmem:[%s1376 + $0x4] sm:$0xf]
      %v1379 = vld [vmem:[%s1376 + $0x8] sm:$0xf]
      %v1380 = vld [vmem:[%s1376 + $0x10] sm:$0xf]
      %v1381 = vld [vmem:[%s1376 + $0x14] sm:$0xf]
      %v1382 = vld [vmem:[%s1376 + $0x18] sm:$0xf]
      %v1383 = vld [vmem:[%s1376 + $0x20] sm:$0xf]
      %v1384 = vld [vmem:[%s1376 + $0x24] sm:$0xf]
      %v1385 = vld [vmem:[%s1376 + $0x28] sm:$0xf]
      %v1386 = vld [vmem:[%s1376 + $0x30] sm:$0xf]
      %v1387 = vld [vmem:[%s1376 + $0x34] sm:$0xf]
      %v1388 = vld [vmem:[%s1376 + $0x38] sm:$0xf]
      %v1389 = vld [vmem:[%s1376 + $0x40] sm:$0xf]
      %v1390 = vld [vmem:[%s1376 + $0x44] sm:$0xf]
      %v1391 = vld [vmem:[%s1376 + $0x48] sm:$0xf]
      %v1392 = vld [vmem:[%s1376 + $0x50] sm:$0xf]
      %v1393 = vld [vmem:[%s1376 + $0x54] sm:$0xf]
      %v1394 = vld [vmem:[%s1376 + $0x58] sm:$0xf]
      %v1395 = vld [vmem:[%s1376 + $0x60] sm:$0xf]
      %v1396 = vld [vmem:[%s1376 + $0x64] sm:$0xf]
      %v1397 = vld [vmem:[%s1376 + $0x68] sm:$0xf]
      %v1398 = vld [vmem:[%s1376 + $0x70] sm:$0xf]
      %v1399 = vld [vmem:[%s1376 + $0x74] sm:$0xf]
      %v1400 = vld [vmem:[%s1376 + $0x78] sm:$0xf]
      %v1401 = vld [vmem:[%s1376 + $0x80] sm:$0xf]
      %v1402 = vld [vmem:[%s1376 + $0x84] sm:$0xf]
      %v1403 = vld [vmem:[%s1376 + $0x88] sm:$0xf]
      %v1404 = vld [vmem:[%s1376 + $0x90] sm:$0xf]
      %v1405 = vld [vmem:[%s1376 + $0x94] sm:$0xf]
      %v1406 = vld [vmem:[%s1376 + $0x98] sm:$0xf]
      %s1407 = scalar_lea.vmem %s1, 6
      %v1408 = vld [vmem:[%s1407] sm:$0x3]
      %v1439 = vunpack.c.l.b16 %v1377
      %v1440 = vunpack.c.l.b16 %v1378
      %v1441 = vunpack.c.l.b16 %v1379
      %v1442 = vunpack.c.l.b16 %v1380
      %v1443 = vunpack.c.l.b16 %v1381
      %v1444 = vunpack.c.l.b16 %v1382
      %v1445 = vunpack.c.l.b16 %v1383
      %v1446 = vunpack.c.l.b16 %v1384
      %v1447 = vunpack.c.l.b16 %v1385
      %v1448 = vunpack.c.l.b16 %v1386
      %v1449 = vunpack.c.l.b16 %v1387
      %v1450 = vunpack.c.l.b16 %v1388
      %v1451 = vunpack.c.l.b16 %v1389
      %v1452 = vunpack.c.l.b16 %v1390
      %v1453 = vunpack.c.l.b16 %v1391
      %v1454 = vunpack.c.l.b16 %v1392
      %v1455 = vunpack.c.l.b16 %v1393
      %v1456 = vunpack.c.l.b16 %v1394
      %v1457 = vunpack.c.l.b16 %v1395
      %v1458 = vunpack.c.l.b16 %v1396
      %v1459 = vunpack.c.l.b16 %v1397
      %v1460 = vunpack.c.l.b16 %v1398
      %v1461 = vunpack.c.l.b16 %v1399
      %v1462 = vunpack.c.l.b16 %v1400
      %v1463 = vunpack.c.l.b16 %v1401
      %v1464 = vunpack.c.l.b16 %v1402
      %v1465 = vunpack.c.l.b16 %v1403
      %v1466 = vunpack.c.l.b16 %v1404
      %v1467 = vunpack.c.l.b16 %v1405
      %v1468 = vunpack.c.l.b16 %v1406
      %v1469 = vpack.c.b16 %v1440, %v1439
      %v1470 = vpack.c.b16 %v1442, %v1441
      %v1471 = vpack.c.b16 %v1444, %v1443
      %v1472 = vpack.c.b16 %v1446, %v1445
      %v1473 = vpack.c.b16 %v1448, %v1447
      %v1474 = vpack.c.b16 %v1450, %v1449
      %v1475 = vpack.c.b16 %v1452, %v1451
      %v1476 = vpack.c.b16 %v1454, %v1453
      %v1477 = vpack.c.b16 %v1456, %v1455
      %v1478 = vpack.c.b16 %v1458, %v1457
      %v1479 = vpack.c.b16 %v1460, %v1459
      %v1480 = vpack.c.b16 %v1462, %v1461
      %v1481 = vpack.c.b16 %v1464, %v1463
      %v1482 = vpack.c.b16 %v1466, %v1465
      %v1483 = vpack.c.b16 %v1468, %v1467
      %v1485 = vsel %vm693, %v1469, 0
      %v1488 = vsel %vm693, %v1470, 0
      %v1491 = vsel %vm693, %v1471, 0
      %v1494 = vsel %vm693, %v1472, 0
      %v1497 = vsel %vm693, %v1473, 0
      %v1500 = vsel %vm693, %v1474, 0
      %v1503 = vsel %vm693, %v1475, 0
      %v1506 = vsel %vm693, %v1476, 0
      %v1509 = vsel %vm693, %v1477, 0
      %v1512 = vsel %vm693, %v1478, 0
      %v1515 = vsel %vm693, %v1479, 0
      %v1518 = vsel %vm693, %v1480, 0
      %v1521 = vsel %vm693, %v1481, 0
      %v1524 = vsel %vm693, %v1482, 0
      %v1527 = vsel %vm693, %v1483, 0
      %v1530 = vsel %vm739, %v1408, 0
      %1532 = vmatpush.bf16.msra.mxu0 0
      %1533 = vmatpush.bf16.msra.mxu0 0
      %1534 = vmatpush.bf16.msra.mxu0 0
      %1535 = vmatpush.bf16.msra.mxu0 0
      %1536 = vmatpush.bf16.msra.mxu0 0
      %1537 = vmatpush.bf16.msra.mxu0 0
      %1538 = vmatpush.bf16.msra.mxu0 0
      %1539 = vmatpush.bf16.msra.mxu0 %v1530
      %1540 = vmatmul.bf16.gmra.mxu0 %v1485
      %v1541 = vpop.f32.mrf.mxu0
      %v1542 = vadd.f32 0.0, %v1541
      %v1543 = vpop.f32.mrf.mxu0
      %v1544 = vadd.f32 0.0, %v1543
      %1545 = vmatmul.bf16.gmra.mxu0 %v1488
      %v1546 = vpop.f32.mrf.mxu0
      %v1547 = vadd.f32 0.0, %v1546
      %v1548 = vpop.f32.mrf.mxu0
      %v1549 = vadd.f32 0.0, %v1548
      %1550 = vmatmul.bf16.gmra.mxu0 %v1491
      %v1551 = vpop.f32.mrf.mxu0
      %v1552 = vadd.f32 0.0, %v1551
      %v1553 = vpop.f32.mrf.mxu0
      %v1554 = vadd.f32 0.0, %v1553
      %1555 = vmatmul.bf16.gmra.mxu0 %v1494
      %v1556 = vpop.f32.mrf.mxu0
      %v1557 = vadd.f32 0.0, %v1556
      %v1558 = vpop.f32.mrf.mxu0
      %v1559 = vadd.f32 0.0, %v1558
      %1560 = vmatmul.bf16.gmra.mxu0 %v1497
      %v1561 = vpop.f32.mrf.mxu0
      %v1562 = vadd.f32 0.0, %v1561
      %v1563 = vpop.f32.mrf.mxu0
      %v1564 = vadd.f32 0.0, %v1563
      %1565 = vmatmul.bf16.gmra.mxu0 %v1500
      %v1566 = vpop.f32.mrf.mxu0
      %v1567 = vadd.f32 0.0, %v1566
      %v1568 = vpop.f32.mrf.mxu0
      %v1569 = vadd.f32 0.0, %v1568
      %1570 = vmatmul.bf16.gmra.mxu0 %v1503
      %v1571 = vpop.f32.mrf.mxu0
      %v1572 = vadd.f32 0.0, %v1571
      %v1573 = vpop.f32.mrf.mxu0
      %v1574 = vadd.f32 0.0, %v1573
      %1575 = vmatmul.bf16.gmra.mxu0 %v1506
      %v1576 = vpop.f32.mrf.mxu0
      %v1577 = vadd.f32 0.0, %v1576
      %v1578 = vpop.f32.mrf.mxu0
      %v1579 = vadd.f32 0.0, %v1578
      %1580 = vmatmul.bf16.gmra.mxu0 %v1509
      %v1581 = vpop.f32.mrf.mxu0
      %v1582 = vadd.f32 0.0, %v1581
      %v1583 = vpop.f32.mrf.mxu0
      %v1584 = vadd.f32 0.0, %v1583
      %1585 = vmatmul.bf16.gmra.mxu0 %v1512
      %v1586 = vpop.f32.mrf.mxu0
      %v1587 = vadd.f32 0.0, %v1586
      %v1588 = vpop.f32.mrf.mxu0
      %v1589 = vadd.f32 0.0, %v1588
      %1590 = vmatmul.bf16.gmra.mxu0 %v1515
      %v1591 = vpop.f32.mrf.mxu0
      %v1592 = vadd.f32 0.0, %v1591
      %v1593 = vpop.f32.mrf.mxu0
      %v1594 = vadd.f32 0.0, %v1593
      %1595 = vmatmul.bf16.gmra.mxu0 %v1518
      %v1596 = vpop.f32.mrf.mxu0
      %v1597 = vadd.f32 0.0, %v1596
      %v1598 = vpop.f32.mrf.mxu0
      %v1599 = vadd.f32 0.0, %v1598
      %1600 = vmatmul.bf16.gmra.mxu0 %v1521
      %v1601 = vpop.f32.mrf.mxu0
      %v1602 = vadd.f32 0.0, %v1601
      %v1603 = vpop.f32.mrf.mxu0
      %v1604 = vadd.f32 0.0, %v1603
      %1605 = vmatmul.bf16.gmra.mxu0 %v1524
      %v1606 = vpop.f32.mrf.mxu0
      %v1607 = vadd.f32 0.0, %v1606
      %v1608 = vpop.f32.mrf.mxu0
      %v1609 = vadd.f32 0.0, %v1608
      %1610 = vmatmul.bf16.gmra.mxu0 %v1527
      %v1611 = vpop.f32.mrf.mxu0
      %v1612 = vadd.f32 0.0, %v1611
      %v1613 = vpop.f32.mrf.mxu0
      %v1614 = vadd.f32 0.0, %v1613
      %1615 = vdwg.mxu0
      %v1616 = vadd.f32 %v1346, %v1542
      %v1617 = vadd.f32 %v1347, %v1544
      %v1618 = vadd.f32 %v1348, %v1547
      %v1619 = vadd.f32 %v1349, %v1549
      %v1620 = vadd.f32 %v1350, %v1552
      %v1621 = vadd.f32 %v1351, %v1554
      %v1622 = vadd.f32 %v1352, %v1557
      %v1623 = vadd.f32 %v1353, %v1559
      %v1624 = vadd.f32 %v1354, %v1562
      %v1625 = vadd.f32 %v1355, %v1564
      %v1626 = vadd.f32 %v1356, %v1567
      %v1627 = vadd.f32 %v1357, %v1569
      %v1628 = vadd.f32 %v1358, %v1572
      %v1629 = vadd.f32 %v1359, %v1574
      %v1630 = vadd.f32 %v1360, %v1577
      %v1631 = vadd.f32 %v1361, %v1579
      %v1632 = vadd.f32 %v1362, %v1582
      %v1633 = vadd.f32 %v1363, %v1584
      %v1634 = vadd.f32 %v1364, %v1587
      %v1635 = vadd.f32 %v1365, %v1589
      %v1636 = vadd.f32 %v1366, %v1592
      %v1637 = vadd.f32 %v1367, %v1594
      %v1638 = vadd.f32 %v1368, %v1597
      %v1639 = vadd.f32 %v1369, %v1599
      %v1640 = vadd.f32 %v1370, %v1602
      %v1641 = vadd.f32 %v1371, %v1604
      %v1642 = vadd.f32 %v1372, %v1607
      %v1643 = vadd.f32 %v1373, %v1609
      %v1644 = vadd.f32 %v1374, %v1612
      %v1645 = vadd.f32 %v1375, %v1614
      %v1646 = vld [vmem:[%s1376] sm:$0xf]
      %v1647 = vld [vmem:[%s1376 + $0x4] sm:$0xf]
      %v1648 = vld [vmem:[%s1376 + $0x8] sm:$0xf]
      %v1649 = vld [vmem:[%s1376 + $0xc] sm:$0x1]
      %v1650 = vld [vmem:[%s1376 + $0x10] sm:$0xf]
      %v1651 = vld [vmem:[%s1376 + $0x14] sm:$0xf]
      %v1652 = vld [vmem:[%s1376 + $0x18] sm:$0xf]
      %v1653 = vld [vmem:[%s1376 + $0x1c] sm:$0x1]
      %v1654 = vld [vmem:[%s1376 + $0x20] sm:$0xf]
      %v1655 = vld [vmem:[%s1376 + $0x24] sm:$0xf]
      %v1656 = vld [vmem:[%s1376 + $0x28] sm:$0xf]
      %v1657 = vld [vmem:[%s1376 + $0x2c] sm:$0x1]
      %v1658 = vld [vmem:[%s1376 + $0x30] sm:$0xf]
      %v1659 = vld [vmem:[%s1376 + $0x34] sm:$0xf]
      %v1660 = vld [vmem:[%s1376 + $0x38] sm:$0xf]
      %v1661 = vld [vmem:[%s1376 + $0x3c] sm:$0x1]
      %v1662 = vld [vmem:[%s1376 + $0x40] sm:$0xf]
      %v1663 = vld [vmem:[%s1376 + $0x44] sm:$0xf]
      %v1664 = vld [vmem:[%s1376 + $0x48] sm:$0xf]
      %v1665 = vld [vmem:[%s1376 + $0x4c] sm:$0x1]
      %v1666 = vld [vmem:[%s1376 + $0x50] sm:$0xf]
      %v1667 = vld [vmem:[%s1376 + $0x54] sm:$0xf]
      %v1668 = vld [vmem:[%s1376 + $0x58] sm:$0xf]
      %v1669 = vld [vmem:[%s1376 + $0x5c] sm:$0x1]
      %v1670 = vld [vmem:[%s1376 + $0x60] sm:$0xf]
      %v1671 = vld [vmem:[%s1376 + $0x64] sm:$0xf]
      %v1672 = vld [vmem:[%s1376 + $0x68] sm:$0xf]
      %v1673 = vld [vmem:[%s1376 + $0x6c] sm:$0x1]
      %v1674 = vld [vmem:[%s1376 + $0x70] sm:$0xf]
      %v1675 = vld [vmem:[%s1376 + $0x74] sm:$0xf]
      %v1676 = vld [vmem:[%s1376 + $0x78] sm:$0xf]
      %v1677 = vld [vmem:[%s1376 + $0x7c] sm:$0x1]
      %v1678 = vld [vmem:[%s1376 + $0x80] sm:$0xf]
      %v1679 = vld [vmem:[%s1376 + $0x84] sm:$0xf]
      %v1680 = vld [vmem:[%s1376 + $0x88] sm:$0xf]
      %v1681 = vld [vmem:[%s1376 + $0x8c] sm:$0x1]
      %v1682 = vld [vmem:[%s1376 + $0x90] sm:$0xf]
      %v1683 = vld [vmem:[%s1376 + $0x94] sm:$0xf]
      %v1684 = vld [vmem:[%s1376 + $0x98] sm:$0xf]
      %v1685 = vld [vmem:[%s1376 + $0x9c] sm:$0x1]
      %v1687 = vshrl.u32 %v1646, 16
      %v1689 = vrot.slane %v1687, 4
      %v1690 = vshll.u32 %v1646, 16
      %v1692 = vrot.slane %v1690, 5
      %v1693 = vor.u32 %v1689, %v1692
      %v1694 = vrot.slane %v1693, 4
      %v1696 = vshll.u32 %v1647, 16
      %v1698 = vrot.slane %v1696, 5
      %v1699 = vsel %vm305, %v1694, %v1698
      %v1700 = vshrl.u32 %v1647, 16
      %v1702 = vrot.slane %v1700, 4
      %v1703 = vor.u32 %v1702, %v1698
      %v1704 = vrot.slane %v1703, 4
      %v1706 = vshll.u32 %v1648, 16
      %v1708 = vrot.slane %v1706, 5
      %v1709 = vsel %vm305, %v1704, %v1708
      %v1710 = vshrl.u32 %v1648, 16
      %v1712 = vrot.slane %v1710, 4
      %v1713 = vor.u32 %v1712, %v1708
      %v1714 = vrot.slane %v1713, 4
      %v1716 = vshll.u32 %v1649, 16
      %v1718 = vrot.slane %v1716, 5
      %v1719 = vsel %vm305, %v1714, %v1718
      %v1721 = vshrl.u32 %v1650, 16
      %v1723 = vrot.slane %v1721, 4
      %v1724 = vshll.u32 %v1650, 16
      %v1726 = vrot.slane %v1724, 5
      %v1727 = vor.u32 %v1723, %v1726
      %v1728 = vrot.slane %v1727, 4
      %v1730 = vshll.u32 %v1651, 16
      %v1732 = vrot.slane %v1730, 5
      %v1733 = vsel %vm305, %v1728, %v1732
      %v1734 = vshrl.u32 %v1651, 16
      %v1736 = vrot.slane %v1734, 4
      %v1737 = vor.u32 %v1736, %v1732
      %v1738 = vrot.slane %v1737, 4
      %v1740 = vshll.u32 %v1652, 16
      %v1742 = vrot.slane %v1740, 5
      %v1743 = vsel %vm305, %v1738, %v1742
      %v1744 = vshrl.u32 %v1652, 16
      %v1746 = vrot.slane %v1744, 4
      %v1747 = vor.u32 %v1746, %v1742
      %v1748 = vrot.slane %v1747, 4
      %v1750 = vshll.u32 %v1653, 16
      %v1752 = vrot.slane %v1750, 5
      %v1753 = vsel %vm305, %v1748, %v1752
      %v1755 = vshrl.u32 %v1654, 16
      %v1757 = vrot.slane %v1755, 4
      %v1758 = vshll.u32 %v1654, 16
      %v1760 = vrot.slane %v1758, 5
      %v1761 = vor.u32 %v1757, %v1760
      %v1762 = vrot.slane %v1761, 4
      %v1764 = vshll.u32 %v1655, 16
      %v1766 = vrot.slane %v1764, 5
      %v1767 = vsel %vm305, %v1762, %v1766
      %v1768 = vshrl.u32 %v1655, 16
      %v1770 = vrot.slane %v1768, 4
      %v1771 = vor.u32 %v1770, %v1766
      %v1772 = vrot.slane %v1771, 4
      %v1774 = vshll.u32 %v1656, 16
      %v1776 = vrot.slane %v1774, 5
      %v1777 = vsel %vm305, %v1772, %v1776
      %v1778 = vshrl.u32 %v1656, 16
      %v1780 = vrot.slane %v1778, 4
      %v1781 = vor.u32 %v1780, %v1776
      %v1782 = vrot.slane %v1781, 4
      %v1784 = vshll.u32 %v1657, 16
      %v1786 = vrot.slane %v1784, 5
      %v1787 = vsel %vm305, %v1782, %v1786
      %v1789 = vshrl.u32 %v1658, 16
      %v1791 = vrot.slane %v1789, 4
      %v1792 = vshll.u32 %v1658, 16
      %v1794 = vrot.slane %v1792, 5
      %v1795 = vor.u32 %v1791, %v1794
      %v1796 = vrot.slane %v1795, 4
      %v1798 = vshll.u32 %v1659, 16
      %v1800 = vrot.slane %v1798, 5
      %v1801 = vsel %vm305, %v1796, %v1800
      %v1802 = vshrl.u32 %v1659, 16
      %v1804 = vrot.slane %v1802, 4
      %v1805 = vor.u32 %v1804, %v1800
      %v1806 = vrot.slane %v1805, 4
      %v1808 = vshll.u32 %v1660, 16
      %v1810 = vrot.slane %v1808, 5
      %v1811 = vsel %vm305, %v1806, %v1810
      %v1812 = vshrl.u32 %v1660, 16
      %v1814 = vrot.slane %v1812, 4
      %v1815 = vor.u32 %v1814, %v1810
      %v1816 = vrot.slane %v1815, 4
      %v1818 = vshll.u32 %v1661, 16
      %v1820 = vrot.slane %v1818, 5
      %v1821 = vsel %vm305, %v1816, %v1820
      %v1823 = vshrl.u32 %v1662, 16
      %v1825 = vrot.slane %v1823, 4
      %v1826 = vshll.u32 %v1662, 16
      %v1828 = vrot.slane %v1826, 5
      %v1829 = vor.u32 %v1825, %v1828
      %v1830 = vrot.slane %v1829, 4
      %v1832 = vshll.u32 %v1663, 16
      %v1834 = vrot.slane %v1832, 5
      %v1835 = vsel %vm305, %v1830, %v1834
      %v1836 = vshrl.u32 %v1663, 16
      %v1838 = vrot.slane %v1836, 4
      %v1839 = vor.u32 %v1838, %v1834
      %v1840 = vrot.slane %v1839, 4
      %v1842 = vshll.u32 %v1664, 16
      %v1844 = vrot.slane %v1842, 5
      %v1845 = vsel %vm305, %v1840, %v1844
      %v1846 = vshrl.u32 %v1664, 16
      %v1848 = vrot.slane %v1846, 4
      %v1849 = vor.u32 %v1848, %v1844
      %v1850 = vrot.slane %v1849, 4
      %v1852 = vshll.u32 %v1665, 16
      %v1854 = vrot.slane %v1852, 5
      %v1855 = vsel %vm305, %v1850, %v1854
      %v1857 = vshrl.u32 %v1666, 16
      %v1859 = vrot.slane %v1857, 4
      %v1860 = vshll.u32 %v1666, 16
      %v1862 = vrot.slane %v1860, 5
      %v1863 = vor.u32 %v1859, %v1862
      %v1864 = vrot.slane %v1863, 4
      %v1866 = vshll.u32 %v1667, 16
      %v1868 = vrot.slane %v1866, 5
      %v1869 = vsel %vm305, %v1864, %v1868
      %v1870 = vshrl.u32 %v1667, 16
      %v1872 = vrot.slane %v1870, 4
      %v1873 = vor.u32 %v1872, %v1868
      %v1874 = vrot.slane %v1873, 4
      %v1876 = vshll.u32 %v1668, 16
      %v1878 = vrot.slane %v1876, 5
      %v1879 = vsel %vm305, %v1874, %v1878
      %v1880 = vshrl.u32 %v1668, 16
      %v1882 = vrot.slane %v1880, 4
      %v1883 = vor.u32 %v1882, %v1878
      %v1884 = vrot.slane %v1883, 4
      %v1886 = vshll.u32 %v1669, 16
      %v1888 = vrot.slane %v1886, 5
      %v1889 = vsel %vm305, %v1884, %v1888
      %v1891 = vshrl.u32 %v1670, 16
      %v1893 = vrot.slane %v1891, 4
      %v1894 = vshll.u32 %v1670, 16
      %v1896 = vrot.slane %v1894, 5
      %v1897 = vor.u32 %v1893, %v1896
      %v1898 = vrot.slane %v1897, 4
      %v1900 = vshll.u32 %v1671, 16
      %v1902 = vrot.slane %v1900, 5
      %v1903 = vsel %vm305, %v1898, %v1902
      %v1904 = vshrl.u32 %v1671, 16
      %v1906 = vrot.slane %v1904, 4
      %v1907 = vor.u32 %v1906, %v1902
      %v1908 = vrot.slane %v1907, 4
      %v1910 = vshll.u32 %v1672, 16
      %v1912 = vrot.slane %v1910, 5
      %v1913 = vsel %vm305, %v1908, %v1912
      %v1914 = vshrl.u32 %v1672, 16
      %v1916 = vrot.slane %v1914, 4
      %v1917 = vor.u32 %v1916, %v1912
      %v1918 = vrot.slane %v1917, 4
      %v1920 = vshll.u32 %v1673, 16
      %v1922 = vrot.slane %v1920, 5
      %v1923 = vsel %vm305, %v1918, %v1922
      %v1925 = vshrl.u32 %v1674, 16
      %v1927 = vrot.slane %v1925, 4
      %v1928 = vshll.u32 %v1674, 16
      %v1930 = vrot.slane %v1928, 5
      %v1931 = vor.u32 %v1927, %v1930
      %v1932 = vrot.slane %v1931, 4
      %v1934 = vshll.u32 %v1675, 16
      %v1936 = vrot.slane %v1934, 5
      %v1937 = vsel %vm305, %v1932, %v1936
      %v1938 = vshrl.u32 %v1675, 16
      %v1940 = vrot.slane %v1938, 4
      %v1941 = vor.u32 %v1940, %v1936
      %v1942 = vrot.slane %v1941, 4
      %v1944 = vshll.u32 %v1676, 16
      %v1946 = vrot.slane %v1944, 5
      %v1947 = vsel %vm305, %v1942, %v1946
      %v1948 = vshrl.u32 %v1676, 16
      %v1950 = vrot.slane %v1948, 4
      %v1951 = vor.u32 %v1950, %v1946
      %v1952 = vrot.slane %v1951, 4
      %v1954 = vshll.u32 %v1677, 16
      %v1956 = vrot.slane %v1954, 5
      %v1957 = vsel %vm305, %v1952, %v1956
      %v1959 = vshrl.u32 %v1678, 16
      %v1961 = vrot.slane %v1959, 4
      %v1962 = vshll.u32 %v1678, 16
      %v1964 = vrot.slane %v1962, 5
      %v1965 = vor.u32 %v1961, %v1964
      %v1966 = vrot.slane %v1965, 4
      %v1968 = vshll.u32 %v1679, 16
      %v1970 = vrot.slane %v1968, 5
      %v1971 = vsel %vm305, %v1966, %v1970
      %v1972 = vshrl.u32 %v1679, 16
      %v1974 = vrot.slane %v1972, 4
      %v1975 = vor.u32 %v1974, %v1970
      %v1976 = vrot.slane %v1975, 4
      %v1978 = vshll.u32 %v1680, 16
      %v1980 = vrot.slane %v1978, 5
      %v1981 = vsel %vm305, %v1976, %v1980
      %v1982 = vshrl.u32 %v1680, 16
      %v1984 = vrot.slane %v1982, 4
      %v1985 = vor.u32 %v1984, %v1980
      %v1986 = vrot.slane %v1985, 4
      %v1988 = vshll.u32 %v1681, 16
      %v1990 = vrot.slane %v1988, 5
      %v1991 = vsel %vm305, %v1986, %v1990
      %v1993 = vshrl.u32 %v1682, 16
      %v1995 = vrot.slane %v1993, 4
      %v1996 = vshll.u32 %v1682, 16
      %v1998 = vrot.slane %v1996, 5
      %v1999 = vor.u32 %v1995, %v1998
      %v2000 = vrot.slane %v1999, 4
      %v2002 = vshll.u32 %v1683, 16
      %v2004 = vrot.slane %v2002, 5
      %v2005 = vsel %vm305, %v2000, %v2004
      %v2006 = vshrl.u32 %v1683, 16
      %v2008 = vrot.slane %v2006, 4
      %v2009 = vor.u32 %v2008, %v2004
      %v2010 = vrot.slane %v2009, 4
      %v2012 = vshll.u32 %v1684, 16
      %v2014 = vrot.slane %v2012, 5
      %v2015 = vsel %vm305, %v2010, %v2014
      %v2016 = vshrl.u32 %v1684, 16
      %v2018 = vrot.slane %v2016, 4
      %v2019 = vor.u32 %v2018, %v2014
      %v2020 = vrot.slane %v2019, 4
      %v2022 = vshll.u32 %v1685, 16
      %v2024 = vrot.slane %v2022, 5
      %v2025 = vsel %vm305, %v2020, %v2024
      %s2026 = scalar_lea.vmem %s1, 8
      %v2027 = vld [vmem:[%s2026] sm:$0x3]
      %v2028 = vunpack.c.l.b16 %v1699
      %v2029 = vunpack.c.l.b16 %v1709
      %v2030 = vunpack.c.l.b16 %v1719
      %v2031 = vunpack.c.l.b16 %v1733
      %v2032 = vunpack.c.l.b16 %v1743
      %v2033 = vunpack.c.l.b16 %v1753
      %v2034 = vunpack.c.l.b16 %v1767
      %v2035 = vunpack.c.l.b16 %v1777
      %v2036 = vunpack.c.l.b16 %v1787
      %v2037 = vunpack.c.l.b16 %v1801
      %v2038 = vunpack.c.l.b16 %v1811
      %v2039 = vunpack.c.l.b16 %v1821
      %v2040 = vunpack.c.l.b16 %v1835
      %v2041 = vunpack.c.l.b16 %v1845
      %v2042 = vunpack.c.l.b16 %v1855
      %v2043 = vunpack.c.l.b16 %v1869
      %v2044 = vunpack.c.l.b16 %v1879
      %v2045 = vunpack.c.l.b16 %v1889
      %v2046 = vunpack.c.l.b16 %v1903
      %v2047 = vunpack.c.l.b16 %v1913
      %v2048 = vunpack.c.l.b16 %v1923
      %v2049 = vunpack.c.l.b16 %v1937
      %v2050 = vunpack.c.l.b16 %v1947
      %v2051 = vunpack.c.l.b16 %v1957
      %v2052 = vunpack.c.l.b16 %v1971
      %v2053 = vunpack.c.l.b16 %v1981
      %v2054 = vunpack.c.l.b16 %v1991
      %v2055 = vunpack.c.l.b16 %v2005
      %v2056 = vunpack.c.l.b16 %v2015
      %v2057 = vunpack.c.l.b16 %v2025
      %v2058 = vpack.c.b16 %v2029, %v2028
      %v2059 = vpack.c.b16 %v2031, %v2030
      %v2060 = vpack.c.b16 %v2033, %v2032
      %v2061 = vpack.c.b16 %v2035, %v2034
      %v2062 = vpack.c.b16 %v2037, %v2036
      %v2063 = vpack.c.b16 %v2039, %v2038
      %v2064 = vpack.c.b16 %v2041, %v2040
      %v2065 = vpack.c.b16 %v2043, %v2042
      %v2066 = vpack.c.b16 %v2045, %v2044
      %v2067 = vpack.c.b16 %v2047, %v2046
      %v2068 = vpack.c.b16 %v2049, %v2048
      %v2069 = vpack.c.b16 %v2051, %v2050
      %v2070 = vpack.c.b16 %v2053, %v2052
      %v2071 = vpack.c.b16 %v2055, %v2054
      %v2072 = vpack.c.b16 %v2057, %v2056
      %v2074 = vsel %vm693, %v2058, 0
      %v2077 = vsel %vm693, %v2059, 0
      %v2080 = vsel %vm693, %v2060, 0
      %v2083 = vsel %vm693, %v2061, 0
      %v2086 = vsel %vm693, %v2062, 0
      %v2089 = vsel %vm693, %v2063, 0
      %v2092 = vsel %vm693, %v2064, 0
      %v2095 = vsel %vm693, %v2065, 0
      %v2098 = vsel %vm693, %v2066, 0
      %v2101 = vsel %vm693, %v2067, 0
      %v2104 = vsel %vm693, %v2068, 0
      %v2107 = vsel %vm693, %v2069, 0
      %v2110 = vsel %vm693, %v2070, 0
      %v2113 = vsel %vm693, %v2071, 0
      %v2116 = vsel %vm693, %v2072, 0
      %v2119 = vsel %vm739, %v2027, 0
      %2121 = vmatpush.bf16.msra.mxu0 0
      %2122 = vmatpush.bf16.msra.mxu0 0
      %2123 = vmatpush.bf16.msra.mxu0 0
      %2124 = vmatpush.bf16.msra.mxu0 0
      %2125 = vmatpush.bf16.msra.mxu0 0
      %2126 = vmatpush.bf16.msra.mxu0 0
      %2127 = vmatpush.bf16.msra.mxu0 0
      %2128 = vmatpush.bf16.msra.mxu0 %v2119
      %2129 = vmatmul.bf16.gmra.mxu0 %v2074
      %v2130 = vpop.f32.mrf.mxu0
      %v2131 = vadd.f32 0.0, %v2130
      %v2132 = vpop.f32.mrf.mxu0
      %v2133 = vadd.f32 0.0, %v2132
      %2134 = vmatmul.bf16.gmra.mxu0 %v2077
      %v2135 = vpop.f32.mrf.mxu0
      %v2136 = vadd.f32 0.0, %v2135
      %v2137 = vpop.f32.mrf.mxu0
      %v2138 = vadd.f32 0.0, %v2137
      %2139 = vmatmul.bf16.gmra.mxu0 %v2080
      %v2140 = vpop.f32.mrf.mxu0
      %v2141 = vadd.f32 0.0, %v2140
      %v2142 = vpop.f32.mrf.mxu0
      %v2143 = vadd.f32 0.0, %v2142
      %2144 = vmatmul.bf16.gmra.mxu0 %v2083
      %v2145 = vpop.f32.mrf.mxu0
      %v2146 = vadd.f32 0.0, %v2145
      %v2147 = vpop.f32.mrf.mxu0
      %v2148 = vadd.f32 0.0, %v2147
      %2149 = vmatmul.bf16.gmra.mxu0 %v2086
      %v2150 = vpop.f32.mrf.mxu0
      %v2151 = vadd.f32 0.0, %v2150
      %v2152 = vpop.f32.mrf.mxu0
      %v2153 = vadd.f32 0.0, %v2152
      %2154 = vmatmul.bf16.gmra.mxu0 %v2089
      %v2155 = vpop.f32.mrf.mxu0
      %v2156 = vadd.f32 0.0, %v2155
      %v2157 = vpop.f32.mrf.mxu0
      %v2158 = vadd.f32 0.0, %v2157
      %2159 = vmatmul.bf16.gmra.mxu0 %v2092
      %v2160 = vpop.f32.mrf.mxu0
      %v2161 = vadd.f32 0.0, %v2160
      %v2162 = vpop.f32.mrf.mxu0
      %v2163 = vadd.f32 0.0, %v2162
      %2164 = vmatmul.bf16.gmra.mxu0 %v2095
      %v2165 = vpop.f32.mrf.mxu0
      %v2166 = vadd.f32 0.0, %v2165
      %v2167 = vpop.f32.mrf.mxu0
      %v2168 = vadd.f32 0.0, %v2167
      %2169 = vmatmul.bf16.gmra.mxu0 %v2098
      %v2170 = vpop.f32.mrf.mxu0
      %v2171 = vadd.f32 0.0, %v2170
      %v2172 = vpop.f32.mrf.mxu0
      %v2173 = vadd.f32 0.0, %v2172
      %2174 = vmatmul.bf16.gmra.mxu0 %v2101
      %v2175 = vpop.f32.mrf.mxu0
      %v2176 = vadd.f32 0.0, %v2175
      %v2177 = vpop.f32.mrf.mxu0
      %v2178 = vadd.f32 0.0, %v2177
      %2179 = vmatmul.bf16.gmra.mxu0 %v2104
      %v2180 = vpop.f32.mrf.mxu0
      %v2181 = vadd.f32 0.0, %v2180
      %v2182 = vpop.f32.mrf.mxu0
      %v2183 = vadd.f32 0.0, %v2182
      %2184 = vmatmul.bf16.gmra.mxu0 %v2107
      %v2185 = vpop.f32.mrf.mxu0
      %v2186 = vadd.f32 0.0, %v2185
      %v2187 = vpop.f32.mrf.mxu0
      %v2188 = vadd.f32 0.0, %v2187
      %2189 = vmatmul.bf16.gmra.mxu0 %v2110
      %v2190 = vpop.f32.mrf.mxu0
      %v2191 = vadd.f32 0.0, %v2190
      %v2192 = vpop.f32.mrf.mxu0
      %v2193 = vadd.f32 0.0, %v2192
      %2194 = vmatmul.bf16.gmra.mxu0 %v2113
      %v2195 = vpop.f32.mrf.mxu0
      %v2196 = vadd.f32 0.0, %v2195
      %v2197 = vpop.f32.mrf.mxu0
      %v2198 = vadd.f32 0.0, %v2197
      %2199 = vmatmul.bf16.gmra.mxu0 %v2116
      %v2200 = vpop.f32.mrf.mxu0
      %v2201 = vadd.f32 0.0, %v2200
      %v2202 = vpop.f32.mrf.mxu0
      %v2203 = vadd.f32 0.0, %v2202
      %2204 = vdwg.mxu0
      %v2205 = vadd.f32 %v1616, %v2131
      %v2206 = vadd.f32 %v1617, %v2133
      %v2207 = vadd.f32 %v1618, %v2136
      %v2208 = vadd.f32 %v1619, %v2138
      %v2209 = vadd.f32 %v1620, %v2141
      %v2210 = vadd.f32 %v1621, %v2143
      %v2211 = vadd.f32 %v1622, %v2146
      %v2212 = vadd.f32 %v1623, %v2148
      %v2213 = vadd.f32 %v1624, %v2151
      %v2214 = vadd.f32 %v1625, %v2153
      %v2215 = vadd.f32 %v1626, %v2156
      %v2216 = vadd.f32 %v1627, %v2158
      %v2217 = vadd.f32 %v1628, %v2161
      %v2218 = vadd.f32 %v1629, %v2163
      %v2219 = vadd.f32 %v1630, %v2166
      %v2220 = vadd.f32 %v1631, %v2168
      %v2221 = vadd.f32 %v1632, %v2171
      %v2222 = vadd.f32 %v1633, %v2173
      %v2223 = vadd.f32 %v1634, %v2176
      %v2224 = vadd.f32 %v1635, %v2178
      %v2225 = vadd.f32 %v1636, %v2181
      %v2226 = vadd.f32 %v1637, %v2183
      %v2227 = vadd.f32 %v1638, %v2186
      %v2228 = vadd.f32 %v1639, %v2188
      %v2229 = vadd.f32 %v1640, %v2191
      %v2230 = vadd.f32 %v1641, %v2193
      %v2231 = vadd.f32 %v1642, %v2196
      %v2232 = vadd.f32 %v1643, %v2198
      %v2233 = vadd.f32 %v1644, %v2201
      %v2234 = vadd.f32 %v1645, %v2203
      %v2235 = vld [vmem:[%s1376] sm:$0xe]
      %v2236 = vld [vmem:[%s1376 + $0x10] sm:$0xe]
      %v2237 = vld [vmem:[%s1376 + $0x20] sm:$0xe]
      %v2238 = vld [vmem:[%s1376 + $0x30] sm:$0xe]
      %v2239 = vld [vmem:[%s1376 + $0x40] sm:$0xe]
      %v2240 = vld [vmem:[%s1376 + $0x50] sm:$0xe]
      %v2241 = vld [vmem:[%s1376 + $0x60] sm:$0xe]
      %v2242 = vld [vmem:[%s1376 + $0x70] sm:$0xe]
      %v2243 = vld [vmem:[%s1376 + $0x80] sm:$0xe]
      %v2244 = vld [vmem:[%s1376 + $0x90] sm:$0xe]
      %v2285 = vrot.slane %v2235, 5
      %v2286 = vrot.slane %v2285, 4
      %v2287 = vrot.slane %v1647, 5
      %v2288 = vsel %vm1066, %v2286, %v2287
      %v2289 = vrot.slane %v2287, 4
      %v2290 = vrot.slane %v1648, 5
      %v2291 = vsel %vm1066, %v2289, %v2290
      %v2292 = vrot.slane %v2290, 4
      %v2293 = vrot.slane %v1649, 5
      %v2294 = vsel %vm1066, %v2292, %v2293
      %v2295 = vrot.slane %v2236, 5
      %v2296 = vrot.slane %v2295, 4
      %v2297 = vrot.slane %v1651, 5
      %v2298 = vsel %vm1066, %v2296, %v2297
      %v2299 = vrot.slane %v2297, 4
      %v2300 = vrot.slane %v1652, 5
      %v2301 = vsel %vm1066, %v2299, %v2300
      %v2302 = vrot.slane %v2300, 4
      %v2303 = vrot.slane %v1653, 5
      %v2304 = vsel %vm1066, %v2302, %v2303
      %v2305 = vrot.slane %v2237, 5
      %v2306 = vrot.slane %v2305, 4
      %v2307 = vrot.slane %v1655, 5
      %v2308 = vsel %vm1066, %v2306, %v2307
      %v2309 = vrot.slane %v2307, 4
      %v2310 = vrot.slane %v1656, 5
      %v2311 = vsel %vm1066, %v2309, %v2310
      %v2312 = vrot.slane %v2310, 4
      %v2313 = vrot.slane %v1657, 5
      %v2314 = vsel %vm1066, %v2312, %v2313
      %v2315 = vrot.slane %v2238, 5
      %v2316 = vrot.slane %v2315, 4
      %v2317 = vrot.slane %v1659, 5
      %v2318 = vsel %vm1066, %v2316, %v2317
      %v2319 = vrot.slane %v2317, 4
      %v2320 = vrot.slane %v1660, 5
      %v2321 = vsel %vm1066, %v2319, %v2320
      %v2322 = vrot.slane %v2320, 4
      %v2323 = vrot.slane %v1661, 5
      %v2324 = vsel %vm1066, %v2322, %v2323
      %v2325 = vrot.slane %v2239, 5
      %v2326 = vrot.slane %v2325, 4
      %v2327 = vrot.slane %v1663, 5
      %v2328 = vsel %vm1066, %v2326, %v2327
      %v2329 = vrot.slane %v2327, 4
      %v2330 = vrot.slane %v1664, 5
      %v2331 = vsel %vm1066, %v2329, %v2330
      %v2332 = vrot.slane %v2330, 4
      %v2333 = vrot.slane %v1665, 5
      %v2334 = vsel %vm1066, %v2332, %v2333
      %v2335 = vrot.slane %v2240, 5
      %v2336 = vrot.slane %v2335, 4
      %v2337 = vrot.slane %v1667, 5
      %v2338 = vsel %vm1066, %v2336, %v2337
      %v2339 = vrot.slane %v2337, 4
      %v2340 = vrot.slane %v1668, 5
      %v2341 = vsel %vm1066, %v2339, %v2340
      %v2342 = vrot.slane %v2340, 4
      %v2343 = vrot.slane %v1669, 5
      %v2344 = vsel %vm1066, %v2342, %v2343
      %v2345 = vrot.slane %v2241, 5
      %v2346 = vrot.slane %v2345, 4
      %v2347 = vrot.slane %v1671, 5
      %v2348 = vsel %vm1066, %v2346, %v2347
      %v2349 = vrot.slane %v2347, 4
      %v2350 = vrot.slane %v1672, 5
      %v2351 = vsel %vm1066, %v2349, %v2350
      %v2352 = vrot.slane %v2350, 4
      %v2353 = vrot.slane %v1673, 5
      %v2354 = vsel %vm1066, %v2352, %v2353
      %v2355 = vrot.slane %v2242, 5
      %v2356 = vrot.slane %v2355, 4
      %v2357 = vrot.slane %v1675, 5
      %v2358 = vsel %vm1066, %v2356, %v2357
      %v2359 = vrot.slane %v2357, 4
      %v2360 = vrot.slane %v1676, 5
      %v2361 = vsel %vm1066, %v2359, %v2360
      %v2362 = vrot.slane %v2360, 4
      %v2363 = vrot.slane %v1677, 5
      %v2364 = vsel %vm1066, %v2362, %v2363
      %v2365 = vrot.slane %v2243, 5
      %v2366 = vrot.slane %v2365, 4
      %v2367 = vrot.slane %v1679, 5
      %v2368 = vsel %vm1066, %v2366, %v2367
      %v2369 = vrot.slane %v2367, 4
      %v2370 = vrot.slane %v1680, 5
      %v2371 = vsel %vm1066, %v2369, %v2370
      %v2372 = vrot.slane %v2370, 4
      %v2373 = vrot.slane %v1681, 5
      %v2374 = vsel %vm1066, %v2372, %v2373
      %v2375 = vrot.slane %v2244, 5
      %v2376 = vrot.slane %v2375, 4
      %v2377 = vrot.slane %v1683, 5
      %v2378 = vsel %vm1066, %v2376, %v2377
      %v2379 = vrot.slane %v2377, 4
      %v2380 = vrot.slane %v1684, 5
      %v2381 = vsel %vm1066, %v2379, %v2380
      %v2382 = vrot.slane %v2380, 4
      %v2383 = vrot.slane %v1685, 5
      %v2384 = vsel %vm1066, %v2382, %v2383
      %s2385 = scalar_lea.vmem %s1, 10
      %v2386 = vld [vmem:[%s2385] sm:$0x3]
      %v2387 = vunpack.c.l.b16 %v2288
      %v2388 = vunpack.c.l.b16 %v2291
      %v2389 = vunpack.c.l.b16 %v2294
      %v2390 = vunpack.c.l.b16 %v2298
      %v2391 = vunpack.c.l.b16 %v2301
      %v2392 = vunpack.c.l.b16 %v2304
      %v2393 = vunpack.c.l.b16 %v2308
      %v2394 = vunpack.c.l.b16 %v2311
      %v2395 = vunpack.c.l.b16 %v2314
      %v2396 = vunpack.c.l.b16 %v2318
      %v2397 = vunpack.c.l.b16 %v2321
      %v2398 = vunpack.c.l.b16 %v2324
      %v2399 = vunpack.c.l.b16 %v2328
      %v2400 = vunpack.c.l.b16 %v2331
      %v2401 = vunpack.c.l.b16 %v2334
      %v2402 = vunpack.c.l.b16 %v2338
      %v2403 = vunpack.c.l.b16 %v2341
      %v2404 = vunpack.c.l.b16 %v2344
      %v2405 = vunpack.c.l.b16 %v2348
      %v2406 = vunpack.c.l.b16 %v2351
      %v2407 = vunpack.c.l.b16 %v2354
      %v2408 = vunpack.c.l.b16 %v2358
      %v2409 = vunpack.c.l.b16 %v2361
      %v2410 = vunpack.c.l.b16 %v2364
      %v2411 = vunpack.c.l.b16 %v2368
      %v2412 = vunpack.c.l.b16 %v2371
      %v2413 = vunpack.c.l.b16 %v2374
      %v2414 = vunpack.c.l.b16 %v2378
      %v2415 = vunpack.c.l.b16 %v2381
      %v2416 = vunpack.c.l.b16 %v2384
      %v2417 = vpack.c.b16 %v2388, %v2387
      %v2418 = vpack.c.b16 %v2390, %v2389
      %v2419 = vpack.c.b16 %v2392, %v2391
      %v2420 = vpack.c.b16 %v2394, %v2393
      %v2421 = vpack.c.b16 %v2396, %v2395
      %v2422 = vpack.c.b16 %v2398, %v2397
      %v2423 = vpack.c.b16 %v2400, %v2399
      %v2424 = vpack.c.b16 %v2402, %v2401
      %v2425 = vpack.c.b16 %v2404, %v2403
      %v2426 = vpack.c.b16 %v2406, %v2405
      %v2427 = vpack.c.b16 %v2408, %v2407
      %v2428 = vpack.c.b16 %v2410, %v2409
      %v2429 = vpack.c.b16 %v2412, %v2411
      %v2430 = vpack.c.b16 %v2414, %v2413
      %v2431 = vpack.c.b16 %v2416, %v2415
      %v2433 = vsel %vm693, %v2417, 0
      %v2436 = vsel %vm693, %v2418, 0
      %v2439 = vsel %vm693, %v2419, 0
      %v2442 = vsel %vm693, %v2420, 0
      %v2445 = vsel %vm693, %v2421, 0
      %v2448 = vsel %vm693, %v2422, 0
      %v2451 = vsel %vm693, %v2423, 0
      %v2454 = vsel %vm693, %v2424, 0
      %v2457 = vsel %vm693, %v2425, 0
      %v2460 = vsel %vm693, %v2426, 0
      %v2463 = vsel %vm693, %v2427, 0
      %v2466 = vsel %vm693, %v2428, 0
      %v2469 = vsel %vm693, %v2429, 0
      %v2472 = vsel %vm693, %v2430, 0
      %v2475 = vsel %vm693, %v2431, 0
      %v2478 = vsel %vm739, %v2386, 0
      %2480 = vmatpush.bf16.msra.mxu0 0
      %2481 = vmatpush.bf16.msra.mxu0 0
      %2482 = vmatpush.bf16.msra.mxu0 0
      %2483 = vmatpush.bf16.msra.mxu0 0
      %2484 = vmatpush.bf16.msra.mxu0 0
      %2485 = vmatpush.bf16.msra.mxu0 0
      %2486 = vmatpush.bf16.msra.mxu0 0
      %2487 = vmatpush.bf16.msra.mxu0 %v2478
      %2488 = vmatmul.bf16.gmra.mxu0 %v2433
      %v2489 = vpop.f32.mrf.mxu0
      %v2490 = vadd.f32 0.0, %v2489
      %v2491 = vpop.f32.mrf.mxu0
      %v2492 = vadd.f32 0.0, %v2491
      %2493 = vmatmul.bf16.gmra.mxu0 %v2436
      %v2494 = vpop.f32.mrf.mxu0
      %v2495 = vadd.f32 0.0, %v2494
      %v2496 = vpop.f32.mrf.mxu0
      %v2497 = vadd.f32 0.0, %v2496
      %2498 = vmatmul.bf16.gmra.mxu0 %v2439
      %v2499 = vpop.f32.mrf.mxu0
      %v2500 = vadd.f32 0.0, %v2499
      %v2501 = vpop.f32.mrf.mxu0
      %v2502 = vadd.f32 0.0, %v2501
      %2503 = vmatmul.bf16.gmra.mxu0 %v2442
      %v2504 = vpop.f32.mrf.mxu0
      %v2505 = vadd.f32 0.0, %v2504
      %v2506 = vpop.f32.mrf.mxu0
      %v2507 = vadd.f32 0.0, %v2506
      %2508 = vmatmul.bf16.gmra.mxu0 %v2445
      %v2509 = vpop.f32.mrf.mxu0
      %v2510 = vadd.f32 0.0, %v2509
      %v2511 = vpop.f32.mrf.mxu0
      %v2512 = vadd.f32 0.0, %v2511
      %2513 = vmatmul.bf16.gmra.mxu0 %v2448
      %v2514 = vpop.f32.mrf.mxu0
      %v2515 = vadd.f32 0.0, %v2514
      %v2516 = vpop.f32.mrf.mxu0
      %v2517 = vadd.f32 0.0, %v2516
      %2518 = vmatmul.bf16.gmra.mxu0 %v2451
      %v2519 = vpop.f32.mrf.mxu0
      %v2520 = vadd.f32 0.0, %v2519
      %v2521 = vpop.f32.mrf.mxu0
      %v2522 = vadd.f32 0.0, %v2521
      %2523 = vmatmul.bf16.gmra.mxu0 %v2454
      %v2524 = vpop.f32.mrf.mxu0
      %v2525 = vadd.f32 0.0, %v2524
      %v2526 = vpop.f32.mrf.mxu0
      %v2527 = vadd.f32 0.0, %v2526
      %2528 = vmatmul.bf16.gmra.mxu0 %v2457
      %v2529 = vpop.f32.mrf.mxu0
      %v2530 = vadd.f32 0.0, %v2529
      %v2531 = vpop.f32.mrf.mxu0
      %v2532 = vadd.f32 0.0, %v2531
      %2533 = vmatmul.bf16.gmra.mxu0 %v2460
      %v2534 = vpop.f32.mrf.mxu0
      %v2535 = vadd.f32 0.0, %v2534
      %v2536 = vpop.f32.mrf.mxu0
      %v2537 = vadd.f32 0.0, %v2536
      %2538 = vmatmul.bf16.gmra.mxu0 %v2463
      %v2539 = vpop.f32.mrf.mxu0
      %v2540 = vadd.f32 0.0, %v2539
      %v2541 = vpop.f32.mrf.mxu0
      %v2542 = vadd.f32 0.0, %v2541
      %2543 = vmatmul.bf16.gmra.mxu0 %v2466
      %v2544 = vpop.f32.mrf.mxu0
      %v2545 = vadd.f32 0.0, %v2544
      %v2546 = vpop.f32.mrf.mxu0
      %v2547 = vadd.f32 0.0, %v2546
      %2548 = vmatmul.bf16.gmra.mxu0 %v2469
      %v2549 = vpop.f32.mrf.mxu0
      %v2550 = vadd.f32 0.0, %v2549
      %v2551 = vpop.f32.mrf.mxu0
      %v2552 = vadd.f32 0.0, %v2551
      %2553 = vmatmul.bf16.gmra.mxu0 %v2472
      %v2554 = vpop.f32.mrf.mxu0
      %v2555 = vadd.f32 0.0, %v2554
      %v2556 = vpop.f32.mrf.mxu0
      %v2557 = vadd.f32 0.0, %v2556
      %2558 = vmatmul.bf16.gmra.mxu0 %v2475
      %v2559 = vpop.f32.mrf.mxu0
      %v2560 = vadd.f32 0.0, %v2559
      %v2561 = vpop.f32.mrf.mxu0
      %v2562 = vadd.f32 0.0, %v2561
      %2563 = vdwg.mxu0
      %v2564 = vadd.f32 %v2205, %v2490
      %v2565 = vadd.f32 %v2206, %v2492
      %v2566 = vadd.f32 %v2207, %v2495
      %v2567 = vadd.f32 %v2208, %v2497
      %v2568 = vadd.f32 %v2209, %v2500
      %v2569 = vadd.f32 %v2210, %v2502
      %v2570 = vadd.f32 %v2211, %v2505
      %v2571 = vadd.f32 %v2212, %v2507
      %v2572 = vadd.f32 %v2213, %v2510
      %v2573 = vadd.f32 %v2214, %v2512
      %v2574 = vadd.f32 %v2215, %v2515
      %v2575 = vadd.f32 %v2216, %v2517
      %v2576 = vadd.f32 %v2217, %v2520
      %v2577 = vadd.f32 %v2218, %v2522
      %v2578 = vadd.f32 %v2219, %v2525
      %v2579 = vadd.f32 %v2220, %v2527
      %v2580 = vadd.f32 %v2221, %v2530
      %v2581 = vadd.f32 %v2222, %v2532
      %v2582 = vadd.f32 %v2223, %v2535
      %v2583 = vadd.f32 %v2224, %v2537
      %v2584 = vadd.f32 %v2225, %v2540
      %v2585 = vadd.f32 %v2226, %v2542
      %v2586 = vadd.f32 %v2227, %v2545
      %v2587 = vadd.f32 %v2228, %v2547
      %v2588 = vadd.f32 %v2229, %v2550
      %v2589 = vadd.f32 %v2230, %v2552
      %v2590 = vadd.f32 %v2231, %v2555
      %v2591 = vadd.f32 %v2232, %v2557
      %v2592 = vadd.f32 %v2233, %v2560
      %v2593 = vadd.f32 %v2234, %v2562
      %s2594 = scalar_lea.vmem %s249, 32
      %v2595 = vld [vmem:[%s2594] sm:$0xf]
      %v2596 = vld [vmem:[%s2594 + $0x4] sm:$0xf]
      %v2597 = vld [vmem:[%s2594 + $0x8] sm:$0xf]
      %v2598 = vld [vmem:[%s2594 + $0x10] sm:$0xf]
      %v2599 = vld [vmem:[%s2594 + $0x14] sm:$0xf]
      %v2600 = vld [vmem:[%s2594 + $0x18] sm:$0xf]
      %v2601 = vld [vmem:[%s2594 + $0x20] sm:$0xf]
      %v2602 = vld [vmem:[%s2594 + $0x24] sm:$0xf]
      %v2603 = vld [vmem:[%s2594 + $0x28] sm:$0xf]
      %v2604 = vld [vmem:[%s2594 + $0x30] sm:$0xf]
      %v2605 = vld [vmem:[%s2594 + $0x34] sm:$0xf]
      %v2606 = vld [vmem:[%s2594 + $0x38] sm:$0xf]
      %v2607 = vld [vmem:[%s2594 + $0x40] sm:$0xf]
      %v2608 = vld [vmem:[%s2594 + $0x44] sm:$0xf]
      %v2609 = vld [vmem:[%s2594 + $0x48] sm:$0xf]
      %v2610 = vld [vmem:[%s2594 + $0x50] sm:$0xf]
      %v2611 = vld [vmem:[%s2594 + $0x54] sm:$0xf]
      %v2612 = vld [vmem:[%s2594 + $0x58] sm:$0xf]
      %v2613 = vld [vmem:[%s2594 + $0x60] sm:$0xf]
      %v2614 = vld [vmem:[%s2594 + $0x64] sm:$0xf]
      %v2615 = vld [vmem:[%s2594 + $0x68] sm:$0xf]
      %v2616 = vld [vmem:[%s2594 + $0x70] sm:$0xf]
      %v2617 = vld [vmem:[%s2594 + $0x74] sm:$0xf]
      %v2618 = vld [vmem:[%s2594 + $0x78] sm:$0xf]
      %v2619 = vld [vmem:[%s2594 + $0x80] sm:$0xf]
      %v2620 = vld [vmem:[%s2594 + $0x84] sm:$0xf]
      %v2621 = vld [vmem:[%s2594 + $0x88] sm:$0xf]
      %v2622 = vld [vmem:[%s2594 + $0x90] sm:$0xf]
      %v2623 = vld [vmem:[%s2594 + $0x94] sm:$0xf]
      %v2624 = vld [vmem:[%s2594 + $0x98] sm:$0xf]
      %s2625 = scalar_lea.vmem %s1, 12
      %v2626 = vld [vmem:[%s2625] sm:$0x3]
      %v2657 = vunpack.c.l.b16 %v2595
      %v2658 = vunpack.c.l.b16 %v2596
      %v2659 = vunpack.c.l.b16 %v2597
      %v2660 = vunpack.c.l.b16 %v2598
      %v2661 = vunpack.c.l.b16 %v2599
      %v2662 = vunpack.c.l.b16 %v2600
      %v2663 = vunpack.c.l.b16 %v2601
      %v2664 = vunpack.c.l.b16 %v2602
      %v2665 = vunpack.c.l.b16 %v2603
      %v2666 = vunpack.c.l.b16 %v2604
      %v2667 = vunpack.c.l.b16 %v2605
      %v2668 = vunpack.c.l.b16 %v2606
      %v2669 = vunpack.c.l.b16 %v2607
      %v2670 = vunpack.c.l.b16 %v2608
      %v2671 = vunpack.c.l.b16 %v2609
      %v2672 = vunpack.c.l.b16 %v2610
      %v2673 = vunpack.c.l.b16 %v2611
      %v2674 = vunpack.c.l.b16 %v2612
      %v2675 = vunpack.c.l.b16 %v2613
      %v2676 = vunpack.c.l.b16 %v2614
      %v2677 = vunpack.c.l.b16 %v2615
      %v2678 = vunpack.c.l.b16 %v2616
      %v2679 = vunpack.c.l.b16 %v2617
      %v2680 = vunpack.c.l.b16 %v2618
      %v2681 = vunpack.c.l.b16 %v2619
      %v2682 = vunpack.c.l.b16 %v2620
      %v2683 = vunpack.c.l.b16 %v2621
      %v2684 = vunpack.c.l.b16 %v2622
      %v2685 = vunpack.c.l.b16 %v2623
      %v2686 = vunpack.c.l.b16 %v2624
      %v2687 = vpack.c.b16 %v2658, %v2657
      %v2688 = vpack.c.b16 %v2660, %v2659
      %v2689 = vpack.c.b16 %v2662, %v2661
      %v2690 = vpack.c.b16 %v2664, %v2663
      %v2691 = vpack.c.b16 %v2666, %v2665
      %v2692 = vpack.c.b16 %v2668, %v2667
      %v2693 = vpack.c.b16 %v2670, %v2669
      %v2694 = vpack.c.b16 %v2672, %v2671
      %v2695 = vpack.c.b16 %v2674, %v2673
      %v2696 = vpack.c.b16 %v2676, %v2675
      %v2697 = vpack.c.b16 %v2678, %v2677
      %v2698 = vpack.c.b16 %v2680, %v2679
      %v2699 = vpack.c.b16 %v2682, %v2681
      %v2700 = vpack.c.b16 %v2684, %v2683
      %v2701 = vpack.c.b16 %v2686, %v2685
      %v2703 = vsel %vm693, %v2687, 0
      %v2706 = vsel %vm693, %v2688, 0
      %v2709 = vsel %vm693, %v2689, 0
      %v2712 = vsel %vm693, %v2690, 0
      %v2715 = vsel %vm693, %v2691, 0
      %v2718 = vsel %vm693, %v2692, 0
      %v2721 = vsel %vm693, %v2693, 0
      %v2724 = vsel %vm693, %v2694, 0
      %v2727 = vsel %vm693, %v2695, 0
      %v2730 = vsel %vm693, %v2696, 0
      %v2733 = vsel %vm693, %v2697, 0
      %v2736 = vsel %vm693, %v2698, 0
      %v2739 = vsel %vm693, %v2699, 0
      %v2742 = vsel %vm693, %v2700, 0
      %v2745 = vsel %vm693, %v2701, 0
      %v2748 = vsel %vm739, %v2626, 0
      %2750 = vmatpush.bf16.msra.mxu0 0
      %2751 = vmatpush.bf16.msra.mxu0 0
      %2752 = vmatpush.bf16.msra.mxu0 0
      %2753 = vmatpush.bf16.msra.mxu0 0
      %2754 = vmatpush.bf16.msra.mxu0 0
      %2755 = vmatpush.bf16.msra.mxu0 0
      %2756 = vmatpush.bf16.msra.mxu0 0
      %2757 = vmatpush.bf16.msra.mxu0 %v2748
      %2758 = vmatmul.bf16.gmra.mxu0 %v2703
      %v2759 = vpop.f32.mrf.mxu0
      %v2760 = vadd.f32 0.0, %v2759
      %v2761 = vpop.f32.mrf.mxu0
      %v2762 = vadd.f32 0.0, %v2761
      %2763 = vmatmul.bf16.gmra.mxu0 %v2706
      %v2764 = vpop.f32.mrf.mxu0
      %v2765 = vadd.f32 0.0, %v2764
      %v2766 = vpop.f32.mrf.mxu0
      %v2767 = vadd.f32 0.0, %v2766
      %2768 = vmatmul.bf16.gmra.mxu0 %v2709
      %v2769 = vpop.f32.mrf.mxu0
      %v2770 = vadd.f32 0.0, %v2769
      %v2771 = vpop.f32.mrf.mxu0
      %v2772 = vadd.f32 0.0, %v2771
      %2773 = vmatmul.bf16.gmra.mxu0 %v2712
      %v2774 = vpop.f32.mrf.mxu0
      %v2775 = vadd.f32 0.0, %v2774
      %v2776 = vpop.f32.mrf.mxu0
      %v2777 = vadd.f32 0.0, %v2776
      %2778 = vmatmul.bf16.gmra.mxu0 %v2715
      %v2779 = vpop.f32.mrf.mxu0
      %v2780 = vadd.f32 0.0, %v2779
      %v2781 = vpop.f32.mrf.mxu0
      %v2782 = vadd.f32 0.0, %v2781
      %2783 = vmatmul.bf16.gmra.mxu0 %v2718
      %v2784 = vpop.f32.mrf.mxu0
      %v2785 = vadd.f32 0.0, %v2784
      %v2786 = vpop.f32.mrf.mxu0
      %v2787 = vadd.f32 0.0, %v2786
      %2788 = vmatmul.bf16.gmra.mxu0 %v2721
      %v2789 = vpop.f32.mrf.mxu0
      %v2790 = vadd.f32 0.0, %v2789
      %v2791 = vpop.f32.mrf.mxu0
      %v2792 = vadd.f32 0.0, %v2791
      %2793 = vmatmul.bf16.gmra.mxu0 %v2724
      %v2794 = vpop.f32.mrf.mxu0
      %v2795 = vadd.f32 0.0, %v2794
      %v2796 = vpop.f32.mrf.mxu0
      %v2797 = vadd.f32 0.0, %v2796
      %2798 = vmatmul.bf16.gmra.mxu0 %v2727
      %v2799 = vpop.f32.mrf.mxu0
      %v2800 = vadd.f32 0.0, %v2799
      %v2801 = vpop.f32.mrf.mxu0
      %v2802 = vadd.f32 0.0, %v2801
      %2803 = vmatmul.bf16.gmra.mxu0 %v2730
      %v2804 = vpop.f32.mrf.mxu0
      %v2805 = vadd.f32 0.0, %v2804
      %v2806 = vpop.f32.mrf.mxu0
      %v2807 = vadd.f32 0.0, %v2806
      %2808 = vmatmul.bf16.gmra.mxu0 %v2733
      %v2809 = vpop.f32.mrf.mxu0
      %v2810 = vadd.f32 0.0, %v2809
      %v2811 = vpop.f32.mrf.mxu0
      %v2812 = vadd.f32 0.0, %v2811
      %2813 = vmatmul.bf16.gmra.mxu0 %v2736
      %v2814 = vpop.f32.mrf.mxu0
      %v2815 = vadd.f32 0.0, %v2814
      %v2816 = vpop.f32.mrf.mxu0
      %v2817 = vadd.f32 0.0, %v2816
      %2818 = vmatmul.bf16.gmra.mxu0 %v2739
      %v2819 = vpop.f32.mrf.mxu0
      %v2820 = vadd.f32 0.0, %v2819
      %v2821 = vpop.f32.mrf.mxu0
      %v2822 = vadd.f32 0.0, %v2821
      %2823 = vmatmul.bf16.gmra.mxu0 %v2742
      %v2824 = vpop.f32.mrf.mxu0
      %v2825 = vadd.f32 0.0, %v2824
      %v2826 = vpop.f32.mrf.mxu0
      %v2827 = vadd.f32 0.0, %v2826
      %2828 = vmatmul.bf16.gmra.mxu0 %v2745
      %v2829 = vpop.f32.mrf.mxu0
      %v2830 = vadd.f32 0.0, %v2829
      %v2831 = vpop.f32.mrf.mxu0
      %v2832 = vadd.f32 0.0, %v2831
      %2833 = vdwg.mxu0
      %v2834 = vadd.f32 %v2564, %v2760
      %v2835 = vadd.f32 %v2565, %v2762
      %v2836 = vadd.f32 %v2566, %v2765
      %v2837 = vadd.f32 %v2567, %v2767
      %v2838 = vadd.f32 %v2568, %v2770
      %v2839 = vadd.f32 %v2569, %v2772
      %v2840 = vadd.f32 %v2570, %v2775
      %v2841 = vadd.f32 %v2571, %v2777
      %v2842 = vadd.f32 %v2572, %v2780
      %v2843 = vadd.f32 %v2573, %v2782
      %v2844 = vadd.f32 %v2574, %v2785
      %v2845 = vadd.f32 %v2575, %v2787
      %v2846 = vadd.f32 %v2576, %v2790
      %v2847 = vadd.f32 %v2577, %v2792
      %v2848 = vadd.f32 %v2578, %v2795
      %v2849 = vadd.f32 %v2579, %v2797
      %v2850 = vadd.f32 %v2580, %v2800
      %v2851 = vadd.f32 %v2581, %v2802
      %v2852 = vadd.f32 %v2582, %v2805
      %v2853 = vadd.f32 %v2583, %v2807
      %v2854 = vadd.f32 %v2584, %v2810
      %v2855 = vadd.f32 %v2585, %v2812
      %v2856 = vadd.f32 %v2586, %v2815
      %v2857 = vadd.f32 %v2587, %v2817
      %v2858 = vadd.f32 %v2588, %v2820
      %v2859 = vadd.f32 %v2589, %v2822
      %v2860 = vadd.f32 %v2590, %v2825
      %v2861 = vadd.f32 %v2591, %v2827
      %v2862 = vadd.f32 %v2592, %v2830
      %v2863 = vadd.f32 %v2593, %v2832
      %v2864 = vld [vmem:[%s2594] sm:$0xf]
      %v2865 = vld [vmem:[%s2594 + $0x4] sm:$0xf]
      %v2866 = vld [vmem:[%s2594 + $0x8] sm:$0xf]
      %v2867 = vld [vmem:[%s2594 + $0xc] sm:$0x1]
      %v2868 = vld [vmem:[%s2594 + $0x10] sm:$0xf]
      %v2869 = vld [vmem:[%s2594 + $0x14] sm:$0xf]
      %v2870 = vld [vmem:[%s2594 + $0x18] sm:$0xf]
      %v2871 = vld [vmem:[%s2594 + $0x1c] sm:$0x1]
      %v2872 = vld [vmem:[%s2594 + $0x20] sm:$0xf]
      %v2873 = vld [vmem:[%s2594 + $0x24] sm:$0xf]
      %v2874 = vld [vmem:[%s2594 + $0x28] sm:$0xf]
      %v2875 = vld [vmem:[%s2594 + $0x2c] sm:$0x1]
      %v2876 = vld [vmem:[%s2594 + $0x30] sm:$0xf]
      %v2877 = vld [vmem:[%s2594 + $0x34] sm:$0xf]
      %v2878 = vld [vmem:[%s2594 + $0x38] sm:$0xf]
      %v2879 = vld [vmem:[%s2594 + $0x3c] sm:$0x1]
      %v2880 = vld [vmem:[%s2594 + $0x40] sm:$0xf]
      %v2881 = vld [vmem:[%s2594 + $0x44] sm:$0xf]
      %v2882 = vld [vmem:[%s2594 + $0x48] sm:$0xf]
      %v2883 = vld [vmem:[%s2594 + $0x4c] sm:$0x1]
      %v2884 = vld [vmem:[%s2594 + $0x50] sm:$0xf]
      %v2885 = vld [vmem:[%s2594 + $0x54] sm:$0xf]
      %v2886 = vld [vmem:[%s2594 + $0x58] sm:$0xf]
      %v2887 = vld [vmem:[%s2594 + $0x5c] sm:$0x1]
      %v2888 = vld [vmem:[%s2594 + $0x60] sm:$0xf]
      %v2889 = vld [vmem:[%s2594 + $0x64] sm:$0xf]
      %v2890 = vld [vmem:[%s2594 + $0x68] sm:$0xf]
      %v2891 = vld [vmem:[%s2594 + $0x6c] sm:$0x1]
      %v2892 = vld [vmem:[%s2594 + $0x70] sm:$0xf]
      %v2893 = vld [vmem:[%s2594 + $0x74] sm:$0xf]
      %v2894 = vld [vmem:[%s2594 + $0x78] sm:$0xf]
      %v2895 = vld [vmem:[%s2594 + $0x7c] sm:$0x1]
      %v2896 = vld [vmem:[%s2594 + $0x80] sm:$0xf]
      %v2897 = vld [vmem:[%s2594 + $0x84] sm:$0xf]
      %v2898 = vld [vmem:[%s2594 + $0x88] sm:$0xf]
      %v2899 = vld [vmem:[%s2594 + $0x8c] sm:$0x1]
      %v2900 = vld [vmem:[%s2594 + $0x90] sm:$0xf]
      %v2901 = vld [vmem:[%s2594 + $0x94] sm:$0xf]
      %v2902 = vld [vmem:[%s2594 + $0x98] sm:$0xf]
      %v2903 = vld [vmem:[%s2594 + $0x9c] sm:$0x1]
      %v2905 = vshrl.u32 %v2864, 16
      %v2907 = vrot.slane %v2905, 4
      %v2908 = vshll.u32 %v2864, 16
      %v2910 = vrot.slane %v2908, 5
      %v2911 = vor.u32 %v2907, %v2910
      %v2912 = vrot.slane %v2911, 4
      %v2914 = vshll.u32 %v2865, 16
      %v2916 = vrot.slane %v2914, 5
      %v2917 = vsel %vm305, %v2912, %v2916
      %v2918 = vshrl.u32 %v2865, 16
      %v2920 = vrot.slane %v2918, 4
      %v2921 = vor.u32 %v2920, %v2916
      %v2922 = vrot.slane %v2921, 4
      %v2924 = vshll.u32 %v2866, 16
      %v2926 = vrot.slane %v2924, 5
      %v2927 = vsel %vm305, %v2922, %v2926
      %v2928 = vshrl.u32 %v2866, 16
      %v2930 = vrot.slane %v2928, 4
      %v2931 = vor.u32 %v2930, %v2926
      %v2932 = vrot.slane %v2931, 4
      %v2934 = vshll.u32 %v2867, 16
      %v2936 = vrot.slane %v2934, 5
      %v2937 = vsel %vm305, %v2932, %v2936
      %v2939 = vshrl.u32 %v2868, 16
      %v2941 = vrot.slane %v2939, 4
      %v2942 = vshll.u32 %v2868, 16
      %v2944 = vrot.slane %v2942, 5
      %v2945 = vor.u32 %v2941, %v2944
      %v2946 = vrot.slane %v2945, 4
      %v2948 = vshll.u32 %v2869, 16
      %v2950 = vrot.slane %v2948, 5
      %v2951 = vsel %vm305, %v2946, %v2950
      %v2952 = vshrl.u32 %v2869, 16
      %v2954 = vrot.slane %v2952, 4
      %v2955 = vor.u32 %v2954, %v2950
      %v2956 = vrot.slane %v2955, 4
      %v2958 = vshll.u32 %v2870, 16
      %v2960 = vrot.slane %v2958, 5
      %v2961 = vsel %vm305, %v2956, %v2960
      %v2962 = vshrl.u32 %v2870, 16
      %v2964 = vrot.slane %v2962, 4
      %v2965 = vor.u32 %v2964, %v2960
      %v2966 = vrot.slane %v2965, 4
      %v2968 = vshll.u32 %v2871, 16
      %v2970 = vrot.slane %v2968, 5
      %v2971 = vsel %vm305, %v2966, %v2970
      %v2973 = vshrl.u32 %v2872, 16
      %v2975 = vrot.slane %v2973, 4
      %v2976 = vshll.u32 %v2872, 16
      %v2978 = vrot.slane %v2976, 5
      %v2979 = vor.u32 %v2975, %v2978
      %v2980 = vrot.slane %v2979, 4
      %v2982 = vshll.u32 %v2873, 16
      %v2984 = vrot.slane %v2982, 5
      %v2985 = vsel %vm305, %v2980, %v2984
      %v2986 = vshrl.u32 %v2873, 16
      %v2988 = vrot.slane %v2986, 4
      %v2989 = vor.u32 %v2988, %v2984
      %v2990 = vrot.slane %v2989, 4
      %v2992 = vshll.u32 %v2874, 16
      %v2994 = vrot.slane %v2992, 5
      %v2995 = vsel %vm305, %v2990, %v2994
      %v2996 = vshrl.u32 %v2874, 16
      %v2998 = vrot.slane %v2996, 4
      %v2999 = vor.u32 %v2998, %v2994
      %v3000 = vrot.slane %v2999, 4
      %v3002 = vshll.u32 %v2875, 16
      %v3004 = vrot.slane %v3002, 5
      %v3005 = vsel %vm305, %v3000, %v3004
      %v3007 = vshrl.u32 %v2876, 16
      %v3009 = vrot.slane %v3007, 4
      %v3010 = vshll.u32 %v2876, 16
      %v3012 = vrot.slane %v3010, 5
      %v3013 = vor.u32 %v3009, %v3012
      %v3014 = vrot.slane %v3013, 4
      %v3016 = vshll.u32 %v2877, 16
      %v3018 = vrot.slane %v3016, 5
      %v3019 = vsel %vm305, %v3014, %v3018
      %v3020 = vshrl.u32 %v2877, 16
      %v3022 = vrot.slane %v3020, 4
      %v3023 = vor.u32 %v3022, %v3018
      %v3024 = vrot.slane %v3023, 4
      %v3026 = vshll.u32 %v2878, 16
      %v3028 = vrot.slane %v3026, 5
      %v3029 = vsel %vm305, %v3024, %v3028
      %v3030 = vshrl.u32 %v2878, 16
      %v3032 = vrot.slane %v3030, 4
      %v3033 = vor.u32 %v3032, %v3028
      %v3034 = vrot.slane %v3033, 4
      %v3036 = vshll.u32 %v2879, 16
      %v3038 = vrot.slane %v3036, 5
      %v3039 = vsel %vm305, %v3034, %v3038
      %v3041 = vshrl.u32 %v2880, 16
      %v3043 = vrot.slane %v3041, 4
      %v3044 = vshll.u32 %v2880, 16
      %v3046 = vrot.slane %v3044, 5
      %v3047 = vor.u32 %v3043, %v3046
      %v3048 = vrot.slane %v3047, 4
      %v3050 = vshll.u32 %v2881, 16
      %v3052 = vrot.slane %v3050, 5
      %v3053 = vsel %vm305, %v3048, %v3052
      %v3054 = vshrl.u32 %v2881, 16
      %v3056 = vrot.slane %v3054, 4
      %v3057 = vor.u32 %v3056, %v3052
      %v3058 = vrot.slane %v3057, 4
      %v3060 = vshll.u32 %v2882, 16
      %v3062 = vrot.slane %v3060, 5
      %v3063 = vsel %vm305, %v3058, %v3062
      %v3064 = vshrl.u32 %v2882, 16
      %v3066 = vrot.slane %v3064, 4
      %v3067 = vor.u32 %v3066, %v3062
      %v3068 = vrot.slane %v3067, 4
      %v3070 = vshll.u32 %v2883, 16
      %v3072 = vrot.slane %v3070, 5
      %v3073 = vsel %vm305, %v3068, %v3072
      %v3075 = vshrl.u32 %v2884, 16
      %v3077 = vrot.slane %v3075, 4
      %v3078 = vshll.u32 %v2884, 16
      %v3080 = vrot.slane %v3078, 5
      %v3081 = vor.u32 %v3077, %v3080
      %v3082 = vrot.slane %v3081, 4
      %v3084 = vshll.u32 %v2885, 16
      %v3086 = vrot.slane %v3084, 5
      %v3087 = vsel %vm305, %v3082, %v3086
      %v3088 = vshrl.u32 %v2885, 16
      %v3090 = vrot.slane %v3088, 4
      %v3091 = vor.u32 %v3090, %v3086
      %v3092 = vrot.slane %v3091, 4
      %v3094 = vshll.u32 %v2886, 16
      %v3096 = vrot.slane %v3094, 5
      %v3097 = vsel %vm305, %v3092, %v3096
      %v3098 = vshrl.u32 %v2886, 16
      %v3100 = vrot.slane %v3098, 4
      %v3101 = vor.u32 %v3100, %v3096
      %v3102 = vrot.slane %v3101, 4
      %v3104 = vshll.u32 %v2887, 16
      %v3106 = vrot.slane %v3104, 5
      %v3107 = vsel %vm305, %v3102, %v3106
      %v3109 = vshrl.u32 %v2888, 16
      %v3111 = vrot.slane %v3109, 4
      %v3112 = vshll.u32 %v2888, 16
      %v3114 = vrot.slane %v3112, 5
      %v3115 = vor.u32 %v3111, %v3114
      %v3116 = vrot.slane %v3115, 4
      %v3118 = vshll.u32 %v2889, 16
      %v3120 = vrot.slane %v3118, 5
      %v3121 = vsel %vm305, %v3116, %v3120
      %v3122 = vshrl.u32 %v2889, 16
      %v3124 = vrot.slane %v3122, 4
      %v3125 = vor.u32 %v3124, %v3120
      %v3126 = vrot.slane %v3125, 4
      %v3128 = vshll.u32 %v2890, 16
      %v3130 = vrot.slane %v3128, 5
      %v3131 = vsel %vm305, %v3126, %v3130
      %v3132 = vshrl.u32 %v2890, 16
      %v3134 = vrot.slane %v3132, 4
      %v3135 = vor.u32 %v3134, %v3130
      %v3136 = vrot.slane %v3135, 4
      %v3138 = vshll.u32 %v2891, 16
      %v3140 = vrot.slane %v3138, 5
      %v3141 = vsel %vm305, %v3136, %v3140
      %v3143 = vshrl.u32 %v2892, 16
      %v3145 = vrot.slane %v3143, 4
      %v3146 = vshll.u32 %v2892, 16
      %v3148 = vrot.slane %v3146, 5
      %v3149 = vor.u32 %v3145, %v3148
      %v3150 = vrot.slane %v3149, 4
      %v3152 = vshll.u32 %v2893, 16
      %v3154 = vrot.slane %v3152, 5
      %v3155 = vsel %vm305, %v3150, %v3154
      %v3156 = vshrl.u32 %v2893, 16
      %v3158 = vrot.slane %v3156, 4
      %v3159 = vor.u32 %v3158, %v3154
      %v3160 = vrot.slane %v3159, 4
      %v3162 = vshll.u32 %v2894, 16
      %v3164 = vrot.slane %v3162, 5
      %v3165 = vsel %vm305, %v3160, %v3164
      %v3166 = vshrl.u32 %v2894, 16
      %v3168 = vrot.slane %v3166, 4
      %v3169 = vor.u32 %v3168, %v3164
      %v3170 = vrot.slane %v3169, 4
      %v3172 = vshll.u32 %v2895, 16
      %v3174 = vrot.slane %v3172, 5
      %v3175 = vsel %vm305, %v3170, %v3174
      %v3177 = vshrl.u32 %v2896, 16
      %v3179 = vrot.slane %v3177, 4
      %v3180 = vshll.u32 %v2896, 16
      %v3182 = vrot.slane %v3180, 5
      %v3183 = vor.u32 %v3179, %v3182
      %v3184 = vrot.slane %v3183, 4
      %v3186 = vshll.u32 %v2897, 16
      %v3188 = vrot.slane %v3186, 5
      %v3189 = vsel %vm305, %v3184, %v3188
      %v3190 = vshrl.u32 %v2897, 16
      %v3192 = vrot.slane %v3190, 4
      %v3193 = vor.u32 %v3192, %v3188
      %v3194 = vrot.slane %v3193, 4
      %v3196 = vshll.u32 %v2898, 16
      %v3198 = vrot.slane %v3196, 5
      %v3199 = vsel %vm305, %v3194, %v3198
      %v3200 = vshrl.u32 %v2898, 16
      %v3202 = vrot.slane %v3200, 4
      %v3203 = vor.u32 %v3202, %v3198
      %v3204 = vrot.slane %v3203, 4
      %v3206 = vshll.u32 %v2899, 16
      %v3208 = vrot.slane %v3206, 5
      %v3209 = vsel %vm305, %v3204, %v3208
      %v3211 = vshrl.u32 %v2900, 16
      %v3213 = vrot.slane %v3211, 4
      %v3214 = vshll.u32 %v2900, 16
      %v3216 = vrot.slane %v3214, 5
      %v3217 = vor.u32 %v3213, %v3216
      %v3218 = vrot.slane %v3217, 4
      %v3220 = vshll.u32 %v2901, 16
      %v3222 = vrot.slane %v3220, 5
      %v3223 = vsel %vm305, %v3218, %v3222
      %v3224 = vshrl.u32 %v2901, 16
      %v3226 = vrot.slane %v3224, 4
      %v3227 = vor.u32 %v3226, %v3222
      %v3228 = vrot.slane %v3227, 4
      %v3230 = vshll.u32 %v2902, 16
      %v3232 = vrot.slane %v3230, 5
      %v3233 = vsel %vm305, %v3228, %v3232
      %v3234 = vshrl.u32 %v2902, 16
      %v3236 = vrot.slane %v3234, 4
      %v3237 = vor.u32 %v3236, %v3232
      %v3238 = vrot.slane %v3237, 4
      %v3240 = vshll.u32 %v2903, 16
      %v3242 = vrot.slane %v3240, 5
      %v3243 = vsel %vm305, %v3238, %v3242
      %s3244 = scalar_lea.vmem %s1, 14
      %v3245 = vld [vmem:[%s3244] sm:$0x3]
      %v3246 = vunpack.c.l.b16 %v2917
      %v3247 = vunpack.c.l.b16 %v2927
      %v3248 = vunpack.c.l.b16 %v2937
      %v3249 = vunpack.c.l.b16 %v2951
      %v3250 = vunpack.c.l.b16 %v2961
      %v3251 = vunpack.c.l.b16 %v2971
      %v3252 = vunpack.c.l.b16 %v2985
      %v3253 = vunpack.c.l.b16 %v2995
      %v3254 = vunpack.c.l.b16 %v3005
      %v3255 = vunpack.c.l.b16 %v3019
      %v3256 = vunpack.c.l.b16 %v3029
      %v3257 = vunpack.c.l.b16 %v3039
      %v3258 = vunpack.c.l.b16 %v3053
      %v3259 = vunpack.c.l.b16 %v3063
      %v3260 = vunpack.c.l.b16 %v3073
      %v3261 = vunpack.c.l.b16 %v3087
      %v3262 = vunpack.c.l.b16 %v3097
      %v3263 = vunpack.c.l.b16 %v3107
      %v3264 = vunpack.c.l.b16 %v3121
      %v3265 = vunpack.c.l.b16 %v3131
      %v3266 = vunpack.c.l.b16 %v3141
      %v3267 = vunpack.c.l.b16 %v3155
      %v3268 = vunpack.c.l.b16 %v3165
      %v3269 = vunpack.c.l.b16 %v3175
      %v3270 = vunpack.c.l.b16 %v3189
      %v3271 = vunpack.c.l.b16 %v3199
      %v3272 = vunpack.c.l.b16 %v3209
      %v3273 = vunpack.c.l.b16 %v3223
      %v3274 = vunpack.c.l.b16 %v3233
      %v3275 = vunpack.c.l.b16 %v3243
      %v3276 = vpack.c.b16 %v3247, %v3246
      %v3277 = vpack.c.b16 %v3249, %v3248
      %v3278 = vpack.c.b16 %v3251, %v3250
      %v3279 = vpack.c.b16 %v3253, %v3252
      %v3280 = vpack.c.b16 %v3255, %v3254
      %v3281 = vpack.c.b16 %v3257, %v3256
      %v3282 = vpack.c.b16 %v3259, %v3258
      %v3283 = vpack.c.b16 %v3261, %v3260
      %v3284 = vpack.c.b16 %v3263, %v3262
      %v3285 = vpack.c.b16 %v3265, %v3264
      %v3286 = vpack.c.b16 %v3267, %v3266
      %v3287 = vpack.c.b16 %v3269, %v3268
      %v3288 = vpack.c.b16 %v3271, %v3270
      %v3289 = vpack.c.b16 %v3273, %v3272
      %v3290 = vpack.c.b16 %v3275, %v3274
      %v3292 = vsel %vm693, %v3276, 0
      %v3295 = vsel %vm693, %v3277, 0
      %v3298 = vsel %vm693, %v3278, 0
      %v3301 = vsel %vm693, %v3279, 0
      %v3304 = vsel %vm693, %v3280, 0
      %v3307 = vsel %vm693, %v3281, 0
      %v3310 = vsel %vm693, %v3282, 0
      %v3313 = vsel %vm693, %v3283, 0
      %v3316 = vsel %vm693, %v3284, 0
      %v3319 = vsel %vm693, %v3285, 0
      %v3322 = vsel %vm693, %v3286, 0
      %v3325 = vsel %vm693, %v3287, 0
      %v3328 = vsel %vm693, %v3288, 0
      %v3331 = vsel %vm693, %v3289, 0
      %v3334 = vsel %vm693, %v3290, 0
      %v3337 = vsel %vm739, %v3245, 0
      %3339 = vmatpush.bf16.msra.mxu0 0
      %3340 = vmatpush.bf16.msra.mxu0 0
      %3341 = vmatpush.bf16.msra.mxu0 0
      %3342 = vmatpush.bf16.msra.mxu0 0
      %3343 = vmatpush.bf16.msra.mxu0 0
      %3344 = vmatpush.bf16.msra.mxu0 0
      %3345 = vmatpush.bf16.msra.mxu0 0
      %3346 = vmatpush.bf16.msra.mxu0 %v3337
      %3347 = vmatmul.bf16.gmra.mxu0 %v3292
      %v3348 = vpop.f32.mrf.mxu0
      %v3349 = vadd.f32 0.0, %v3348
      %v3350 = vpop.f32.mrf.mxu0
      %v3351 = vadd.f32 0.0, %v3350
      %3352 = vmatmul.bf16.gmra.mxu0 %v3295
      %v3353 = vpop.f32.mrf.mxu0
      %v3354 = vadd.f32 0.0, %v3353
      %v3355 = vpop.f32.mrf.mxu0
      %v3356 = vadd.f32 0.0, %v3355
      %3357 = vmatmul.bf16.gmra.mxu0 %v3298
      %v3358 = vpop.f32.mrf.mxu0
      %v3359 = vadd.f32 0.0, %v3358
      %v3360 = vpop.f32.mrf.mxu0
      %v3361 = vadd.f32 0.0, %v3360
      %3362 = vmatmul.bf16.gmra.mxu0 %v3301
      %v3363 = vpop.f32.mrf.mxu0
      %v3364 = vadd.f32 0.0, %v3363
      %v3365 = vpop.f32.mrf.mxu0
      %v3366 = vadd.f32 0.0, %v3365
      %3367 = vmatmul.bf16.gmra.mxu0 %v3304
      %v3368 = vpop.f32.mrf.mxu0
      %v3369 = vadd.f32 0.0, %v3368
      %v3370 = vpop.f32.mrf.mxu0
      %v3371 = vadd.f32 0.0, %v3370
      %3372 = vmatmul.bf16.gmra.mxu0 %v3307
      %v3373 = vpop.f32.mrf.mxu0
      %v3374 = vadd.f32 0.0, %v3373
      %v3375 = vpop.f32.mrf.mxu0
      %v3376 = vadd.f32 0.0, %v3375
      %3377 = vmatmul.bf16.gmra.mxu0 %v3310
      %v3378 = vpop.f32.mrf.mxu0
      %v3379 = vadd.f32 0.0, %v3378
      %v3380 = vpop.f32.mrf.mxu0
      %v3381 = vadd.f32 0.0, %v3380
      %3382 = vmatmul.bf16.gmra.mxu0 %v3313
      %v3383 = vpop.f32.mrf.mxu0
      %v3384 = vadd.f32 0.0, %v3383
      %v3385 = vpop.f32.mrf.mxu0
      %v3386 = vadd.f32 0.0, %v3385
      %3387 = vmatmul.bf16.gmra.mxu0 %v3316
      %v3388 = vpop.f32.mrf.mxu0
      %v3389 = vadd.f32 0.0, %v3388
      %v3390 = vpop.f32.mrf.mxu0
      %v3391 = vadd.f32 0.0, %v3390
      %3392 = vmatmul.bf16.gmra.mxu0 %v3319
      %v3393 = vpop.f32.mrf.mxu0
      %v3394 = vadd.f32 0.0, %v3393
      %v3395 = vpop.f32.mrf.mxu0
      %v3396 = vadd.f32 0.0, %v3395
      %3397 = vmatmul.bf16.gmra.mxu0 %v3322
      %v3398 = vpop.f32.mrf.mxu0
      %v3399 = vadd.f32 0.0, %v3398
      %v3400 = vpop.f32.mrf.mxu0
      %v3401 = vadd.f32 0.0, %v3400
      %3402 = vmatmul.bf16.gmra.mxu0 %v3325
      %v3403 = vpop.f32.mrf.mxu0
      %v3404 = vadd.f32 0.0, %v3403
      %v3405 = vpop.f32.mrf.mxu0
      %v3406 = vadd.f32 0.0, %v3405
      %3407 = vmatmul.bf16.gmra.mxu0 %v3328
      %v3408 = vpop.f32.mrf.mxu0
      %v3409 = vadd.f32 0.0, %v3408
      %v3410 = vpop.f32.mrf.mxu0
      %v3411 = vadd.f32 0.0, %v3410
      %3412 = vmatmul.bf16.gmra.mxu0 %v3331
      %v3413 = vpop.f32.mrf.mxu0
      %v3414 = vadd.f32 0.0, %v3413
      %v3415 = vpop.f32.mrf.mxu0
      %v3416 = vadd.f32 0.0, %v3415
      %3417 = vmatmul.bf16.gmra.mxu0 %v3334
      %v3418 = vpop.f32.mrf.mxu0
      %v3419 = vadd.f32 0.0, %v3418
      %v3420 = vpop.f32.mrf.mxu0
      %v3421 = vadd.f32 0.0, %v3420
      %3422 = vdwg.mxu0
      %v3423 = vadd.f32 %v2834, %v3349
      %v3424 = vadd.f32 %v2835, %v3351
      %v3425 = vadd.f32 %v2836, %v3354
      %v3426 = vadd.f32 %v2837, %v3356
      %v3427 = vadd.f32 %v2838, %v3359
      %v3428 = vadd.f32 %v2839, %v3361
      %v3429 = vadd.f32 %v2840, %v3364
      %v3430 = vadd.f32 %v2841, %v3366
      %v3431 = vadd.f32 %v2842, %v3369
      %v3432 = vadd.f32 %v2843, %v3371
      %v3433 = vadd.f32 %v2844, %v3374
      %v3434 = vadd.f32 %v2845, %v3376
      %v3435 = vadd.f32 %v2846, %v3379
      %v3436 = vadd.f32 %v2847, %v3381
      %v3437 = vadd.f32 %v2848, %v3384
      %v3438 = vadd.f32 %v2849, %v3386
      %v3439 = vadd.f32 %v2850, %v3389
      %v3440 = vadd.f32 %v2851, %v3391
      %v3441 = vadd.f32 %v2852, %v3394
      %v3442 = vadd.f32 %v2853, %v3396
      %v3443 = vadd.f32 %v2854, %v3399
      %v3444 = vadd.f32 %v2855, %v3401
      %v3445 = vadd.f32 %v2856, %v3404
      %v3446 = vadd.f32 %v2857, %v3406
      %v3447 = vadd.f32 %v2858, %v3409
      %v3448 = vadd.f32 %v2859, %v3411
      %v3449 = vadd.f32 %v2860, %v3414
      %v3450 = vadd.f32 %v2861, %v3416
      %v3451 = vadd.f32 %v2862, %v3419
      %v3452 = vadd.f32 %v2863, %v3421
      %v3453 = vld [vmem:[%s2594] sm:$0xe]
      %v3454 = vld [vmem:[%s2594 + $0x10] sm:$0xe]
      %v3455 = vld [vmem:[%s2594 + $0x20] sm:$0xe]
      %v3456 = vld [vmem:[%s2594 + $0x30] sm:$0xe]
      %v3457 = vld [vmem:[%s2594 + $0x40] sm:$0xe]
      %v3458 = vld [vmem:[%s2594 + $0x50] sm:$0xe]
      %v3459 = vld [vmem:[%s2594 + $0x60] sm:$0xe]
      %v3460 = vld [vmem:[%s2594 + $0x70] sm:$0xe]
      %v3461 = vld [vmem:[%s2594 + $0x80] sm:$0xe]
      %v3462 = vld [vmem:[%s2594 + $0x90] sm:$0xe]
      %v3503 = vrot.slane %v3453, 5
      %v3504 = vrot.slane %v3503, 4
      %v3505 = vrot.slane %v2865, 5
      %v3506 = vsel %vm1066, %v3504, %v3505
      %v3507 = vrot.slane %v3505, 4
      %v3508 = vrot.slane %v2866, 5
      %v3509 = vsel %vm1066, %v3507, %v3508
      %v3510 = vrot.slane %v3508, 4
      %v3511 = vrot.slane %v2867, 5
      %v3512 = vsel %vm1066, %v3510, %v3511
      %v3513 = vrot.slane %v3454, 5
      %v3514 = vrot.slane %v3513, 4
      %v3515 = vrot.slane %v2869, 5
      %v3516 = vsel %vm1066, %v3514, %v3515
      %v3517 = vrot.slane %v3515, 4
      %v3518 = vrot.slane %v2870, 5
      %v3519 = vsel %vm1066, %v3517, %v3518
      %v3520 = vrot.slane %v3518, 4
      %v3521 = vrot.slane %v2871, 5
      %v3522 = vsel %vm1066, %v3520, %v3521
      %v3523 = vrot.slane %v3455, 5
      %v3524 = vrot.slane %v3523, 4
      %v3525 = vrot.slane %v2873, 5
      %v3526 = vsel %vm1066, %v3524, %v3525
      %v3527 = vrot.slane %v3525, 4
      %v3528 = vrot.slane %v2874, 5
      %v3529 = vsel %vm1066, %v3527, %v3528
      %v3530 = vrot.slane %v3528, 4
      %v3531 = vrot.slane %v2875, 5
      %v3532 = vsel %vm1066, %v3530, %v3531
      %v3533 = vrot.slane %v3456, 5
      %v3534 = vrot.slane %v3533, 4
      %v3535 = vrot.slane %v2877, 5
      %v3536 = vsel %vm1066, %v3534, %v3535
      %v3537 = vrot.slane %v3535, 4
      %v3538 = vrot.slane %v2878, 5
      %v3539 = vsel %vm1066, %v3537, %v3538
      %v3540 = vrot.slane %v3538, 4
      %v3541 = vrot.slane %v2879, 5
      %v3542 = vsel %vm1066, %v3540, %v3541
      %v3543 = vrot.slane %v3457, 5
      %v3544 = vrot.slane %v3543, 4
      %v3545 = vrot.slane %v2881, 5
      %v3546 = vsel %vm1066, %v3544, %v3545
      %v3547 = vrot.slane %v3545, 4
      %v3548 = vrot.slane %v2882, 5
      %v3549 = vsel %vm1066, %v3547, %v3548
      %v3550 = vrot.slane %v3548, 4
      %v3551 = vrot.slane %v2883, 5
      %v3552 = vsel %vm1066, %v3550, %v3551
      %v3553 = vrot.slane %v3458, 5
      %v3554 = vrot.slane %v3553, 4
      %v3555 = vrot.slane %v2885, 5
      %v3556 = vsel %vm1066, %v3554, %v3555
      %v3557 = vrot.slane %v3555, 4
      %v3558 = vrot.slane %v2886, 5
      %v3559 = vsel %vm1066, %v3557, %v3558
      %v3560 = vrot.slane %v3558, 4
      %v3561 = vrot.slane %v2887, 5
      %v3562 = vsel %vm1066, %v3560, %v3561
      %v3563 = vrot.slane %v3459, 5
      %v3564 = vrot.slane %v3563, 4
      %v3565 = vrot.slane %v2889, 5
      %v3566 = vsel %vm1066, %v3564, %v3565
      %v3567 = vrot.slane %v3565, 4
      %v3568 = vrot.slane %v2890, 5
      %v3569 = vsel %vm1066, %v3567, %v3568
      %v3570 = vrot.slane %v3568, 4
      %v3571 = vrot.slane %v2891, 5
      %v3572 = vsel %vm1066, %v3570, %v3571
      %v3573 = vrot.slane %v3460, 5
      %v3574 = vrot.slane %v3573, 4
      %v3575 = vrot.slane %v2893, 5
      %v3576 = vsel %vm1066, %v3574, %v3575
      %v3577 = vrot.slane %v3575, 4
      %v3578 = vrot.slane %v2894, 5
      %v3579 = vsel %vm1066, %v3577, %v3578
      %v3580 = vrot.slane %v3578, 4
      %v3581 = vrot.slane %v2895, 5
      %v3582 = vsel %vm1066, %v3580, %v3581
      %v3583 = vrot.slane %v3461, 5
      %v3584 = vrot.slane %v3583, 4
      %v3585 = vrot.slane %v2897, 5
      %v3586 = vsel %vm1066, %v3584, %v3585
      %v3587 = vrot.slane %v3585, 4
      %v3588 = vrot.slane %v2898, 5
      %v3589 = vsel %vm1066, %v3587, %v3588
      %v3590 = vrot.slane %v3588, 4
      %v3591 = vrot.slane %v2899, 5
      %v3592 = vsel %vm1066, %v3590, %v3591
      %v3593 = vrot.slane %v3462, 5
      %v3594 = vrot.slane %v3593, 4
      %v3595 = vrot.slane %v2901, 5
      %v3596 = vsel %vm1066, %v3594, %v3595
      %v3597 = vrot.slane %v3595, 4
      %v3598 = vrot.slane %v2902, 5
      %v3599 = vsel %vm1066, %v3597, %v3598
      %v3600 = vrot.slane %v3598, 4
      %v3601 = vrot.slane %v2903, 5
      %v3602 = vsel %vm1066, %v3600, %v3601
      %s3603 = scalar_lea.vmem %s1, 16
      %v3604 = vld [vmem:[%s3603] sm:$0x3]
      %v3605 = vunpack.c.l.b16 %v3506
      %v3606 = vunpack.c.l.b16 %v3509
      %v3607 = vunpack.c.l.b16 %v3512
      %v3608 = vunpack.c.l.b16 %v3516
      %v3609 = vunpack.c.l.b16 %v3519
      %v3610 = vunpack.c.l.b16 %v3522
      %v3611 = vunpack.c.l.b16 %v3526
      %v3612 = vunpack.c.l.b16 %v3529
      %v3613 = vunpack.c.l.b16 %v3532
      %v3614 = vunpack.c.l.b16 %v3536
      %v3615 = vunpack.c.l.b16 %v3539
      %v3616 = vunpack.c.l.b16 %v3542
      %v3617 = vunpack.c.l.b16 %v3546
      %v3618 = vunpack.c.l.b16 %v3549
      %v3619 = vunpack.c.l.b16 %v3552
      %v3620 = vunpack.c.l.b16 %v3556
      %v3621 = vunpack.c.l.b16 %v3559
      %v3622 = vunpack.c.l.b16 %v3562
      %v3623 = vunpack.c.l.b16 %v3566
      %v3624 = vunpack.c.l.b16 %v3569
      %v3625 = vunpack.c.l.b16 %v3572
      %v3626 = vunpack.c.l.b16 %v3576
      %v3627 = vunpack.c.l.b16 %v3579
      %v3628 = vunpack.c.l.b16 %v3582
      %v3629 = vunpack.c.l.b16 %v3586
      %v3630 = vunpack.c.l.b16 %v3589
      %v3631 = vunpack.c.l.b16 %v3592
      %v3632 = vunpack.c.l.b16 %v3596
      %v3633 = vunpack.c.l.b16 %v3599
      %v3634 = vunpack.c.l.b16 %v3602
      %v3635 = vpack.c.b16 %v3606, %v3605
      %v3636 = vpack.c.b16 %v3608, %v3607
      %v3637 = vpack.c.b16 %v3610, %v3609
      %v3638 = vpack.c.b16 %v3612, %v3611
      %v3639 = vpack.c.b16 %v3614, %v3613
      %v3640 = vpack.c.b16 %v3616, %v3615
      %v3641 = vpack.c.b16 %v3618, %v3617
      %v3642 = vpack.c.b16 %v3620, %v3619
      %v3643 = vpack.c.b16 %v3622, %v3621
      %v3644 = vpack.c.b16 %v3624, %v3623
      %v3645 = vpack.c.b16 %v3626, %v3625
      %v3646 = vpack.c.b16 %v3628, %v3627
      %v3647 = vpack.c.b16 %v3630, %v3629
      %v3648 = vpack.c.b16 %v3632, %v3631
      %v3649 = vpack.c.b16 %v3634, %v3633
      %v3651 = vsel %vm693, %v3635, 0
      %v3654 = vsel %vm693, %v3636, 0
      %v3657 = vsel %vm693, %v3637, 0
      %v3660 = vsel %vm693, %v3638, 0
      %v3663 = vsel %vm693, %v3639, 0
      %v3666 = vsel %vm693, %v3640, 0
      %v3669 = vsel %vm693, %v3641, 0
      %v3672 = vsel %vm693, %v3642, 0
      %v3675 = vsel %vm693, %v3643, 0
      %v3678 = vsel %vm693, %v3644, 0
      %v3681 = vsel %vm693, %v3645, 0
      %v3684 = vsel %vm693, %v3646, 0
      %v3687 = vsel %vm693, %v3647, 0
      %v3690 = vsel %vm693, %v3648, 0
      %v3693 = vsel %vm693, %v3649, 0
      %v3696 = vsel %vm739, %v3604, 0
      %3698 = vmatpush.bf16.msra.mxu0 0
      %3699 = vmatpush.bf16.msra.mxu0 0
      %3700 = vmatpush.bf16.msra.mxu0 0
      %3701 = vmatpush.bf16.msra.mxu0 0
      %3702 = vmatpush.bf16.msra.mxu0 0
      %3703 = vmatpush.bf16.msra.mxu0 0
      %3704 = vmatpush.bf16.msra.mxu0 0
      %3705 = vmatpush.bf16.msra.mxu0 %v3696
      %3706 = vmatmul.bf16.gmra.mxu0 %v3651
      %v3707 = vpop.f32.mrf.mxu0
      %v3708 = vadd.f32 0.0, %v3707
      %v3709 = vpop.f32.mrf.mxu0
      %v3710 = vadd.f32 0.0, %v3709
      %3711 = vmatmul.bf16.gmra.mxu0 %v3654
      %v3712 = vpop.f32.mrf.mxu0
      %v3713 = vadd.f32 0.0, %v3712
      %v3714 = vpop.f32.mrf.mxu0
      %v3715 = vadd.f32 0.0, %v3714
      %3716 = vmatmul.bf16.gmra.mxu0 %v3657
      %v3717 = vpop.f32.mrf.mxu0
      %v3718 = vadd.f32 0.0, %v3717
      %v3719 = vpop.f32.mrf.mxu0
      %v3720 = vadd.f32 0.0, %v3719
      %3721 = vmatmul.bf16.gmra.mxu0 %v3660
      %v3722 = vpop.f32.mrf.mxu0
      %v3723 = vadd.f32 0.0, %v3722
      %v3724 = vpop.f32.mrf.mxu0
      %v3725 = vadd.f32 0.0, %v3724
      %3726 = vmatmul.bf16.gmra.mxu0 %v3663
      %v3727 = vpop.f32.mrf.mxu0
      %v3728 = vadd.f32 0.0, %v3727
      %v3729 = vpop.f32.mrf.mxu0
      %v3730 = vadd.f32 0.0, %v3729
      %3731 = vmatmul.bf16.gmra.mxu0 %v3666
      %v3732 = vpop.f32.mrf.mxu0
      %v3733 = vadd.f32 0.0, %v3732
      %v3734 = vpop.f32.mrf.mxu0
      %v3735 = vadd.f32 0.0, %v3734
      %3736 = vmatmul.bf16.gmra.mxu0 %v3669
      %v3737 = vpop.f32.mrf.mxu0
      %v3738 = vadd.f32 0.0, %v3737
      %v3739 = vpop.f32.mrf.mxu0
      %v3740 = vadd.f32 0.0, %v3739
      %3741 = vmatmul.bf16.gmra.mxu0 %v3672
      %v3742 = vpop.f32.mrf.mxu0
      %v3743 = vadd.f32 0.0, %v3742
      %v3744 = vpop.f32.mrf.mxu0
      %v3745 = vadd.f32 0.0, %v3744
      %3746 = vmatmul.bf16.gmra.mxu0 %v3675
      %v3747 = vpop.f32.mrf.mxu0
      %v3748 = vadd.f32 0.0, %v3747
      %v3749 = vpop.f32.mrf.mxu0
      %v3750 = vadd.f32 0.0, %v3749
      %3751 = vmatmul.bf16.gmra.mxu0 %v3678
      %v3752 = vpop.f32.mrf.mxu0
      %v3753 = vadd.f32 0.0, %v3752
      %v3754 = vpop.f32.mrf.mxu0
      %v3755 = vadd.f32 0.0, %v3754
      %3756 = vmatmul.bf16.gmra.mxu0 %v3681
      %v3757 = vpop.f32.mrf.mxu0
      %v3758 = vadd.f32 0.0, %v3757
      %v3759 = vpop.f32.mrf.mxu0
      %v3760 = vadd.f32 0.0, %v3759
      %3761 = vmatmul.bf16.gmra.mxu0 %v3684
      %v3762 = vpop.f32.mrf.mxu0
      %v3763 = vadd.f32 0.0, %v3762
      %v3764 = vpop.f32.mrf.mxu0
      %v3765 = vadd.f32 0.0, %v3764
      %3766 = vmatmul.bf16.gmra.mxu0 %v3687
      %v3767 = vpop.f32.mrf.mxu0
      %v3768 = vadd.f32 0.0, %v3767
      %v3769 = vpop.f32.mrf.mxu0
      %v3770 = vadd.f32 0.0, %v3769
      %3771 = vmatmul.bf16.gmra.mxu0 %v3690
      %v3772 = vpop.f32.mrf.mxu0
      %v3773 = vadd.f32 0.0, %v3772
      %v3774 = vpop.f32.mrf.mxu0
      %v3775 = vadd.f32 0.0, %v3774
      %3776 = vmatmul.bf16.gmra.mxu0 %v3693
      %v3777 = vpop.f32.mrf.mxu0
      %v3778 = vadd.f32 0.0, %v3777
      %v3779 = vpop.f32.mrf.mxu0
      %v3780 = vadd.f32 0.0, %v3779
      %3781 = vdwg.mxu0
      %v3782 = vadd.f32 %v3423, %v3708
      %v3783 = vadd.f32 %v3424, %v3710
      %v3784 = vadd.f32 %v3425, %v3713
      %v3785 = vadd.f32 %v3426, %v3715
      %v3786 = vadd.f32 %v3427, %v3718
      %v3787 = vadd.f32 %v3428, %v3720
      %v3788 = vadd.f32 %v3429, %v3723
      %v3789 = vadd.f32 %v3430, %v3725
      %v3790 = vadd.f32 %v3431, %v3728
      %v3791 = vadd.f32 %v3432, %v3730
      %v3792 = vadd.f32 %v3433, %v3733
      %v3793 = vadd.f32 %v3434, %v3735
      %v3794 = vadd.f32 %v3435, %v3738
      %v3795 = vadd.f32 %v3436, %v3740
      %v3796 = vadd.f32 %v3437, %v3743
      %v3797 = vadd.f32 %v3438, %v3745
      %v3798 = vadd.f32 %v3439, %v3748
      %v3799 = vadd.f32 %v3440, %v3750
      %v3800 = vadd.f32 %v3441, %v3753
      %v3801 = vadd.f32 %v3442, %v3755
      %v3802 = vadd.f32 %v3443, %v3758
      %v3803 = vadd.f32 %v3444, %v3760
      %v3804 = vadd.f32 %v3445, %v3763
      %v3805 = vadd.f32 %v3446, %v3765
      %v3806 = vadd.f32 %v3447, %v3768
      %v3807 = vadd.f32 %v3448, %v3770
      %v3808 = vadd.f32 %v3449, %v3773
      %v3809 = vadd.f32 %v3450, %v3775
      %v3810 = vadd.f32 %v3451, %v3778
      %v3811 = vadd.f32 %v3452, %v3780
      %s3812 = smul.u32 %s21, 8
      %s3813 = ssub.s32 %s3812, 1
      %v3814 = vstv %s3813
      %v3815 = vadd.s32 %v3814, 1
      %v3816 = vadd.s32 %v3814, 2
      %v3817 = vadd.s32 %v3814, 3
      %v3818 = vadd.s32 %v3814, 4
      %v3819 = vadd.s32 %v3814, 5
      %v3820 = vadd.s32 %v3814, 6
      %v3821 = vadd.s32 %v3814, 7
      %v3822 = vadd.s32 %v3814, 8
      %v3823 = vadd.s32 %v3814, 9
      %v3824 = vlaneseq
      %v3825 = vshrl.u32 %v3824, 7
      %v3826 = vadd.s32 %v3825, 8
      %v3827 = vadd.s32 %v3825, 16
      %vm3828 = vcmp.ge.s32.totalorder %v3814, 0
      %vm3829 = vcmp.ge.s32.totalorder %v3815, 0
      %vm3830 = vcmp.ge.s32.totalorder %v3816, 0
      %vm3831 = vcmp.ge.s32.totalorder %v3817, 0
      %vm3832 = vcmp.ge.s32.totalorder %v3818, 0
      %vm3833 = vcmp.ge.s32.totalorder %v3819, 0
      %vm3834 = vcmp.ge.s32.totalorder %v3820, 0
      %vm3835 = vcmp.ge.s32.totalorder %v3821, 0
      %vm3836 = vcmp.ge.s32.totalorder %v3822, 0
      %vm3837 = vcmp.ge.s32.totalorder %v3823, 0
      %vm3838 = vcmp.lt.s32.totalorder %v3814, 16
      %vm3839 = vcmp.lt.s32.totalorder %v3815, 16
      %vm3840 = vcmp.lt.s32.totalorder %v3816, 16
      %vm3841 = vcmp.lt.s32.totalorder %v3817, 16
      %vm3842 = vcmp.lt.s32.totalorder %v3818, 16
      %vm3843 = vcmp.lt.s32.totalorder %v3819, 16
      %vm3844 = vcmp.lt.s32.totalorder %v3820, 16
      %vm3845 = vcmp.lt.s32.totalorder %v3821, 16
      %vm3846 = vcmp.lt.s32.totalorder %v3822, 16
      %vm3847 = vcmp.lt.s32.totalorder %v3823, 16
      %vm3848 = vmand %vm3828, %vm3838
      %vm3849 = vmand %vm3829, %vm3839
      %vm3850 = vmand %vm3830, %vm3840
      %vm3851 = vmand %vm3831, %vm3841
      %vm3852 = vmand %vm3832, %vm3842
      %vm3853 = vmand %vm3833, %vm3843
      %vm3854 = vmand %vm3834, %vm3844
      %vm3855 = vmand %vm3835, %vm3845
      %vm3856 = vmand %vm3836, %vm3846
      %vm3857 = vmand %vm3837, %vm3847
      %vm3858 = vcmp.ge.s32.totalorder %v3825, 1
      %vm3859 = vcmp.ge.s32.totalorder %v3826, 1
      %vm3860 = vcmp.ge.s32.totalorder %v3827, 1
      %vm3861 = vmand %vm3848, %vm3858
      %vm3862 = vmand %vm3848, %vm3859
      %vm3863 = vmand %vm3848, %vm3860
      %vm3864 = vmand %vm3849, %vm3858
      %vm3865 = vmand %vm3849, %vm3859
      %vm3866 = vmand %vm3849, %vm3860
      %vm3867 = vmand %vm3850, %vm3858
      %vm3868 = vmand %vm3850, %vm3859
      %vm3869 = vmand %vm3850, %vm3860
      %vm3870 = vmand %vm3851, %vm3858
      %vm3871 = vmand %vm3851, %vm3859
      %vm3872 = vmand %vm3851, %vm3860
      %vm3873 = vmand %vm3852, %vm3858
      %vm3874 = vmand %vm3852, %vm3859
      %vm3875 = vmand %vm3852, %vm3860
      %vm3876 = vmand %vm3853, %vm3858
      %vm3877 = vmand %vm3853, %vm3859
      %vm3878 = vmand %vm3853, %vm3860
      %vm3879 = vmand %vm3854, %vm3858
      %vm3880 = vmand %vm3854, %vm3859
      %vm3881 = vmand %vm3854, %vm3860
      %vm3882 = vmand %vm3855, %vm3858
      %vm3883 = vmand %vm3855, %vm3859
      %vm3884 = vmand %vm3855, %vm3860
      %vm3885 = vmand %vm3856, %vm3858
      %vm3886 = vmand %vm3856, %vm3859
      %vm3887 = vmand %vm3856, %vm3860
      %vm3888 = vmand %vm3857, %vm3858
      %vm3889 = vmand %vm3857, %vm3859
      %vm3890 = vmand %vm3857, %vm3860
      %vm3891 = vcmp.lt.s32.totalorder %v3825, 17
      %vm3892 = vcmp.lt.s32.totalorder %v3826, 17
      %vm3893 = vcmp.lt.s32.totalorder %v3827, 17
      %vm3894 = vmand %vm3861, %vm3891
      %vm3895 = vmand %vm3862, %vm3892
      %vm3896 = vmand %vm3863, %vm3893
      %vm3897 = vmand %vm3864, %vm3891
      %vm3898 = vmand %vm3865, %vm3892
      %vm3899 = vmand %vm3866, %vm3893
      %vm3900 = vmand %vm3867, %vm3891
      %vm3901 = vmand %vm3868, %vm3892
      %vm3902 = vmand %vm3869, %vm3893
      %vm3903 = vmand %vm3870, %vm3891
      %vm3904 = vmand %vm3871, %vm3892
      %vm3905 = vmand %vm3872, %vm3893
      %vm3906 = vmand %vm3873, %vm3891
      %vm3907 = vmand %vm3874, %vm3892
      %vm3908 = vmand %vm3875, %vm3893
      %vm3909 = vmand %vm3876, %vm3891
      %vm3910 = vmand %vm3877, %vm3892
      %vm3911 = vmand %vm3878, %vm3893
      %vm3912 = vmand %vm3879, %vm3891
      %vm3913 = vmand %vm3880, %vm3892
      %vm3914 = vmand %vm3881, %vm3893
      %vm3915 = vmand %vm3882, %vm3891
      %vm3916 = vmand %vm3883, %vm3892
      %vm3917 = vmand %vm3884, %vm3893
      %vm3918 = vmand %vm3885, %vm3891
      %vm3919 = vmand %vm3886, %vm3892
      %vm3920 = vmand %vm3887, %vm3893
      %vm3921 = vmand %vm3888, %vm3891
      %vm3922 = vmand %vm3889, %vm3892
      %vm3923 = vmand %vm3890, %vm3893
      %v3924 = vld [vmem:[%s3] sm:$0x1]
      %v3926 = vperm.slane %v3924, 0
      %v3928 = vadd.f32 %v3782, %v3926
      %v3929 = vadd.f32 %v3783, %v3926
      %v3930 = vadd.f32 %v3784, %v3926
      %v3931 = vadd.f32 %v3785, %v3926
      %v3932 = vadd.f32 %v3786, %v3926
      %v3933 = vadd.f32 %v3787, %v3926
      %v3934 = vadd.f32 %v3788, %v3926
      %v3935 = vadd.f32 %v3789, %v3926
      %v3936 = vadd.f32 %v3790, %v3926
      %v3937 = vadd.f32 %v3791, %v3926
      %v3938 = vadd.f32 %v3792, %v3926
      %v3939 = vadd.f32 %v3793, %v3926
      %v3940 = vadd.f32 %v3794, %v3926
      %v3941 = vadd.f32 %v3795, %v3926
      %v3942 = vadd.f32 %v3796, %v3926
      %v3943 = vadd.f32 %v3797, %v3926
      %v3944 = vadd.f32 %v3798, %v3926
      %v3945 = vadd.f32 %v3799, %v3926
      %v3946 = vadd.f32 %v3800, %v3926
      %v3947 = vadd.f32 %v3801, %v3926
      %v3948 = vadd.f32 %v3802, %v3926
      %v3949 = vadd.f32 %v3803, %v3926
      %v3950 = vadd.f32 %v3804, %v3926
      %v3951 = vadd.f32 %v3805, %v3926
      %v3952 = vadd.f32 %v3806, %v3926
      %v3953 = vadd.f32 %v3807, %v3926
      %v3954 = vadd.f32 %v3808, %v3926
      %v3955 = vadd.f32 %v3809, %v3926
      %v3956 = vadd.f32 %v3810, %v3926
      %v3957 = vadd.f32 %v3811, %v3926
      %v3958 = vmax.f32 %v3928, 0.0
      %v3959 = vmax.f32 %v3929, 0.0
      %v3960 = vmax.f32 %v3930, 0.0
      %v3961 = vmax.f32 %v3931, 0.0
      %v3962 = vmax.f32 %v3932, 0.0
      %v3963 = vmax.f32 %v3933, 0.0
      %v3964 = vmax.f32 %v3934, 0.0
      %v3965 = vmax.f32 %v3935, 0.0
      %v3966 = vmax.f32 %v3936, 0.0
      %v3967 = vmax.f32 %v3937, 0.0
      %v3968 = vmax.f32 %v3938, 0.0
      %v3969 = vmax.f32 %v3939, 0.0
      %v3970 = vmax.f32 %v3940, 0.0
      %v3971 = vmax.f32 %v3941, 0.0
      %v3972 = vmax.f32 %v3942, 0.0
      %v3973 = vmax.f32 %v3943, 0.0
      %v3974 = vmax.f32 %v3944, 0.0
      %v3975 = vmax.f32 %v3945, 0.0
      %v3976 = vmax.f32 %v3946, 0.0
      %v3977 = vmax.f32 %v3947, 0.0
      %v3978 = vmax.f32 %v3948, 0.0
      %v3979 = vmax.f32 %v3949, 0.0
      %v3980 = vmax.f32 %v3950, 0.0
      %v3981 = vmax.f32 %v3951, 0.0
      %v3982 = vmax.f32 %v3952, 0.0
      %v3983 = vmax.f32 %v3953, 0.0
      %v3984 = vmax.f32 %v3954, 0.0
      %v3985 = vmax.f32 %v3955, 0.0
      %v3986 = vmax.f32 %v3956, 0.0
      %v3987 = vmax.f32 %v3957, 0.0
      %v3988 = vsel %vm3894, 1, 0
      %v3989 = vsel %vm3895, 1, 0
      %v3990 = vsel %vm3896, 1, 0
      %v3991 = vsel %vm3897, 1, 0
      %v3992 = vsel %vm3898, 1, 0
      %v3993 = vsel %vm3899, 1, 0
      %v3994 = vsel %vm3900, 1, 0
      %v3995 = vsel %vm3901, 1, 0
      %v3996 = vsel %vm3902, 1, 0
      %v3997 = vsel %vm3903, 1, 0
      %v3998 = vsel %vm3904, 1, 0
      %v3999 = vsel %vm3905, 1, 0
      %v4000 = vsel %vm3906, 1, 0
      %v4001 = vsel %vm3907, 1, 0
      %v4002 = vsel %vm3908, 1, 0
      %v4003 = vsel %vm3909, 1, 0
      %v4004 = vsel %vm3910, 1, 0
      %v4005 = vsel %vm3911, 1, 0
      %v4006 = vsel %vm3912, 1, 0
      %v4007 = vsel %vm3913, 1, 0
      %v4008 = vsel %vm3914, 1, 0
      %v4009 = vsel %vm3915, 1, 0
      %v4010 = vsel %vm3916, 1, 0
      %v4011 = vsel %vm3917, 1, 0
      %v4012 = vsel %vm3918, 1, 0
      %v4013 = vsel %vm3919, 1, 0
      %v4014 = vsel %vm3920, 1, 0
      %v4015 = vsel %vm3921, 1, 0
      %v4016 = vsel %vm3922, 1, 0
      %v4017 = vsel %vm3923, 1, 0
      %vm4018 = vcmp.eq.s32.totalorder %v3988, 1
      %vm4019 = vcmp.eq.s32.totalorder %v3989, 1
      %vm4020 = vcmp.eq.s32.totalorder %v3990, 1
      %vm4021 = vcmp.eq.s32.totalorder %v3991, 1
      %vm4022 = vcmp.eq.s32.totalorder %v3992, 1
      %vm4023 = vcmp.eq.s32.totalorder %v3993, 1
      %vm4024 = vcmp.eq.s32.totalorder %v3994, 1
      %vm4025 = vcmp.eq.s32.totalorder %v3995, 1
      %vm4026 = vcmp.eq.s32.totalorder %v3996, 1
      %vm4027 = vcmp.eq.s32.totalorder %v3997, 1
      %vm4028 = vcmp.eq.s32.totalorder %v3998, 1
      %vm4029 = vcmp.eq.s32.totalorder %v3999, 1
      %vm4030 = vcmp.eq.s32.totalorder %v4000, 1
      %vm4031 = vcmp.eq.s32.totalorder %v4001, 1
      %vm4032 = vcmp.eq.s32.totalorder %v4002, 1
      %vm4033 = vcmp.eq.s32.totalorder %v4003, 1
      %vm4034 = vcmp.eq.s32.totalorder %v4004, 1
      %vm4035 = vcmp.eq.s32.totalorder %v4005, 1
      %vm4036 = vcmp.eq.s32.totalorder %v4006, 1
      %vm4037 = vcmp.eq.s32.totalorder %v4007, 1
      %vm4038 = vcmp.eq.s32.totalorder %v4008, 1
      %vm4039 = vcmp.eq.s32.totalorder %v4009, 1
      %vm4040 = vcmp.eq.s32.totalorder %v4010, 1
      %vm4041 = vcmp.eq.s32.totalorder %v4011, 1
      %vm4042 = vcmp.eq.s32.totalorder %v4012, 1
      %vm4043 = vcmp.eq.s32.totalorder %v4013, 1
      %vm4044 = vcmp.eq.s32.totalorder %v4014, 1
      %vm4045 = vcmp.eq.s32.totalorder %v4015, 1
      %vm4046 = vcmp.eq.s32.totalorder %v4016, 1
      %vm4047 = vcmp.eq.s32.totalorder %v4017, 1
      %v4048 = vsel %vm4018, %v3958, 0.0
      %v4049 = vsel %vm4019, %v3959, 0.0
      %v4050 = vsel %vm4020, %v3960, 0.0
      %v4051 = vsel %vm4021, %v3961, 0.0
      %v4052 = vsel %vm4022, %v3962, 0.0
      %v4053 = vsel %vm4023, %v3963, 0.0
      %v4054 = vsel %vm4024, %v3964, 0.0
      %v4055 = vsel %vm4025, %v3965, 0.0
      %v4056 = vsel %vm4026, %v3966, 0.0
      %v4057 = vsel %vm4027, %v3967, 0.0
      %v4058 = vsel %vm4028, %v3968, 0.0
      %v4059 = vsel %vm4029, %v3969, 0.0
      %v4060 = vsel %vm4030, %v3970, 0.0
      %v4061 = vsel %vm4031, %v3971, 0.0
      %v4062 = vsel %vm4032, %v3972, 0.0
      %v4063 = vsel %vm4033, %v3973, 0.0
      %v4064 = vsel %vm4034, %v3974, 0.0
      %v4065 = vsel %vm4035, %v3975, 0.0
      %v4066 = vsel %vm4036, %v3976, 0.0
      %v4067 = vsel %vm4037, %v3977, 0.0
      %v4068 = vsel %vm4038, %v3978, 0.0
      %v4069 = vsel %vm4039, %v3979, 0.0
      %v4070 = vsel %vm4040, %v3980, 0.0
      %v4071 = vsel %vm4041, %v3981, 0.0
      %v4072 = vsel %vm4042, %v3982, 0.0
      %v4073 = vsel %vm4043, %v3983, 0.0
      %v4074 = vsel %vm4044, %v3984, 0.0
      %v4075 = vsel %vm4045, %v3985, 0.0
      %v4076 = vsel %vm4046, %v3986, 0.0
      %v4077 = vsel %vm4047, %v3987, 0.0
      %v4078 = vpack.c.bf16 %v4048, %v4048
      %v4079 = vpack.c.bf16 %v4049, %v4049
      %v4080 = vpack.c.bf16 %v4050, %v4050
      %v4081 = vpack.c.bf16 %v4051, %v4051
      %v4082 = vpack.c.bf16 %v4052, %v4052
      %v4083 = vpack.c.bf16 %v4053, %v4053
      %v4084 = vpack.c.bf16 %v4054, %v4054
      %v4085 = vpack.c.bf16 %v4055, %v4055
      %v4086 = vpack.c.bf16 %v4056, %v4056
      %v4087 = vpack.c.bf16 %v4057, %v4057
      %v4088 = vpack.c.bf16 %v4058, %v4058
      %v4089 = vpack.c.bf16 %v4059, %v4059
      %v4090 = vpack.c.bf16 %v4060, %v4060
      %v4091 = vpack.c.bf16 %v4061, %v4061
      %v4092 = vpack.c.bf16 %v4062, %v4062
      %v4093 = vpack.c.bf16 %v4063, %v4063
      %v4094 = vpack.c.bf16 %v4064, %v4064
      %v4095 = vpack.c.bf16 %v4065, %v4065
      %v4096 = vpack.c.bf16 %v4066, %v4066
      %v4097 = vpack.c.bf16 %v4067, %v4067
      %v4098 = vpack.c.bf16 %v4068, %v4068
      %v4099 = vpack.c.bf16 %v4069, %v4069
      %v4100 = vpack.c.bf16 %v4070, %v4070
      %v4101 = vpack.c.bf16 %v4071, %v4071
      %v4102 = vpack.c.bf16 %v4072, %v4072
      %v4103 = vpack.c.bf16 %v4073, %v4073
      %v4104 = vpack.c.bf16 %v4074, %v4074
      %v4105 = vpack.c.bf16 %v4075, %v4075
      %v4106 = vpack.c.bf16 %v4076, %v4076
      %v4107 = vpack.c.bf16 %v4077, %v4077
      %v4108 = vld [vmem:[%s2] sm:$0x3]
      %v4110 = vshrl.u32 %v4078, 16
      %v4112 = vrot.slane %v4110, 4
      %v4113 = vshll.u32 %v4078, 16
      %v4115 = vrot.slane %v4113, 5
      %v4116 = vor.u32 %v4112, %v4115
      %v4117 = vrot.slane %v4116, 4
      %v4119 = vshll.u32 %v4079, 16
      %v4121 = vrot.slane %v4119, 5
      %v4122 = vsel %vm305, %v4117, %v4121
      %v4123 = vshrl.u32 %v4079, 16
      %v4125 = vrot.slane %v4123, 4
      %v4126 = vor.u32 %v4125, %v4121
      %v4127 = vrot.slane %v4126, 4
      %v4129 = vshll.u32 %v4080, 16
      %v4131 = vrot.slane %v4129, 5
      %v4132 = vsel %vm305, %v4127, %v4131
      %v4134 = vshrl.u32 %v4081, 16
      %v4136 = vrot.slane %v4134, 4
      %v4137 = vshll.u32 %v4081, 16
      %v4139 = vrot.slane %v4137, 5
      %v4140 = vor.u32 %v4136, %v4139
      %v4141 = vrot.slane %v4140, 4
      %v4143 = vshll.u32 %v4082, 16
      %v4145 = vrot.slane %v4143, 5
      %v4146 = vsel %vm305, %v4141, %v4145
      %v4147 = vshrl.u32 %v4082, 16
      %v4149 = vrot.slane %v4147, 4
      %v4150 = vor.u32 %v4149, %v4145
      %v4151 = vrot.slane %v4150, 4
      %v4153 = vshll.u32 %v4083, 16
      %v4155 = vrot.slane %v4153, 5
      %v4156 = vsel %vm305, %v4151, %v4155
      %v4158 = vshrl.u32 %v4084, 16
      %v4160 = vrot.slane %v4158, 4
      %v4161 = vshll.u32 %v4084, 16
      %v4163 = vrot.slane %v4161, 5
      %v4164 = vor.u32 %v4160, %v4163
      %v4165 = vrot.slane %v4164, 4
      %v4167 = vshll.u32 %v4085, 16
      %v4169 = vrot.slane %v4167, 5
      %v4170 = vsel %vm305, %v4165, %v4169
      %v4171 = vshrl.u32 %v4085, 16
      %v4173 = vrot.slane %v4171, 4
      %v4174 = vor.u32 %v4173, %v4169
      %v4175 = vrot.slane %v4174, 4
      %v4177 = vshll.u32 %v4086, 16
      %v4179 = vrot.slane %v4177, 5
      %v4180 = vsel %vm305, %v4175, %v4179
      %v4182 = vshrl.u32 %v4087, 16
      %v4184 = vrot.slane %v4182, 4
      %v4185 = vshll.u32 %v4087, 16
      %v4187 = vrot.slane %v4185, 5
      %v4188 = vor.u32 %v4184, %v4187
      %v4189 = vrot.slane %v4188, 4
      %v4191 = vshll.u32 %v4088, 16
      %v4193 = vrot.slane %v4191, 5
      %v4194 = vsel %vm305, %v4189, %v4193
      %v4195 = vshrl.u32 %v4088, 16
      %v4197 = vrot.slane %v4195, 4
      %v4198 = vor.u32 %v4197, %v4193
      %v4199 = vrot.slane %v4198, 4
      %v4201 = vshll.u32 %v4089, 16
      %v4203 = vrot.slane %v4201, 5
      %v4204 = vsel %vm305, %v4199, %v4203
      %v4206 = vshrl.u32 %v4090, 16
      %v4208 = vrot.slane %v4206, 4
      %v4209 = vshll.u32 %v4090, 16
      %v4211 = vrot.slane %v4209, 5
      %v4212 = vor.u32 %v4208, %v4211
      %v4213 = vrot.slane %v4212, 4
      %v4215 = vshll.u32 %v4091, 16
      %v4217 = vrot.slane %v4215, 5
      %v4218 = vsel %vm305, %v4213, %v4217
      %v4219 = vshrl.u32 %v4091, 16
      %v4221 = vrot.slane %v4219, 4
      %v4222 = vor.u32 %v4221, %v4217
      %v4223 = vrot.slane %v4222, 4
      %v4225 = vshll.u32 %v4092, 16
      %v4227 = vrot.slane %v4225, 5
      %v4228 = vsel %vm305, %v4223, %v4227
      %v4230 = vshrl.u32 %v4093, 16
      %v4232 = vrot.slane %v4230, 4
      %v4233 = vshll.u32 %v4093, 16
      %v4235 = vrot.slane %v4233, 5
      %v4236 = vor.u32 %v4232, %v4235
      %v4237 = vrot.slane %v4236, 4
      %v4239 = vshll.u32 %v4094, 16
      %v4241 = vrot.slane %v4239, 5
      %v4242 = vsel %vm305, %v4237, %v4241
      %v4243 = vshrl.u32 %v4094, 16
      %v4245 = vrot.slane %v4243, 4
      %v4246 = vor.u32 %v4245, %v4241
      %v4247 = vrot.slane %v4246, 4
      %v4249 = vshll.u32 %v4095, 16
      %v4251 = vrot.slane %v4249, 5
      %v4252 = vsel %vm305, %v4247, %v4251
      %v4254 = vshrl.u32 %v4096, 16
      %v4256 = vrot.slane %v4254, 4
      %v4257 = vshll.u32 %v4096, 16
      %v4259 = vrot.slane %v4257, 5
      %v4260 = vor.u32 %v4256, %v4259
      %v4261 = vrot.slane %v4260, 4
      %v4263 = vshll.u32 %v4097, 16
      %v4265 = vrot.slane %v4263, 5
      %v4266 = vsel %vm305, %v4261, %v4265
      %v4267 = vshrl.u32 %v4097, 16
      %v4269 = vrot.slane %v4267, 4
      %v4270 = vor.u32 %v4269, %v4265
      %v4271 = vrot.slane %v4270, 4
      %v4273 = vshll.u32 %v4098, 16
      %v4275 = vrot.slane %v4273, 5
      %v4276 = vsel %vm305, %v4271, %v4275
      %v4278 = vshrl.u32 %v4099, 16
      %v4280 = vrot.slane %v4278, 4
      %v4281 = vshll.u32 %v4099, 16
      %v4283 = vrot.slane %v4281, 5
      %v4284 = vor.u32 %v4280, %v4283
      %v4285 = vrot.slane %v4284, 4
      %v4287 = vshll.u32 %v4100, 16
      %v4289 = vrot.slane %v4287, 5
      %v4290 = vsel %vm305, %v4285, %v4289
      %v4291 = vshrl.u32 %v4100, 16
      %v4293 = vrot.slane %v4291, 4
      %v4294 = vor.u32 %v4293, %v4289
      %v4295 = vrot.slane %v4294, 4
      %v4297 = vshll.u32 %v4101, 16
      %v4299 = vrot.slane %v4297, 5
      %v4300 = vsel %vm305, %v4295, %v4299
      %s4301 = scalar_lea.vmem %s2, 2
      %v4302 = vld [vmem:[%s4301] sm:$0x3]
      %v4303 = vunpack.c.l.b16 %v4122
      %v4304 = vunpack.c.l.b16 %v4132
      %v4305 = vunpack.c.l.b16 %v4146
      %v4306 = vunpack.c.l.b16 %v4156
      %v4307 = vunpack.c.l.b16 %v4170
      %v4308 = vunpack.c.l.b16 %v4180
      %v4309 = vunpack.c.l.b16 %v4194
      %v4310 = vunpack.c.l.b16 %v4204
      %v4311 = vunpack.c.l.b16 %v4218
      %v4312 = vunpack.c.l.b16 %v4228
      %v4313 = vunpack.c.l.b16 %v4242
      %v4314 = vunpack.c.l.b16 %v4252
      %v4315 = vunpack.c.l.b16 %v4266
      %v4316 = vunpack.c.l.b16 %v4276
      %v4317 = vunpack.c.l.b16 %v4290
      %v4318 = vunpack.c.l.b16 %v4300
      %v4319 = vpack.c.b16 %v4304, %v4303
      %v4320 = vpack.c.b16 %v4306, %v4305
      %v4321 = vpack.c.b16 %v4308, %v4307
      %v4322 = vpack.c.b16 %v4310, %v4309
      %v4323 = vpack.c.b16 %v4312, %v4311
      %v4324 = vpack.c.b16 %v4314, %v4313
      %v4325 = vpack.c.b16 %v4316, %v4315
      %v4326 = vpack.c.b16 %v4318, %v4317
      %v4328 = vsel %vm693, %v4319, 0
      %v4331 = vsel %vm693, %v4320, 0
      %v4334 = vsel %vm693, %v4321, 0
      %v4337 = vsel %vm693, %v4322, 0
      %v4340 = vsel %vm693, %v4323, 0
      %v4343 = vsel %vm693, %v4324, 0
      %v4346 = vsel %vm693, %v4325, 0
      %v4349 = vsel %vm693, %v4326, 0
      %v4352 = vsel %vm739, %v4302, 0
      %4354 = vmatpush.bf16.msra.mxu0 0
      %4355 = vmatpush.bf16.msra.mxu0 0
      %4356 = vmatpush.bf16.msra.mxu0 0
      %4357 = vmatpush.bf16.msra.mxu0 0
      %4358 = vmatpush.bf16.msra.mxu0 0
      %4359 = vmatpush.bf16.msra.mxu0 0
      %4360 = vmatpush.bf16.msra.mxu0 0
      %4361 = vmatpush.bf16.msra.mxu0 %v4352
      %4362 = vmatmul.bf16.gmra.mxu0 %v4328
      %v4363 = vpop.f32.mrf.mxu0
      %v4364 = vadd.f32 0.0, %v4363
      %v4365 = vpop.f32.mrf.mxu0
      %v4366 = vadd.f32 0.0, %v4365
      %4367 = vmatmul.bf16.gmra.mxu0 %v4331
      %v4368 = vpop.f32.mrf.mxu0
      %v4369 = vadd.f32 0.0, %v4368
      %v4370 = vpop.f32.mrf.mxu0
      %v4371 = vadd.f32 0.0, %v4370
      %4372 = vmatmul.bf16.gmra.mxu0 %v4334
      %v4373 = vpop.f32.mrf.mxu0
      %v4374 = vadd.f32 0.0, %v4373
      %v4375 = vpop.f32.mrf.mxu0
      %v4376 = vadd.f32 0.0, %v4375
      %4377 = vmatmul.bf16.gmra.mxu0 %v4337
      %v4378 = vpop.f32.mrf.mxu0
      %v4379 = vadd.f32 0.0, %v4378
      %v4380 = vpop.f32.mrf.mxu0
      %v4381 = vadd.f32 0.0, %v4380
      %4382 = vmatmul.bf16.gmra.mxu0 %v4340
      %v4383 = vpop.f32.mrf.mxu0
      %v4384 = vadd.f32 0.0, %v4383
      %v4385 = vpop.f32.mrf.mxu0
      %v4386 = vadd.f32 0.0, %v4385
      %4387 = vmatmul.bf16.gmra.mxu0 %v4343
      %v4388 = vpop.f32.mrf.mxu0
      %v4389 = vadd.f32 0.0, %v4388
      %v4390 = vpop.f32.mrf.mxu0
      %v4391 = vadd.f32 0.0, %v4390
      %4392 = vmatmul.bf16.gmra.mxu0 %v4346
      %v4393 = vpop.f32.mrf.mxu0
      %v4394 = vadd.f32 0.0, %v4393
      %v4395 = vpop.f32.mrf.mxu0
      %v4396 = vadd.f32 0.0, %v4395
      %4397 = vmatmul.bf16.gmra.mxu0 %v4349
      %v4398 = vpop.f32.mrf.mxu0
      %v4399 = vadd.f32 0.0, %v4398
      %v4400 = vpop.f32.mrf.mxu0
      %v4401 = vadd.f32 0.0, %v4400
      %4402 = vdwg.mxu0
      %v4419 = vunpack.c.l.b16 %v4078
      %v4420 = vunpack.c.l.b16 %v4079
      %v4421 = vunpack.c.l.b16 %v4081
      %v4422 = vunpack.c.l.b16 %v4082
      %v4423 = vunpack.c.l.b16 %v4084
      %v4424 = vunpack.c.l.b16 %v4085
      %v4425 = vunpack.c.l.b16 %v4087
      %v4426 = vunpack.c.l.b16 %v4088
      %v4427 = vunpack.c.l.b16 %v4090
      %v4428 = vunpack.c.l.b16 %v4091
      %v4429 = vunpack.c.l.b16 %v4093
      %v4430 = vunpack.c.l.b16 %v4094
      %v4431 = vunpack.c.l.b16 %v4096
      %v4432 = vunpack.c.l.b16 %v4097
      %v4433 = vunpack.c.l.b16 %v4099
      %v4434 = vunpack.c.l.b16 %v4100
      %v4435 = vpack.c.b16 %v4420, %v4419
      %v4436 = vpack.c.b16 %v4422, %v4421
      %v4437 = vpack.c.b16 %v4424, %v4423
      %v4438 = vpack.c.b16 %v4426, %v4425
      %v4439 = vpack.c.b16 %v4428, %v4427
      %v4440 = vpack.c.b16 %v4430, %v4429
      %v4441 = vpack.c.b16 %v4432, %v4431
      %v4442 = vpack.c.b16 %v4434, %v4433
      %v4444 = vsel %vm693, %v4435, 0
      %v4447 = vsel %vm693, %v4436, 0
      %v4450 = vsel %vm693, %v4437, 0
      %v4453 = vsel %vm693, %v4438, 0
      %v4456 = vsel %vm693, %v4439, 0
      %v4459 = vsel %vm693, %v4440, 0
      %v4462 = vsel %vm693, %v4441, 0
      %v4465 = vsel %vm693, %v4442, 0
      %v4468 = vsel %vm739, %v4108, 0
      %4470 = vmatpush.bf16.msra.mxu0 0
      %4471 = vmatpush.bf16.msra.mxu0 0
      %4472 = vmatpush.bf16.msra.mxu0 0
      %4473 = vmatpush.bf16.msra.mxu0 0
      %4474 = vmatpush.bf16.msra.mxu0 0
      %4475 = vmatpush.bf16.msra.mxu0 0
      %4476 = vmatpush.bf16.msra.mxu0 0
      %4477 = vmatpush.bf16.msra.mxu0 %v4468
      %4478 = vmatmul.bf16.gmra.mxu0 %v4444
      %v4479 = vpop.f32.mrf.mxu0
      %v4480 = vadd.f32 %v4364, %v4479
      %v4481 = vpop.f32.mrf.mxu0
      %v4482 = vadd.f32 %v4366, %v4481
      %4483 = vmatmul.bf16.gmra.mxu0 %v4447
      %v4484 = vpop.f32.mrf.mxu0
      %v4485 = vadd.f32 %v4369, %v4484
      %v4486 = vpop.f32.mrf.mxu0
      %v4487 = vadd.f32 %v4371, %v4486
      %4488 = vmatmul.bf16.gmra.mxu0 %v4450
      %v4489 = vpop.f32.mrf.mxu0
      %v4490 = vadd.f32 %v4374, %v4489
      %v4491 = vpop.f32.mrf.mxu0
      %v4492 = vadd.f32 %v4376, %v4491
      %4493 = vmatmul.bf16.gmra.mxu0 %v4453
      %v4494 = vpop.f32.mrf.mxu0
      %v4495 = vadd.f32 %v4379, %v4494
      %v4496 = vpop.f32.mrf.mxu0
      %v4497 = vadd.f32 %v4381, %v4496
      %4498 = vmatmul.bf16.gmra.mxu0 %v4456
      %v4499 = vpop.f32.mrf.mxu0
      %v4500 = vadd.f32 %v4384, %v4499
      %v4501 = vpop.f32.mrf.mxu0
      %v4502 = vadd.f32 %v4386, %v4501
      %4503 = vmatmul.bf16.gmra.mxu0 %v4459
      %v4504 = vpop.f32.mrf.mxu0
      %v4505 = vadd.f32 %v4389, %v4504
      %v4506 = vpop.f32.mrf.mxu0
      %v4507 = vadd.f32 %v4391, %v4506
      %4508 = vmatmul.bf16.gmra.mxu0 %v4462
      %v4509 = vpop.f32.mrf.mxu0
      %v4510 = vadd.f32 %v4394, %v4509
      %v4511 = vpop.f32.mrf.mxu0
      %v4512 = vadd.f32 %v4396, %v4511
      %4513 = vmatmul.bf16.gmra.mxu0 %v4465
      %v4514 = vpop.f32.mrf.mxu0
      %v4515 = vadd.f32 %v4399, %v4514
      %v4516 = vpop.f32.mrf.mxu0
      %v4517 = vadd.f32 %v4401, %v4516
      %4518 = vdwg.mxu0
      %v4527 = vrot.slane %v4078, 5
      %v4528 = vrot.slane %v4527, 4
      %v4529 = vrot.slane %v4079, 5
      %v4530 = vsel %vm1066, %v4528, %v4529
      %v4531 = vrot.slane %v4529, 4
      %v4532 = vrot.slane %v4080, 5
      %v4533 = vsel %vm1066, %v4531, %v4532
      %v4534 = vrot.slane %v4081, 5
      %v4535 = vrot.slane %v4534, 4
      %v4536 = vrot.slane %v4082, 5
      %v4537 = vsel %vm1066, %v4535, %v4536
      %v4538 = vrot.slane %v4536, 4
      %v4539 = vrot.slane %v4083, 5
      %v4540 = vsel %vm1066, %v4538, %v4539
      %v4541 = vrot.slane %v4084, 5
      %v4542 = vrot.slane %v4541, 4
      %v4543 = vrot.slane %v4085, 5
      %v4544 = vsel %vm1066, %v4542, %v4543
      %v4545 = vrot.slane %v4543, 4
      %v4546 = vrot.slane %v4086, 5
      %v4547 = vsel %vm1066, %v4545, %v4546
      %v4548 = vrot.slane %v4087, 5
      %v4549 = vrot.slane %v4548, 4
      %v4550 = vrot.slane %v4088, 5
      %v4551 = vsel %vm1066, %v4549, %v4550
      %v4552 = vrot.slane %v4550, 4
      %v4553 = vrot.slane %v4089, 5
      %v4554 = vsel %vm1066, %v4552, %v4553
      %v4555 = vrot.slane %v4090, 5
      %v4556 = vrot.slane %v4555, 4
      %v4557 = vrot.slane %v4091, 5
      %v4558 = vsel %vm1066, %v4556, %v4557
      %v4559 = vrot.slane %v4557, 4
      %v4560 = vrot.slane %v4092, 5
      %v4561 = vsel %vm1066, %v4559, %v4560
      %v4562 = vrot.slane %v4093, 5
      %v4563 = vrot.slane %v4562, 4
      %v4564 = vrot.slane %v4094, 5
      %v4565 = vsel %vm1066, %v4563, %v4564
      %v4566 = vrot.slane %v4564, 4
      %v4567 = vrot.slane %v4095, 5
      %v4568 = vsel %vm1066, %v4566, %v4567
      %v4569 = vrot.slane %v4096, 5
      %v4570 = vrot.slane %v4569, 4
      %v4571 = vrot.slane %v4097, 5
      %v4572 = vsel %vm1066, %v4570, %v4571
      %v4573 = vrot.slane %v4571, 4
      %v4574 = vrot.slane %v4098, 5
      %v4575 = vsel %vm1066, %v4573, %v4574
      %v4576 = vrot.slane %v4099, 5
      %v4577 = vrot.slane %v4576, 4
      %v4578 = vrot.slane %v4100, 5
      %v4579 = vsel %vm1066, %v4577, %v4578
      %v4580 = vrot.slane %v4578, 4
      %v4581 = vrot.slane %v4101, 5
      %v4582 = vsel %vm1066, %v4580, %v4581
      %s4583 = scalar_lea.vmem %s2, 4
      %v4584 = vld [vmem:[%s4583] sm:$0x3]
      %v4585 = vunpack.c.l.b16 %v4530
      %v4586 = vunpack.c.l.b16 %v4533
      %v4587 = vunpack.c.l.b16 %v4537
      %v4588 = vunpack.c.l.b16 %v4540
      %v4589 = vunpack.c.l.b16 %v4544
      %v4590 = vunpack.c.l.b16 %v4547
      %v4591 = vunpack.c.l.b16 %v4551
      %v4592 = vunpack.c.l.b16 %v4554
      %v4593 = vunpack.c.l.b16 %v4558
      %v4594 = vunpack.c.l.b16 %v4561
      %v4595 = vunpack.c.l.b16 %v4565
      %v4596 = vunpack.c.l.b16 %v4568
      %v4597 = vunpack.c.l.b16 %v4572
      %v4598 = vunpack.c.l.b16 %v4575
      %v4599 = vunpack.c.l.b16 %v4579
      %v4600 = vunpack.c.l.b16 %v4582
      %v4601 = vpack.c.b16 %v4586, %v4585
      %v4602 = vpack.c.b16 %v4588, %v4587
      %v4603 = vpack.c.b16 %v4590, %v4589
      %v4604 = vpack.c.b16 %v4592, %v4591
      %v4605 = vpack.c.b16 %v4594, %v4593
      %v4606 = vpack.c.b16 %v4596, %v4595
      %v4607 = vpack.c.b16 %v4598, %v4597
      %v4608 = vpack.c.b16 %v4600, %v4599
      %v4610 = vsel %vm693, %v4601, 0
      %v4613 = vsel %vm693, %v4602, 0
      %v4616 = vsel %vm693, %v4603, 0
      %v4619 = vsel %vm693, %v4604, 0
      %v4622 = vsel %vm693, %v4605, 0
      %v4625 = vsel %vm693, %v4606, 0
      %v4628 = vsel %vm693, %v4607, 0
      %v4631 = vsel %vm693, %v4608, 0
      %v4634 = vsel %vm739, %v4584, 0
      %4636 = vmatpush.bf16.msra.mxu0 0
      %4637 = vmatpush.bf16.msra.mxu0 0
      %4638 = vmatpush.bf16.msra.mxu0 0
      %4639 = vmatpush.bf16.msra.mxu0 0
      %4640 = vmatpush.bf16.msra.mxu0 0
      %4641 = vmatpush.bf16.msra.mxu0 0
      %4642 = vmatpush.bf16.msra.mxu0 0
      %4643 = vmatpush.bf16.msra.mxu0 %v4634
      %4644 = vmatmul.bf16.gmra.mxu0 %v4610
      %v4645 = vpop.f32.mrf.mxu0
      %v4646 = vadd.f32 0.0, %v4645
      %v4647 = vpop.f32.mrf.mxu0
      %v4648 = vadd.f32 0.0, %v4647
      %4649 = vmatmul.bf16.gmra.mxu0 %v4613
      %v4650 = vpop.f32.mrf.mxu0
      %v4651 = vadd.f32 0.0, %v4650
      %v4652 = vpop.f32.mrf.mxu0
      %v4653 = vadd.f32 0.0, %v4652
      %4654 = vmatmul.bf16.gmra.mxu0 %v4616
      %v4655 = vpop.f32.mrf.mxu0
      %v4656 = vadd.f32 0.0, %v4655
      %v4657 = vpop.f32.mrf.mxu0
      %v4658 = vadd.f32 0.0, %v4657
      %4659 = vmatmul.bf16.gmra.mxu0 %v4619
      %v4660 = vpop.f32.mrf.mxu0
      %v4661 = vadd.f32 0.0, %v4660
      %v4662 = vpop.f32.mrf.mxu0
      %v4663 = vadd.f32 0.0, %v4662
      %4664 = vmatmul.bf16.gmra.mxu0 %v4622
      %v4665 = vpop.f32.mrf.mxu0
      %v4666 = vadd.f32 0.0, %v4665
      %v4667 = vpop.f32.mrf.mxu0
      %v4668 = vadd.f32 0.0, %v4667
      %4669 = vmatmul.bf16.gmra.mxu0 %v4625
      %v4670 = vpop.f32.mrf.mxu0
      %v4671 = vadd.f32 0.0, %v4670
      %v4672 = vpop.f32.mrf.mxu0
      %v4673 = vadd.f32 0.0, %v4672
      %4674 = vmatmul.bf16.gmra.mxu0 %v4628
      %v4675 = vpop.f32.mrf.mxu0
      %v4676 = vadd.f32 0.0, %v4675
      %v4677 = vpop.f32.mrf.mxu0
      %v4678 = vadd.f32 0.0, %v4677
      %4679 = vmatmul.bf16.gmra.mxu0 %v4631
      %v4680 = vpop.f32.mrf.mxu0
      %v4681 = vadd.f32 0.0, %v4680
      %v4682 = vpop.f32.mrf.mxu0
      %v4683 = vadd.f32 0.0, %v4682
      %4684 = vdwg.mxu0
      %v4685 = vadd.f32 %v4480, %v4646
      %v4686 = vadd.f32 %v4482, %v4648
      %v4687 = vadd.f32 %v4485, %v4651
      %v4688 = vadd.f32 %v4487, %v4653
      %v4689 = vadd.f32 %v4490, %v4656
      %v4690 = vadd.f32 %v4492, %v4658
      %v4691 = vadd.f32 %v4495, %v4661
      %v4692 = vadd.f32 %v4497, %v4663
      %v4693 = vadd.f32 %v4500, %v4666
      %v4694 = vadd.f32 %v4502, %v4668
      %v4695 = vadd.f32 %v4505, %v4671
      %v4696 = vadd.f32 %v4507, %v4673
      %v4697 = vadd.f32 %v4510, %v4676
      %v4698 = vadd.f32 %v4512, %v4678
      %v4699 = vadd.f32 %v4515, %v4681
      %v4700 = vadd.f32 %v4517, %v4683
      %s4701 = scalar_lea.vmem %s2, 6
      %v4702 = vld [vmem:[%s4701] sm:$0x3]
      %v4705 = vunpack.c.l.b16 %v4102
      %v4706 = vunpack.c.l.b16 %v4103
      %v4707 = vpack.c.b16 %v4706, %v4705
      %v4709 = vsel %vm693, %v4707, 0
      %v4712 = vsel %vm739, %v4702, 0
      %4714 = vmatpush.bf16.msra.mxu0 0
      %4715 = vmatpush.bf16.msra.mxu0 0
      %4716 = vmatpush.bf16.msra.mxu0 0
      %4717 = vmatpush.bf16.msra.mxu0 0
      %4718 = vmatpush.bf16.msra.mxu0 0
      %4719 = vmatpush.bf16.msra.mxu0 0
      %4720 = vmatpush.bf16.msra.mxu0 0
      %4721 = vmatpush.bf16.msra.mxu0 %v4712
      %4722 = vmatmul.bf16.gmra.mxu0 %v4447
      %v4723 = vpop.f32.mrf.mxu0
      %v4724 = vadd.f32 0.0, %v4723
      %v4725 = vpop.f32.mrf.mxu0
      %v4726 = vadd.f32 0.0, %v4725
      %4727 = vmatmul.bf16.gmra.mxu0 %v4450
      %v4728 = vpop.f32.mrf.mxu0
      %v4729 = vadd.f32 0.0, %v4728
      %v4730 = vpop.f32.mrf.mxu0
      %v4731 = vadd.f32 0.0, %v4730
      %4732 = vmatmul.bf16.gmra.mxu0 %v4453
      %v4733 = vpop.f32.mrf.mxu0
      %v4734 = vadd.f32 0.0, %v4733
      %v4735 = vpop.f32.mrf.mxu0
      %v4736 = vadd.f32 0.0, %v4735
      %4737 = vmatmul.bf16.gmra.mxu0 %v4456
      %v4738 = vpop.f32.mrf.mxu0
      %v4739 = vadd.f32 0.0, %v4738
      %v4740 = vpop.f32.mrf.mxu0
      %v4741 = vadd.f32 0.0, %v4740
      %4742 = vmatmul.bf16.gmra.mxu0 %v4459
      %v4743 = vpop.f32.mrf.mxu0
      %v4744 = vadd.f32 0.0, %v4743
      %v4745 = vpop.f32.mrf.mxu0
      %v4746 = vadd.f32 0.0, %v4745
      %4747 = vmatmul.bf16.gmra.mxu0 %v4462
      %v4748 = vpop.f32.mrf.mxu0
      %v4749 = vadd.f32 0.0, %v4748
      %v4750 = vpop.f32.mrf.mxu0
      %v4751 = vadd.f32 0.0, %v4750
      %4752 = vmatmul.bf16.gmra.mxu0 %v4465
      %v4753 = vpop.f32.mrf.mxu0
      %v4754 = vadd.f32 0.0, %v4753
      %v4755 = vpop.f32.mrf.mxu0
      %v4756 = vadd.f32 0.0, %v4755
      %4757 = vmatmul.bf16.gmra.mxu0 %v4709
      %v4758 = vpop.f32.mrf.mxu0
      %v4759 = vadd.f32 0.0, %v4758
      %v4760 = vpop.f32.mrf.mxu0
      %v4761 = vadd.f32 0.0, %v4760
      %4762 = vdwg.mxu0
      %v4763 = vadd.f32 %v4685, %v4724
      %v4764 = vadd.f32 %v4686, %v4726
      %v4765 = vadd.f32 %v4687, %v4729
      %v4766 = vadd.f32 %v4688, %v4731
      %v4767 = vadd.f32 %v4689, %v4734
      %v4768 = vadd.f32 %v4690, %v4736
      %v4769 = vadd.f32 %v4691, %v4739
      %v4770 = vadd.f32 %v4692, %v4741
      %v4771 = vadd.f32 %v4693, %v4744
      %v4772 = vadd.f32 %v4694, %v4746
      %v4773 = vadd.f32 %v4695, %v4749
      %v4774 = vadd.f32 %v4696, %v4751
      %v4775 = vadd.f32 %v4697, %v4754
      %v4776 = vadd.f32 %v4698, %v4756
      %v4777 = vadd.f32 %v4699, %v4759
      %v4778 = vadd.f32 %v4700, %v4761
      %v4780 = vshrl.u32 %v4102, 16
      %v4782 = vrot.slane %v4780, 4
      %v4783 = vshll.u32 %v4102, 16
      %v4785 = vrot.slane %v4783, 5
      %v4786 = vor.u32 %v4782, %v4785
      %v4787 = vrot.slane %v4786, 4
      %v4789 = vshll.u32 %v4103, 16
      %v4791 = vrot.slane %v4789, 5
      %v4792 = vsel %vm305, %v4787, %v4791
      %v4793 = vshrl.u32 %v4103, 16
      %v4795 = vrot.slane %v4793, 4
      %v4796 = vor.u32 %v4795, %v4791
      %v4797 = vrot.slane %v4796, 4
      %v4799 = vshll.u32 %v4104, 16
      %v4801 = vrot.slane %v4799, 5
      %v4802 = vsel %vm305, %v4797, %v4801
      %s4803 = scalar_lea.vmem %s2, 8
      %v4804 = vld [vmem:[%s4803] sm:$0x3]
      %v4805 = vunpack.c.l.b16 %v4792
      %v4806 = vunpack.c.l.b16 %v4802
      %v4807 = vpack.c.b16 %v4806, %v4805
      %v4809 = vsel %vm693, %v4807, 0
      %v4812 = vsel %vm739, %v4804, 0
      %4814 = vmatpush.bf16.msra.mxu0 0
      %4815 = vmatpush.bf16.msra.mxu0 0
      %4816 = vmatpush.bf16.msra.mxu0 0
      %4817 = vmatpush.bf16.msra.mxu0 0
      %4818 = vmatpush.bf16.msra.mxu0 0
      %4819 = vmatpush.bf16.msra.mxu0 0
      %4820 = vmatpush.bf16.msra.mxu0 0
      %4821 = vmatpush.bf16.msra.mxu0 %v4812
      %4822 = vmatmul.bf16.gmra.mxu0 %v4331
      %v4823 = vpop.f32.mrf.mxu0
      %v4824 = vadd.f32 0.0, %v4823
      %v4825 = vpop.f32.mrf.mxu0
      %v4826 = vadd.f32 0.0, %v4825
      %4827 = vmatmul.bf16.gmra.mxu0 %v4334
      %v4828 = vpop.f32.mrf.mxu0
      %v4829 = vadd.f32 0.0, %v4828
      %v4830 = vpop.f32.mrf.mxu0
      %v4831 = vadd.f32 0.0, %v4830
      %4832 = vmatmul.bf16.gmra.mxu0 %v4337
      %v4833 = vpop.f32.mrf.mxu0
      %v4834 = vadd.f32 0.0, %v4833
      %v4835 = vpop.f32.mrf.mxu0
      %v4836 = vadd.f32 0.0, %v4835
      %4837 = vmatmul.bf16.gmra.mxu0 %v4340
      %v4838 = vpop.f32.mrf.mxu0
      %v4839 = vadd.f32 0.0, %v4838
      %v4840 = vpop.f32.mrf.mxu0
      %v4841 = vadd.f32 0.0, %v4840
      %4842 = vmatmul.bf16.gmra.mxu0 %v4343
      %v4843 = vpop.f32.mrf.mxu0
      %v4844 = vadd.f32 0.0, %v4843
      %v4845 = vpop.f32.mrf.mxu0
      %v4846 = vadd.f32 0.0, %v4845
      %4847 = vmatmul.bf16.gmra.mxu0 %v4346
      %v4848 = vpop.f32.mrf.mxu0
      %v4849 = vadd.f32 0.0, %v4848
      %v4850 = vpop.f32.mrf.mxu0
      %v4851 = vadd.f32 0.0, %v4850
      %4852 = vmatmul.bf16.gmra.mxu0 %v4349
      %v4853 = vpop.f32.mrf.mxu0
      %v4854 = vadd.f32 0.0, %v4853
      %v4855 = vpop.f32.mrf.mxu0
      %v4856 = vadd.f32 0.0, %v4855
      %4857 = vmatmul.bf16.gmra.mxu0 %v4809
      %v4858 = vpop.f32.mrf.mxu0
      %v4859 = vadd.f32 0.0, %v4858
      %v4860 = vpop.f32.mrf.mxu0
      %v4861 = vadd.f32 0.0, %v4860
      %4862 = vdwg.mxu0
      %v4863 = vadd.f32 %v4763, %v4824
      %v4864 = vadd.f32 %v4764, %v4826
      %v4865 = vadd.f32 %v4765, %v4829
      %v4866 = vadd.f32 %v4766, %v4831
      %v4867 = vadd.f32 %v4767, %v4834
      %v4868 = vadd.f32 %v4768, %v4836
      %v4869 = vadd.f32 %v4769, %v4839
      %v4870 = vadd.f32 %v4770, %v4841
      %v4871 = vadd.f32 %v4771, %v4844
      %v4872 = vadd.f32 %v4772, %v4846
      %v4873 = vadd.f32 %v4773, %v4849
      %v4874 = vadd.f32 %v4774, %v4851
      %v4875 = vadd.f32 %v4775, %v4854
      %v4876 = vadd.f32 %v4776, %v4856
      %v4877 = vadd.f32 %v4777, %v4859
      %v4878 = vadd.f32 %v4778, %v4861
      %v4880 = vrot.slane %v4102, 5
      %v4881 = vrot.slane %v4880, 4
      %v4882 = vrot.slane %v4103, 5
      %v4883 = vsel %vm1066, %v4881, %v4882
      %v4884 = vrot.slane %v4882, 4
      %v4885 = vrot.slane %v4104, 5
      %v4886 = vsel %vm1066, %v4884, %v4885
      %s4887 = scalar_lea.vmem %s2, 10
      %v4888 = vld [vmem:[%s4887] sm:$0x3]
      %v4889 = vunpack.c.l.b16 %v4883
      %v4890 = vunpack.c.l.b16 %v4886
      %v4891 = vpack.c.b16 %v4890, %v4889
      %v4893 = vsel %vm693, %v4891, 0
      %v4896 = vsel %vm739, %v4888, 0
      %4898 = vmatpush.bf16.msra.mxu0 0
      %4899 = vmatpush.bf16.msra.mxu0 0
      %4900 = vmatpush.bf16.msra.mxu0 0
      %4901 = vmatpush.bf16.msra.mxu0 0
      %4902 = vmatpush.bf16.msra.mxu0 0
      %4903 = vmatpush.bf16.msra.mxu0 0
      %4904 = vmatpush.bf16.msra.mxu0 0
      %4905 = vmatpush.bf16.msra.mxu0 %v4896
      %4906 = vmatmul.bf16.gmra.mxu0 %v4613
      %v4907 = vpop.f32.mrf.mxu0
      %v4908 = vadd.f32 0.0, %v4907
      %v4909 = vpop.f32.mrf.mxu0
      %v4910 = vadd.f32 0.0, %v4909
      %4911 = vmatmul.bf16.gmra.mxu0 %v4616
      %v4912 = vpop.f32.mrf.mxu0
      %v4913 = vadd.f32 0.0, %v4912
      %v4914 = vpop.f32.mrf.mxu0
      %v4915 = vadd.f32 0.0, %v4914
      %4916 = vmatmul.bf16.gmra.mxu0 %v4619
      %v4917 = vpop.f32.mrf.mxu0
      %v4918 = vadd.f32 0.0, %v4917
      %v4919 = vpop.f32.mrf.mxu0
      %v4920 = vadd.f32 0.0, %v4919
      %4921 = vmatmul.bf16.gmra.mxu0 %v4622
      %v4922 = vpop.f32.mrf.mxu0
      %v4923 = vadd.f32 0.0, %v4922
      %v4924 = vpop.f32.mrf.mxu0
      %v4925 = vadd.f32 0.0, %v4924
      %4926 = vmatmul.bf16.gmra.mxu0 %v4625
      %v4927 = vpop.f32.mrf.mxu0
      %v4928 = vadd.f32 0.0, %v4927
      %v4929 = vpop.f32.mrf.mxu0
      %v4930 = vadd.f32 0.0, %v4929
      %4931 = vmatmul.bf16.gmra.mxu0 %v4628
      %v4932 = vpop.f32.mrf.mxu0
      %v4933 = vadd.f32 0.0, %v4932
      %v4934 = vpop.f32.mrf.mxu0
      %v4935 = vadd.f32 0.0, %v4934
      %4936 = vmatmul.bf16.gmra.mxu0 %v4631
      %v4937 = vpop.f32.mrf.mxu0
      %v4938 = vadd.f32 0.0, %v4937
      %v4939 = vpop.f32.mrf.mxu0
      %v4940 = vadd.f32 0.0, %v4939
      %4941 = vmatmul.bf16.gmra.mxu0 %v4893
      %v4942 = vpop.f32.mrf.mxu0
      %v4943 = vadd.f32 0.0, %v4942
      %v4944 = vpop.f32.mrf.mxu0
      %v4945 = vadd.f32 0.0, %v4944
      %4946 = vdwg.mxu0
      %v4947 = vadd.f32 %v4863, %v4908
      %v4948 = vadd.f32 %v4864, %v4910
      %v4949 = vadd.f32 %v4865, %v4913
      %v4950 = vadd.f32 %v4866, %v4915
      %v4951 = vadd.f32 %v4867, %v4918
      %v4952 = vadd.f32 %v4868, %v4920
      %v4953 = vadd.f32 %v4869, %v4923
      %v4954 = vadd.f32 %v4870, %v4925
      %v4955 = vadd.f32 %v4871, %v4928
      %v4956 = vadd.f32 %v4872, %v4930
      %v4957 = vadd.f32 %v4873, %v4933
      %v4958 = vadd.f32 %v4874, %v4935
      %v4959 = vadd.f32 %v4875, %v4938
      %v4960 = vadd.f32 %v4876, %v4940
      %v4961 = vadd.f32 %v4877, %v4943
      %v4962 = vadd.f32 %v4878, %v4945
      %s4963 = scalar_lea.vmem %s2, 12
      %v4964 = vld [vmem:[%s4963] sm:$0x3]
      %v4967 = vunpack.c.l.b16 %v4105
      %v4968 = vunpack.c.l.b16 %v4106
      %v4969 = vpack.c.b16 %v4968, %v4967
      %v4971 = vsel %vm693, %v4969, 0
      %v4974 = vsel %vm739, %v4964, 0
      %4976 = vmatpush.bf16.msra.mxu0 0
      %4977 = vmatpush.bf16.msra.mxu0 0
      %4978 = vmatpush.bf16.msra.mxu0 0
      %4979 = vmatpush.bf16.msra.mxu0 0
      %4980 = vmatpush.bf16.msra.mxu0 0
      %4981 = vmatpush.bf16.msra.mxu0 0
      %4982 = vmatpush.bf16.msra.mxu0 0
      %4983 = vmatpush.bf16.msra.mxu0 %v4974
      %4984 = vmatmul.bf16.gmra.mxu0 %v4450
      %v4985 = vpop.f32.mrf.mxu0
      %v4986 = vadd.f32 0.0, %v4985
      %v4987 = vpop.f32.mrf.mxu0
      %v4988 = vadd.f32 0.0, %v4987
      %4989 = vmatmul.bf16.gmra.mxu0 %v4453
      %v4990 = vpop.f32.mrf.mxu0
      %v4991 = vadd.f32 0.0, %v4990
      %v4992 = vpop.f32.mrf.mxu0
      %v4993 = vadd.f32 0.0, %v4992
      %4994 = vmatmul.bf16.gmra.mxu0 %v4456
      %v4995 = vpop.f32.mrf.mxu0
      %v4996 = vadd.f32 0.0, %v4995
      %v4997 = vpop.f32.mrf.mxu0
      %v4998 = vadd.f32 0.0, %v4997
      %4999 = vmatmul.bf16.gmra.mxu0 %v4459
      %v5000 = vpop.f32.mrf.mxu0
      %v5001 = vadd.f32 0.0, %v5000
      %v5002 = vpop.f32.mrf.mxu0
      %v5003 = vadd.f32 0.0, %v5002
      %5004 = vmatmul.bf16.gmra.mxu0 %v4462
      %v5005 = vpop.f32.mrf.mxu0
      %v5006 = vadd.f32 0.0, %v5005
      %v5007 = vpop.f32.mrf.mxu0
      %v5008 = vadd.f32 0.0, %v5007
      %5009 = vmatmul.bf16.gmra.mxu0 %v4465
      %v5010 = vpop.f32.mrf.mxu0
      %v5011 = vadd.f32 0.0, %v5010
      %v5012 = vpop.f32.mrf.mxu0
      %v5013 = vadd.f32 0.0, %v5012
      %5014 = vmatmul.bf16.gmra.mxu0 %v4709
      %v5015 = vpop.f32.mrf.mxu0
      %v5016 = vadd.f32 0.0, %v5015
      %v5017 = vpop.f32.mrf.mxu0
      %v5018 = vadd.f32 0.0, %v5017
      %5019 = vmatmul.bf16.gmra.mxu0 %v4971
      %v5020 = vpop.f32.mrf.mxu0
      %v5021 = vadd.f32 0.0, %v5020
      %v5022 = vpop.f32.mrf.mxu0
      %v5023 = vadd.f32 0.0, %v5022
      %5024 = vdwg.mxu0
      %v5025 = vadd.f32 %v4947, %v4986
      %v5026 = vadd.f32 %v4948, %v4988
      %v5027 = vadd.f32 %v4949, %v4991
      %v5028 = vadd.f32 %v4950, %v4993
      %v5029 = vadd.f32 %v4951, %v4996
      %v5030 = vadd.f32 %v4952, %v4998
      %v5031 = vadd.f32 %v4953, %v5001
      %v5032 = vadd.f32 %v4954, %v5003
      %v5033 = vadd.f32 %v4955, %v5006
      %v5034 = vadd.f32 %v4956, %v5008
      %v5035 = vadd.f32 %v4957, %v5011
      %v5036 = vadd.f32 %v4958, %v5013
      %v5037 = vadd.f32 %v4959, %v5016
      %v5038 = vadd.f32 %v4960, %v5018
      %v5039 = vadd.f32 %v4961, %v5021
      %v5040 = vadd.f32 %v4962, %v5023
      %v5042 = vshrl.u32 %v4105, 16
      %v5044 = vrot.slane %v5042, 4
      %v5045 = vshll.u32 %v4105, 16
      %v5047 = vrot.slane %v5045, 5
      %v5048 = vor.u32 %v5044, %v5047
      %v5049 = vrot.slane %v5048, 4
      %v5051 = vshll.u32 %v4106, 16
      %v5053 = vrot.slane %v5051, 5
      %v5054 = vsel %vm305, %v5049, %v5053
      %v5055 = vshrl.u32 %v4106, 16
      %v5057 = vrot.slane %v5055, 4
      %v5058 = vor.u32 %v5057, %v5053
      %v5059 = vrot.slane %v5058, 4
      %v5061 = vshll.u32 %v4107, 16
      %v5063 = vrot.slane %v5061, 5
      %v5064 = vsel %vm305, %v5059, %v5063
      %s5065 = scalar_lea.vmem %s2, 14
      %v5066 = vld [vmem:[%s5065] sm:$0x3]
      %v5067 = vunpack.c.l.b16 %v5054
      %v5068 = vunpack.c.l.b16 %v5064
      %v5069 = vpack.c.b16 %v5068, %v5067
      %v5071 = vsel %vm693, %v5069, 0
      %v5074 = vsel %vm739, %v5066, 0
      %5076 = vmatpush.bf16.msra.mxu0 0
      %5077 = vmatpush.bf16.msra.mxu0 0
      %5078 = vmatpush.bf16.msra.mxu0 0
      %5079 = vmatpush.bf16.msra.mxu0 0
      %5080 = vmatpush.bf16.msra.mxu0 0
      %5081 = vmatpush.bf16.msra.mxu0 0
      %5082 = vmatpush.bf16.msra.mxu0 0
      %5083 = vmatpush.bf16.msra.mxu0 %v5074
      %5084 = vmatmul.bf16.gmra.mxu0 %v4334
      %v5085 = vpop.f32.mrf.mxu0
      %v5086 = vadd.f32 0.0, %v5085
      %v5087 = vpop.f32.mrf.mxu0
      %v5088 = vadd.f32 0.0, %v5087
      %5089 = vmatmul.bf16.gmra.mxu0 %v4337
      %v5090 = vpop.f32.mrf.mxu0
      %v5091 = vadd.f32 0.0, %v5090
      %v5092 = vpop.f32.mrf.mxu0
      %v5093 = vadd.f32 0.0, %v5092
      %5094 = vmatmul.bf16.gmra.mxu0 %v4340
      %v5095 = vpop.f32.mrf.mxu0
      %v5096 = vadd.f32 0.0, %v5095
      %v5097 = vpop.f32.mrf.mxu0
      %v5098 = vadd.f32 0.0, %v5097
      %5099 = vmatmul.bf16.gmra.mxu0 %v4343
      %v5100 = vpop.f32.mrf.mxu0
      %v5101 = vadd.f32 0.0, %v5100
      %v5102 = vpop.f32.mrf.mxu0
      %v5103 = vadd.f32 0.0, %v5102
      %5104 = vmatmul.bf16.gmra.mxu0 %v4346
      %v5105 = vpop.f32.mrf.mxu0
      %v5106 = vadd.f32 0.0, %v5105
      %v5107 = vpop.f32.mrf.mxu0
      %v5108 = vadd.f32 0.0, %v5107
      %5109 = vmatmul.bf16.gmra.mxu0 %v4349
      %v5110 = vpop.f32.mrf.mxu0
      %v5111 = vadd.f32 0.0, %v5110
      %v5112 = vpop.f32.mrf.mxu0
      %v5113 = vadd.f32 0.0, %v5112
      %5114 = vmatmul.bf16.gmra.mxu0 %v4809
      %v5115 = vpop.f32.mrf.mxu0
      %v5116 = vadd.f32 0.0, %v5115
      %v5117 = vpop.f32.mrf.mxu0
      %v5118 = vadd.f32 0.0, %v5117
      %5119 = vmatmul.bf16.gmra.mxu0 %v5071
      %v5120 = vpop.f32.mrf.mxu0
      %v5121 = vadd.f32 0.0, %v5120
      %v5122 = vpop.f32.mrf.mxu0
      %v5123 = vadd.f32 0.0, %v5122
      %5124 = vdwg.mxu0
      %v5125 = vadd.f32 %v5025, %v5086
      %v5126 = vadd.f32 %v5026, %v5088
      %v5127 = vadd.f32 %v5027, %v5091
      %v5128 = vadd.f32 %v5028, %v5093
      %v5129 = vadd.f32 %v5029, %v5096
      %v5130 = vadd.f32 %v5030, %v5098
      %v5131 = vadd.f32 %v5031, %v5101
      %v5132 = vadd.f32 %v5032, %v5103
      %v5133 = vadd.f32 %v5033, %v5106
      %v5134 = vadd.f32 %v5034, %v5108
      %v5135 = vadd.f32 %v5035, %v5111
      %v5136 = vadd.f32 %v5036, %v5113
      %v5137 = vadd.f32 %v5037, %v5116
      %v5138 = vadd.f32 %v5038, %v5118
      %v5139 = vadd.f32 %v5039, %v5121
      %v5140 = vadd.f32 %v5040, %v5123
      %v5142 = vrot.slane %v4105, 5
      %v5143 = vrot.slane %v5142, 4
      %v5144 = vrot.slane %v4106, 5
      %v5145 = vsel %vm1066, %v5143, %v5144
      %v5146 = vrot.slane %v5144, 4
      %v5147 = vrot.slane %v4107, 5
      %v5148 = vsel %vm1066, %v5146, %v5147
      %s5149 = scalar_lea.vmem %s2, 16
      %v5150 = vld [vmem:[%s5149] sm:$0x3]
      %v5151 = vunpack.c.l.b16 %v5145
      %v5152 = vunpack.c.l.b16 %v5148
      %v5153 = vpack.c.b16 %v5152, %v5151
      %v5155 = vsel %vm693, %v5153, 0
      %v5158 = vsel %vm739, %v5150, 0
      %5160 = vmatpush.bf16.msra.mxu0 0
      %5161 = vmatpush.bf16.msra.mxu0 0
      %5162 = vmatpush.bf16.msra.mxu0 0
      %5163 = vmatpush.bf16.msra.mxu0 0
      %5164 = vmatpush.bf16.msra.mxu0 0
      %5165 = vmatpush.bf16.msra.mxu0 0
      %5166 = vmatpush.bf16.msra.mxu0 0
      %5167 = vmatpush.bf16.msra.mxu0 %v5158
      %5168 = vmatmul.bf16.gmra.mxu0 %v4616
      %v5169 = vpop.f32.mrf.mxu0
      %v5170 = vadd.f32 0.0, %v5169
      %v5171 = vpop.f32.mrf.mxu0
      %v5172 = vadd.f32 0.0, %v5171
      %5173 = vmatmul.bf16.gmra.mxu0 %v4619
      %v5174 = vpop.f32.mrf.mxu0
      %v5175 = vadd.f32 0.0, %v5174
      %v5176 = vpop.f32.mrf.mxu0
      %v5177 = vadd.f32 0.0, %v5176
      %5178 = vmatmul.bf16.gmra.mxu0 %v4622
      %v5179 = vpop.f32.mrf.mxu0
      %v5180 = vadd.f32 0.0, %v5179
      %v5181 = vpop.f32.mrf.mxu0
      %v5182 = vadd.f32 0.0, %v5181
      %5183 = vmatmul.bf16.gmra.mxu0 %v4625
      %v5184 = vpop.f32.mrf.mxu0
      %v5185 = vadd.f32 0.0, %v5184
      %v5186 = vpop.f32.mrf.mxu0
      %v5187 = vadd.f32 0.0, %v5186
      %5188 = vmatmul.bf16.gmra.mxu0 %v4628
      %v5189 = vpop.f32.mrf.mxu0
      %v5190 = vadd.f32 0.0, %v5189
      %v5191 = vpop.f32.mrf.mxu0
      %v5192 = vadd.f32 0.0, %v5191
      %5193 = vmatmul.bf16.gmra.mxu0 %v4631
      %v5194 = vpop.f32.mrf.mxu0
      %v5195 = vadd.f32 0.0, %v5194
      %v5196 = vpop.f32.mrf.mxu0
      %v5197 = vadd.f32 0.0, %v5196
      %5198 = vmatmul.bf16.gmra.mxu0 %v4893
      %v5199 = vpop.f32.mrf.mxu0
      %v5200 = vadd.f32 0.0, %v5199
      %v5201 = vpop.f32.mrf.mxu0
      %v5202 = vadd.f32 0.0, %v5201
      %5203 = vmatmul.bf16.gmra.mxu0 %v5155
      %v5204 = vpop.f32.mrf.mxu0
      %v5205 = vadd.f32 0.0, %v5204
      %v5206 = vpop.f32.mrf.mxu0
      %v5207 = vadd.f32 0.0, %v5206
      %5208 = vdwg.mxu0
      %v5209 = vadd.f32 %v5125, %v5170
      %v5210 = vadd.f32 %v5126, %v5172
      %v5211 = vadd.f32 %v5127, %v5175
      %v5212 = vadd.f32 %v5128, %v5177
      %v5213 = vadd.f32 %v5129, %v5180
      %v5214 = vadd.f32 %v5130, %v5182
      %v5215 = vadd.f32 %v5131, %v5185
      %v5216 = vadd.f32 %v5132, %v5187
      %v5217 = vadd.f32 %v5133, %v5190
      %v5218 = vadd.f32 %v5134, %v5192
      %v5219 = vadd.f32 %v5135, %v5195
      %v5220 = vadd.f32 %v5136, %v5197
      %v5221 = vadd.f32 %v5137, %v5200
      %v5222 = vadd.f32 %v5138, %v5202
      %v5223 = vadd.f32 %v5139, %v5205
      %v5224 = vadd.f32 %v5140, %v5207
      %v5225 = vld [vmem:[%s2594] sm:$0xe]
      %v5226 = vld [vmem:[%s2594 + $0x4] sm:$0xf]
      %v5227 = vld [vmem:[%s2594 + $0x8] sm:$0x1]
      %v5228 = vld [vmem:[%s2594 + $0x10] sm:$0xe]
      %v5229 = vld [vmem:[%s2594 + $0x14] sm:$0xf]
      %v5230 = vld [vmem:[%s2594 + $0x18] sm:$0x1]
      %v5231 = vld [vmem:[%s2594 + $0x20] sm:$0xe]
      %v5232 = vld [vmem:[%s2594 + $0x24] sm:$0xf]
      %v5233 = vld [vmem:[%s2594 + $0x28] sm:$0x1]
      %v5234 = vld [vmem:[%s2594 + $0x30] sm:$0xe]
      %v5235 = vld [vmem:[%s2594 + $0x34] sm:$0xf]
      %v5236 = vld [vmem:[%s2594 + $0x38] sm:$0x1]
      %v5237 = vld [vmem:[%s2594 + $0x40] sm:$0xe]
      %v5238 = vld [vmem:[%s2594 + $0x44] sm:$0xf]
      %v5239 = vld [vmem:[%s2594 + $0x48] sm:$0x1]
      %v5240 = vld [vmem:[%s2594 + $0x50] sm:$0xe]
      %v5241 = vld [vmem:[%s2594 + $0x54] sm:$0xf]
      %v5242 = vld [vmem:[%s2594 + $0x58] sm:$0x1]
      %v5243 = vld [vmem:[%s2594 + $0x60] sm:$0xe]
      %v5244 = vld [vmem:[%s2594 + $0x64] sm:$0xf]
      %v5245 = vld [vmem:[%s2594 + $0x68] sm:$0x1]
      %v5246 = vld [vmem:[%s2594 + $0x70] sm:$0xe]
      %v5247 = vld [vmem:[%s2594 + $0x74] sm:$0xf]
      %v5248 = vld [vmem:[%s2594 + $0x78] sm:$0x1]
      %v5273 = vrot.slane %v5225, 5
      %v5274 = vrot.slane %v5273, 4
      %v5275 = vrot.slane %v5226, 5
      %v5276 = vsel %vm1066, %v5274, %v5275
      %v5277 = vrot.slane %v5275, 4
      %v5278 = vrot.slane %v5227, 5
      %v5279 = vsel %vm1066, %v5277, %v5278
      %v5280 = vrot.slane %v5228, 5
      %v5281 = vrot.slane %v5280, 4
      %v5282 = vrot.slane %v5229, 5
      %v5283 = vsel %vm1066, %v5281, %v5282
      %v5284 = vrot.slane %v5282, 4
      %v5285 = vrot.slane %v5230, 5
      %v5286 = vsel %vm1066, %v5284, %v5285
      %v5287 = vrot.slane %v5231, 5
      %v5288 = vrot.slane %v5287, 4
      %v5289 = vrot.slane %v5232, 5
      %v5290 = vsel %vm1066, %v5288, %v5289
      %v5291 = vrot.slane %v5289, 4
      %v5292 = vrot.slane %v5233, 5
      %v5293 = vsel %vm1066, %v5291, %v5292
      %v5294 = vrot.slane %v5234, 5
      %v5295 = vrot.slane %v5294, 4
      %v5296 = vrot.slane %v5235, 5
      %v5297 = vsel %vm1066, %v5295, %v5296
      %v5298 = vrot.slane %v5296, 4
      %v5299 = vrot.slane %v5236, 5
      %v5300 = vsel %vm1066, %v5298, %v5299
      %v5301 = vrot.slane %v5237, 5
      %v5302 = vrot.slane %v5301, 4
      %v5303 = vrot.slane %v5238, 5
      %v5304 = vsel %vm1066, %v5302, %v5303
      %v5305 = vrot.slane %v5303, 4
      %v5306 = vrot.slane %v5239, 5
      %v5307 = vsel %vm1066, %v5305, %v5306
      %v5308 = vrot.slane %v5240, 5
      %v5309 = vrot.slane %v5308, 4
      %v5310 = vrot.slane %v5241, 5
      %v5311 = vsel %vm1066, %v5309, %v5310
      %v5312 = vrot.slane %v5310, 4
      %v5313 = vrot.slane %v5242, 5
      %v5314 = vsel %vm1066, %v5312, %v5313
      %v5315 = vrot.slane %v5243, 5
      %v5316 = vrot.slane %v5315, 4
      %v5317 = vrot.slane %v5244, 5
      %v5318 = vsel %vm1066, %v5316, %v5317
      %v5319 = vrot.slane %v5317, 4
      %v5320 = vrot.slane %v5245, 5
      %v5321 = vsel %vm1066, %v5319, %v5320
      %v5322 = vrot.slane %v5246, 5
      %v5323 = vrot.slane %v5322, 4
      %v5324 = vrot.slane %v5247, 5
      %v5325 = vsel %vm1066, %v5323, %v5324
      %v5326 = vrot.slane %v5324, 4
      %v5327 = vrot.slane %v5248, 5
      %v5328 = vsel %vm1066, %v5326, %v5327
      %v5345 = vunpack.c.l.bf16 %v5276
      %v5346 = vunpack.c.l.bf16 %v5279
      %v5347 = vunpack.c.l.bf16 %v5283
      %v5348 = vunpack.c.l.bf16 %v5286
      %v5349 = vunpack.c.l.bf16 %v5290
      %v5350 = vunpack.c.l.bf16 %v5293
      %v5351 = vunpack.c.l.bf16 %v5297
      %v5352 = vunpack.c.l.bf16 %v5300
      %v5353 = vunpack.c.l.bf16 %v5304
      %v5354 = vunpack.c.l.bf16 %v5307
      %v5355 = vunpack.c.l.bf16 %v5311
      %v5356 = vunpack.c.l.bf16 %v5314
      %v5357 = vunpack.c.l.bf16 %v5318
      %v5358 = vunpack.c.l.bf16 %v5321
      %v5359 = vunpack.c.l.bf16 %v5325
      %v5360 = vunpack.c.l.bf16 %v5328
      %v5361 = vld [vmem:[%s4] sm:$0x1]
      %v5363 = vperm.slane %v5361, 0
      %v5365 = vadd.f32 %v5209, %v5363
      %v5366 = vadd.f32 %v5210, %v5363
      %v5367 = vadd.f32 %v5211, %v5363
      %v5368 = vadd.f32 %v5212, %v5363
      %v5369 = vadd.f32 %v5213, %v5363
      %v5370 = vadd.f32 %v5214, %v5363
      %v5371 = vadd.f32 %v5215, %v5363
      %v5372 = vadd.f32 %v5216, %v5363
      %v5373 = vadd.f32 %v5217, %v5363
      %v5374 = vadd.f32 %v5218, %v5363
      %v5375 = vadd.f32 %v5219, %v5363
      %v5376 = vadd.f32 %v5220, %v5363
      %v5377 = vadd.f32 %v5221, %v5363
      %v5378 = vadd.f32 %v5222, %v5363
      %v5379 = vadd.f32 %v5223, %v5363
      %v5380 = vadd.f32 %v5224, %v5363
      %v5381 = vadd.f32 %v5365, %v5345
      %v5382 = vadd.f32 %v5366, %v5346
      %v5383 = vadd.f32 %v5367, %v5347
      %v5384 = vadd.f32 %v5368, %v5348
      %v5385 = vadd.f32 %v5369, %v5349
      %v5386 = vadd.f32 %v5370, %v5350
      %v5387 = vadd.f32 %v5371, %v5351
      %v5388 = vadd.f32 %v5372, %v5352
      %v5389 = vadd.f32 %v5373, %v5353
      %v5390 = vadd.f32 %v5374, %v5354
      %v5391 = vadd.f32 %v5375, %v5355
      %v5392 = vadd.f32 %v5376, %v5356
      %v5393 = vadd.f32 %v5377, %v5357
      %v5394 = vadd.f32 %v5378, %v5358
      %v5395 = vadd.f32 %v5379, %v5359
      %v5396 = vadd.f32 %v5380, %v5360
      %v5397 = vmax.f32 %v5381, 0.0
      %v5398 = vmax.f32 %v5382, 0.0
      %v5399 = vmax.f32 %v5383, 0.0
      %v5400 = vmax.f32 %v5384, 0.0
      %v5401 = vmax.f32 %v5385, 0.0
      %v5402 = vmax.f32 %v5386, 0.0
      %v5403 = vmax.f32 %v5387, 0.0
      %v5404 = vmax.f32 %v5388, 0.0
      %v5405 = vmax.f32 %v5389, 0.0
      %v5406 = vmax.f32 %v5390, 0.0
      %v5407 = vmax.f32 %v5391, 0.0
      %v5408 = vmax.f32 %v5392, 0.0
      %v5409 = vmax.f32 %v5393, 0.0
      %v5410 = vmax.f32 %v5394, 0.0
      %v5411 = vmax.f32 %v5395, 0.0
      %v5412 = vmax.f32 %v5396, 0.0
      %v5413 = vpack.c.bf16 %v5397, %v5397
      %v5414 = vpack.c.bf16 %v5398, %v5398
      %v5415 = vpack.c.bf16 %v5399, %v5399
      %v5416 = vpack.c.bf16 %v5400, %v5400
      %v5417 = vpack.c.bf16 %v5401, %v5401
      %v5418 = vpack.c.bf16 %v5402, %v5402
      %v5419 = vpack.c.bf16 %v5403, %v5403
      %v5420 = vpack.c.bf16 %v5404, %v5404
      %v5421 = vpack.c.bf16 %v5405, %v5405
      %v5422 = vpack.c.bf16 %v5406, %v5406
      %v5423 = vpack.c.bf16 %v5407, %v5407
      %v5424 = vpack.c.bf16 %v5408, %v5408
      %v5425 = vpack.c.bf16 %v5409, %v5409
      %v5426 = vpack.c.bf16 %v5410, %v5410
      %v5427 = vpack.c.bf16 %v5411, %v5411
      %v5428 = vpack.c.bf16 %v5412, %v5412
      %vm5429 = vcmask 27648
      %5430 = vst.msk [vmem:[%s258] sm:$0xf] %vm5429, %v5413
      %5431 = vst.msk [vmem:[%s258 + $0x4] sm:$0xf] %vm5429, %v5414
      %5432 = vst.msk [vmem:[%s258 + $0x8] sm:$0xf] %vm5429, %v5415
      %5433 = vst.msk [vmem:[%s258 + $0xc] sm:$0xf] %vm5429, %v5416
      %5434 = vst.msk [vmem:[%s258 + $0x10] sm:$0xf] %vm5429, %v5417
      %5435 = vst.msk [vmem:[%s258 + $0x14] sm:$0xf] %vm5429, %v5418
      %5436 = vst.msk [vmem:[%s258 + $0x18] sm:$0xf] %vm5429, %v5419
      %5437 = vst.msk [vmem:[%s258 + $0x1c] sm:$0xf] %vm5429, %v5420
      %5438 = vst.msk [vmem:[%s258 + $0x20] sm:$0xf] %vm5429, %v5421
      %5439 = vst.msk [vmem:[%s258 + $0x24] sm:$0xf] %vm5429, %v5422
      %5440 = vst.msk [vmem:[%s258 + $0x28] sm:$0xf] %vm5429, %v5423
      %5441 = vst.msk [vmem:[%s258 + $0x2c] sm:$0xf] %vm5429, %v5424
      %5442 = vst.msk [vmem:[%s258 + $0x30] sm:$0xf] %vm5429, %v5425
      %5443 = vst.msk [vmem:[%s258 + $0x34] sm:$0xf] %vm5429, %v5426
      %5444 = vst.msk [vmem:[%s258 + $0x38] sm:$0xf] %vm5429, %v5427
      %5445 = vst.msk [vmem:[%s258 + $0x3c] sm:$0xf] %vm5429, %v5428
      %s5446 = smul.u32 %s20, 2
      %s5447 = sadd.s32 %s5446, %s21
      %p5448 = scmp.lt.s32.totalorder %s5447, 3
      %s5449 = scalar_select %p5448, %s5447, 3
      %s5450 = smul.addr %s5449, 16
      %s5451 = smul.addr %s5450, 4
      %s5452 = scalar_lea.vmem %s5, %s5451
      // Predicated region
      $region41: #{tpu_custom_call.1} parent=39 // pred_check
        %p5453 = pneg %p164
      $region42: #{tpu_custom_call.1} parent=39 // pred_check_branch
        %5455 = sbr.rel (%p5453) target = $region44
      $region43: #{tpu_custom_call.1} parent=39 // pred_region
        %s5456 = smul.u32 %s20, 2
        %s5457 = sadd.s32 %s5456, %s21
      $region44: #{tpu_custom_call.1} parent=39 // pred_fallthru
        _
    $region40: #{tpu_custom_call.1} parent=5 // pred_fallthru
      _
    %p5458 = scmp.le.s32.totalorder 2, %s11
    // Predicated region
    $region45: #{tpu_custom_call.1} parent=5 // pred_check
      %p5459 = pneg %p5458
    $region46: #{tpu_custom_call.1} parent=5 // pred_check_branch
      %5461 = sbr.rel (%p5459) target = $region48
    $region47: #{tpu_custom_call.1} parent=5 // pred_region
      %s5462 = ssub.s32 %s11, 2
      // Predicated region
      $region49: #{tpu_custom_call.1} parent=47 // pred_check
        %p5463 = pneg %p170
      $region50: #{tpu_custom_call.1} parent=47 // pred_check_branch
        %5465 = sbr.rel (%p5463) target = $region52
      $region51: #{tpu_custom_call.1} parent=47 // pred_region
        %s5466 = smul.u32 %s22, 2
        %s5467 = sadd.s32 %s5466, %s23
        %p5468 = scmp.lt.s32.totalorder %s5467, 3
        %s5469 = scalar_select %p5468, %s5467, 3
        %s5470 = smul.addr %s5469, 16
        %s5471 = smul.addr %s5470, 4
        %s5472 = scalar_lea.vmem %s5, %s5471
      $region52: #{tpu_custom_call.1} parent=47 // pred_fallthru
        _
    $region48: #{tpu_custom_call.1} parent=5 // pred_fallthru
      _
  $region6: #{tpu_custom_call.1} parent=0 // loop_footer
    %s15 = sadd.s32 1, %s11
  $region7: #{tpu_custom_call.1} parent=0 // loop_footer_branch
    %10 = sbr.rel target = $region3
  $region8: #{tpu_custom_call.1} parent=0 // loop_exit
    _

// kernel: tpu_custom_call.1
$region0: #{tpu_custom_call.1}
  #allocation0 [shape = 'u32[]', space=smem, size = 0x4, offset = 0x4, fixed_abs, tag = 'smem constant byte address 0x4 - core index']
  #allocation1 [shape = 'u32[72,128]{1,0:T(1,128)}', space=vmem, size = 0x9000, scoped, tag = 'internal scratch']
  %s0 = inlined_call_operand.vmem [shape: bf16[4,12,26,4], index: 0, kind: input, shape index: {}]
  %s1 = inlined_call_operand.vmem [shape: bf16[9,4,4], index: 1, kind: input, shape index: {}]
  %s2 = inlined_call_operand.vmem [shape: bf16[9,4,4], index: 2, kind: input, shape index: {}]
  %s3 = inlined_call_operand.vmem [shape: f32[1,4], index: 3, kind: input, shape index: {}]
  %s4 = inlined_call_operand.vmem [shape: f32[1,4], index: 4, kind: input, shape index: {}]
  %s5 = inlined_call_operand.vmem [shape: bf16[4,128,4], index: 5, kind: output, shape index: {}]
  %s6 = sld [smem:[#allocation0]]
  $region53: #{tpu_custom_call.1} parent=0
    _
  %s8 = ssub.s32 1, %s6
  %s9 = scalar_select 0, %s8, %s6
  loop: start=0, step=1, limit=6
  $region2: #{tpu_custom_call.1} parent=0 // loop_pre_header
    _
  $region3: #{tpu_custom_call.1} parent=0 // loop_header
    %s11 = sphi 0, %s15
    %p12 = scmp.ge.s32.totalorder %s11, 6
    %s18 = sphi 0, %s30
    %s19 = sphi 0, %s26
    %s20 = sphi 0, %s18
    %s21 = sphi 0, %s19
    %s22 = sphi 0, %s20
    %s23 = sphi 0, %s21
    %s37 = sphi 0, %s39
    %s40 = sphi 0, %s37
    %s41 = sphi 0, %s40
    %s57 = sphi 0, %s41
    %s61 = sphi 0, %s61
    %s63 = sphi 0, %s61
    %s64 = sphi 0, %s63
    %s78 = sphi 0, %s64
    %s82 = sphi 0, %s82
    %s84 = sphi 0, %s82
    %s85 = sphi 0, %s84
    %s99 = sphi 0, %s85
    %s103 = sphi 0, %s103
    %s105 = sphi 0, %s103
    %s106 = sphi 0, %s105
    %s120 = sphi 0, %s106
    %s124 = sphi 0, %s124
    %s126 = sphi 0, %s124
    %s127 = sphi 0, %s126
    %s141 = sphi 0, %s127
    %s151 = sphi 0, %s153
    %s154 = sphi 0, %s151
    %s155 = sphi 0, %s154
    %s171 = sphi 0, %s155
  $region4: #{tpu_custom_call.1} parent=0 // loop_header_branch
    %14 = sbr.rel (%p12) target = $region8
  $region5: #{tpu_custom_call.1} parent=0 // loop_body
    %s16 = ssub.s32 %s11, 1
    %s17 = ssub.s32 %s11, 2
    %s24 = sadd.s32 1, %s19
    %p25 = scmp.ge.s32.totalorder %s24, 2
    %s26 = scalar_select %p25, 0, %s24
    %s27 = sadd.s32 1, %s18
    %s28 = scalar_select %p25, %s27, %s18
    %p29 = scmp.ge.s32.totalorder %s28, 2
    %s30 = scalar_select %p29, 0, %s28
    %s31 = smul.u32 %s18, 2
    %s32 = sadd.s32 %s31, %s19
    %s33 = smul.u32 %s30, 2
    %s34 = sadd.s32 %s33, %s26
    %s35 = ssub.s32 %s32, %s34
    %p36 = scmp.eq.s32.totalorder %s35, 0
    %s38 = sadd.s32 %s37, 1
    %s39 = scalar_select %p36, %s37, %s38
    %p42 = pneg %p36
    %p43 = scmp.eq.s32.totalorder %s11, 3
    %p44 = por %p42, %p43
    %p45 = scmp.ne.s32.totalorder %s37, %s40
    %p46 = scmp.eq.s32.totalorder %s11, 0
    %p47 = por %p45, %p46
    %p48 = scmp.ne.s32.totalorder %s37, %s40
    %p49 = scmp.eq.s32.totalorder %s16, 3
    %p50 = por %p48, %p49
    %p51 = scmp.ne.s32.totalorder %s40, %s41
    %p52 = scmp.eq.s32.totalorder %s16, 0
    %p53 = por %p51, %p52
    %p54 = scmp.ne.s32.totalorder %s40, %s41
    %p55 = scmp.eq.s32.totalorder %s17, 3
    %p56 = por %p54, %p55
    %p58 = scmp.ne.s32.totalorder %s41, %s57
    %p59 = scmp.eq.s32.totalorder %s17, 0
    %p60 = por %p58, %p59
    %s62 = sadd.s32 %s61, 1
    %p65 = scmp.eq.s32.totalorder %s11, 3
    %p66 = scmp.ne.s32.totalorder %s61, %s63
    %p67 = scmp.eq.s32.totalorder %s11, 0
    %p68 = por %p66, %p67
    %p69 = scmp.ne.s32.totalorder %s61, %s63
    %p70 = scmp.eq.s32.totalorder %s16, 3
    %p71 = por %p69, %p70
    %p72 = scmp.ne.s32.totalorder %s63, %s64
    %p73 = scmp.eq.s32.totalorder %s16, 0
    %p74 = por %p72, %p73
    %p75 = scmp.ne.s32.totalorder %s63, %s64
    %p76 = scmp.eq.s32.totalorder %s17, 3
    %p77 = por %p75, %p76
    %p79 = scmp.ne.s32.totalorder %s64, %s78
    %p80 = scmp.eq.s32.totalorder %s17, 0
    %p81 = por %p79, %p80
    %s83 = sadd.s32 %s82, 1
    %p86 = scmp.eq.s32.totalorder %s11, 3
    %p87 = scmp.ne.s32.totalorder %s82, %s84
    %p88 = scmp.eq.s32.totalorder %s11, 0
    %p89 = por %p87, %p88
    %p90 = scmp.ne.s32.totalorder %s82, %s84
    %p91 = scmp.eq.s32.totalorder %s16, 3
    %p92 = por %p90, %p91
    %p93 = scmp.ne.s32.totalorder %s84, %s85
    %p94 = scmp.eq.s32.totalorder %s16, 0
    %p95 = por %p93, %p94
    %p96 = scmp.ne.s32.totalorder %s84, %s85
    %p97 = scmp.eq.s32.totalorder %s17, 3
    %p98 = por %p96, %p97
    %p100 = scmp.ne.s32.totalorder %s85, %s99
    %p101 = scmp.eq.s32.totalorder %s17, 0
    %p102 = por %p100, %p101
    %s104 = sadd.s32 %s103, 1
    %p107 = scmp.eq.s32.totalorder %s11, 3
    %p108 = scmp.ne.s32.totalorder %s103, %s105
    %p109 = scmp.eq.s32.totalorder %s11, 0
    %p110 = por %p108, %p109
    %p111 = scmp.ne.s32.totalorder %s103, %s105
    %p112 = scmp.eq.s32.totalorder %s16, 3
    %p113 = por %p111, %p112
    %p114 = scmp.ne.s32.totalorder %s105, %s106
    %p115 = scmp.eq.s32.totalorder %s16, 0
    %p116 = por %p114, %p115
    %p117 = scmp.ne.s32.totalorder %s105, %s106
    %p118 = scmp.eq.s32.totalorder %s17, 3
    %p119 = por %p117, %p118
    %p121 = scmp.ne.s32.totalorder %s106, %s120
    %p122 = scmp.eq.s32.totalorder %s17, 0
    %p123 = por %p121, %p122
    %s125 = sadd.s32 %s124, 1
    %p128 = scmp.eq.s32.totalorder %s11, 3
    %p129 = scmp.ne.s32.totalorder %s124, %s126
    %p130 = scmp.eq.s32.totalorder %s11, 0
    %p131 = por %p129, %p130
    %p132 = scmp.ne.s32.totalorder %s124, %s126
    %p133 = scmp.eq.s32.totalorder %s16, 3
    %p134 = por %p132, %p133
    %p135 = scmp.ne.s32.totalorder %s126, %s127
    %p136 = scmp.eq.s32.totalorder %s16, 0
    %p137 = por %p135, %p136
    %p138 = scmp.ne.s32.totalorder %s126, %s127
    %p139 = scmp.eq.s32.totalorder %s17, 3
    %p140 = por %p138, %p139
    %p142 = scmp.ne.s32.totalorder %s127, %s141
    %p143 = scmp.eq.s32.totalorder %s17, 0
    %p144 = por %p142, %p143
    %s145 = smul.u32 %s18, 2
    %s146 = sadd.s32 %s145, %s19
    %s147 = smul.u32 %s30, 2
    %s148 = sadd.s32 %s147, %s26
    %s149 = ssub.s32 %s146, %s148
    %p150 = scmp.eq.s32.totalorder %s149, 0
    %s152 = sadd.s32 %s151, 1
    %s153 = scalar_select %p150, %s151, %s152
    %p156 = pneg %p150
    %p157 = scmp.eq.s32.totalorder %s11, 3
    %p158 = por %p156, %p157
    %p159 = scmp.ne.s32.totalorder %s151, %s154
    %p160 = scmp.eq.s32.totalorder %s11, 0
    %p161 = por %p159, %p160
    %p162 = scmp.ne.s32.totalorder %s151, %s154
    %p163 = scmp.eq.s32.totalorder %s16, 3
    %p164 = por %p162, %p163
    %p165 = scmp.ne.s32.totalorder %s154, %s155
    %p166 = scmp.eq.s32.totalorder %s16, 0
    %p167 = por %p165, %p166
    %p168 = scmp.ne.s32.totalorder %s154, %s155
    %p169 = scmp.eq.s32.totalorder %s17, 3
    %p170 = por %p168, %p169
    %p172 = scmp.ne.s32.totalorder %s155, %s171
    %p173 = scmp.eq.s32.totalorder %s17, 0
    %p174 = por %p172, %p173
    %p175 = scmp.le.s32.totalorder 1, %s11
    %p176 = scmp.lt.s32.totalorder %s11, 5
    %p177 = pnand %p175, %p176
    %p178 = pneg %p177
    // Predicated region
    $region9: #{tpu_custom_call.1} parent=5 // pred_check
      _
    $region10: #{tpu_custom_call.1} parent=5 // pred_check_branch
      %180 = sbr.rel (%p177) target = $region12
    $region11: #{tpu_custom_call.1} parent=5 // pred_region
      %s181 = ssub.s32 %s11, 1
      // Predicated region
      $region13: #{tpu_custom_call.1} parent=11 // pred_check
        %p182 = pneg %p74
      $region14: #{tpu_custom_call.1} parent=11 // pred_check_branch
        %184 = sbr.rel (%p182) target = $region16
      $region15: #{tpu_custom_call.1} parent=11 // pred_region
        _
      $region16: #{tpu_custom_call.1} parent=11 // pred_fallthru
        _
      // Predicated region
      $region17: #{tpu_custom_call.1} parent=11 // pred_check
        %p185 = pneg %p95
      $region18: #{tpu_custom_call.1} parent=11 // pred_check_branch
        %187 = sbr.rel (%p185) target = $region20
      $region19: #{tpu_custom_call.1} parent=11 // pred_region
        _
      $region20: #{tpu_custom_call.1} parent=11 // pred_fallthru
        _
      // Predicated region
      $region21: #{tpu_custom_call.1} parent=11 // pred_check
        %p188 = pneg %p116
      $region22: #{tpu_custom_call.1} parent=11 // pred_check_branch
        %190 = sbr.rel (%p188) target = $region24
      $region23: #{tpu_custom_call.1} parent=11 // pred_region
        _
      $region24: #{tpu_custom_call.1} parent=11 // pred_fallthru
        _
      // Predicated region
      $region25: #{tpu_custom_call.1} parent=11 // pred_check
        %p191 = pneg %p137
      $region26: #{tpu_custom_call.1} parent=11 // pred_check_branch
        %193 = sbr.rel (%p191) target = $region28
      $region27: #{tpu_custom_call.1} parent=11 // pred_region
        _
      $region28: #{tpu_custom_call.1} parent=11 // pred_fallthru
        _
    $region12: #{tpu_custom_call.1} parent=5 // pred_fallthru
      _
    %p194 = scmp.lt.s32.totalorder %s11, 4
    // Predicated region
    $region29: #{tpu_custom_call.1} parent=5 // pred_check
      %p195 = pneg %p194
    $region30: #{tpu_custom_call.1} parent=5 // pred_check_branch
      %197 = sbr.rel (%p195) target = $region32
    $region31: #{tpu_custom_call.1} parent=5 // pred_region
      // Predicated region
      $region33: #{tpu_custom_call.1} parent=31 // pred_check
        %p198 = pneg %p47
      $region34: #{tpu_custom_call.1} parent=31 // pred_check_branch
        %200 = sbr.rel (%p198) target = $region36
      $region35: #{tpu_custom_call.1} parent=31 // pred_region
        %s201 = smul.u32 %s18, 2
        %s202 = sadd.s32 %s201, %s19
        %p203 = scmp.lt.s32.totalorder %s202, 3
        %s204 = scalar_select %p203, %s202, 3
        %s205 = smul.addr %s204, 48
        %s206 = smul.addr %s205, 4
        %s207 = scalar_lea.vmem %s0, %s206
        %s208 = smul.u32 %s18, 2
        %s209 = sadd.s32 %s208, %s19
      $region36: #{tpu_custom_call.1} parent=31 // pred_fallthru
        _
    $region32: #{tpu_custom_call.1} parent=5 // pred_fallthru
      _
    %p210 = scmp.le.s32.totalorder 1, %s11
    %p211 = scmp.lt.s32.totalorder %s11, 5
    %p212 = pnand %p210, %p211
    %p213 = pneg %p212
    // Predicated region
    $region37: #{tpu_custom_call.1} parent=5 // pred_check
      _
    $region38: #{tpu_custom_call.1} parent=5 // pred_check_branch
      %215 = sbr.rel (%p212) target = $region40
    $region39: #{tpu_custom_call.1} parent=5 // pred_region
      %s216 = ssub.s32 %s11, 1
      %s217 = smul.u32 %s20, 2
      %s218 = sadd.s32 %s217, %s21
      %p219 = scmp.lt.s32.totalorder %s218, 3
      %s220 = scalar_select %p219, %s218, 3
      %s221 = smul.addr %s220, 48
      %s222 = smul.addr %s221, 4
      %s223 = scalar_lea.vmem %s0, %s222
      %p224 = pneg %p53
      %p225 = pneg %p50
      %p226 = pneg %p74
      %p227 = pneg %p71
      %p228 = pneg %p95
      %p229 = pneg %p92
      %p230 = pneg %p116
      %p231 = pneg %p113
      %p232 = pneg %p137
      %p233 = pneg %p134
      %p234 = pneg %p167
      %p235 = pneg %p164
      %s236 = smul.u32 %s20, 2
      %s237 = sadd.s32 %s236, %s21
      %p238 = scmp.lt.s32.totalorder %s237, 3
      %s239 = scalar_select %p238, %s237, 3
      %s240 = smul.addr %s239, 16
      %s241 = smul.addr %s240, 4
      %s242 = scalar_lea.vmem %s5, %s241
      %s243 = smul.u32 %s20, 2
      %s244 = sadd.s32 %s243, %s21
      %p245 = scmp.lt.s32.totalorder %s244, 3
      %s246 = scalar_select %p245, %s244, 3
      %s247 = smul.addr %s246, 48
      %s248 = smul.addr %s247, 4
      %s249 = scalar_lea.vmem %s0, %s248
      %s250 = smul.u32 %s20, 2
      %s251 = sadd.s32 %s250, %s21
      %s252 = smul.u32 %s20, 2
      %s253 = sadd.s32 %s252, %s21
      %p254 = scmp.lt.s32.totalorder %s253, 3
      %s255 = scalar_select %p254, %s253, 3
      %s256 = smul.addr %s255, 16
      %s257 = smul.addr %s256, 4
      %s258 = scalar_lea.vmem %s5, %s257
      %s259 = smul.u32 %s20, 2
      %s260 = sadd.s32 %s259, %s21
      %v262 = vld [vmem:[%s249] sm:$0xf]
      %v263 = vld [vmem:[%s249 + $0x4] sm:$0xf]
      %v264 = vld [vmem:[%s249 + $0x8] sm:$0xf]
      %v265 = vld [vmem:[%s249 + $0x10] sm:$0xf]
      %v266 = vld [vmem:[%s249 + $0x14] sm:$0xf]
      %v267 = vld [vmem:[%s249 + $0x18] sm:$0xf]
      %v268 = vld [vmem:[%s249 + $0x20] sm:$0xf]
      %v269 = vld [vmem:[%s249 + $0x24] sm:$0xf]
      %v270 = vld [vmem:[%s249 + $0x28] sm:$0xf]
      %v271 = vld [vmem:[%s249 + $0x30] sm:$0xf]
      %v272 = vld [vmem:[%s249 + $0x34] sm:$0xf]
      %v273 = vld [vmem:[%s249 + $0x38] sm:$0xf]
      %v274 = vld [vmem:[%s249 + $0x40] sm:$0xf]
      %v275 = vld [vmem:[%s249 + $0x44] sm:$0xf]
      %v276 = vld [vmem:[%s249 + $0x48] sm:$0xf]
      %v277 = vld [vmem:[%s249 + $0x50] sm:$0xf]
      %v278 = vld [vmem:[%s249 + $0x54] sm:$0xf]
      %v279 = vld [vmem:[%s249 + $0x58] sm:$0xf]
      %v280 = vld [vmem:[%s249 + $0x60] sm:$0xf]
      %v281 = vld [vmem:[%s249 + $0x64] sm:$0xf]
      %v282 = vld [vmem:[%s249 + $0x68] sm:$0xf]
      %v283 = vld [vmem:[%s249 + $0x70] sm:$0xf]
      %v284 = vld [vmem:[%s249 + $0x74] sm:$0xf]
      %v285 = vld [vmem:[%s249 + $0x78] sm:$0xf]
      %v286 = vld [vmem:[%s249 + $0x80] sm:$0xf]
      %v287 = vld [vmem:[%s249 + $0x84] sm:$0xf]
      %v288 = vld [vmem:[%s249 + $0x88] sm:$0xf]
      %v289 = vld [vmem:[%s249 + $0x90] sm:$0xf]
      %v290 = vld [vmem:[%s249 + $0x94] sm:$0xf]
      %v291 = vld [vmem:[%s249 + $0x98] sm:$0xf]
      %v292 = vld [vmem:[%s1] sm:$0x3]
      %v293 = vld [vmem:[%s249 + $0xc] sm:$0x1]
      %v294 = vld [vmem:[%s249 + $0x1c] sm:$0x1]
      %v295 = vld [vmem:[%s249 + $0x2c] sm:$0x1]
      %v296 = vld [vmem:[%s249 + $0x3c] sm:$0x1]
      %v297 = vld [vmem:[%s249 + $0x4c] sm:$0x1]
      %v298 = vld [vmem:[%s249 + $0x5c] sm:$0x1]
      %v299 = vld [vmem:[%s249 + $0x6c] sm:$0x1]
      %v300 = vld [vmem:[%s249 + $0x7c] sm:$0x1]
      %v301 = vld [vmem:[%s249 + $0x8c] sm:$0x1]
      %v302 = vld [vmem:[%s249 + $0x9c] sm:$0x1]
      %vm303 = vsmask.f32 3328
      %vm304 = vsmask.f32 7440
      %vm305 = vmor %vm303, %vm304
      %v307 = vshrl.u32 %v262, 16
      %v309 = vrot.slane %v307, 4
      %v310 = vshll.u32 %v262, 16
      %v312 = vrot.slane %v310, 5
      %v313 = vor.u32 %v309, %v312
      %v314 = vrot.slane %v313, 4
      %v316 = vshll.u32 %v263, 16
      %v318 = vrot.slane %v316, 5
      %v319 = vsel %vm305, %v314, %v318
      %v320 = vshrl.u32 %v263, 16
      %v322 = vrot.slane %v320, 4
      %v323 = vor.u32 %v322, %v318
      %v324 = vrot.slane %v323, 4
      %v326 = vshll.u32 %v264, 16
      %v328 = vrot.slane %v326, 5
      %v329 = vsel %vm305, %v324, %v328
      %v330 = vshrl.u32 %v264, 16
      %v332 = vrot.slane %v330, 4
      %v333 = vor.u32 %v332, %v328
      %v334 = vrot.slane %v333, 4
      %v336 = vshll.u32 %v293, 16
      %v338 = vrot.slane %v336, 5
      %v339 = vsel %vm305, %v334, %v338
      %v341 = vshrl.u32 %v265, 16
      %v343 = vrot.slane %v341, 4
      %v344 = vshll.u32 %v265, 16
      %v346 = vrot.slane %v344, 5
      %v347 = vor.u32 %v343, %v346
      %v348 = vrot.slane %v347, 4
      %v350 = vshll.u32 %v266, 16
      %v352 = vrot.slane %v350, 5
      %v353 = vsel %vm305, %v348, %v352
      %v354 = vshrl.u32 %v266, 16
      %v356 = vrot.slane %v354, 4
      %v357 = vor.u32 %v356, %v352
      %v358 = vrot.slane %v357, 4
      %v360 = vshll.u32 %v267, 16
      %v362 = vrot.slane %v360, 5
      %v363 = vsel %vm305, %v358, %v362
      %v364 = vshrl.u32 %v267, 16
      %v366 = vrot.slane %v364, 4
      %v367 = vor.u32 %v366, %v362
      %v368 = vrot.slane %v367, 4
      %v370 = vshll.u32 %v294, 16
      %v372 = vrot.slane %v370, 5
      %v373 = vsel %vm305, %v368, %v372
      %v375 = vshrl.u32 %v268, 16
      %v377 = vrot.slane %v375, 4
      %v378 = vshll.u32 %v268, 16
      %v380 = vrot.slane %v378, 5
      %v381 = vor.u32 %v377, %v380
      %v382 = vrot.slane %v381, 4
      %v384 = vshll.u32 %v269, 16
      %v386 = vrot.slane %v384, 5
      %v387 = vsel %vm305, %v382, %v386
      %v388 = vshrl.u32 %v269, 16
      %v390 = vrot.slane %v388, 4
      %v391 = vor.u32 %v390, %v386
      %v392 = vrot.slane %v391, 4
      %v394 = vshll.u32 %v270, 16
      %v396 = vrot.slane %v394, 5
      %v397 = vsel %vm305, %v392, %v396
      %v398 = vshrl.u32 %v270, 16
      %v400 = vrot.slane %v398, 4
      %v401 = vor.u32 %v400, %v396
      %v402 = vrot.slane %v401, 4
      %v404 = vshll.u32 %v295, 16
      %v406 = vrot.slane %v404, 5
      %v407 = vsel %vm305, %v402, %v406
      %v409 = vshrl.u32 %v271, 16
      %v411 = vrot.slane %v409, 4
      %v412 = vshll.u32 %v271, 16
      %v414 = vrot.slane %v412, 5
      %v415 = vor.u32 %v411, %v414
      %v416 = vrot.slane %v415, 4
      %v418 = vshll.u32 %v272, 16
      %v420 = vrot.slane %v418, 5
      %v421 = vsel %vm305, %v416, %v420
      %v422 = vshrl.u32 %v272, 16
      %v424 = vrot.slane %v422, 4
      %v425 = vor.u32 %v424, %v420
      %v426 = vrot.slane %v425, 4
      %v428 = vshll.u32 %v273, 16
      %v430 = vrot.slane %v428, 5
      %v431 = vsel %vm305, %v426, %v430
      %v432 = vshrl.u32 %v273, 16
      %v434 = vrot.slane %v432, 4
      %v435 = vor.u32 %v434, %v430
      %v436 = vrot.slane %v435, 4
      %v438 = vshll.u32 %v296, 16
      %v440 = vrot.slane %v438, 5
      %v441 = vsel %vm305, %v436, %v440
      %v443 = vshrl.u32 %v274, 16
      %v445 = vrot.slane %v443, 4
      %v446 = vshll.u32 %v274, 16
      %v448 = vrot.slane %v446, 5
      %v449 = vor.u32 %v445, %v448
      %v450 = vrot.slane %v449, 4
      %v452 = vshll.u32 %v275, 16
      %v454 = vrot.slane %v452, 5
      %v455 = vsel %vm305, %v450, %v454
      %v456 = vshrl.u32 %v275, 16
      %v458 = vrot.slane %v456, 4
      %v459 = vor.u32 %v458, %v454
      %v460 = vrot.slane %v459, 4
      %v462 = vshll.u32 %v276, 16
      %v464 = vrot.slane %v462, 5
      %v465 = vsel %vm305, %v460, %v464
      %v466 = vshrl.u32 %v276, 16
      %v468 = vrot.slane %v466, 4
      %v469 = vor.u32 %v468, %v464
      %v470 = vrot.slane %v469, 4
      %v472 = vshll.u32 %v297, 16
      %v474 = vrot.slane %v472, 5
      %v475 = vsel %vm305, %v470, %v474
      %v477 = vshrl.u32 %v277, 16
      %v479 = vrot.slane %v477, 4
      %v480 = vshll.u32 %v277, 16
      %v482 = vrot.slane %v480, 5
      %v483 = vor.u32 %v479, %v482
      %v484 = vrot.slane %v483, 4
      %v486 = vshll.u32 %v278, 16
      %v488 = vrot.slane %v486, 5
      %v489 = vsel %vm305, %v484, %v488
      %v490 = vshrl.u32 %v278, 16
      %v492 = vrot.slane %v490, 4
      %v493 = vor.u32 %v492, %v488
      %v494 = vrot.slane %v493, 4
      %v496 = vshll.u32 %v279, 16
      %v498 = vrot.slane %v496, 5
      %v499 = vsel %vm305, %v494, %v498
      %v500 = vshrl.u32 %v279, 16
      %v502 = vrot.slane %v500, 4
      %v503 = vor.u32 %v502, %v498
      %v504 = vrot.slane %v503, 4
      %v506 = vshll.u32 %v298, 16
      %v508 = vrot.slane %v506, 5
      %v509 = vsel %vm305, %v504, %v508
      %v511 = vshrl.u32 %v280, 16
      %v513 = vrot.slane %v511, 4
      %v514 = vshll.u32 %v280, 16
      %v516 = vrot.slane %v514, 5
      %v517 = vor.u32 %v513, %v516
      %v518 = vrot.slane %v517, 4
      %v520 = vshll.u32 %v281, 16
      %v522 = vrot.slane %v520, 5
      %v523 = vsel %vm305, %v518, %v522
      %v524 = vshrl.u32 %v281, 16
      %v526 = vrot.slane %v524, 4
      %v527 = vor.u32 %v526, %v522
      %v528 = vrot.slane %v527, 4
      %v530 = vshll.u32 %v282, 16
      %v532 = vrot.slane %v530, 5
      %v533 = vsel %vm305, %v528, %v532
      %v534 = vshrl.u32 %v282, 16
      %v536 = vrot.slane %v534, 4
      %v537 = vor.u32 %v536, %v532
      %v538 = vrot.slane %v537, 4
      %v540 = vshll.u32 %v299, 16
      %v542 = vrot.slane %v540, 5
      %v543 = vsel %vm305, %v538, %v542
      %v545 = vshrl.u32 %v283, 16
      %v547 = vrot.slane %v545, 4
      %v548 = vshll.u32 %v283, 16
      %v550 = vrot.slane %v548, 5
      %v551 = vor.u32 %v547, %v550
      %v552 = vrot.slane %v551, 4
      %v554 = vshll.u32 %v284, 16
      %v556 = vrot.slane %v554, 5
      %v557 = vsel %vm305, %v552, %v556
      %v558 = vshrl.u32 %v284, 16
      %v560 = vrot.slane %v558, 4
      %v561 = vor.u32 %v560, %v556
      %v562 = vrot.slane %v561, 4
      %v564 = vshll.u32 %v285, 16
      %v566 = vrot.slane %v564, 5
      %v567 = vsel %vm305, %v562, %v566
      %v568 = vshrl.u32 %v285, 16
      %v570 = vrot.slane %v568, 4
      %v571 = vor.u32 %v570, %v566
      %v572 = vrot.slane %v571, 4
      %v574 = vshll.u32 %v300, 16
      %v576 = vrot.slane %v574, 5
      %v577 = vsel %vm305, %v572, %v576
      %v579 = vshrl.u32 %v286, 16
      %v581 = vrot.slane %v579, 4
      %v582 = vshll.u32 %v286, 16
      %v584 = vrot.slane %v582, 5
      %v585 = vor.u32 %v581, %v584
      %v586 = vrot.slane %v585, 4
      %v588 = vshll.u32 %v287, 16
      %v590 = vrot.slane %v588, 5
      %v591 = vsel %vm305, %v586, %v590
      %v592 = vshrl.u32 %v287, 16
      %v594 = vrot.slane %v592, 4
      %v595 = vor.u32 %v594, %v590
      %v596 = vrot.slane %v595, 4
      %v598 = vshll.u32 %v288, 16
      %v600 = vrot.slane %v598, 5
      %v601 = vsel %vm305, %v596, %v600
      %v602 = vshrl.u32 %v288, 16
      %v604 = vrot.slane %v602, 4
      %v605 = vor.u32 %v604, %v600
      %v606 = vrot.slane %v605, 4
      %v608 = vshll.u32 %v301, 16
      %v610 = vrot.slane %v608, 5
      %v611 = vsel %vm305, %v606, %v610
      %v613 = vshrl.u32 %v289, 16
      %v615 = vrot.slane %v613, 4
      %v616 = vshll.u32 %v289, 16
      %v618 = vrot.slane %v616, 5
      %v619 = vor.u32 %v615, %v618
      %v620 = vrot.slane %v619, 4
      %v622 = vshll.u32 %v290, 16
      %v624 = vrot.slane %v622, 5
      %v625 = vsel %vm305, %v620, %v624
      %v626 = vshrl.u32 %v290, 16
      %v628 = vrot.slane %v626, 4
      %v629 = vor.u32 %v628, %v624
      %v630 = vrot.slane %v629, 4
      %v632 = vshll.u32 %v291, 16
      %v634 = vrot.slane %v632, 5
      %v635 = vsel %vm305, %v630, %v634
      %v636 = vshrl.u32 %v291, 16
      %v638 = vrot.slane %v636, 4
      %v639 = vor.u32 %v638, %v634
      %v640 = vrot.slane %v639, 4
      %v642 = vshll.u32 %v302, 16
      %v644 = vrot.slane %v642, 5
      %v645 = vsel %vm305, %v640, %v644
      %s646 = scalar_lea.vmem %s1, 2
      %v647 = vld [vmem:[%s646] sm:$0x3]
      %v648 = vunpack.c.l.b16 %v319
      %v649 = vunpack.c.l.b16 %v329
      %v650 = vunpack.c.l.b16 %v339
      %v651 = vunpack.c.l.b16 %v353
      %v652 = vunpack.c.l.b16 %v363
      %v653 = vunpack.c.l.b16 %v373
      %v654 = vunpack.c.l.b16 %v387
      %v655 = vunpack.c.l.b16 %v397
      %v656 = vunpack.c.l.b16 %v407
      %v657 = vunpack.c.l.b16 %v421
      %v658 = vunpack.c.l.b16 %v431
      %v659 = vunpack.c.l.b16 %v441
      %v660 = vunpack.c.l.b16 %v455
      %v661 = vunpack.c.l.b16 %v465
      %v662 = vunpack.c.l.b16 %v475
      %v663 = vunpack.c.l.b16 %v489
      %v664 = vunpack.c.l.b16 %v499
      %v665 = vunpack.c.l.b16 %v509
      %v666 = vunpack.c.l.b16 %v523
      %v667 = vunpack.c.l.b16 %v533
      %v668 = vunpack.c.l.b16 %v543
      %v669 = vunpack.c.l.b16 %v557
      %v670 = vunpack.c.l.b16 %v567
      %v671 = vunpack.c.l.b16 %v577
      %v672 = vunpack.c.l.b16 %v591
      %v673 = vunpack.c.l.b16 %v601
      %v674 = vunpack.c.l.b16 %v611
      %v675 = vunpack.c.l.b16 %v625
      %v676 = vunpack.c.l.b16 %v635
      %v677 = vunpack.c.l.b16 %v645
      %v678 = vpack.c.b16 %v649, %v648
      %v679 = vpack.c.b16 %v651, %v650
      %v680 = vpack.c.b16 %v653, %v652
      %v681 = vpack.c.b16 %v655, %v654
      %v682 = vpack.c.b16 %v657, %v656
      %v683 = vpack.c.b16 %v659, %v658
      %v684 = vpack.c.b16 %v661, %v660
      %v685 = vpack.c.b16 %v663, %v662
      %v686 = vpack.c.b16 %v665, %v664
      %v687 = vpack.c.b16 %v667, %v666
      %v688 = vpack.c.b16 %v669, %v668
      %v689 = vpack.c.b16 %v671, %v670
      %v690 = vpack.c.b16 %v673, %v672
      %v691 = vpack.c.b16 %v675, %v674
      %v692 = vpack.c.b16 %v677, %v676
      %vm693 = vcmask 31744
      %v695 = vsel %vm693, %v678, 0
      %v698 = vsel %vm693, %v679, 0
      %v701 = vsel %vm693, %v680, 0
      %v704 = vsel %vm693, %v681, 0
      %v707 = vsel %vm693, %v682, 0
      %v710 = vsel %vm693, %v683, 0
      %v713 = vsel %vm693, %v684, 0
      %v716 = vsel %vm693, %v685, 0
      %v719 = vsel %vm693, %v686, 0
      %v722 = vsel %vm693, %v687, 0
      %v725 = vsel %vm693, %v688, 0
      %v728 = vsel %vm693, %v689, 0
      %v731 = vsel %vm693, %v690, 0
      %v734 = vsel %vm693, %v691, 0
      %v737 = vsel %vm693, %v692, 0
      %vm739 = vcmask 1041408
      %v741 = vsel %vm739, %v647, 0
      %743 = vmatpush.bf16.msra.mxu0 0
      %744 = vmatpush.bf16.msra.mxu0 0
      %745 = vmatpush.bf16.msra.mxu0 0
      %746 = vmatpush.bf16.msra.mxu0 0
      %747 = vmatpush.bf16.msra.mxu0 0
      %748 = vmatpush.bf16.msra.mxu0 0
      %749 = vmatpush.bf16.msra.mxu0 0
      %750 = vmatpush.bf16.msra.mxu0 %v741
      %751 = vmatmul.bf16.gmra.mxu0 %v695
      %v752 = vpop.f32.mrf.mxu0
      %v753 = vadd.f32 0.0, %v752
      %v754 = vpop.f32.mrf.mxu0
      %v755 = vadd.f32 0.0, %v754
      %756 = vmatmul.bf16.gmra.mxu0 %v698
      %v757 = vpop.f32.mrf.mxu0
      %v758 = vadd.f32 0.0, %v757
      %v759 = vpop.f32.mrf.mxu0
      %v760 = vadd.f32 0.0, %v759
      %761 = vmatmul.bf16.gmra.mxu0 %v701
      %v762 = vpop.f32.mrf.mxu0
      %v763 = vadd.f32 0.0, %v762
      %v764 = vpop.f32.mrf.mxu0
      %v765 = vadd.f32 0.0, %v764
      %766 = vmatmul.bf16.gmra.mxu0 %v704
      %v767 = vpop.f32.mrf.mxu0
      %v768 = vadd.f32 0.0, %v767
      %v769 = vpop.f32.mrf.mxu0
      %v770 = vadd.f32 0.0, %v769
      %771 = vmatmul.bf16.gmra.mxu0 %v707
      %v772 = vpop.f32.mrf.mxu0
      %v773 = vadd.f32 0.0, %v772
      %v774 = vpop.f32.mrf.mxu0
      %v775 = vadd.f32 0.0, %v774
      %776 = vmatmul.bf16.gmra.mxu0 %v710
      %v777 = vpop.f32.mrf.mxu0
      %v778 = vadd.f32 0.0, %v777
      %v779 = vpop.f32.mrf.mxu0
      %v780 = vadd.f32 0.0, %v779
      %781 = vmatmul.bf16.gmra.mxu0 %v713
      %v782 = vpop.f32.mrf.mxu0
      %v783 = vadd.f32 0.0, %v782
      %v784 = vpop.f32.mrf.mxu0
      %v785 = vadd.f32 0.0, %v784
      %786 = vmatmul.bf16.gmra.mxu0 %v716
      %v787 = vpop.f32.mrf.mxu0
      %v788 = vadd.f32 0.0, %v787
      %v789 = vpop.f32.mrf.mxu0
      %v790 = vadd.f32 0.0, %v789
      %791 = vmatmul.bf16.gmra.mxu0 %v719
      %v792 = vpop.f32.mrf.mxu0
      %v793 = vadd.f32 0.0, %v792
      %v794 = vpop.f32.mrf.mxu0
      %v795 = vadd.f32 0.0, %v794
      %796 = vmatmul.bf16.gmra.mxu0 %v722
      %v797 = vpop.f32.mrf.mxu0
      %v798 = vadd.f32 0.0, %v797
      %v799 = vpop.f32.mrf.mxu0
      %v800 = vadd.f32 0.0, %v799
      %801 = vmatmul.bf16.gmra.mxu0 %v725
      %v802 = vpop.f32.mrf.mxu0
      %v803 = vadd.f32 0.0, %v802
      %v804 = vpop.f32.mrf.mxu0
      %v805 = vadd.f32 0.0, %v804
      %806 = vmatmul.bf16.gmra.mxu0 %v728
      %v807 = vpop.f32.mrf.mxu0
      %v808 = vadd.f32 0.0, %v807
      %v809 = vpop.f32.mrf.mxu0
      %v810 = vadd.f32 0.0, %v809
      %811 = vmatmul.bf16.gmra.mxu0 %v731
      %v812 = vpop.f32.mrf.mxu0
      %v813 = vadd.f32 0.0, %v812
      %v814 = vpop.f32.mrf.mxu0
      %v815 = vadd.f32 0.0, %v814
      %816 = vmatmul.bf16.gmra.mxu0 %v734
      %v817 = vpop.f32.mrf.mxu0
      %v818 = vadd.f32 0.0, %v817
      %v819 = vpop.f32.mrf.mxu0
      %v820 = vadd.f32 0.0, %v819
      %821 = vmatmul.bf16.gmra.mxu0 %v737
      %v822 = vpop.f32.mrf.mxu0
      %v823 = vadd.f32 0.0, %v822
      %v824 = vpop.f32.mrf.mxu0
      %v825 = vadd.f32 0.0, %v824
      %826 = vdwg.mxu0
      %v857 = vunpack.c.l.b16 %v262
      %v858 = vunpack.c.l.b16 %v263
      %v859 = vunpack.c.l.b16 %v264
      %v860 = vunpack.c.l.b16 %v265
      %v861 = vunpack.c.l.b16 %v266
      %v862 = vunpack.c.l.b16 %v267
      %v863 = vunpack.c.l.b16 %v268
      %v864 = vunpack.c.l.b16 %v269
      %v865 = vunpack.c.l.b16 %v270
      %v866 = vunpack.c.l.b16 %v271
      %v867 = vunpack.c.l.b16 %v272
      %v868 = vunpack.c.l.b16 %v273
      %v869 = vunpack.c.l.b16 %v274
      %v870 = vunpack.c.l.b16 %v275
      %v871 = vunpack.c.l.b16 %v276
      %v872 = vunpack.c.l.b16 %v277
      %v873 = vunpack.c.l.b16 %v278
      %v874 = vunpack.c.l.b16 %v279
      %v875 = vunpack.c.l.b16 %v280
      %v876 = vunpack.c.l.b16 %v281
      %v877 = vunpack.c.l.b16 %v282
      %v878 = vunpack.c.l.b16 %v283
      %v879 = vunpack.c.l.b16 %v284
      %v880 = vunpack.c.l.b16 %v285
      %v881 = vunpack.c.l.b16 %v286
      %v882 = vunpack.c.l.b16 %v287
      %v883 = vunpack.c.l.b16 %v288
      %v884 = vunpack.c.l.b16 %v289
      %v885 = vunpack.c.l.b16 %v290
      %v886 = vunpack.c.l.b16 %v291
      %v887 = vpack.c.b16 %v858, %v857
      %v888 = vpack.c.b16 %v860, %v859
      %v889 = vpack.c.b16 %v862, %v861
      %v890 = vpack.c.b16 %v864, %v863
      %v891 = vpack.c.b16 %v866, %v865
      %v892 = vpack.c.b16 %v868, %v867
      %v893 = vpack.c.b16 %v870, %v869
      %v894 = vpack.c.b16 %v872, %v871
      %v895 = vpack.c.b16 %v874, %v873
      %v896 = vpack.c.b16 %v876, %v875
      %v897 = vpack.c.b16 %v878, %v877
      %v898 = vpack.c.b16 %v880, %v879
      %v899 = vpack.c.b16 %v882, %v881
      %v900 = vpack.c.b16 %v884, %v883
      %v901 = vpack.c.b16 %v886, %v885
      %v903 = vsel %vm693, %v887, 0
      %v906 = vsel %vm693, %v888, 0
      %v909 = vsel %vm693, %v889, 0
      %v912 = vsel %vm693, %v890, 0
      %v915 = vsel %vm693, %v891, 0
      %v918 = vsel %vm693, %v892, 0
      %v921 = vsel %vm693, %v893, 0
      %v924 = vsel %vm693, %v894, 0
      %v927 = vsel %vm693, %v895, 0
      %v930 = vsel %vm693, %v896, 0
      %v933 = vsel %vm693, %v897, 0
      %v936 = vsel %vm693, %v898, 0
      %v939 = vsel %vm693, %v899, 0
      %v942 = vsel %vm693, %v900, 0
      %v945 = vsel %vm693, %v901, 0
      %v948 = vsel %vm739, %v292, 0
      %950 = vmatpush.bf16.msra.mxu0 0
      %951 = vmatpush.bf16.msra.mxu0 0
      %952 = vmatpush.bf16.msra.mxu0 0
      %953 = vmatpush.bf16.msra.mxu0 0
      %954 = vmatpush.bf16.msra.mxu0 0
      %955 = vmatpush.bf16.msra.mxu0 0
      %956 = vmatpush.bf16.msra.mxu0 0
      %957 = vmatpush.bf16.msra.mxu0 %v948
      %958 = vmatmul.bf16.gmra.mxu0 %v903
      %v959 = vpop.f32.mrf.mxu0
      %v960 = vadd.f32 %v753, %v959
      %v961 = vpop.f32.mrf.mxu0
      %v962 = vadd.f32 %v755, %v961
      %963 = vmatmul.bf16.gmra.mxu0 %v906
      %v964 = vpop.f32.mrf.mxu0
      %v965 = vadd.f32 %v758, %v964
      %v966 = vpop.f32.mrf.mxu0
      %v967 = vadd.f32 %v760, %v966
      %968 = vmatmul.bf16.gmra.mxu0 %v909
      %v969 = vpop.f32.mrf.mxu0
      %v970 = vadd.f32 %v763, %v969
      %v971 = vpop.f32.mrf.mxu0
      %v972 = vadd.f32 %v765, %v971
      %973 = vmatmul.bf16.gmra.mxu0 %v912
      %v974 = vpop.f32.mrf.mxu0
      %v975 = vadd.f32 %v768, %v974
      %v976 = vpop.f32.mrf.mxu0
      %v977 = vadd.f32 %v770, %v976
      %978 = vmatmul.bf16.gmra.mxu0 %v915
      %v979 = vpop.f32.mrf.mxu0
      %v980 = vadd.f32 %v773, %v979
      %v981 = vpop.f32.mrf.mxu0
      %v982 = vadd.f32 %v775, %v981
      %983 = vmatmul.bf16.gmra.mxu0 %v918
      %v984 = vpop.f32.mrf.mxu0
      %v985 = vadd.f32 %v778, %v984
      %v986 = vpop.f32.mrf.mxu0
      %v987 = vadd.f32 %v780, %v986
      %988 = vmatmul.bf16.gmra.mxu0 %v921
      %v989 = vpop.f32.mrf.mxu0
      %v990 = vadd.f32 %v783, %v989
      %v991 = vpop.f32.mrf.mxu0
      %v992 = vadd.f32 %v785, %v991
      %993 = vmatmul.bf16.gmra.mxu0 %v924
      %v994 = vpop.f32.mrf.mxu0
      %v995 = vadd.f32 %v788, %v994
      %v996 = vpop.f32.mrf.mxu0
      %v997 = vadd.f32 %v790, %v996
      %998 = vmatmul.bf16.gmra.mxu0 %v927
      %v999 = vpop.f32.mrf.mxu0
      %v1000 = vadd.f32 %v793, %v999
      %v1001 = vpop.f32.mrf.mxu0
      %v1002 = vadd.f32 %v795, %v1001
      %1003 = vmatmul.bf16.gmra.mxu0 %v930
      %v1004 = vpop.f32.mrf.mxu0
      %v1005 = vadd.f32 %v798, %v1004
      %v1006 = vpop.f32.mrf.mxu0
      %v1007 = vadd.f32 %v800, %v1006
      %1008 = vmatmul.bf16.gmra.mxu0 %v933
      %v1009 = vpop.f32.mrf.mxu0
      %v1010 = vadd.f32 %v803, %v1009
      %v1011 = vpop.f32.mrf.mxu0
      %v1012 = vadd.f32 %v805, %v1011
      %1013 = vmatmul.bf16.gmra.mxu0 %v936
      %v1014 = vpop.f32.mrf.mxu0
      %v1015 = vadd.f32 %v808, %v1014
      %v1016 = vpop.f32.mrf.mxu0
      %v1017 = vadd.f32 %v810, %v1016
      %1018 = vmatmul.bf16.gmra.mxu0 %v939
      %v1019 = vpop.f32.mrf.mxu0
      %v1020 = vadd.f32 %v813, %v1019
      %v1021 = vpop.f32.mrf.mxu0
      %v1022 = vadd.f32 %v815, %v1021
      %1023 = vmatmul.bf16.gmra.mxu0 %v942
      %v1024 = vpop.f32.mrf.mxu0
      %v1025 = vadd.f32 %v818, %v1024
      %v1026 = vpop.f32.mrf.mxu0
      %v1027 = vadd.f32 %v820, %v1026
      %1028 = vmatmul.bf16.gmra.mxu0 %v945
      %v1029 = vpop.f32.mrf.mxu0
      %v1030 = vadd.f32 %v823, %v1029
      %v1031 = vpop.f32.mrf.mxu0
      %v1032 = vadd.f32 %v825, %v1031
      %1033 = vdwg.mxu0
      %v1034 = vld [vmem:[%s249] sm:$0xe]
      %v1035 = vld [vmem:[%s249 + $0x10] sm:$0xe]
      %v1036 = vld [vmem:[%s249 + $0x20] sm:$0xe]
      %v1037 = vld [vmem:[%s249 + $0x30] sm:$0xe]
      %v1038 = vld [vmem:[%s249 + $0x40] sm:$0xe]
      %v1039 = vld [vmem:[%s249 + $0x50] sm:$0xe]
      %v1040 = vld [vmem:[%s249 + $0x60] sm:$0xe]
      %v1041 = vld [vmem:[%s249 + $0x70] sm:$0xe]
      %v1042 = vld [vmem:[%s249 + $0x80] sm:$0xe]
      %v1043 = vld [vmem:[%s249 + $0x90] sm:$0xe]
      %vm1064 = vcmask 1042432
      %vm1065 = vcmask 1046532
      %vm1066 = vmor %vm1064, %vm1065
      %v1067 = vrot.slane %v1034, 5
      %v1068 = vrot.slane %v1067, 4
      %v1069 = vrot.slane %v263, 5
      %v1070 = vsel %vm1066, %v1068, %v1069
      %v1071 = vrot.slane %v1069, 4
      %v1072 = vrot.slane %v264, 5
      %v1073 = vsel %vm1066, %v1071, %v1072
      %v1074 = vrot.slane %v1072, 4
      %v1075 = vrot.slane %v293, 5
      %v1076 = vsel %vm1066, %v1074, %v1075
      %v1077 = vrot.slane %v1035, 5
      %v1078 = vrot.slane %v1077, 4
      %v1079 = vrot.slane %v266, 5
      %v1080 = vsel %vm1066, %v1078, %v1079
      %v1081 = vrot.slane %v1079, 4
      %v1082 = vrot.slane %v267, 5
      %v1083 = vsel %vm1066, %v1081, %v1082
      %v1084 = vrot.slane %v1082, 4
      %v1085 = vrot.slane %v294, 5
      %v1086 = vsel %vm1066, %v1084, %v1085
      %v1087 = vrot.slane %v1036, 5
      %v1088 = vrot.slane %v1087, 4
      %v1089 = vrot.slane %v269, 5
      %v1090 = vsel %vm1066, %v1088, %v1089
      %v1091 = vrot.slane %v1089, 4
      %v1092 = vrot.slane %v270, 5
      %v1093 = vsel %vm1066, %v1091, %v1092
      %v1094 = vrot.slane %v1092, 4
      %v1095 = vrot.slane %v295, 5
      %v1096 = vsel %vm1066, %v1094, %v1095
      %v1097 = vrot.slane %v1037, 5
      %v1098 = vrot.slane %v1097, 4
      %v1099 = vrot.slane %v272, 5
      %v1100 = vsel %vm1066, %v1098, %v1099
      %v1101 = vrot.slane %v1099, 4
      %v1102 = vrot.slane %v273, 5
      %v1103 = vsel %vm1066, %v1101, %v1102
      %v1104 = vrot.slane %v1102, 4
      %v1105 = vrot.slane %v296, 5
      %v1106 = vsel %vm1066, %v1104, %v1105
      %v1107 = vrot.slane %v1038, 5
      %v1108 = vrot.slane %v1107, 4
      %v1109 = vrot.slane %v275, 5
      %v1110 = vsel %vm1066, %v1108, %v1109
      %v1111 = vrot.slane %v1109, 4
      %v1112 = vrot.slane %v276, 5
      %v1113 = vsel %vm1066, %v1111, %v1112
      %v1114 = vrot.slane %v1112, 4
      %v1115 = vrot.slane %v297, 5
      %v1116 = vsel %vm1066, %v1114, %v1115
      %v1117 = vrot.slane %v1039, 5
      %v1118 = vrot.slane %v1117, 4
      %v1119 = vrot.slane %v278, 5
      %v1120 = vsel %vm1066, %v1118, %v1119
      %v1121 = vrot.slane %v1119, 4
      %v1122 = vrot.slane %v279, 5
      %v1123 = vsel %vm1066, %v1121, %v1122
      %v1124 = vrot.slane %v1122, 4
      %v1125 = vrot.slane %v298, 5
      %v1126 = vsel %vm1066, %v1124, %v1125
      %v1127 = vrot.slane %v1040, 5
      %v1128 = vrot.slane %v1127, 4
      %v1129 = vrot.slane %v281, 5
      %v1130 = vsel %vm1066, %v1128, %v1129
      %v1131 = vrot.slane %v1129, 4
      %v1132 = vrot.slane %v282, 5
      %v1133 = vsel %vm1066, %v1131, %v1132
      %v1134 = vrot.slane %v1132, 4
      %v1135 = vrot.slane %v299, 5
      %v1136 = vsel %vm1066, %v1134, %v1135
      %v1137 = vrot.slane %v1041, 5
      %v1138 = vrot.slane %v1137, 4
      %v1139 = vrot.slane %v284, 5
      %v1140 = vsel %vm1066, %v1138, %v1139
      %v1141 = vrot.slane %v1139, 4
      %v1142 = vrot.slane %v285, 5
      %v1143 = vsel %vm1066, %v1141, %v1142
      %v1144 = vrot.slane %v1142, 4
      %v1145 = vrot.slane %v300, 5
      %v1146 = vsel %vm1066, %v1144, %v1145
      %v1147 = vrot.slane %v1042, 5
      %v1148 = vrot.slane %v1147, 4
      %v1149 = vrot.slane %v287, 5
      %v1150 = vsel %vm1066, %v1148, %v1149
      %v1151 = vrot.slane %v1149, 4
      %v1152 = vrot.slane %v288, 5
      %v1153 = vsel %vm1066, %v1151, %v1152
      %v1154 = vrot.slane %v1152, 4
      %v1155 = vrot.slane %v301, 5
      %v1156 = vsel %vm1066, %v1154, %v1155
      %v1157 = vrot.slane %v1043, 5
      %v1158 = vrot.slane %v1157, 4
      %v1159 = vrot.slane %v290, 5
      %v1160 = vsel %vm1066, %v1158, %v1159
      %v1161 = vrot.slane %v1159, 4
      %v1162 = vrot.slane %v291, 5
      %v1163 = vsel %vm1066, %v1161, %v1162
      %v1164 = vrot.slane %v1162, 4
      %v1165 = vrot.slane %v302, 5
      %v1166 = vsel %vm1066, %v1164, %v1165
      %s1167 = scalar_lea.vmem %s1, 4
      %v1168 = vld [vmem:[%s1167] sm:$0x3]
      %v1169 = vunpack.c.l.b16 %v1070
      %v1170 = vunpack.c.l.b16 %v1073
      %v1171 = vunpack.c.l.b16 %v1076
      %v1172 = vunpack.c.l.b16 %v1080
      %v1173 = vunpack.c.l.b16 %v1083
      %v1174 = vunpack.c.l.b16 %v1086
      %v1175 = vunpack.c.l.b16 %v1090
      %v1176 = vunpack.c.l.b16 %v1093
      %v1177 = vunpack.c.l.b16 %v1096
      %v1178 = vunpack.c.l.b16 %v1100
      %v1179 = vunpack.c.l.b16 %v1103
      %v1180 = vunpack.c.l.b16 %v1106
      %v1181 = vunpack.c.l.b16 %v1110
      %v1182 = vunpack.c.l.b16 %v1113
      %v1183 = vunpack.c.l.b16 %v1116
      %v1184 = vunpack.c.l.b16 %v1120
      %v1185 = vunpack.c.l.b16 %v1123
      %v1186 = vunpack.c.l.b16 %v1126
      %v1187 = vunpack.c.l.b16 %v1130
      %v1188 = vunpack.c.l.b16 %v1133
      %v1189 = vunpack.c.l.b16 %v1136
      %v1190 = vunpack.c.l.b16 %v1140
      %v1191 = vunpack.c.l.b16 %v1143
      %v1192 = vunpack.c.l.b16 %v1146
      %v1193 = vunpack.c.l.b16 %v1150
      %v1194 = vunpack.c.l.b16 %v1153
      %v1195 = vunpack.c.l.b16 %v1156
      %v1196 = vunpack.c.l.b16 %v1160
      %v1197 = vunpack.c.l.b16 %v1163
      %v1198 = vunpack.c.l.b16 %v1166
      %v1199 = vpack.c.b16 %v1170, %v1169
      %v1200 = vpack.c.b16 %v1172, %v1171
      %v1201 = vpack.c.b16 %v1174, %v1173
      %v1202 = vpack.c.b16 %v1176, %v1175
      %v1203 = vpack.c.b16 %v1178, %v1177
      %v1204 = vpack.c.b16 %v1180, %v1179
      %v1205 = vpack.c.b16 %v1182, %v1181
      %v1206 = vpack.c.b16 %v1184, %v1183
      %v1207 = vpack.c.b16 %v1186, %v1185
      %v1208 = vpack.c.b16 %v1188, %v1187
      %v1209 = vpack.c.b16 %v1190, %v1189
      %v1210 = vpack.c.b16 %v1192, %v1191
      %v1211 = vpack.c.b16 %v1194, %v1193
      %v1212 = vpack.c.b16 %v1196, %v1195
      %v1213 = vpack.c.b16 %v1198, %v1197
      %v1215 = vsel %vm693, %v1199, 0
      %v1218 = vsel %vm693, %v1200, 0
      %v1221 = vsel %vm693, %v1201, 0
      %v1224 = vsel %vm693, %v1202, 0
      %v1227 = vsel %vm693, %v1203, 0
      %v1230 = vsel %vm693, %v1204, 0
      %v1233 = vsel %vm693, %v1205, 0
      %v1236 = vsel %vm693, %v1206, 0
      %v1239 = vsel %vm693, %v1207, 0
      %v1242 = vsel %vm693, %v1208, 0
      %v1245 = vsel %vm693, %v1209, 0
      %v1248 = vsel %vm693, %v1210, 0
      %v1251 = vsel %vm693, %v1211, 0
      %v1254 = vsel %vm693, %v1212, 0
      %v1257 = vsel %vm693, %v1213, 0
      %v1260 = vsel %vm739, %v1168, 0
      %1262 = vmatpush.bf16.msra.mxu0 0
      %1263 = vmatpush.bf16.msra.mxu0 0
      %1264 = vmatpush.bf16.msra.mxu0 0
      %1265 = vmatpush.bf16.msra.mxu0 0
      %1266 = vmatpush.bf16.msra.mxu0 0
      %1267 = vmatpush.bf16.msra.mxu0 0
      %1268 = vmatpush.bf16.msra.mxu0 0
      %1269 = vmatpush.bf16.msra.mxu0 %v1260
      %1270 = vmatmul.bf16.gmra.mxu0 %v1215
      %v1271 = vpop.f32.mrf.mxu0
      %v1272 = vadd.f32 0.0, %v1271
      %v1273 = vpop.f32.mrf.mxu0
      %v1274 = vadd.f32 0.0, %v1273
      %1275 = vmatmul.bf16.gmra.mxu0 %v1218
      %v1276 = vpop.f32.mrf.mxu0
      %v1277 = vadd.f32 0.0, %v1276
      %v1278 = vpop.f32.mrf.mxu0
      %v1279 = vadd.f32 0.0, %v1278
      %1280 = vmatmul.bf16.gmra.mxu0 %v1221
      %v1281 = vpop.f32.mrf.mxu0
      %v1282 = vadd.f32 0.0, %v1281
      %v1283 = vpop.f32.mrf.mxu0
      %v1284 = vadd.f32 0.0, %v1283
      %1285 = vmatmul.bf16.gmra.mxu0 %v1224
      %v1286 = vpop.f32.mrf.mxu0
      %v1287 = vadd.f32 0.0, %v1286
      %v1288 = vpop.f32.mrf.mxu0
      %v1289 = vadd.f32 0.0, %v1288
      %1290 = vmatmul.bf16.gmra.mxu0 %v1227
      %v1291 = vpop.f32.mrf.mxu0
      %v1292 = vadd.f32 0.0, %v1291
      %v1293 = vpop.f32.mrf.mxu0
      %v1294 = vadd.f32 0.0, %v1293
      %1295 = vmatmul.bf16.gmra.mxu0 %v1230
      %v1296 = vpop.f32.mrf.mxu0
      %v1297 = vadd.f32 0.0, %v1296
      %v1298 = vpop.f32.mrf.mxu0
      %v1299 = vadd.f32 0.0, %v1298
      %1300 = vmatmul.bf16.gmra.mxu0 %v1233
      %v1301 = vpop.f32.mrf.mxu0
      %v1302 = vadd.f32 0.0, %v1301
      %v1303 = vpop.f32.mrf.mxu0
      %v1304 = vadd.f32 0.0, %v1303
      %1305 = vmatmul.bf16.gmra.mxu0 %v1236
      %v1306 = vpop.f32.mrf.mxu0
      %v1307 = vadd.f32 0.0, %v1306
      %v1308 = vpop.f32.mrf.mxu0
      %v1309 = vadd.f32 0.0, %v1308
      %1310 = vmatmul.bf16.gmra.mxu0 %v1239
      %v1311 = vpop.f32.mrf.mxu0
      %v1312 = vadd.f32 0.0, %v1311
      %v1313 = vpop.f32.mrf.mxu0
      %v1314 = vadd.f32 0.0, %v1313
      %1315 = vmatmul.bf16.gmra.mxu0 %v1242
      %v1316 = vpop.f32.mrf.mxu0
      %v1317 = vadd.f32 0.0, %v1316
      %v1318 = vpop.f32.mrf.mxu0
      %v1319 = vadd.f32 0.0, %v1318
      %1320 = vmatmul.bf16.gmra.mxu0 %v1245
      %v1321 = vpop.f32.mrf.mxu0
      %v1322 = vadd.f32 0.0, %v1321
      %v1323 = vpop.f32.mrf.mxu0
      %v1324 = vadd.f32 0.0, %v1323
      %1325 = vmatmul.bf16.gmra.mxu0 %v1248
      %v1326 = vpop.f32.mrf.mxu0
      %v1327 = vadd.f32 0.0, %v1326
      %v1328 = vpop.f32.mrf.mxu0
      %v1329 = vadd.f32 0.0, %v1328
      %1330 = vmatmul.bf16.gmra.mxu0 %v1251
      %v1331 = vpop.f32.mrf.mxu0
      %v1332 = vadd.f32 0.0, %v1331
      %v1333 = vpop.f32.mrf.mxu0
      %v1334 = vadd.f32 0.0, %v1333
      %1335 = vmatmul.bf16.gmra.mxu0 %v1254
      %v1336 = vpop.f32.mrf.mxu0
      %v1337 = vadd.f32 0.0, %v1336
      %v1338 = vpop.f32.mrf.mxu0
      %v1339 = vadd.f32 0.0, %v1338
      %1340 = vmatmul.bf16.gmra.mxu0 %v1257
      %v1341 = vpop.f32.mrf.mxu0
      %v1342 = vadd.f32 0.0, %v1341
      %v1343 = vpop.f32.mrf.mxu0
      %v1344 = vadd.f32 0.0, %v1343
      %1345 = vdwg.mxu0
      %v1346 = vadd.f32 %v960, %v1272
      %v1347 = vadd.f32 %v962, %v1274
      %v1348 = vadd.f32 %v965, %v1277
      %v1349 = vadd.f32 %v967, %v1279
      %v1350 = vadd.f32 %v970, %v1282
      %v1351 = vadd.f32 %v972, %v1284
      %v1352 = vadd.f32 %v975, %v1287
      %v1353 = vadd.f32 %v977, %v1289
      %v1354 = vadd.f32 %v980, %v1292
      %v1355 = vadd.f32 %v982, %v1294
      %v1356 = vadd.f32 %v985, %v1297
      %v1357 = vadd.f32 %v987, %v1299
      %v1358 = vadd.f32 %v990, %v1302
      %v1359 = vadd.f32 %v992, %v1304
      %v1360 = vadd.f32 %v995, %v1307
      %v1361 = vadd.f32 %v997, %v1309
      %v1362 = vadd.f32 %v1000, %v1312
      %v1363 = vadd.f32 %v1002, %v1314
      %v1364 = vadd.f32 %v1005, %v1317
      %v1365 = vadd.f32 %v1007, %v1319
      %v1366 = vadd.f32 %v1010, %v1322
      %v1367 = vadd.f32 %v1012, %v1324
      %v1368 = vadd.f32 %v1015, %v1327
      %v1369 = vadd.f32 %v1017, %v1329
      %v1370 = vadd.f32 %v1020, %v1332
      %v1371 = vadd.f32 %v1022, %v1334
      %v1372 = vadd.f32 %v1025, %v1337
      %v1373 = vadd.f32 %v1027, %v1339
      %v1374 = vadd.f32 %v1030, %v1342
      %v1375 = vadd.f32 %v1032, %v1344
      %s1376 = scalar_lea.vmem %s249, 16
      %v1377 = vld [vmem:[%s1376] sm:$0xf]
      %v1378 = vld [vmem:[%s1376 + $0x4] sm:$0xf]
      %v1379 = vld [vmem:[%s1376 + $0x8] sm:$0xf]
      %v1380 = vld [vmem:[%s1376 + $0x10] sm:$0xf]
      %v1381 = vld [vmem:[%s1376 + $0x14] sm:$0xf]
      %v1382 = vld [vmem:[%s1376 + $0x18] sm:$0xf]
      %v1383 = vld [vmem:[%s1376 + $0x20] sm:$0xf]
      %v1384 = vld [vmem:[%s1376 + $0x24] sm:$0xf]
      %v1385 = vld [vmem:[%s1376 + $0x28] sm:$0xf]
      %v1386 = vld [vmem:[%s1376 + $0x30] sm:$0xf]
      %v1387 = vld [vmem:[%s1376 + $0x34] sm:$0xf]
      %v1388 = vld [vmem:[%s1376 + $0x38] sm:$0xf]
      %v1389 = vld [vmem:[%s1376 + $0x40] sm:$0xf]
      %v1390 = vld [vmem:[%s1376 + $0x44] sm:$0xf]
      %v1391 = vld [vmem:[%s1376 + $0x48] sm:$0xf]
      %v1392 = vld [vmem:[%s1376 + $0x50] sm:$0xf]
      %v1393 = vld [vmem:[%s1376 + $0x54] sm:$0xf]
      %v1394 = vld [vmem:[%s1376 + $0x58] sm:$0xf]
      %v1395 = vld [vmem:[%s1376 + $0x60] sm:$0xf]
      %v1396 = vld [vmem:[%s1376 + $0x64] sm:$0xf]
      %v1397 = vld [vmem:[%s1376 + $0x68] sm:$0xf]
      %v1398 = vld [vmem:[%s1376 + $0x70] sm:$0xf]
      %v1399 = vld [vmem:[%s1376 + $0x74] sm:$0xf]
      %v1400 = vld [vmem:[%s1376 + $0x78] sm:$0xf]
      %v1401 = vld [vmem:[%s1376 + $0x80] sm:$0xf]
      %v1402 = vld [vmem:[%s1376 + $0x84] sm:$0xf]
      %v1403 = vld [vmem:[%s1376 + $0x88] sm:$0xf]
      %v1404 = vld [vmem:[%s1376 + $0x90] sm:$0xf]
      %v1405 = vld [vmem:[%s1376 + $0x94] sm:$0xf]
      %v1406 = vld [vmem:[%s1376 + $0x98] sm:$0xf]
      %s1407 = scalar_lea.vmem %s1, 6
      %v1408 = vld [vmem:[%s1407] sm:$0x3]
      %v1439 = vunpack.c.l.b16 %v1377
      %v1440 = vunpack.c.l.b16 %v1378
      %v1441 = vunpack.c.l.b16 %v1379
      %v1442 = vunpack.c.l.b16 %v1380
      %v1443 = vunpack.c.l.b16 %v1381
      %v1444 = vunpack.c.l.b16 %v1382
      %v1445 = vunpack.c.l.b16 %v1383
      %v1446 = vunpack.c.l.b16 %v1384
      %v1447 = vunpack.c.l.b16 %v1385
      %v1448 = vunpack.c.l.b16 %v1386
      %v1449 = vunpack.c.l.b16 %v1387
      %v1450 = vunpack.c.l.b16 %v1388
      %v1451 = vunpack.c.l.b16 %v1389
      %v1452 = vunpack.c.l.b16 %v1390
      %v1453 = vunpack.c.l.b16 %v1391
      %v1454 = vunpack.c.l.b16 %v1392
      %v1455 = vunpack.c.l.b16 %v1393
      %v1456 = vunpack.c.l.b16 %v1394
      %v1457 = vunpack.c.l.b16 %v1395
      %v1458 = vunpack.c.l.b16 %v1396
      %v1459 = vunpack.c.l.b16 %v1397
      %v1460 = vunpack.c.l.b16 %v1398
      %v1461 = vunpack.c.l.b16 %v1399
      %v1462 = vunpack.c.l.b16 %v1400
      %v1463 = vunpack.c.l.b16 %v1401
      %v1464 = vunpack.c.l.b16 %v1402
      %v1465 = vunpack.c.l.b16 %v1403
      %v1466 = vunpack.c.l.b16 %v1404
      %v1467 = vunpack.c.l.b16 %v1405
      %v1468 = vunpack.c.l.b16 %v1406
      %v1469 = vpack.c.b16 %v1440, %v1439
      %v1470 = vpack.c.b16 %v1442, %v1441
      %v1471 = vpack.c.b16 %v1444, %v1443
      %v1472 = vpack.c.b16 %v1446, %v1445
      %v1473 = vpack.c.b16 %v1448, %v1447
      %v1474 = vpack.c.b16 %v1450, %v1449
      %v1475 = vpack.c.b16 %v1452, %v1451
      %v1476 = vpack.c.b16 %v1454, %v1453
      %v1477 = vpack.c.b16 %v1456, %v1455
      %v1478 = vpack.c.b16 %v1458, %v1457
      %v1479 = vpack.c.b16 %v1460, %v1459
      %v1480 = vpack.c.b16 %v1462, %v1461
      %v1481 = vpack.c.b16 %v1464, %v1463
      %v1482 = vpack.c.b16 %v1466, %v1465
      %v1483 = vpack.c.b16 %v1468, %v1467
      %v1485 = vsel %vm693, %v1469, 0
      %v1488 = vsel %vm693, %v1470, 0
      %v1491 = vsel %vm693, %v1471, 0
      %v1494 = vsel %vm693, %v1472, 0
      %v1497 = vsel %vm693, %v1473, 0
      %v1500 = vsel %vm693, %v1474, 0
      %v1503 = vsel %vm693, %v1475, 0
      %v1506 = vsel %vm693, %v1476, 0
      %v1509 = vsel %vm693, %v1477, 0
      %v1512 = vsel %vm693, %v1478, 0
      %v1515 = vsel %vm693, %v1479, 0
      %v1518 = vsel %vm693, %v1480, 0
      %v1521 = vsel %vm693, %v1481, 0
      %v1524 = vsel %vm693, %v1482, 0
      %v1527 = vsel %vm693, %v1483, 0
      %v1530 = vsel %vm739, %v1408, 0
      %1532 = vmatpush.bf16.msra.mxu0 0
      %1533 = vmatpush.bf16.msra.mxu0 0
      %1534 = vmatpush.bf16.msra.mxu0 0
      %1535 = vmatpush.bf16.msra.mxu0 0
      %1536 = vmatpush.bf16.msra.mxu0 0
      %1537 = vmatpush.bf16.msra.mxu0 0
      %1538 = vmatpush.bf16.msra.mxu0 0
      %1539 = vmatpush.bf16.msra.mxu0 %v1530
      %1540 = vmatmul.bf16.gmra.mxu0 %v1485
      %v1541 = vpop.f32.mrf.mxu0
      %v1542 = vadd.f32 0.0, %v1541
      %v1543 = vpop.f32.mrf.mxu0
      %v1544 = vadd.f32 0.0, %v1543
      %1545 = vmatmul.bf16.gmra.mxu0 %v1488
      %v1546 = vpop.f32.mrf.mxu0
      %v1547 = vadd.f32 0.0, %v1546
      %v1548 = vpop.f32.mrf.mxu0
      %v1549 = vadd.f32 0.0, %v1548
      %1550 = vmatmul.bf16.gmra.mxu0 %v1491
      %v1551 = vpop.f32.mrf.mxu0
      %v1552 = vadd.f32 0.0, %v1551
      %v1553 = vpop.f32.mrf.mxu0
      %v1554 = vadd.f32 0.0, %v1553
      %1555 = vmatmul.bf16.gmra.mxu0 %v1494
      %v1556 = vpop.f32.mrf.mxu0
      %v1557 = vadd.f32 0.0, %v1556
      %v1558 = vpop.f32.mrf.mxu0
      %v1559 = vadd.f32 0.0, %v1558
      %1560 = vmatmul.bf16.gmra.mxu0 %v1497
      %v1561 = vpop.f32.mrf.mxu0
      %v1562 = vadd.f32 0.0, %v1561
      %v1563 = vpop.f32.mrf.mxu0
      %v1564 = vadd.f32 0.0, %v1563
      %1565 = vmatmul.bf16.gmra.mxu0 %v1500
      %v1566 = vpop.f32.mrf.mxu0
      %v1567 = vadd.f32 0.0, %v1566
      %v1568 = vpop.f32.mrf.mxu0
      %v1569 = vadd.f32 0.0, %v1568
      %1570 = vmatmul.bf16.gmra.mxu0 %v1503
      %v1571 = vpop.f32.mrf.mxu0
      %v1572 = vadd.f32 0.0, %v1571
      %v1573 = vpop.f32.mrf.mxu0
      %v1574 = vadd.f32 0.0, %v1573
      %1575 = vmatmul.bf16.gmra.mxu0 %v1506
      %v1576 = vpop.f32.mrf.mxu0
      %v1577 = vadd.f32 0.0, %v1576
      %v1578 = vpop.f32.mrf.mxu0
      %v1579 = vadd.f32 0.0, %v1578
      %1580 = vmatmul.bf16.gmra.mxu0 %v1509
      %v1581 = vpop.f32.mrf.mxu0
      %v1582 = vadd.f32 0.0, %v1581
      %v1583 = vpop.f32.mrf.mxu0
      %v1584 = vadd.f32 0.0, %v1583
      %1585 = vmatmul.bf16.gmra.mxu0 %v1512
      %v1586 = vpop.f32.mrf.mxu0
      %v1587 = vadd.f32 0.0, %v1586
      %v1588 = vpop.f32.mrf.mxu0
      %v1589 = vadd.f32 0.0, %v1588
      %1590 = vmatmul.bf16.gmra.mxu0 %v1515
      %v1591 = vpop.f32.mrf.mxu0
      %v1592 = vadd.f32 0.0, %v1591
      %v1593 = vpop.f32.mrf.mxu0
      %v1594 = vadd.f32 0.0, %v1593
      %1595 = vmatmul.bf16.gmra.mxu0 %v1518
      %v1596 = vpop.f32.mrf.mxu0
      %v1597 = vadd.f32 0.0, %v1596
      %v1598 = vpop.f32.mrf.mxu0
      %v1599 = vadd.f32 0.0, %v1598
      %1600 = vmatmul.bf16.gmra.mxu0 %v1521
      %v1601 = vpop.f32.mrf.mxu0
      %v1602 = vadd.f32 0.0, %v1601
      %v1603 = vpop.f32.mrf.mxu0
      %v1604 = vadd.f32 0.0, %v1603
      %1605 = vmatmul.bf16.gmra.mxu0 %v1524
      %v1606 = vpop.f32.mrf.mxu0
      %v1607 = vadd.f32 0.0, %v1606
      %v1608 = vpop.f32.mrf.mxu0
      %v1609 = vadd.f32 0.0, %v1608
      %1610 = vmatmul.bf16.gmra.mxu0 %v1527
      %v1611 = vpop.f32.mrf.mxu0
      %v1612 = vadd.f32 0.0, %v1611
      %v1613 = vpop.f32.mrf.mxu0
      %v1614 = vadd.f32 0.0, %v1613
      %1615 = vdwg.mxu0
      %v1616 = vadd.f32 %v1346, %v1542
      %v1617 = vadd.f32 %v1347, %v1544
      %v1618 = vadd.f32 %v1348, %v1547
      %v1619 = vadd.f32 %v1349, %v1549
      %v1620 = vadd.f32 %v1350, %v1552
      %v1621 = vadd.f32 %v1351, %v1554
      %v1622 = vadd.f32 %v1352, %v1557
      %v1623 = vadd.f32 %v1353, %v1559
      %v1624 = vadd.f32 %v1354, %v1562
      %v1625 = vadd.f32 %v1355, %v1564
      %v1626 = vadd.f32 %v1356, %v1567
      %v1627 = vadd.f32 %v1357, %v1569
      %v1628 = vadd.f32 %v1358, %v1572
      %v1629 = vadd.f32 %v1359, %v1574
      %v1630 = vadd.f32 %v1360, %v1577
      %v1631 = vadd.f32 %v1361, %v1579
      %v1632 = vadd.f32 %v1362, %v1582
      %v1633 = vadd.f32 %v1363, %v1584
      %v1634 = vadd.f32 %v1364, %v1587
      %v1635 = vadd.f32 %v1365, %v1589
      %v1636 = vadd.f32 %v1366, %v1592
      %v1637 = vadd.f32 %v1367, %v1594
      %v1638 = vadd.f32 %v1368, %v1597
      %v1639 = vadd.f32 %v1369, %v1599
      %v1640 = vadd.f32 %v1370, %v1602
      %v1641 = vadd.f32 %v1371, %v1604
      %v1642 = vadd.f32 %v1372, %v1607
      %v1643 = vadd.f32 %v1373, %v1609
      %v1644 = vadd.f32 %v1374, %v1612
      %v1645 = vadd.f32 %v1375, %v1614
      %v1646 = vld [vmem:[%s1376] sm:$0xf]
      %v1647 = vld [vmem:[%s1376 + $0x4] sm:$0xf]
      %v1648 = vld [vmem:[%s1376 + $0x8] sm:$0xf]
      %v1649 = vld [vmem:[%s1376 + $0xc] sm:$0x1]
      %v1650 = vld [vmem:[%s1376 + $0x10] sm:$0xf]
      %v1651 = vld [vmem:[%s1376 + $0x14] sm:$0xf]
      %v1652 = vld [vmem:[%s1376 + $0x18] sm:$0xf]
      %v1653 = vld [vmem:[%s1376 + $0x1c] sm:$0x1]
      %v1654 = vld [vmem:[%s1376 + $0x20] sm:$0xf]
      %v1655 = vld [vmem:[%s1376 + $0x24] sm:$0xf]
      %v1656 = vld [vmem:[%s1376 + $0x28] sm:$0xf]
      %v1657 = vld [vmem:[%s1376 + $0x2c] sm:$0x1]
      %v1658 = vld [vmem:[%s1376 + $0x30] sm:$0xf]
      %v1659 = vld [vmem:[%s1376 + $0x34] sm:$0xf]
      %v1660 = vld [vmem:[%s1376 + $0x38] sm:$0xf]
      %v1661 = vld [vmem:[%s1376 + $0x3c] sm:$0x1]
      %v1662 = vld [vmem:[%s1376 + $0x40] sm:$0xf]
      %v1663 = vld [vmem:[%s1376 + $0x44] sm:$0xf]
      %v1664 = vld [vmem:[%s1376 + $0x48] sm:$0xf]
      %v1665 = vld [vmem:[%s1376 + $0x4c] sm:$0x1]
      %v1666 = vld [vmem:[%s1376 + $0x50] sm:$0xf]
      %v1667 = vld [vmem:[%s1376 + $0x54] sm:$0xf]
      %v1668 = vld [vmem:[%s1376 + $0x58] sm:$0xf]
      %v1669 = vld [vmem:[%s1376 + $0x5c] sm:$0x1]
      %v1670 = vld [vmem:[%s1376 + $0x60] sm:$0xf]
      %v1671 = vld [vmem:[%s1376 + $0x64] sm:$0xf]
      %v1672 = vld [vmem:[%s1376 + $0x68] sm:$0xf]
      %v1673 = vld [vmem:[%s1376 + $0x6c] sm:$0x1]
      %v1674 = vld [vmem:[%s1376 + $0x70] sm:$0xf]
      %v1675 = vld [vmem:[%s1376 + $0x74] sm:$0xf]
      %v1676 = vld [vmem:[%s1376 + $0x78] sm:$0xf]
      %v1677 = vld [vmem:[%s1376 + $0x7c] sm:$0x1]
      %v1678 = vld [vmem:[%s1376 + $0x80] sm:$0xf]
      %v1679 = vld [vmem:[%s1376 + $0x84] sm:$0xf]
      %v1680 = vld [vmem:[%s1376 + $0x88] sm:$0xf]
      %v1681 = vld [vmem:[%s1376 + $0x8c] sm:$0x1]
      %v1682 = vld [vmem:[%s1376 + $0x90] sm:$0xf]
      %v1683 = vld [vmem:[%s1376 + $0x94] sm:$0xf]
      %v1684 = vld [vmem:[%s1376 + $0x98] sm:$0xf]
      %v1685 = vld [vmem:[%s1376 + $0x9c] sm:$0x1]
      %v1687 = vshrl.u32 %v1646, 16
      %v1689 = vrot.slane %v1687, 4
      %v1690 = vshll.u32 %v1646, 16
      %v1692 = vrot.slane %v1690, 5
      %v1693 = vor.u32 %v1689, %v1692
      %v1694 = vrot.slane %v1693, 4
      %v1696 = vshll.u32 %v1647, 16
      %v1698 = vrot.slane %v1696, 5
      %v1699 = vsel %vm305, %v1694, %v1698
      %v1700 = vshrl.u32 %v1647, 16
      %v1702 = vrot.slane %v1700, 4
      %v1703 = vor.u32 %v1702, %v1698
      %v1704 = vrot.slane %v1703, 4
      %v1706 = vshll.u32 %v1648, 16
      %v1708 = vrot.slane %v1706, 5
      %v1709 = vsel %vm305, %v1704, %v1708
      %v1710 = vshrl.u32 %v1648, 16
      %v1712 = vrot.slane %v1710, 4
      %v1713 = vor.u32 %v1712, %v1708
      %v1714 = vrot.slane %v1713, 4
      %v1716 = vshll.u32 %v1649, 16
      %v1718 = vrot.slane %v1716, 5
      %v1719 = vsel %vm305, %v1714, %v1718
      %v1721 = vshrl.u32 %v1650, 16
      %v1723 = vrot.slane %v1721, 4
      %v1724 = vshll.u32 %v1650, 16
      %v1726 = vrot.slane %v1724, 5
      %v1727 = vor.u32 %v1723, %v1726
      %v1728 = vrot.slane %v1727, 4
      %v1730 = vshll.u32 %v1651, 16
      %v1732 = vrot.slane %v1730, 5
      %v1733 = vsel %vm305, %v1728, %v1732
      %v1734 = vshrl.u32 %v1651, 16
      %v1736 = vrot.slane %v1734, 4
      %v1737 = vor.u32 %v1736, %v1732
      %v1738 = vrot.slane %v1737, 4
      %v1740 = vshll.u32 %v1652, 16
      %v1742 = vrot.slane %v1740, 5
      %v1743 = vsel %vm305, %v1738, %v1742
      %v1744 = vshrl.u32 %v1652, 16
      %v1746 = vrot.slane %v1744, 4
      %v1747 = vor.u32 %v1746, %v1742
      %v1748 = vrot.slane %v1747, 4
      %v1750 = vshll.u32 %v1653, 16
      %v1752 = vrot.slane %v1750, 5
      %v1753 = vsel %vm305, %v1748, %v1752
      %v1755 = vshrl.u32 %v1654, 16
      %v1757 = vrot.slane %v1755, 4
      %v1758 = vshll.u32 %v1654, 16
      %v1760 = vrot.slane %v1758, 5
      %v1761 = vor.u32 %v1757, %v1760
      %v1762 = vrot.slane %v1761, 4
      %v1764 = vshll.u32 %v1655, 16
      %v1766 = vrot.slane %v1764, 5
      %v1767 = vsel %vm305, %v1762, %v1766
      %v1768 = vshrl.u32 %v1655, 16
      %v1770 = vrot.slane %v1768, 4
      %v1771 = vor.u32 %v1770, %v1766
      %v1772 = vrot.slane %v1771, 4
      %v1774 = vshll.u32 %v1656, 16
      %v1776 = vrot.slane %v1774, 5
      %v1777 = vsel %vm305, %v1772, %v1776
      %v1778 = vshrl.u32 %v1656, 16
      %v1780 = vrot.slane %v1778, 4
      %v1781 = vor.u32 %v1780, %v1776
      %v1782 = vrot.slane %v1781, 4
      %v1784 = vshll.u32 %v1657, 16
      %v1786 = vrot.slane %v1784, 5
      %v1787 = vsel %vm305, %v1782, %v1786
      %v1789 = vshrl.u32 %v1658, 16
      %v1791 = vrot.slane %v1789, 4
      %v1792 = vshll.u32 %v1658, 16
      %v1794 = vrot.slane %v1792, 5
      %v1795 = vor.u32 %v1791, %v1794
      %v1796 = vrot.slane %v1795, 4
      %v1798 = vshll.u32 %v1659, 16
      %v1800 = vrot.slane %v1798, 5
      %v1801 = vsel %vm305, %v1796, %v1800
      %v1802 = vshrl.u32 %v1659, 16
      %v1804 = vrot.slane %v1802, 4
      %v1805 = vor.u32 %v1804, %v1800
      %v1806 = vrot.slane %v1805, 4
      %v1808 = vshll.u32 %v1660, 16
      %v1810 = vrot.slane %v1808, 5
      %v1811 = vsel %vm305, %v1806, %v1810
      %v1812 = vshrl.u32 %v1660, 16
      %v1814 = vrot.slane %v1812, 4
      %v1815 = vor.u32 %v1814, %v1810
      %v1816 = vrot.slane %v1815, 4
      %v1818 = vshll.u32 %v1661, 16
      %v1820 = vrot.slane %v1818, 5
      %v1821 = vsel %vm305, %v1816, %v1820
      %v1823 = vshrl.u32 %v1662, 16
      %v1825 = vrot.slane %v1823, 4
      %v1826 = vshll.u32 %v1662, 16
      %v1828 = vrot.slane %v1826, 5
      %v1829 = vor.u32 %v1825, %v1828
      %v1830 = vrot.slane %v1829, 4
      %v1832 = vshll.u32 %v1663, 16
      %v1834 = vrot.slane %v1832, 5
      %v1835 = vsel %vm305, %v1830, %v1834
      %v1836 = vshrl.u32 %v1663, 16
      %v1838 = vrot.slane %v1836, 4
      %v1839 = vor.u32 %v1838, %v1834
      %v1840 = vrot.slane %v1839, 4
      %v1842 = vshll.u32 %v1664, 16
      %v1844 = vrot.slane %v1842, 5
      %v1845 = vsel %vm305, %v1840, %v1844
      %v1846 = vshrl.u32 %v1664, 16
      %v1848 = vrot.slane %v1846, 4
      %v1849 = vor.u32 %v1848, %v1844
      %v1850 = vrot.slane %v1849, 4
      %v1852 = vshll.u32 %v1665, 16
      %v1854 = vrot.slane %v1852, 5
      %v1855 = vsel %vm305, %v1850, %v1854
      %v1857 = vshrl.u32 %v1666, 16
      %v1859 = vrot.slane %v1857, 4
      %v1860 = vshll.u32 %v1666, 16
      %v1862 = vrot.slane %v1860, 5
      %v1863 = vor.u32 %v1859, %v1862
      %v1864 = vrot.slane %v1863, 4
      %v1866 = vshll.u32 %v1667, 16
      %v1868 = vrot.slane %v1866, 5
      %v1869 = vsel %vm305, %v1864, %v1868
      %v1870 = vshrl.u32 %v1667, 16
      %v1872 = vrot.slane %v1870, 4
      %v1873 = vor.u32 %v1872, %v1868
      %v1874 = vrot.slane %v1873, 4
      %v1876 = vshll.u32 %v1668, 16
      %v1878 = vrot.slane %v1876, 5
      %v1879 = vsel %vm305, %v1874, %v1878
      %v1880 = vshrl.u32 %v1668, 16
      %v1882 = vrot.slane %v1880, 4
      %v1883 = vor.u32 %v1882, %v1878
      %v1884 = vrot.slane %v1883, 4
      %v1886 = vshll.u32 %v1669, 16
      %v1888 = vrot.slane %v1886, 5
      %v1889 = vsel %vm305, %v1884, %v1888
      %v1891 = vshrl.u32 %v1670, 16
      %v1893 = vrot.slane %v1891, 4
      %v1894 = vshll.u32 %v1670, 16
      %v1896 = vrot.slane %v1894, 5
      %v1897 = vor.u32 %v1893, %v1896
      %v1898 = vrot.slane %v1897, 4
      %v1900 = vshll.u32 %v1671, 16
      %v1902 = vrot.slane %v1900, 5
      %v1903 = vsel %vm305, %v1898, %v1902
      %v1904 = vshrl.u32 %v1671, 16
      %v1906 = vrot.slane %v1904, 4
      %v1907 = vor.u32 %v1906, %v1902
      %v1908 = vrot.slane %v1907, 4
      %v1910 = vshll.u32 %v1672, 16
      %v1912 = vrot.slane %v1910, 5
      %v1913 = vsel %vm305, %v1908, %v1912
      %v1914 = vshrl.u32 %v1672, 16
      %v1916 = vrot.slane %v1914, 4
      %v1917 = vor.u32 %v1916, %v1912
      %v1918 = vrot.slane %v1917, 4
      %v1920 = vshll.u32 %v1673, 16
      %v1922 = vrot.slane %v1920, 5
      %v1923 = vsel %vm305, %v1918, %v1922
      %v1925 = vshrl.u32 %v1674, 16
      %v1927 = vrot.slane %v1925, 4
      %v1928 = vshll.u32 %v1674, 16
      %v1930 = vrot.slane %v1928, 5
      %v1931 = vor.u32 %v1927, %v1930
      %v1932 = vrot.slane %v1931, 4
      %v1934 = vshll.u32 %v1675, 16
      %v1936 = vrot.slane %v1934, 5
      %v1937 = vsel %vm305, %v1932, %v1936
      %v1938 = vshrl.u32 %v1675, 16
      %v1940 = vrot.slane %v1938, 4
      %v1941 = vor.u32 %v1940, %v1936
      %v1942 = vrot.slane %v1941, 4
      %v1944 = vshll.u32 %v1676, 16
      %v1946 = vrot.slane %v1944, 5
      %v1947 = vsel %vm305, %v1942, %v1946
      %v1948 = vshrl.u32 %v1676, 16
      %v1950 = vrot.slane %v1948, 4
      %v1951 = vor.u32 %v1950, %v1946
      %v1952 = vrot.slane %v1951, 4
      %v1954 = vshll.u32 %v1677, 16
      %v1956 = vrot.slane %v1954, 5
      %v1957 = vsel %vm305, %v1952, %v1956
      %v1959 = vshrl.u32 %v1678, 16
      %v1961 = vrot.slane %v1959, 4
      %v1962 = vshll.u32 %v1678, 16
      %v1964 = vrot.slane %v1962, 5
      %v1965 = vor.u32 %v1961, %v1964
      %v1966 = vrot.slane %v1965, 4
      %v1968 = vshll.u32 %v1679, 16
      %v1970 = vrot.slane %v1968, 5
      %v1971 = vsel %vm305, %v1966, %v1970
      %v1972 = vshrl.u32 %v1679, 16
      %v1974 = vrot.slane %v1972, 4
      %v1975 = vor.u32 %v1974, %v1970
      %v1976 = vrot.slane %v1975, 4
      %v1978 = vshll.u32 %v1680, 16
      %v1980 = vrot.slane %v1978, 5
      %v1981 = vsel %vm305, %v1976, %v1980
      %v1982 = vshrl.u32 %v1680, 16
      %v1984 = vrot.slane %v1982, 4
      %v1985 = vor.u32 %v1984, %v1980
      %v1986 = vrot.slane %v1985, 4
      %v1988 = vshll.u32 %v1681, 16
      %v1990 = vrot.slane %v1988, 5
      %v1991 = vsel %vm305, %v1986, %v1990
      %v1993 = vshrl.u32 %v1682, 16
      %v1995 = vrot.slane %v1993, 4
      %v1996 = vshll.u32 %v1682, 16
      %v1998 = vrot.slane %v1996, 5
      %v1999 = vor.u32 %v1995, %v1998
      %v2000 = vrot.slane %v1999, 4
      %v2002 = vshll.u32 %v1683, 16
      %v2004 = vrot.slane %v2002, 5
      %v2005 = vsel %vm305, %v2000, %v2004
      %v2006 = vshrl.u32 %v1683, 16
      %v2008 = vrot.slane %v2006, 4
      %v2009 = vor.u32 %v2008, %v2004
      %v2010 = vrot.slane %v2009, 4
      %v2012 = vshll.u32 %v1684, 16
      %v2014 = vrot.slane %v2012, 5
      %v2015 = vsel %vm305, %v2010, %v2014
      %v2016 = vshrl.u32 %v1684, 16
      %v2018 = vrot.slane %v2016, 4
      %v2019 = vor.u32 %v2018, %v2014
      %v2020 = vrot.slane %v2019, 4
      %v2022 = vshll.u32 %v1685, 16
      %v2024 = vrot.slane %v2022, 5
      %v2025 = vsel %vm305, %v2020, %v2024
      %s2026 = scalar_lea.vmem %s1, 8
      %v2027 = vld [vmem:[%s2026] sm:$0x3]
      %v2028 = vunpack.c.l.b16 %v1699
      %v2029 = vunpack.c.l.b16 %v1709
      %v2030 = vunpack.c.l.b16 %v1719
      %v2031 = vunpack.c.l.b16 %v1733
      %v2032 = vunpack.c.l.b16 %v1743
      %v2033 = vunpack.c.l.b16 %v1753
      %v2034 = vunpack.c.l.b16 %v1767
      %v2035 = vunpack.c.l.b16 %v1777
      %v2036 = vunpack.c.l.b16 %v1787
      %v2037 = vunpack.c.l.b16 %v1801
      %v2038 = vunpack.c.l.b16 %v1811
      %v2039 = vunpack.c.l.b16 %v1821
      %v2040 = vunpack.c.l.b16 %v1835
      %v2041 = vunpack.c.l.b16 %v1845
      %v2042 = vunpack.c.l.b16 %v1855
      %v2043 = vunpack.c.l.b16 %v1869
      %v2044 = vunpack.c.l.b16 %v1879
      %v2045 = vunpack.c.l.b16 %v1889
      %v2046 = vunpack.c.l.b16 %v1903
      %v2047 = vunpack.c.l.b16 %v1913
      %v2048 = vunpack.c.l.b16 %v1923
      %v2049 = vunpack.c.l.b16 %v1937
      %v2050 = vunpack.c.l.b16 %v1947
      %v2051 = vunpack.c.l.b16 %v1957
      %v2052 = vunpack.c.l.b16 %v1971
      %v2053 = vunpack.c.l.b16 %v1981
      %v2054 = vunpack.c.l.b16 %v1991
      %v2055 = vunpack.c.l.b16 %v2005
      %v2056 = vunpack.c.l.b16 %v2015
      %v2057 = vunpack.c.l.b16 %v2025
      %v2058 = vpack.c.b16 %v2029, %v2028
      %v2059 = vpack.c.b16 %v2031, %v2030
      %v2060 = vpack.c.b16 %v2033, %v2032
      %v2061 = vpack.c.b16 %v2035, %v2034
      %v2062 = vpack.c.b16 %v2037, %v2036
      %v2063 = vpack.c.b16 %v2039, %v2038
      %v2064 = vpack.c.b16 %v2041, %v2040
      %v2065 = vpack.c.b16 %v2043, %v2042
      %v2066 = vpack.c.b16 %v2045, %v2044
      %v2067 = vpack.c.b16 %v2047, %v2046
      %v2068 = vpack.c.b16 %v2049, %v2048
      %v2069 = vpack.c.b16 %v2051, %v2050
      %v2070 = vpack.c.b16 %v2053, %v2052
      %v2071 = vpack.c.b16 %v2055, %v2054
      %v2072 = vpack.c.b16 %v2057, %v2056
      %v2074 = vsel %vm693, %v2058, 0
      %v2077 = vsel %vm693, %v2059, 0
      %v2080 = vsel %vm693, %v2060, 0
      %v2083 = vsel %vm693, %v2061, 0
      %v2086 = vsel %vm693, %v2062, 0
      %v2089 = vsel %vm693, %v2063, 0
      %v2092 = vsel %vm693, %v2064, 0
      %v2095 = vsel %vm693, %v2065, 0
      %v2098 = vsel %vm693, %v2066, 0
      %v2101 = vsel %vm693, %v2067, 0
      %v2104 = vsel %vm693, %v2068, 0
      %v2107 = vsel %vm693, %v2069, 0
      %v2110 = vsel %vm693, %v2070, 0
      %v2113 = vsel %vm693, %v2071, 0
      %v2116 = vsel %vm693, %v2072, 0
      %v2119 = vsel %vm739, %v2027, 0
      %2121 = vmatpush.bf16.msra.mxu0 0
      %2122 = vmatpush.bf16.msra.mxu0 0
      %2123 = vmatpush.bf16.msra.mxu0 0
      %2124 = vmatpush.bf16.msra.mxu0 0
      %2125 = vmatpush.bf16.msra.mxu0 0
      %2126 = vmatpush.bf16.msra.mxu0 0
      %2127 = vmatpush.bf16.msra.mxu0 0
      %2128 = vmatpush.bf16.msra.mxu0 %v2119
      %2129 = vmatmul.bf16.gmra.mxu0 %v2074
      %v2130 = vpop.f32.mrf.mxu0
      %v2131 = vadd.f32 0.0, %v2130
      %v2132 = vpop.f32.mrf.mxu0
      %v2133 = vadd.f32 0.0, %v2132
      %2134 = vmatmul.bf16.gmra.mxu0 %v2077
      %v2135 = vpop.f32.mrf.mxu0
      %v2136 = vadd.f32 0.0, %v2135
      %v2137 = vpop.f32.mrf.mxu0
      %v2138 = vadd.f32 0.0, %v2137
      %2139 = vmatmul.bf16.gmra.mxu0 %v2080
      %v2140 = vpop.f32.mrf.mxu0
      %v2141 = vadd.f32 0.0, %v2140
      %v2142 = vpop.f32.mrf.mxu0
      %v2143 = vadd.f32 0.0, %v2142
      %2144 = vmatmul.bf16.gmra.mxu0 %v2083
      %v2145 = vpop.f32.mrf.mxu0
      %v2146 = vadd.f32 0.0, %v2145
      %v2147 = vpop.f32.mrf.mxu0
      %v2148 = vadd.f32 0.0, %v2147
      %2149 = vmatmul.bf16.gmra.mxu0 %v2086
      %v2150 = vpop.f32.mrf.mxu0
      %v2151 = vadd.f32 0.0, %v2150
      %v2152 = vpop.f32.mrf.mxu0
      %v2153 = vadd.f32 0.0, %v2152
      %2154 = vmatmul.bf16.gmra.mxu0 %v2089
      %v2155 = vpop.f32.mrf.mxu0
      %v2156 = vadd.f32 0.0, %v2155
      %v2157 = vpop.f32.mrf.mxu0
      %v2158 = vadd.f32 0.0, %v2157
      %2159 = vmatmul.bf16.gmra.mxu0 %v2092
      %v2160 = vpop.f32.mrf.mxu0
      %v2161 = vadd.f32 0.0, %v2160
      %v2162 = vpop.f32.mrf.mxu0
      %v2163 = vadd.f32 0.0, %v2162
      %2164 = vmatmul.bf16.gmra.mxu0 %v2095
      %v2165 = vpop.f32.mrf.mxu0
      %v2166 = vadd.f32 0.0, %v2165
      %v2167 = vpop.f32.mrf.mxu0
      %v2168 = vadd.f32 0.0, %v2167
      %2169 = vmatmul.bf16.gmra.mxu0 %v2098
      %v2170 = vpop.f32.mrf.mxu0
      %v2171 = vadd.f32 0.0, %v2170
      %v2172 = vpop.f32.mrf.mxu0
      %v2173 = vadd.f32 0.0, %v2172
      %2174 = vmatmul.bf16.gmra.mxu0 %v2101
      %v2175 = vpop.f32.mrf.mxu0
      %v2176 = vadd.f32 0.0, %v2175
      %v2177 = vpop.f32.mrf.mxu0
      %v2178 = vadd.f32 0.0, %v2177
      %2179 = vmatmul.bf16.gmra.mxu0 %v2104
      %v2180 = vpop.f32.mrf.mxu0
      %v2181 = vadd.f32 0.0, %v2180
      %v2182 = vpop.f32.mrf.mxu0
      %v2183 = vadd.f32 0.0, %v2182
      %2184 = vmatmul.bf16.gmra.mxu0 %v2107
      %v2185 = vpop.f32.mrf.mxu0
      %v2186 = vadd.f32 0.0, %v2185
      %v2187 = vpop.f32.mrf.mxu0
      %v2188 = vadd.f32 0.0, %v2187
      %2189 = vmatmul.bf16.gmra.mxu0 %v2110
      %v2190 = vpop.f32.mrf.mxu0
      %v2191 = vadd.f32 0.0, %v2190
      %v2192 = vpop.f32.mrf.mxu0
      %v2193 = vadd.f32 0.0, %v2192
      %2194 = vmatmul.bf16.gmra.mxu0 %v2113
      %v2195 = vpop.f32.mrf.mxu0
      %v2196 = vadd.f32 0.0, %v2195
      %v2197 = vpop.f32.mrf.mxu0
      %v2198 = vadd.f32 0.0, %v2197
      %2199 = vmatmul.bf16.gmra.mxu0 %v2116
      %v2200 = vpop.f32.mrf.mxu0
      %v2201 = vadd.f32 0.0, %v2200
      %v2202 = vpop.f32.mrf.mxu0
      %v2203 = vadd.f32 0.0, %v2202
      %2204 = vdwg.mxu0
      %v2205 = vadd.f32 %v1616, %v2131
      %v2206 = vadd.f32 %v1617, %v2133
      %v2207 = vadd.f32 %v1618, %v2136
      %v2208 = vadd.f32 %v1619, %v2138
      %v2209 = vadd.f32 %v1620, %v2141
      %v2210 = vadd.f32 %v1621, %v2143
      %v2211 = vadd.f32 %v1622, %v2146
      %v2212 = vadd.f32 %v1623, %v2148
      %v2213 = vadd.f32 %v1624, %v2151
      %v2214 = vadd.f32 %v1625, %v2153
      %v2215 = vadd.f32 %v1626, %v2156
      %v2216 = vadd.f32 %v1627, %v2158
      %v2217 = vadd.f32 %v1628, %v2161
      %v2218 = vadd.f32 %v1629, %v2163
      %v2219 = vadd.f32 %v1630, %v2166
      %v2220 = vadd.f32 %v1631, %v2168
      %v2221 = vadd.f32 %v1632, %v2171
      %v2222 = vadd.f32 %v1633, %v2173
      %v2223 = vadd.f32 %v1634, %v2176
      %v2224 = vadd.f32 %v1635, %v2178
      %v2225 = vadd.f32 %v1636, %v2181
      %v2226 = vadd.f32 %v1637, %v2183
      %v2227 = vadd.f32 %v1638, %v2186
      %v2228 = vadd.f32 %v1639, %v2188
      %v2229 = vadd.f32 %v1640, %v2191
      %v2230 = vadd.f32 %v1641, %v2193
      %v2231 = vadd.f32 %v1642, %v2196
      %v2232 = vadd.f32 %v1643, %v2198
      %v2233 = vadd.f32 %v1644, %v2201
      %v2234 = vadd.f32 %v1645, %v2203
      %v2235 = vld [vmem:[%s1376] sm:$0xe]
      %v2236 = vld [vmem:[%s1376 + $0x10] sm:$0xe]
      %v2237 = vld [vmem:[%s1376 + $0x20] sm:$0xe]
      %v2238 = vld [vmem:[%s1376 + $0x30] sm:$0xe]
      %v2239 = vld [vmem:[%s1376 + $0x40] sm:$0xe]
      %v2240 = vld [vmem:[%s1376 + $0x50] sm:$0xe]
      %v2241 = vld [vmem:[%s1376 + $0x60] sm:$0xe]
      %v2242 = vld [vmem:[%s1376 + $0x70] sm:$0xe]
      %v2243 = vld [vmem:[%s1376 + $0x80] sm:$0xe]
      %v2244 = vld [vmem:[%s1376 + $0x90] sm:$0xe]
      %v2285 = vrot.slane %v2235, 5
      %v2286 = vrot.slane %v2285, 4
      %v2287 = vrot.slane %v1647, 5
      %v2288 = vsel %vm1066, %v2286, %v2287
      %v2289 = vrot.slane %v2287, 4
      %v2290 = vrot.slane %v1648, 5
      %v2291 = vsel %vm1066, %v2289, %v2290
      %v2292 = vrot.slane %v2290, 4
      %v2293 = vrot.slane %v1649, 5
      %v2294 = vsel %vm1066, %v2292, %v2293
      %v2295 = vrot.slane %v2236, 5
      %v2296 = vrot.slane %v2295, 4
      %v2297 = vrot.slane %v1651, 5
      %v2298 = vsel %vm1066, %v2296, %v2297
      %v2299 = vrot.slane %v2297, 4
      %v2300 = vrot.slane %v1652, 5
      %v2301 = vsel %vm1066, %v2299, %v2300
      %v2302 = vrot.slane %v2300, 4
      %v2303 = vrot.slane %v1653, 5
      %v2304 = vsel %vm1066, %v2302, %v2303
      %v2305 = vrot.slane %v2237, 5
      %v2306 = vrot.slane %v2305, 4
      %v2307 = vrot.slane %v1655, 5
      %v2308 = vsel %vm1066, %v2306, %v2307
      %v2309 = vrot.slane %v2307, 4
      %v2310 = vrot.slane %v1656, 5
      %v2311 = vsel %vm1066, %v2309, %v2310
      %v2312 = vrot.slane %v2310, 4
      %v2313 = vrot.slane %v1657, 5
      %v2314 = vsel %vm1066, %v2312, %v2313
      %v2315 = vrot.slane %v2238, 5
      %v2316 = vrot.slane %v2315, 4
      %v2317 = vrot.slane %v1659, 5
      %v2318 = vsel %vm1066, %v2316, %v2317
      %v2319 = vrot.slane %v2317, 4
      %v2320 = vrot.slane %v1660, 5
      %v2321 = vsel %vm1066, %v2319, %v2320
      %v2322 = vrot.slane %v2320, 4
      %v2323 = vrot.slane %v1661, 5
      %v2324 = vsel %vm1066, %v2322, %v2323
      %v2325 = vrot.slane %v2239, 5
      %v2326 = vrot.slane %v2325, 4
      %v2327 = vrot.slane %v1663, 5
      %v2328 = vsel %vm1066, %v2326, %v2327
      %v2329 = vrot.slane %v2327, 4
      %v2330 = vrot.slane %v1664, 5
      %v2331 = vsel %vm1066, %v2329, %v2330
      %v2332 = vrot.slane %v2330, 4
      %v2333 = vrot.slane %v1665, 5
      %v2334 = vsel %vm1066, %v2332, %v2333
      %v2335 = vrot.slane %v2240, 5
      %v2336 = vrot.slane %v2335, 4
      %v2337 = vrot.slane %v1667, 5
      %v2338 = vsel %vm1066, %v2336, %v2337
      %v2339 = vrot.slane %v2337, 4
      %v2340 = vrot.slane %v1668, 5
      %v2341 = vsel %vm1066, %v2339, %v2340
      %v2342 = vrot.slane %v2340, 4
      %v2343 = vrot.slane %v1669, 5
      %v2344 = vsel %vm1066, %v2342, %v2343
      %v2345 = vrot.slane %v2241, 5
      %v2346 = vrot.slane %v2345, 4
      %v2347 = vrot.slane %v1671, 5
      %v2348 = vsel %vm1066, %v2346, %v2347
      %v2349 = vrot.slane %v2347, 4
      %v2350 = vrot.slane %v1672, 5
      %v2351 = vsel %vm1066, %v2349, %v2350
      %v2352 = vrot.slane %v2350, 4
      %v2353 = vrot.slane %v1673, 5
      %v2354 = vsel %vm1066, %v2352, %v2353
      %v2355 = vrot.slane %v2242, 5
      %v2356 = vrot.slane %v2355, 4
      %v2357 = vrot.slane %v1675, 5
      %v2358 = vsel %vm1066, %v2356, %v2357
      %v2359 = vrot.slane %v2357, 4
      %v2360 = vrot.slane %v1676, 5
      %v2361 = vsel %vm1066, %v2359, %v2360
      %v2362 = vrot.slane %v2360, 4
      %v2363 = vrot.slane %v1677, 5
      %v2364 = vsel %vm1066, %v2362, %v2363
      %v2365 = vrot.slane %v2243, 5
      %v2366 = vrot.slane %v2365, 4
      %v2367 = vrot.slane %v1679, 5
      %v2368 = vsel %vm1066, %v2366, %v2367
      %v2369 = vrot.slane %v2367, 4
      %v2370 = vrot.slane %v1680, 5
      %v2371 = vsel %vm1066, %v2369, %v2370
      %v2372 = vrot.slane %v2370, 4
      %v2373 = vrot.slane %v1681, 5
      %v2374 = vsel %vm1066, %v2372, %v2373
      %v2375 = vrot.slane %v2244, 5
      %v2376 = vrot.slane %v2375, 4
      %v2377 = vrot.slane %v1683, 5
      %v2378 = vsel %vm1066, %v2376, %v2377
      %v2379 = vrot.slane %v2377, 4
      %v2380 = vrot.slane %v1684, 5
      %v2381 = vsel %vm1066, %v2379, %v2380
      %v2382 = vrot.slane %v2380, 4
      %v2383 = vrot.slane %v1685, 5
      %v2384 = vsel %vm1066, %v2382, %v2383
      %s2385 = scalar_lea.vmem %s1, 10
      %v2386 = vld [vmem:[%s2385] sm:$0x3]
      %v2387 = vunpack.c.l.b16 %v2288
      %v2388 = vunpack.c.l.b16 %v2291
      %v2389 = vunpack.c.l.b16 %v2294
      %v2390 = vunpack.c.l.b16 %v2298
      %v2391 = vunpack.c.l.b16 %v2301
      %v2392 = vunpack.c.l.b16 %v2304
      %v2393 = vunpack.c.l.b16 %v2308
      %v2394 = vunpack.c.l.b16 %v2311
      %v2395 = vunpack.c.l.b16 %v2314
      %v2396 = vunpack.c.l.b16 %v2318
      %v2397 = vunpack.c.l.b16 %v2321
      %v2398 = vunpack.c.l.b16 %v2324
      %v2399 = vunpack.c.l.b16 %v2328
      %v2400 = vunpack.c.l.b16 %v2331
      %v2401 = vunpack.c.l.b16 %v2334
      %v2402 = vunpack.c.l.b16 %v2338
      %v2403 = vunpack.c.l.b16 %v2341
      %v2404 = vunpack.c.l.b16 %v2344
      %v2405 = vunpack.c.l.b16 %v2348
      %v2406 = vunpack.c.l.b16 %v2351
      %v2407 = vunpack.c.l.b16 %v2354
      %v2408 = vunpack.c.l.b16 %v2358
      %v2409 = vunpack.c.l.b16 %v2361
      %v2410 = vunpack.c.l.b16 %v2364
      %v2411 = vunpack.c.l.b16 %v2368
      %v2412 = vunpack.c.l.b16 %v2371
      %v2413 = vunpack.c.l.b16 %v2374
      %v2414 = vunpack.c.l.b16 %v2378
      %v2415 = vunpack.c.l.b16 %v2381
      %v2416 = vunpack.c.l.b16 %v2384
      %v2417 = vpack.c.b16 %v2388, %v2387
      %v2418 = vpack.c.b16 %v2390, %v2389
      %v2419 = vpack.c.b16 %v2392, %v2391
      %v2420 = vpack.c.b16 %v2394, %v2393
      %v2421 = vpack.c.b16 %v2396, %v2395
      %v2422 = vpack.c.b16 %v2398, %v2397
      %v2423 = vpack.c.b16 %v2400, %v2399
      %v2424 = vpack.c.b16 %v2402, %v2401
      %v2425 = vpack.c.b16 %v2404, %v2403
      %v2426 = vpack.c.b16 %v2406, %v2405
      %v2427 = vpack.c.b16 %v2408, %v2407
      %v2428 = vpack.c.b16 %v2410, %v2409
      %v2429 = vpack.c.b16 %v2412, %v2411
      %v2430 = vpack.c.b16 %v2414, %v2413
      %v2431 = vpack.c.b16 %v2416, %v2415
      %v2433 = vsel %vm693, %v2417, 0
      %v2436 = vsel %vm693, %v2418, 0
      %v2439 = vsel %vm693, %v2419, 0
      %v2442 = vsel %vm693, %v2420, 0
      %v2445 = vsel %vm693, %v2421, 0
      %v2448 = vsel %vm693, %v2422, 0
      %v2451 = vsel %vm693, %v2423, 0
      %v2454 = vsel %vm693, %v2424, 0
      %v2457 = vsel %vm693, %v2425, 0
      %v2460 = vsel %vm693, %v2426, 0
      %v2463 = vsel %vm693, %v2427, 0
      %v2466 = vsel %vm693, %v2428, 0
      %v2469 = vsel %vm693, %v2429, 0
      %v2472 = vsel %vm693, %v2430, 0
      %v2475 = vsel %vm693, %v2431, 0
      %v2478 = vsel %vm739, %v2386, 0
      %2480 = vmatpush.bf16.msra.mxu0 0
      %2481 = vmatpush.bf16.msra.mxu0 0
      %2482 = vmatpush.bf16.msra.mxu0 0
      %2483 = vmatpush.bf16.msra.mxu0 0
      %2484 = vmatpush.bf16.msra.mxu0 0
      %2485 = vmatpush.bf16.msra.mxu0 0
      %2486 = vmatpush.bf16.msra.mxu0 0
      %2487 = vmatpush.bf16.msra.mxu0 %v2478
      %2488 = vmatmul.bf16.gmra.mxu0 %v2433
      %v2489 = vpop.f32.mrf.mxu0
      %v2490 = vadd.f32 0.0, %v2489
      %v2491 = vpop.f32.mrf.mxu0
      %v2492 = vadd.f32 0.0, %v2491
      %2493 = vmatmul.bf16.gmra.mxu0 %v2436
      %v2494 = vpop.f32.mrf.mxu0
      %v2495 = vadd.f32 0.0, %v2494
      %v2496 = vpop.f32.mrf.mxu0
      %v2497 = vadd.f32 0.0, %v2496
      %2498 = vmatmul.bf16.gmra.mxu0 %v2439
      %v2499 = vpop.f32.mrf.mxu0
      %v2500 = vadd.f32 0.0, %v2499
      %v2501 = vpop.f32.mrf.mxu0
      %v2502 = vadd.f32 0.0, %v2501
      %2503 = vmatmul.bf16.gmra.mxu0 %v2442
      %v2504 = vpop.f32.mrf.mxu0
      %v2505 = vadd.f32 0.0, %v2504
      %v2506 = vpop.f32.mrf.mxu0
      %v2507 = vadd.f32 0.0, %v2506
      %2508 = vmatmul.bf16.gmra.mxu0 %v2445
      %v2509 = vpop.f32.mrf.mxu0
      %v2510 = vadd.f32 0.0, %v2509
      %v2511 = vpop.f32.mrf.mxu0
      %v2512 = vadd.f32 0.0, %v2511
      %2513 = vmatmul.bf16.gmra.mxu0 %v2448
      %v2514 = vpop.f32.mrf.mxu0
      %v2515 = vadd.f32 0.0, %v2514
      %v2516 = vpop.f32.mrf.mxu0
      %v2517 = vadd.f32 0.0, %v2516
      %2518 = vmatmul.bf16.gmra.mxu0 %v2451
      %v2519 = vpop.f32.mrf.mxu0
      %v2520 = vadd.f32 0.0, %v2519
      %v2521 = vpop.f32.mrf.mxu0
      %v2522 = vadd.f32 0.0, %v2521
      %2523 = vmatmul.bf16.gmra.mxu0 %v2454
      %v2524 = vpop.f32.mrf.mxu0
      %v2525 = vadd.f32 0.0, %v2524
      %v2526 = vpop.f32.mrf.mxu0
      %v2527 = vadd.f32 0.0, %v2526
      %2528 = vmatmul.bf16.gmra.mxu0 %v2457
      %v2529 = vpop.f32.mrf.mxu0
      %v2530 = vadd.f32 0.0, %v2529
      %v2531 = vpop.f32.mrf.mxu0
      %v2532 = vadd.f32 0.0, %v2531
      %2533 = vmatmul.bf16.gmra.mxu0 %v2460
      %v2534 = vpop.f32.mrf.mxu0
      %v2535 = vadd.f32 0.0, %v2534
      %v2536 = vpop.f32.mrf.mxu0
      %v2537 = vadd.f32 0.0, %v2536
      %2538 = vmatmul.bf16.gmra.mxu0 %v2463
      %v2539 = vpop.f32.mrf.mxu0
      %v2540 = vadd.f32 0.0, %v2539
      %v2541 = vpop.f32.mrf.mxu0
      %v2542 = vadd.f32 0.0, %v2541
      %2543 = vmatmul.bf16.gmra.mxu0 %v2466
      %v2544 = vpop.f32.mrf.mxu0
      %v2545 = vadd.f32 0.0, %v2544
      %v2546 = vpop.f32.mrf.mxu0
      %v2547 = vadd.f32 0.0, %v2546
      %2548 = vmatmul.bf16.gmra.mxu0 %v2469
      %v2549 = vpop.f32.mrf.mxu0
      %v2550 = vadd.f32 0.0, %v2549
      %v2551 = vpop.f32.mrf.mxu0
      %v2552 = vadd.f32 0.0, %v2551
      %2553 = vmatmul.bf16.gmra.mxu0 %v2472
      %v2554 = vpop.f32.mrf.mxu0
      %v2555 = vadd.f32 0.0, %v2554
      %v2556 = vpop.f32.mrf.mxu0
      %v2557 = vadd.f32 0.0, %v2556
      %2558 = vmatmul.bf16.gmra.mxu0 %v2475
      %v2559 = vpop.f32.mrf.mxu0
      %v2560 = vadd.f32 0.0, %v2559
      %v2561 = vpop.f32.mrf.mxu0
      %v2562 = vadd.f32 0.0, %v2561
      %2563 = vdwg.mxu0
      %v2564 = vadd.f32 %v2205, %v2490
      %v2565 = vadd.f32 %v2206, %v2492
      %v2566 = vadd.f32 %v2207, %v2495
      %v2567 = vadd.f32 %v2208, %v2497
      %v2568 = vadd.f32 %v2209, %v2500
      %v2569 = vadd.f32 %v2210, %v2502
      %v2570 = vadd.f32 %v2211, %v2505
      %v2571 = vadd.f32 %v2212, %v2507
      %v2572 = vadd.f32 %v2213, %v2510
      %v2573 = vadd.f32 %v2214, %v2512
      %v2574 = vadd.f32 %v2215, %v2515
      %v2575 = vadd.f32 %v2216, %v2517
      %v2576 = vadd.f32 %v2217, %v2520
      %v2577 = vadd.f32 %v2218, %v2522
      %v2578 = vadd.f32 %v2219, %v2525
      %v2579 = vadd.f32 %v2220, %v2527
      %v2580 = vadd.f32 %v2221, %v2530
      %v2581 = vadd.f32 %v2222, %v2532
      %v2582 = vadd.f32 %v2223, %v2535
      %v2583 = vadd.f32 %v2224, %v2537
      %v2584 = vadd.f32 %v2225, %v2540
      %v2585 = vadd.f32 %v2226, %v2542
      %v2586 = vadd.f32 %v2227, %v2545
      %v2587 = vadd.f32 %v2228, %v2547
      %v2588 = vadd.f32 %v2229, %v2550
      %v2589 = vadd.f32 %v2230, %v2552
      %v2590 = vadd.f32 %v2231, %v2555
      %v2591 = vadd.f32 %v2232, %v2557
      %v2592 = vadd.f32 %v2233, %v2560
      %v2593 = vadd.f32 %v2234, %v2562
      %s2594 = scalar_lea.vmem %s249, 32
      %v2595 = vld [vmem:[%s2594] sm:$0xf]
      %v2596 = vld [vmem:[%s2594 + $0x4] sm:$0xf]
      %v2597 = vld [vmem:[%s2594 + $0x8] sm:$0xf]
      %v2598 = vld [vmem:[%s2594 + $0x10] sm:$0xf]
      %v2599 = vld [vmem:[%s2594 + $0x14] sm:$0xf]
      %v2600 = vld [vmem:[%s2594 + $0x18] sm:$0xf]
      %v2601 = vld [vmem:[%s2594 + $0x20] sm:$0xf]
      %v2602 = vld [vmem:[%s2594 + $0x24] sm:$0xf]
      %v2603 = vld [vmem:[%s2594 + $0x28] sm:$0xf]
      %v2604 = vld [vmem:[%s2594 + $0x30] sm:$0xf]
      %v2605 = vld [vmem:[%s2594 + $0x34] sm:$0xf]
      %v2606 = vld [vmem:[%s2594 + $0x38] sm:$0xf]
      %v2607 = vld [vmem:[%s2594 + $0x40] sm:$0xf]
      %v2608 = vld [vmem:[%s2594 + $0x44] sm:$0xf]
      %v2609 = vld [vmem:[%s2594 + $0x48] sm:$0xf]
      %v2610 = vld [vmem:[%s2594 + $0x50] sm:$0xf]
      %v2611 = vld [vmem:[%s2594 + $0x54] sm:$0xf]
      %v2612 = vld [vmem:[%s2594 + $0x58] sm:$0xf]
      %v2613 = vld [vmem:[%s2594 + $0x60] sm:$0xf]
      %v2614 = vld [vmem:[%s2594 + $0x64] sm:$0xf]
      %v2615 = vld [vmem:[%s2594 + $0x68] sm:$0xf]
      %v2616 = vld [vmem:[%s2594 + $0x70] sm:$0xf]
      %v2617 = vld [vmem:[%s2594 + $0x74] sm:$0xf]
      %v2618 = vld [vmem:[%s2594 + $0x78] sm:$0xf]
      %v2619 = vld [vmem:[%s2594 + $0x80] sm:$0xf]
      %v2620 = vld [vmem:[%s2594 + $0x84] sm:$0xf]
      %v2621 = vld [vmem:[%s2594 + $0x88] sm:$0xf]
      %v2622 = vld [vmem:[%s2594 + $0x90] sm:$0xf]
      %v2623 = vld [vmem:[%s2594 + $0x94] sm:$0xf]
      %v2624 = vld [vmem:[%s2594 + $0x98] sm:$0xf]
      %s2625 = scalar_lea.vmem %s1, 12
      %v2626 = vld [vmem:[%s2625] sm:$0x3]
      %v2657 = vunpack.c.l.b16 %v2595
      %v2658 = vunpack.c.l.b16 %v2596
      %v2659 = vunpack.c.l.b16 %v2597
      %v2660 = vunpack.c.l.b16 %v2598
      %v2661 = vunpack.c.l.b16 %v2599
      %v2662 = vunpack.c.l.b16 %v2600
      %v2663 = vunpack.c.l.b16 %v2601
      %v2664 = vunpack.c.l.b16 %v2602
      %v2665 = vunpack.c.l.b16 %v2603
      %v2666 = vunpack.c.l.b16 %v2604
      %v2667 = vunpack.c.l.b16 %v2605
      %v2668 = vunpack.c.l.b16 %v2606
      %v2669 = vunpack.c.l.b16 %v2607
      %v2670 = vunpack.c.l.b16 %v2608
      %v2671 = vunpack.c.l.b16 %v2609
      %v2672 = vunpack.c.l.b16 %v2610
      %v2673 = vunpack.c.l.b16 %v2611
      %v2674 = vunpack.c.l.b16 %v2612
      %v2675 = vunpack.c.l.b16 %v2613
      %v2676 = vunpack.c.l.b16 %v2614
      %v2677 = vunpack.c.l.b16 %v2615
      %v2678 = vunpack.c.l.b16 %v2616
      %v2679 = vunpack.c.l.b16 %v2617
      %v2680 = vunpack.c.l.b16 %v2618
      %v2681 = vunpack.c.l.b16 %v2619
      %v2682 = vunpack.c.l.b16 %v2620
      %v2683 = vunpack.c.l.b16 %v2621
      %v2684 = vunpack.c.l.b16 %v2622
      %v2685 = vunpack.c.l.b16 %v2623
      %v2686 = vunpack.c.l.b16 %v2624
      %v2687 = vpack.c.b16 %v2658, %v2657
      %v2688 = vpack.c.b16 %v2660, %v2659
      %v2689 = vpack.c.b16 %v2662, %v2661
      %v2690 = vpack.c.b16 %v2664, %v2663
      %v2691 = vpack.c.b16 %v2666, %v2665
      %v2692 = vpack.c.b16 %v2668, %v2667
      %v2693 = vpack.c.b16 %v2670, %v2669
      %v2694 = vpack.c.b16 %v2672, %v2671
      %v2695 = vpack.c.b16 %v2674, %v2673
      %v2696 = vpack.c.b16 %v2676, %v2675
      %v2697 = vpack.c.b16 %v2678, %v2677
      %v2698 = vpack.c.b16 %v2680, %v2679
      %v2699 = vpack.c.b16 %v2682, %v2681
      %v2700 = vpack.c.b16 %v2684, %v2683
      %v2701 = vpack.c.b16 %v2686, %v2685
      %v2703 = vsel %vm693, %v2687, 0
      %v2706 = vsel %vm693, %v2688, 0
      %v2709 = vsel %vm693, %v2689, 0
      %v2712 = vsel %vm693, %v2690, 0
      %v2715 = vsel %vm693, %v2691, 0
      %v2718 = vsel %vm693, %v2692, 0
      %v2721 = vsel %vm693, %v2693, 0
      %v2724 = vsel %vm693, %v2694, 0
      %v2727 = vsel %vm693, %v2695, 0
      %v2730 = vsel %vm693, %v2696, 0
      %v2733 = vsel %vm693, %v2697, 0
      %v2736 = vsel %vm693, %v2698, 0
      %v2739 = vsel %vm693, %v2699, 0
      %v2742 = vsel %vm693, %v2700, 0
      %v2745 = vsel %vm693, %v2701, 0
      %v2748 = vsel %vm739, %v2626, 0
      %2750 = vmatpush.bf16.msra.mxu0 0
      %2751 = vmatpush.bf16.msra.mxu0 0
      %2752 = vmatpush.bf16.msra.mxu0 0
      %2753 = vmatpush.bf16.msra.mxu0 0
      %2754 = vmatpush.bf16.msra.mxu0 0
      %2755 = vmatpush.bf16.msra.mxu0 0
      %2756 = vmatpush.bf16.msra.mxu0 0
      %2757 = vmatpush.bf16.msra.mxu0 %v2748
      %2758 = vmatmul.bf16.gmra.mxu0 %v2703
      %v2759 = vpop.f32.mrf.mxu0
      %v2760 = vadd.f32 0.0, %v2759
      %v2761 = vpop.f32.mrf.mxu0
      %v2762 = vadd.f32 0.0, %v2761
      %2763 = vmatmul.bf16.gmra.mxu0 %v2706
      %v2764 = vpop.f32.mrf.mxu0
      %v2765 = vadd.f32 0.0, %v2764
      %v2766 = vpop.f32.mrf.mxu0
      %v2767 = vadd.f32 0.0, %v2766
      %2768 = vmatmul.bf16.gmra.mxu0 %v2709
      %v2769 = vpop.f32.mrf.mxu0
      %v2770 = vadd.f32 0.0, %v2769
      %v2771 = vpop.f32.mrf.mxu0
      %v2772 = vadd.f32 0.0, %v2771
      %2773 = vmatmul.bf16.gmra.mxu0 %v2712
      %v2774 = vpop.f32.mrf.mxu0
      %v2775 = vadd.f32 0.0, %v2774
      %v2776 = vpop.f32.mrf.mxu0
      %v2777 = vadd.f32 0.0, %v2776
      %2778 = vmatmul.bf16.gmra.mxu0 %v2715
      %v2779 = vpop.f32.mrf.mxu0
      %v2780 = vadd.f32 0.0, %v2779
      %v2781 = vpop.f32.mrf.mxu0
      %v2782 = vadd.f32 0.0, %v2781
      %2783 = vmatmul.bf16.gmra.mxu0 %v2718
      %v2784 = vpop.f32.mrf.mxu0
      %v2785 = vadd.f32 0.0, %v2784
      %v2786 = vpop.f32.mrf.mxu0
      %v2787 = vadd.f32 0.0, %v2786
      %2788 = vmatmul.bf16.gmra.mxu0 %v2721
      %v2789 = vpop.f32.mrf.mxu0
      %v2790 = vadd.f32 0.0, %v2789
      %v2791 = vpop.f32.mrf.mxu0
      %v2792 = vadd.f32 0.0, %v2791
      %2793 = vmatmul.bf16.gmra.mxu0 %v2724
      %v2794 = vpop.f32.mrf.mxu0
      %v2795 = vadd.f32 0.0, %v2794
      %v2796 = vpop.f32.mrf.mxu0
      %v2797 = vadd.f32 0.0, %v2796
      %2798 = vmatmul.bf16.gmra.mxu0 %v2727
      %v2799 = vpop.f32.mrf.mxu0
      %v2800 = vadd.f32 0.0, %v2799
      %v2801 = vpop.f32.mrf.mxu0
      %v2802 = vadd.f32 0.0, %v2801
      %2803 = vmatmul.bf16.gmra.mxu0 %v2730
      %v2804 = vpop.f32.mrf.mxu0
      %v2805 = vadd.f32 0.0, %v2804
      %v2806 = vpop.f32.mrf.mxu0
      %v2807 = vadd.f32 0.0, %v2806
      %2808 = vmatmul.bf16.gmra.mxu0 %v2733
      %v2809 = vpop.f32.mrf.mxu0
      %v2810 = vadd.f32 0.0, %v2809
      %v2811 = vpop.f32.mrf.mxu0
      %v2812 = vadd.f32 0.0, %v2811
      %2813 = vmatmul.bf16.gmra.mxu0 %v2736
      %v2814 = vpop.f32.mrf.mxu0
      %v2815 = vadd.f32 0.0, %v2814
      %v2816 = vpop.f32.mrf.mxu0
      %v2817 = vadd.f32 0.0, %v2816
      %2818 = vmatmul.bf16.gmra.mxu0 %v2739
      %v2819 = vpop.f32.mrf.mxu0
      %v2820 = vadd.f32 0.0, %v2819
      %v2821 = vpop.f32.mrf.mxu0
      %v2822 = vadd.f32 0.0, %v2821
      %2823 = vmatmul.bf16.gmra.mxu0 %v2742
      %v2824 = vpop.f32.mrf.mxu0
      %v2825 = vadd.f32 0.0, %v2824
      %v2826 = vpop.f32.mrf.mxu0
      %v2827 = vadd.f32 0.0, %v2826
      %2828 = vmatmul.bf16.gmra.mxu0 %v2745
      %v2829 = vpop.f32.mrf.mxu0
      %v2830 = vadd.f32 0.0, %v2829
      %v2831 = vpop.f32.mrf.mxu0
      %v2832 = vadd.f32 0.0, %v2831
      %2833 = vdwg.mxu0
      %v2834 = vadd.f32 %v2564, %v2760
      %v2835 = vadd.f32 %v2565, %v2762
      %v2836 = vadd.f32 %v2566, %v2765
      %v2837 = vadd.f32 %v2567, %v2767
      %v2838 = vadd.f32 %v2568, %v2770
      %v2839 = vadd.f32 %v2569, %v2772
      %v2840 = vadd.f32 %v2570, %v2775
      %v2841 = vadd.f32 %v2571, %v2777
      %v2842 = vadd.f32 %v2572, %v2780
      %v2843 = vadd.f32 %v2573, %v2782
      %v2844 = vadd.f32 %v2574, %v2785
      %v2845 = vadd.f32 %v2575, %v2787
      %v2846 = vadd.f32 %v2576, %v2790
      %v2847 = vadd.f32 %v2577, %v2792
      %v2848 = vadd.f32 %v2578, %v2795
      %v2849 = vadd.f32 %v2579, %v2797
      %v2850 = vadd.f32 %v2580, %v2800
      %v2851 = vadd.f32 %v2581, %v2802
      %v2852 = vadd.f32 %v2582, %v2805
      %v2853 = vadd.f32 %v2583, %v2807
      %v2854 = vadd.f32 %v2584, %v2810
      %v2855 = vadd.f32 %v2585, %v2812
      %v2856 = vadd.f32 %v2586, %v2815
      %v2857 = vadd.f32 %v2587, %v2817
      %v2858 = vadd.f32 %v2588, %v2820
      %v2859 = vadd.f32 %v2589, %v2822
      %v2860 = vadd.f32 %v2590, %v2825
      %v2861 = vadd.f32 %v2591, %v2827
      %v2862 = vadd.f32 %v2592, %v2830
      %v2863 = vadd.f32 %v2593, %v2832
      %v2864 = vld [vmem:[%s2594] sm:$0xf]
      %v2865 = vld [vmem:[%s2594 + $0x4] sm:$0xf]
      %v2866 = vld [vmem:[%s2594 + $0x8] sm:$0xf]
      %v2867 = vld [vmem:[%s2594 + $0xc] sm:$0x1]
      %v2868 = vld [vmem:[%s2594 + $0x10] sm:$0xf]
      %v2869 = vld [vmem:[%s2594 + $0x14] sm:$0xf]
      %v2870 = vld [vmem:[%s2594 + $0x18] sm:$0xf]
      %v2871 = vld [vmem:[%s2594 + $0x1c] sm:$0x1]
      %v2872 = vld [vmem:[%s2594 + $0x20] sm:$0xf]
      %v2873 = vld [vmem:[%s2594 + $0x24] sm:$0xf]
      %v2874 = vld [vmem:[%s2594 + $0x28] sm:$0xf]
      %v2875 = vld [vmem:[%s2594 + $0x2c] sm:$0x1]
      %v2876 = vld [vmem:[%s2594 + $0x30] sm:$0xf]
      %v2877 = vld [vmem:[%s2594 + $0x34] sm:$0xf]
      %v2878 = vld [vmem:[%s2594 + $0x38] sm:$0xf]
      %v2879 = vld [vmem:[%s2594 + $0x3c] sm:$0x1]
      %v2880 = vld [vmem:[%s2594 + $0x40] sm:$0xf]
      %v2881 = vld [vmem:[%s2594 + $0x44] sm:$0xf]
      %v2882 = vld [vmem:[%s2594 + $0x48] sm:$0xf]
      %v2883 = vld [vmem:[%s2594 + $0x4c] sm:$0x1]
      %v2884 = vld [vmem:[%s2594 + $0x50] sm:$0xf]
      %v2885 = vld [vmem:[%s2594 + $0x54] sm:$0xf]
      %v2886 = vld [vmem:[%s2594 + $0x58] sm:$0xf]
      %v2887 = vld [vmem:[%s2594 + $0x5c] sm:$0x1]
      %v2888 = vld [vmem:[%s2594 + $0x60] sm:$0xf]
      %v2889 = vld [vmem:[%s2594 + $0x64] sm:$0xf]
      %v2890 = vld [vmem:[%s2594 + $0x68] sm:$0xf]
      %v2891 = vld [vmem:[%s2594 + $0x6c] sm:$0x1]
      %v2892 = vld [vmem:[%s2594 + $0x70] sm:$0xf]
      %v2893 = vld [vmem:[%s2594 + $0x74] sm:$0xf]
      %v2894 = vld [vmem:[%s2594 + $0x78] sm:$0xf]
      %v2895 = vld [vmem:[%s2594 + $0x7c] sm:$0x1]
      %v2896 = vld [vmem:[%s2594 + $0x80] sm:$0xf]
      %v2897 = vld [vmem:[%s2594 + $0x84] sm:$0xf]
      %v2898 = vld [vmem:[%s2594 + $0x88] sm:$0xf]
      %v2899 = vld [vmem:[%s2594 + $0x8c] sm:$0x1]
      %v2900 = vld [vmem:[%s2594 + $0x90] sm:$0xf]
      %v2901 = vld [vmem:[%s2594 + $0x94] sm:$0xf]
      %v2902 = vld [vmem:[%s2594 + $0x98] sm:$0xf]
      %v2903 = vld [vmem:[%s2594 + $0x9c] sm:$0x1]
      %v2905 = vshrl.u32 %v2864, 16
      %v2907 = vrot.slane %v2905, 4
      %v2908 = vshll.u32 %v2864, 16
      %v2910 = vrot.slane %v2908, 5
      %v2911 = vor.u32 %v2907, %v2910
      %v2912 = vrot.slane %v2911, 4
      %v2914 = vshll.u32 %v2865, 16
      %v2916 = vrot.slane %v2914, 5
      %v2917 = vsel %vm305, %v2912, %v2916
      %v2918 = vshrl.u32 %v2865, 16
      %v2920 = vrot.slane %v2918, 4
      %v2921 = vor.u32 %v2920, %v2916
      %v2922 = vrot.slane %v2921, 4
      %v2924 = vshll.u32 %v2866, 16
      %v2926 = vrot.slane %v2924, 5
      %v2927 = vsel %vm305, %v2922, %v2926
      %v2928 = vshrl.u32 %v2866, 16
      %v2930 = vrot.slane %v2928, 4
      %v2931 = vor.u32 %v2930, %v2926
      %v2932 = vrot.slane %v2931, 4
      %v2934 = vshll.u32 %v2867, 16
      %v2936 = vrot.slane %v2934, 5
      %v2937 = vsel %vm305, %v2932, %v2936
      %v2939 = vshrl.u32 %v2868, 16
      %v2941 = vrot.slane %v2939, 4
      %v2942 = vshll.u32 %v2868, 16
      %v2944 = vrot.slane %v2942, 5
      %v2945 = vor.u32 %v2941, %v2944
      %v2946 = vrot.slane %v2945, 4
      %v2948 = vshll.u32 %v2869, 16
      %v2950 = vrot.slane %v2948, 5
      %v2951 = vsel %vm305, %v2946, %v2950
      %v2952 = vshrl.u32 %v2869, 16
      %v2954 = vrot.slane %v2952, 4
      %v2955 = vor.u32 %v2954, %v2950
      %v2956 = vrot.slane %v2955, 4
      %v2958 = vshll.u32 %v2870, 16
      %v2960 = vrot.slane %v2958, 5
      %v2961 = vsel %vm305, %v2956, %v2960
      %v2962 = vshrl.u32 %v2870, 16
      %v2964 = vrot.slane %v2962, 4
      %v2965 = vor.u32 %v2964, %v2960
      %v2966 = vrot.slane %v2965, 4
      %v2968 = vshll.u32 %v2871, 16
      %v2970 = vrot.slane %v2968, 5
      %v2971 = vsel %vm305, %v2966, %v2970
      %v2973 = vshrl.u32 %v2872, 16
      %v2975 = vrot.slane %v2973, 4
      %v2976 = vshll.u32 %v2872, 16
      %v2978 = vrot.slane %v2976, 5
      %v2979 = vor.u32 %v2975, %v2978
      %v2980 = vrot.slane %v2979, 4
      %v2982 = vshll.u32 %v2873, 16
      %v2984 = vrot.slane %v2982, 5
      %v2985 = vsel %vm305, %v2980, %v2984
      %v2986 = vshrl.u32 %v2873, 16
      %v2988 = vrot.slane %v2986, 4
      %v2989 = vor.u32 %v2988, %v2984
      %v2990 = vrot.slane %v2989, 4
      %v2992 = vshll.u32 %v2874, 16
      %v2994 = vrot.slane %v2992, 5
      %v2995 = vsel %vm305, %v2990, %v2994
      %v2996 = vshrl.u32 %v2874, 16
      %v2998 = vrot.slane %v2996, 4
      %v2999 = vor.u32 %v2998, %v2994
      %v3000 = vrot.slane %v2999, 4
      %v3002 = vshll.u32 %v2875, 16
      %v3004 = vrot.slane %v3002, 5
      %v3005 = vsel %vm305, %v3000, %v3004
      %v3007 = vshrl.u32 %v2876, 16
      %v3009 = vrot.slane %v3007, 4
      %v3010 = vshll.u32 %v2876, 16
      %v3012 = vrot.slane %v3010, 5
      %v3013 = vor.u32 %v3009, %v3012
      %v3014 = vrot.slane %v3013, 4
      %v3016 = vshll.u32 %v2877, 16
      %v3018 = vrot.slane %v3016, 5
      %v3019 = vsel %vm305, %v3014, %v3018
      %v3020 = vshrl.u32 %v2877, 16
      %v3022 = vrot.slane %v3020, 4
      %v3023 = vor.u32 %v3022, %v3018
      %v3024 = vrot.slane %v3023, 4
      %v3026 = vshll.u32 %v2878, 16
      %v3028 = vrot.slane %v3026, 5
      %v3029 = vsel %vm305, %v3024, %v3028
      %v3030 = vshrl.u32 %v2878, 16
      %v3032 = vrot.slane %v3030, 4
      %v3033 = vor.u32 %v3032, %v3028
      %v3034 = vrot.slane %v3033, 4
      %v3036 = vshll.u32 %v2879, 16
      %v3038 = vrot.slane %v3036, 5
      %v3039 = vsel %vm305, %v3034, %v3038
      %v3041 = vshrl.u32 %v2880, 16
      %v3043 = vrot.slane %v3041, 4
      %v3044 = vshll.u32 %v2880, 16
      %v3046 = vrot.slane %v3044, 5
      %v3047 = vor.u32 %v3043, %v3046
      %v3048 = vrot.slane %v3047, 4
      %v3050 = vshll.u32 %v2881, 16
      %v3052 = vrot.slane %v3050, 5
      %v3053 = vsel %vm305, %v3048, %v3052
      %v3054 = vshrl.u32 %v2881, 16
      %v3056 = vrot.slane %v3054, 4
      %v3057 = vor.u32 %v3056, %v3052
      %v3058 = vrot.slane %v3057, 4
      %v3060 = vshll.u32 %v2882, 16
      %v3062 = vrot.slane %v3060, 5
      %v3063 = vsel %vm305, %v3058, %v3062
      %v3064 = vshrl.u32 %v2882, 16
      %v3066 = vrot.slane %v3064, 4
      %v3067 = vor.u32 %v3066, %v3062
      %v3068 = vrot.slane %v3067, 4
      %v3070 = vshll.u32 %v2883, 16
      %v3072 = vrot.slane %v3070, 5
      %v3073 = vsel %vm305, %v3068, %v3072
      %v3075 = vshrl.u32 %v2884, 16
      %v3077 = vrot.slane %v3075, 4
      %v3078 = vshll.u32 %v2884, 16
      %v3080 = vrot.slane %v3078, 5
      %v3081 = vor.u32 %v3077, %v3080
      %v3082 = vrot.slane %v3081, 4
      %v3084 = vshll.u32 %v2885, 16
      %v3086 = vrot.slane %v3084, 5
      %v3087 = vsel %vm305, %v3082, %v3086
      %v3088 = vshrl.u32 %v2885, 16
      %v3090 = vrot.slane %v3088, 4
      %v3091 = vor.u32 %v3090, %v3086
      %v3092 = vrot.slane %v3091, 4
      %v3094 = vshll.u32 %v2886, 16
      %v3096 = vrot.slane %v3094, 5
      %v3097 = vsel %vm305, %v3092, %v3096
      %v3098 = vshrl.u32 %v2886, 16
      %v3100 = vrot.slane %v3098, 4
      %v3101 = vor.u32 %v3100, %v3096
      %v3102 = vrot.slane %v3101, 4
      %v3104 = vshll.u32 %v2887, 16
      %v3106 = vrot.slane %v3104, 5
      %v3107 = vsel %vm305, %v3102, %v3106
      %v3109 = vshrl.u32 %v2888, 16
      %v3111 = vrot.slane %v3109, 4
      %v3112 = vshll.u32 %v2888, 16
      %v3114 = vrot.slane %v3112, 5
      %v3115 = vor.u32 %v3111, %v3114
      %v3116 = vrot.slane %v3115, 4
      %v3118 = vshll.u32 %v2889, 16
      %v3120 = vrot.slane %v3118, 5
      %v3121 = vsel %vm305, %v3116, %v3120
      %v3122 = vshrl.u32 %v2889, 16
      %v3124 = vrot.slane %v3122, 4
      %v3125 = vor.u32 %v3124, %v3120
      %v3126 = vrot.slane %v3125, 4
      %v3128 = vshll.u32 %v2890, 16
      %v3130 = vrot.slane %v3128, 5
      %v3131 = vsel %vm305, %v3126, %v3130
      %v3132 = vshrl.u32 %v2890, 16
      %v3134 = vrot.slane %v3132, 4
      %v3135 = vor.u32 %v3134, %v3130
      %v3136 = vrot.slane %v3135, 4
      %v3138 = vshll.u32 %v2891, 16
      %v3140 = vrot.slane %v3138, 5
      %v3141 = vsel %vm305, %v3136, %v3140
      %v3143 = vshrl.u32 %v2892, 16
      %v3145 = vrot.slane %v3143, 4
      %v3146 = vshll.u32 %v2892, 16
      %v3148 = vrot.slane %v3146, 5
      %v3149 = vor.u32 %v3145, %v3148
      %v3150 = vrot.slane %v3149, 4
      %v3152 = vshll.u32 %v2893, 16
      %v3154 = vrot.slane %v3152, 5
      %v3155 = vsel %vm305, %v3150, %v3154
      %v3156 = vshrl.u32 %v2893, 16
      %v3158 = vrot.slane %v3156, 4
      %v3159 = vor.u32 %v3158, %v3154
      %v3160 = vrot.slane %v3159, 4
      %v3162 = vshll.u32 %v2894, 16
      %v3164 = vrot.slane %v3162, 5
      %v3165 = vsel %vm305, %v3160, %v3164
      %v3166 = vshrl.u32 %v2894, 16
      %v3168 = vrot.slane %v3166, 4
      %v3169 = vor.u32 %v3168, %v3164
      %v3170 = vrot.slane %v3169, 4
      %v3172 = vshll.u32 %v2895, 16
      %v3174 = vrot.slane %v3172, 5
      %v3175 = vsel %vm305, %v3170, %v3174
      %v3177 = vshrl.u32 %v2896, 16
      %v3179 = vrot.slane %v3177, 4
      %v3180 = vshll.u32 %v2896, 16
      %v3182 = vrot.slane %v3180, 5
      %v3183 = vor.u32 %v3179, %v3182
      %v3184 = vrot.slane %v3183, 4
      %v3186 = vshll.u32 %v2897, 16
      %v3188 = vrot.slane %v3186, 5
      %v3189 = vsel %vm305, %v3184, %v3188
      %v3190 = vshrl.u32 %v2897, 16
      %v3192 = vrot.slane %v3190, 4
      %v3193 = vor.u32 %v3192, %v3188
      %v3194 = vrot.slane %v3193, 4
      %v3196 = vshll.u32 %v2898, 16
      %v3198 = vrot.slane %v3196, 5
      %v3199 = vsel %vm305, %v3194, %v3198
      %v3200 = vshrl.u32 %v2898, 16
      %v3202 = vrot.slane %v3200, 4
      %v3203 = vor.u32 %v3202, %v3198
      %v3204 = vrot.slane %v3203, 4
      %v3206 = vshll.u32 %v2899, 16
      %v3208 = vrot.slane %v3206, 5
      %v3209 = vsel %vm305, %v3204, %v3208
      %v3211 = vshrl.u32 %v2900, 16
      %v3213 = vrot.slane %v3211, 4
      %v3214 = vshll.u32 %v2900, 16
      %v3216 = vrot.slane %v3214, 5
      %v3217 = vor.u32 %v3213, %v3216
      %v3218 = vrot.slane %v3217, 4
      %v3220 = vshll.u32 %v2901, 16
      %v3222 = vrot.slane %v3220, 5
      %v3223 = vsel %vm305, %v3218, %v3222
      %v3224 = vshrl.u32 %v2901, 16
      %v3226 = vrot.slane %v3224, 4
      %v3227 = vor.u32 %v3226, %v3222
      %v3228 = vrot.slane %v3227, 4
      %v3230 = vshll.u32 %v2902, 16
      %v3232 = vrot.slane %v3230, 5
      %v3233 = vsel %vm305, %v3228, %v3232
      %v3234 = vshrl.u32 %v2902, 16
      %v3236 = vrot.slane %v3234, 4
      %v3237 = vor.u32 %v3236, %v3232
      %v3238 = vrot.slane %v3237, 4
      %v3240 = vshll.u32 %v2903, 16
      %v3242 = vrot.slane %v3240, 5
      %v3243 = vsel %vm305, %v3238, %v3242
      %s3244 = scalar_lea.vmem %s1, 14
      %v3245 = vld [vmem:[%s3244] sm:$0x3]
      %v3246 = vunpack.c.l.b16 %v2917
      %v3247 = vunpack.c.l.b16 %v2927
      %v3248 = vunpack.c.l.b16 %v2937
      %v3249 = vunpack.c.l.b16 %v2951
      %v3250 = vunpack.c.l.b16 %v2961
      %v3251 = vunpack.c.l.b16 %v2971
      %v3252 = vunpack.c.l.b16 %v2985
      %v3253 = vunpack.c.l.b16 %v2995
      %v3254 = vunpack.c.l.b16 %v3005
      %v3255 = vunpack.c.l.b16 %v3019
      %v3256 = vunpack.c.l.b16 %v3029
      %v3257 = vunpack.c.l.b16 %v3039
      %v3258 = vunpack.c.l.b16 %v3053
      %v3259 = vunpack.c.l.b16 %v3063
      %v3260 = vunpack.c.l.b16 %v3073
      %v3261 = vunpack.c.l.b16 %v3087
      %v3262 = vunpack.c.l.b16 %v3097
      %v3263 = vunpack.c.l.b16 %v3107
      %v3264 = vunpack.c.l.b16 %v3121
      %v3265 = vunpack.c.l.b16 %v3131
      %v3266 = vunpack.c.l.b16 %v3141
      %v3267 = vunpack.c.l.b16 %v3155
      %v3268 = vunpack.c.l.b16 %v3165
      %v3269 = vunpack.c.l.b16 %v3175
      %v3270 = vunpack.c.l.b16 %v3189
      %v3271 = vunpack.c.l.b16 %v3199
      %v3272 = vunpack.c.l.b16 %v3209
      %v3273 = vunpack.c.l.b16 %v3223
      %v3274 = vunpack.c.l.b16 %v3233
      %v3275 = vunpack.c.l.b16 %v3243
      %v3276 = vpack.c.b16 %v3247, %v3246
      %v3277 = vpack.c.b16 %v3249, %v3248
      %v3278 = vpack.c.b16 %v3251, %v3250
      %v3279 = vpack.c.b16 %v3253, %v3252
      %v3280 = vpack.c.b16 %v3255, %v3254
      %v3281 = vpack.c.b16 %v3257, %v3256
      %v3282 = vpack.c.b16 %v3259, %v3258
      %v3283 = vpack.c.b16 %v3261, %v3260
      %v3284 = vpack.c.b16 %v3263, %v3262
      %v3285 = vpack.c.b16 %v3265, %v3264
      %v3286 = vpack.c.b16 %v3267, %v3266
      %v3287 = vpack.c.b16 %v3269, %v3268
      %v3288 = vpack.c.b16 %v3271, %v3270
      %v3289 = vpack.c.b16 %v3273, %v3272
      %v3290 = vpack.c.b16 %v3275, %v3274
      %v3292 = vsel %vm693, %v3276, 0
      %v3295 = vsel %vm693, %v3277, 0
      %v3298 = vsel %vm693, %v3278, 0
      %v3301 = vsel %vm693, %v3279, 0
      %v3304 = vsel %vm693, %v3280, 0
      %v3307 = vsel %vm693, %v3281, 0
      %v3310 = vsel %vm693, %v3282, 0
      %v3313 = vsel %vm693, %v3283, 0
      %v3316 = vsel %vm693, %v3284, 0
      %v3319 = vsel %vm693, %v3285, 0
      %v3322 = vsel %vm693, %v3286, 0
      %v3325 = vsel %vm693, %v3287, 0
      %v3328 = vsel %vm693, %v3288, 0
      %v3331 = vsel %vm693, %v3289, 0
      %v3334 = vsel %vm693, %v3290, 0
      %v3337 = vsel %vm739, %v3245, 0
      %3339 = vmatpush.bf16.msra.mxu0 0
      %3340 = vmatpush.bf16.msra.mxu0 0
      %3341 = vmatpush.bf16.msra.mxu0 0
      %3342 = vmatpush.bf16.msra.mxu0 0
      %3343 = vmatpush.bf16.msra.mxu0 0
      %3344 = vmatpush.bf16.msra.mxu0 0
      %3345 = vmatpush.bf16.msra.mxu0 0
      %3346 = vmatpush.bf16.msra.mxu0 %v3337
      %3347 = vmatmul.bf16.gmra.mxu0 %v3292
      %v3348 = vpop.f32.mrf.mxu0
      %v3349 = vadd.f32 0.0, %v3348
      %v3350 = vpop.f32.mrf.mxu0
      %v3351 = vadd.f32 0.0, %v3350
      %3352 = vmatmul.bf16.gmra.mxu0 %v3295
      %v3353 = vpop.f32.mrf.mxu0
      %v3354 = vadd.f32 0.0, %v3353
      %v3355 = vpop.f32.mrf.mxu0
      %v3356 = vadd.f32 0.0, %v3355
      %3357 = vmatmul.bf16.gmra.mxu0 %v3298
      %v3358 = vpop.f32.mrf.mxu0
      %v3359 = vadd.f32 0.0, %v3358
      %v3360 = vpop.f32.mrf.mxu0
      %v3361 = vadd.f32 0.0, %v3360
      %3362 = vmatmul.bf16.gmra.mxu0 %v3301
      %v3363 = vpop.f32.mrf.mxu0
      %v3364 = vadd.f32 0.0, %v3363
      %v3365 = vpop.f32.mrf.mxu0
      %v3366 = vadd.f32 0.0, %v3365
      %3367 = vmatmul.bf16.gmra.mxu0 %v3304
      %v3368 = vpop.f32.mrf.mxu0
      %v3369 = vadd.f32 0.0, %v3368
      %v3370 = vpop.f32.mrf.mxu0
      %v3371 = vadd.f32 0.0, %v3370
      %3372 = vmatmul.bf16.gmra.mxu0 %v3307
      %v3373 = vpop.f32.mrf.mxu0
      %v3374 = vadd.f32 0.0, %v3373
      %v3375 = vpop.f32.mrf.mxu0
      %v3376 = vadd.f32 0.0, %v3375
      %3377 = vmatmul.bf16.gmra.mxu0 %v3310
      %v3378 = vpop.f32.mrf.mxu0
      %v3379 = vadd.f32 0.0, %v3378
      %v3380 = vpop.f32.mrf.mxu0
      %v3381 = vadd.f32 0.0, %v3380
      %3382 = vmatmul.bf16.gmra.mxu0 %v3313
      %v3383 = vpop.f32.mrf.mxu0
      %v3384 = vadd.f32 0.0, %v3383
      %v3385 = vpop.f32.mrf.mxu0
      %v3386 = vadd.f32 0.0, %v3385
      %3387 = vmatmul.bf16.gmra.mxu0 %v3316
      %v3388 = vpop.f32.mrf.mxu0
      %v3389 = vadd.f32 0.0, %v3388
      %v3390 = vpop.f32.mrf.mxu0
      %v3391 = vadd.f32 0.0, %v3390
      %3392 = vmatmul.bf16.gmra.mxu0 %v3319
      %v3393 = vpop.f32.mrf.mxu0
      %v3394 = vadd.f32 0.0, %v3393
      %v3395 = vpop.f32.mrf.mxu0
      %v3396 = vadd.f32 0.0, %v3395
      %3397 = vmatmul.bf16.gmra.mxu0 %v3322
      %v3398 = vpop.f32.mrf.mxu0
      %v3399 = vadd.f32 0.0, %v3398
      %v3400 = vpop.f32.mrf.mxu0
      %v3401 = vadd.f32 0.0, %v3400
      %3402 = vmatmul.bf16.gmra.mxu0 %v3325
      %v3403 = vpop.f32.mrf.mxu0
      %v3404 = vadd.f32 0.0, %v3403
      %v3405 = vpop.f32.mrf.mxu0
      %v3406 = vadd.f32 0.0, %v3405
      %3407 = vmatmul.bf16.gmra.mxu0 %v3328
      %v3408 = vpop.f32.mrf.mxu0
      %v3409 = vadd.f32 0.0, %v3408
      %v3410 = vpop.f32.mrf.mxu0
      %v3411 = vadd.f32 0.0, %v3410
      %3412 = vmatmul.bf16.gmra.mxu0 %v3331
      %v3413 = vpop.f32.mrf.mxu0
      %v3414 = vadd.f32 0.0, %v3413
      %v3415 = vpop.f32.mrf.mxu0
      %v3416 = vadd.f32 0.0, %v3415
      %3417 = vmatmul.bf16.gmra.mxu0 %v3334
      %v3418 = vpop.f32.mrf.mxu0
      %v3419 = vadd.f32 0.0, %v3418
      %v3420 = vpop.f32.mrf.mxu0
      %v3421 = vadd.f32 0.0, %v3420
      %3422 = vdwg.mxu0
      %v3423 = vadd.f32 %v2834, %v3349
      %v3424 = vadd.f32 %v2835, %v3351
      %v3425 = vadd.f32 %v2836, %v3354
      %v3426 = vadd.f32 %v2837, %v3356
      %v3427 = vadd.f32 %v2838, %v3359
      %v3428 = vadd.f32 %v2839, %v3361
      %v3429 = vadd.f32 %v2840, %v3364
      %v3430 = vadd.f32 %v2841, %v3366
      %v3431 = vadd.f32 %v2842, %v3369
      %v3432 = vadd.f32 %v2843, %v3371
      %v3433 = vadd.f32 %v2844, %v3374
      %v3434 = vadd.f32 %v2845, %v3376
      %v3435 = vadd.f32 %v2846, %v3379
      %v3436 = vadd.f32 %v2847, %v3381
      %v3437 = vadd.f32 %v2848, %v3384
      %v3438 = vadd.f32 %v2849, %v3386
      %v3439 = vadd.f32 %v2850, %v3389
      %v3440 = vadd.f32 %v2851, %v3391
      %v3441 = vadd.f32 %v2852, %v3394
      %v3442 = vadd.f32 %v2853, %v3396
      %v3443 = vadd.f32 %v2854, %v3399
      %v3444 = vadd.f32 %v2855, %v3401
      %v3445 = vadd.f32 %v2856, %v3404
      %v3446 = vadd.f32 %v2857, %v3406
      %v3447 = vadd.f32 %v2858, %v3409
      %v3448 = vadd.f32 %v2859, %v3411
      %v3449 = vadd.f32 %v2860, %v3414
      %v3450 = vadd.f32 %v2861, %v3416
      %v3451 = vadd.f32 %v2862, %v3419
      %v3452 = vadd.f32 %v2863, %v3421
      %v3453 = vld [vmem:[%s2594] sm:$0xe]
      %v3454 = vld [vmem:[%s2594 + $0x10] sm:$0xe]
      %v3455 = vld [vmem:[%s2594 + $0x20] sm:$0xe]
      %v3456 = vld [vmem:[%s2594 + $0x30] sm:$0xe]
      %v3457 = vld [vmem:[%s2594 + $0x40] sm:$0xe]
      %v3458 = vld [vmem:[%s2594 + $0x50] sm:$0xe]
      %v3459 = vld [vmem:[%s2594 + $0x60] sm:$0xe]
      %v3460 = vld [vmem:[%s2594 + $0x70] sm:$0xe]
      %v3461 = vld [vmem:[%s2594 + $0x80] sm:$0xe]
      %v3462 = vld [vmem:[%s2594 + $0x90] sm:$0xe]
      %v3503 = vrot.slane %v3453, 5
      %v3504 = vrot.slane %v3503, 4
      %v3505 = vrot.slane %v2865, 5
      %v3506 = vsel %vm1066, %v3504, %v3505
      %v3507 = vrot.slane %v3505, 4
      %v3508 = vrot.slane %v2866, 5
      %v3509 = vsel %vm1066, %v3507, %v3508
      %v3510 = vrot.slane %v3508, 4
      %v3511 = vrot.slane %v2867, 5
      %v3512 = vsel %vm1066, %v3510, %v3511
      %v3513 = vrot.slane %v3454, 5
      %v3514 = vrot.slane %v3513, 4
      %v3515 = vrot.slane %v2869, 5
      %v3516 = vsel %vm1066, %v3514, %v3515
      %v3517 = vrot.slane %v3515, 4
      %v3518 = vrot.slane %v2870, 5
      %v3519 = vsel %vm1066, %v3517, %v3518
      %v3520 = vrot.slane %v3518, 4
      %v3521 = vrot.slane %v2871, 5
      %v3522 = vsel %vm1066, %v3520, %v3521
      %v3523 = vrot.slane %v3455, 5
      %v3524 = vrot.slane %v3523, 4
      %v3525 = vrot.slane %v2873, 5
      %v3526 = vsel %vm1066, %v3524, %v3525
      %v3527 = vrot.slane %v3525, 4
      %v3528 = vrot.slane %v2874, 5
      %v3529 = vsel %vm1066, %v3527, %v3528
      %v3530 = vrot.slane %v3528, 4
      %v3531 = vrot.slane %v2875, 5
      %v3532 = vsel %vm1066, %v3530, %v3531
      %v3533 = vrot.slane %v3456, 5
      %v3534 = vrot.slane %v3533, 4
      %v3535 = vrot.slane %v2877, 5
      %v3536 = vsel %vm1066, %v3534, %v3535
      %v3537 = vrot.slane %v3535, 4
      %v3538 = vrot.slane %v2878, 5
      %v3539 = vsel %vm1066, %v3537, %v3538
      %v3540 = vrot.slane %v3538, 4
      %v3541 = vrot.slane %v2879, 5
      %v3542 = vsel %vm1066, %v3540, %v3541
      %v3543 = vrot.slane %v3457, 5
      %v3544 = vrot.slane %v3543, 4
      %v3545 = vrot.slane %v2881, 5
      %v3546 = vsel %vm1066, %v3544, %v3545
      %v3547 = vrot.slane %v3545, 4
      %v3548 = vrot.slane %v2882, 5
      %v3549 = vsel %vm1066, %v3547, %v3548
      %v3550 = vrot.slane %v3548, 4
      %v3551 = vrot.slane %v2883, 5
      %v3552 = vsel %vm1066, %v3550, %v3551
      %v3553 = vrot.slane %v3458, 5
      %v3554 = vrot.slane %v3553, 4
      %v3555 = vrot.slane %v2885, 5
      %v3556 = vsel %vm1066, %v3554, %v3555
      %v3557 = vrot.slane %v3555, 4
      %v3558 = vrot.slane %v2886, 5
      %v3559 = vsel %vm1066, %v3557, %v3558
      %v3560 = vrot.slane %v3558, 4
      %v3561 = vrot.slane %v2887, 5
      %v3562 = vsel %vm1066, %v3560, %v3561
      %v3563 = vrot.slane %v3459, 5
      %v3564 = vrot.slane %v3563, 4
      %v3565 = vrot.slane %v2889, 5
      %v3566 = vsel %vm1066, %v3564, %v3565
      %v3567 = vrot.slane %v3565, 4
      %v3568 = vrot.slane %v2890, 5
      %v3569 = vsel %vm1066, %v3567, %v3568
      %v3570 = vrot.slane %v3568, 4
      %v3571 = vrot.slane %v2891, 5
      %v3572 = vsel %vm1066, %v3570, %v3571
      %v3573 = vrot.slane %v3460, 5
      %v3574 = vrot.slane %v3573, 4
      %v3575 = vrot.slane %v2893, 5
      %v3576 = vsel %vm1066, %v3574, %v3575
      %v3577 = vrot.slane %v3575, 4
      %v3578 = vrot.slane %v2894, 5
      %v3579 = vsel %vm1066, %v3577, %v3578
      %v3580 = vrot.slane %v3578, 4
      %v3581 = vrot.slane %v2895, 5
      %v3582 = vsel %vm1066, %v3580, %v3581
      %v3583 = vrot.slane %v3461, 5
      %v3584 = vrot.slane %v3583, 4
      %v3585 = vrot.slane %v2897, 5
      %v3586 = vsel %vm1066, %v3584, %v3585
      %v3587 = vrot.slane %v3585, 4
      %v3588 = vrot.slane %v2898, 5
      %v3589 = vsel %vm1066, %v3587, %v3588
      %v3590 = vrot.slane %v3588, 4
      %v3591 = vrot.slane %v2899, 5
      %v3592 = vsel %vm1066, %v3590, %v3591
      %v3593 = vrot.slane %v3462, 5
      %v3594 = vrot.slane %v3593, 4
      %v3595 = vrot.slane %v2901, 5
      %v3596 = vsel %vm1066, %v3594, %v3595
      %v3597 = vrot.slane %v3595, 4
      %v3598 = vrot.slane %v2902, 5
      %v3599 = vsel %vm1066, %v3597, %v3598
      %v3600 = vrot.slane %v3598, 4
      %v3601 = vrot.slane %v2903, 5
      %v3602 = vsel %vm1066, %v3600, %v3601
      %s3603 = scalar_lea.vmem %s1, 16
      %v3604 = vld [vmem:[%s3603] sm:$0x3]
      %v3605 = vunpack.c.l.b16 %v3506
      %v3606 = vunpack.c.l.b16 %v3509
      %v3607 = vunpack.c.l.b16 %v3512
      %v3608 = vunpack.c.l.b16 %v3516
      %v3609 = vunpack.c.l.b16 %v3519
      %v3610 = vunpack.c.l.b16 %v3522
      %v3611 = vunpack.c.l.b16 %v3526
      %v3612 = vunpack.c.l.b16 %v3529
      %v3613 = vunpack.c.l.b16 %v3532
      %v3614 = vunpack.c.l.b16 %v3536
      %v3615 = vunpack.c.l.b16 %v3539
      %v3616 = vunpack.c.l.b16 %v3542
      %v3617 = vunpack.c.l.b16 %v3546
      %v3618 = vunpack.c.l.b16 %v3549
      %v3619 = vunpack.c.l.b16 %v3552
      %v3620 = vunpack.c.l.b16 %v3556
      %v3621 = vunpack.c.l.b16 %v3559
      %v3622 = vunpack.c.l.b16 %v3562
      %v3623 = vunpack.c.l.b16 %v3566
      %v3624 = vunpack.c.l.b16 %v3569
      %v3625 = vunpack.c.l.b16 %v3572
      %v3626 = vunpack.c.l.b16 %v3576
      %v3627 = vunpack.c.l.b16 %v3579
      %v3628 = vunpack.c.l.b16 %v3582
      %v3629 = vunpack.c.l.b16 %v3586
      %v3630 = vunpack.c.l.b16 %v3589
      %v3631 = vunpack.c.l.b16 %v3592
      %v3632 = vunpack.c.l.b16 %v3596
      %v3633 = vunpack.c.l.b16 %v3599
      %v3634 = vunpack.c.l.b16 %v3602
      %v3635 = vpack.c.b16 %v3606, %v3605
      %v3636 = vpack.c.b16 %v3608, %v3607
      %v3637 = vpack.c.b16 %v3610, %v3609
      %v3638 = vpack.c.b16 %v3612, %v3611
      %v3639 = vpack.c.b16 %v3614, %v3613
      %v3640 = vpack.c.b16 %v3616, %v3615
      %v3641 = vpack.c.b16 %v3618, %v3617
      %v3642 = vpack.c.b16 %v3620, %v3619
      %v3643 = vpack.c.b16 %v3622, %v3621
      %v3644 = vpack.c.b16 %v3624, %v3623
      %v3645 = vpack.c.b16 %v3626, %v3625
      %v3646 = vpack.c.b16 %v3628, %v3627
      %v3647 = vpack.c.b16 %v3630, %v3629
      %v3648 = vpack.c.b16 %v3632, %v3631
      %v3649 = vpack.c.b16 %v3634, %v3633
      %v3651 = vsel %vm693, %v3635, 0
      %v3654 = vsel %vm693, %v3636, 0
      %v3657 = vsel %vm693, %v3637, 0
      %v3660 = vsel %vm693, %v3638, 0
      %v3663 = vsel %vm693, %v3639, 0
      %v3666 = vsel %vm693, %v3640, 0
      %v3669 = vsel %vm693, %v3641, 0
      %v3672 = vsel %vm693, %v3642, 0
      %v3675 = vsel %vm693, %v3643, 0
      %v3678 = vsel %vm693, %v3644, 0
      %v3681 = vsel %vm693, %v3645, 0
      %v3684 = vsel %vm693, %v3646, 0
      %v3687 = vsel %vm693, %v3647, 0
      %v3690 = vsel %vm693, %v3648, 0
      %v3693 = vsel %vm693, %v3649, 0
      %v3696 = vsel %vm739, %v3604, 0
      %3698 = vmatpush.bf16.msra.mxu0 0
      %3699 = vmatpush.bf16.msra.mxu0 0
      %3700 = vmatpush.bf16.msra.mxu0 0
      %3701 = vmatpush.bf16.msra.mxu0 0
      %3702 = vmatpush.bf16.msra.mxu0 0
      %3703 = vmatpush.bf16.msra.mxu0 0
      %3704 = vmatpush.bf16.msra.mxu0 0
      %3705 = vmatpush.bf16.msra.mxu0 %v3696
      %3706 = vmatmul.bf16.gmra.mxu0 %v3651
      %v3707 = vpop.f32.mrf.mxu0
      %v3708 = vadd.f32 0.0, %v3707
      %v3709 = vpop.f32.mrf.mxu0
      %v3710 = vadd.f32 0.0, %v3709
      %3711 = vmatmul.bf16.gmra.mxu0 %v3654
      %v3712 = vpop.f32.mrf.mxu0
      %v3713 = vadd.f32 0.0, %v3712
      %v3714 = vpop.f32.mrf.mxu0
      %v3715 = vadd.f32 0.0, %v3714
      %3716 = vmatmul.bf16.gmra.mxu0 %v3657
      %v3717 = vpop.f32.mrf.mxu0
      %v3718 = vadd.f32 0.0, %v3717
      %v3719 = vpop.f32.mrf.mxu0
      %v3720 = vadd.f32 0.0, %v3719
      %3721 = vmatmul.bf16.gmra.mxu0 %v3660
      %v3722 = vpop.f32.mrf.mxu0
      %v3723 = vadd.f32 0.0, %v3722
      %v3724 = vpop.f32.mrf.mxu0
      %v3725 = vadd.f32 0.0, %v3724
      %3726 = vmatmul.bf16.gmra.mxu0 %v3663
      %v3727 = vpop.f32.mrf.mxu0
      %v3728 = vadd.f32 0.0, %v3727
      %v3729 = vpop.f32.mrf.mxu0
      %v3730 = vadd.f32 0.0, %v3729
      %3731 = vmatmul.bf16.gmra.mxu0 %v3666
      %v3732 = vpop.f32.mrf.mxu0
      %v3733 = vadd.f32 0.0, %v3732
      %v3734 = vpop.f32.mrf.mxu0
      %v3735 = vadd.f32 0.0, %v3734
      %3736 = vmatmul.bf16.gmra.mxu0 %v3669
      %v3737 = vpop.f32.mrf.mxu0
      %v3738 = vadd.f32 0.0, %v3737
      %v3739 = vpop.f32.mrf.mxu0
      %v3740 = vadd.f32 0.0, %v3739
      %3741 = vmatmul.bf16.gmra.mxu0 %v3672
      %v3742 = vpop.f32.mrf.mxu0
      %v3743 = vadd.f32 0.0, %v3742
      %v3744 = vpop.f32.mrf.mxu0
      %v3745 = vadd.f32 0.0, %v3744
      %3746 = vmatmul.bf16.gmra.mxu0 %v3675
      %v3747 = vpop.f32.mrf.mxu0
      %v3748 = vadd.f32 0.0, %v3747
      %v3749 = vpop.f32.mrf.mxu0
      %v3750 = vadd.f32 0.0, %v3749
      %3751 = vmatmul.bf16.gmra.mxu0 %v3678
      %v3752 = vpop.f32.mrf.mxu0
      %v3753 = vadd.f32 0.0, %v3752
      %v3754 = vpop.f32.mrf.mxu0
      %v3755 = vadd.f32 0.0, %v3754
      %3756 = vmatmul.bf16.gmra.mxu0 %v3681
      %v3757 = vpop.f32.mrf.mxu0
      %v3758 = vadd.f32 0.0, %v3757
      %v3759 = vpop.f32.mrf.mxu0
      %v3760 = vadd.f32 0.0, %v3759
      %3761 = vmatmul.bf16.gmra.mxu0 %v3684
      %v3762 = vpop.f32.mrf.mxu0
      %v3763 = vadd.f32 0.0, %v3762
      %v3764 = vpop.f32.mrf.mxu0
      %v3765 = vadd.f32 0.0, %v3764
      %3766 = vmatmul.bf16.gmra.mxu0 %v3687
      %v3767 = vpop.f32.mrf.mxu0
      %v3768 = vadd.f32 0.0, %v3767
      %v3769 = vpop.f32.mrf.mxu0
      %v3770 = vadd.f32 0.0, %v3769
      %3771 = vmatmul.bf16.gmra.mxu0 %v3690
      %v3772 = vpop.f32.mrf.mxu0
      %v3773 = vadd.f32 0.0, %v3772
      %v3774 = vpop.f32.mrf.mxu0
      %v3775 = vadd.f32 0.0, %v3774
      %3776 = vmatmul.bf16.gmra.mxu0 %v3693
      %v3777 = vpop.f32.mrf.mxu0
      %v3778 = vadd.f32 0.0, %v3777
      %v3779 = vpop.f32.mrf.mxu0
      %v3780 = vadd.f32 0.0, %v3779
      %3781 = vdwg.mxu0
      %v3782 = vadd.f32 %v3423, %v3708
      %v3783 = vadd.f32 %v3424, %v3710
      %v3784 = vadd.f32 %v3425, %v3713
      %v3785 = vadd.f32 %v3426, %v3715
      %v3786 = vadd.f32 %v3427, %v3718
      %v3787 = vadd.f32 %v3428, %v3720
      %v3788 = vadd.f32 %v3429, %v3723
      %v3789 = vadd.f32 %v3430, %v3725
      %v3790 = vadd.f32 %v3431, %v3728
      %v3791 = vadd.f32 %v3432, %v3730
      %v3792 = vadd.f32 %v3433, %v3733
      %v3793 = vadd.f32 %v3434, %v3735
      %v3794 = vadd.f32 %v3435, %v3738
      %v3795 = vadd.f32 %v3436, %v3740
      %v3796 = vadd.f32 %v3437, %v3743
      %v3797 = vadd.f32 %v3438, %v3745
      %v3798 = vadd.f32 %v3439, %v3748
      %v3799 = vadd.f32 %v3440, %v3750
      %v3800 = vadd.f32 %v3441, %v3753
      %v3801 = vadd.f32 %v3442, %v3755
      %v3802 = vadd.f32 %v3443, %v3758
      %v3803 = vadd.f32 %v3444, %v3760
      %v3804 = vadd.f32 %v3445, %v3763
      %v3805 = vadd.f32 %v3446, %v3765
      %v3806 = vadd.f32 %v3447, %v3768
      %v3807 = vadd.f32 %v3448, %v3770
      %v3808 = vadd.f32 %v3449, %v3773
      %v3809 = vadd.f32 %v3450, %v3775
      %v3810 = vadd.f32 %v3451, %v3778
      %v3811 = vadd.f32 %v3452, %v3780
      %s3812 = smul.u32 %s21, 8
      %s3813 = ssub.s32 %s3812, 1
      %v3814 = vstv %s3813
      %v3815 = vadd.s32 %v3814, 1
      %v3816 = vadd.s32 %v3814, 2
      %v3817 = vadd.s32 %v3814, 3
      %v3818 = vadd.s32 %v3814, 4
      %v3819 = vadd.s32 %v3814, 5
      %v3820 = vadd.s32 %v3814, 6
      %v3821 = vadd.s32 %v3814, 7
      %v3822 = vadd.s32 %v3814, 8
      %v3823 = vadd.s32 %v3814, 9
      %v3824 = vlaneseq
      %v3825 = vshrl.u32 %v3824, 7
      %v3826 = vadd.s32 %v3825, 8
      %v3827 = vadd.s32 %v3825, 16
      %vm3828 = vcmp.ge.s32.totalorder %v3814, 0
      %vm3829 = vcmp.ge.s32.totalorder %v3815, 0
      %vm3830 = vcmp.ge.s32.totalorder %v3816, 0
      %vm3831 = vcmp.ge.s32.totalorder %v3817, 0
      %vm3832 = vcmp.ge.s32.totalorder %v3818, 0
      %vm3833 = vcmp.ge.s32.totalorder %v3819, 0
      %vm3834 = vcmp.ge.s32.totalorder %v3820, 0
      %vm3835 = vcmp.ge.s32.totalorder %v3821, 0
      %vm3836 = vcmp.ge.s32.totalorder %v3822, 0
      %vm3837 = vcmp.ge.s32.totalorder %v3823, 0
      %vm3838 = vcmp.lt.s32.totalorder %v3814, 16
      %vm3839 = vcmp.lt.s32.totalorder %v3815, 16
      %vm3840 = vcmp.lt.s32.totalorder %v3816, 16
      %vm3841 = vcmp.lt.s32.totalorder %v3817, 16
      %vm3842 = vcmp.lt.s32.totalorder %v3818, 16
      %vm3843 = vcmp.lt.s32.totalorder %v3819, 16
      %vm3844 = vcmp.lt.s32.totalorder %v3820, 16
      %vm3845 = vcmp.lt.s32.totalorder %v3821, 16
      %vm3846 = vcmp.lt.s32.totalorder %v3822, 16
      %vm3847 = vcmp.lt.s32.totalorder %v3823, 16
      %vm3848 = vmand %vm3828, %vm3838
      %vm3849 = vmand %vm3829, %vm3839
      %vm3850 = vmand %vm3830, %vm3840
      %vm3851 = vmand %vm3831, %vm3841
      %vm3852 = vmand %vm3832, %vm3842
      %vm3853 = vmand %vm3833, %vm3843
      %vm3854 = vmand %vm3834, %vm3844
      %vm3855 = vmand %vm3835, %vm3845
      %vm3856 = vmand %vm3836, %vm3846
      %vm3857 = vmand %vm3837, %vm3847
      %vm3858 = vcmp.ge.s32.totalorder %v3825, 1
      %vm3859 = vcmp.ge.s32.totalorder %v3826, 1
      %vm3860 = vcmp.ge.s32.totalorder %v3827, 1
      %vm3861 = vmand %vm3848, %vm3858
      %vm3862 = vmand %vm3848, %vm3859
      %vm3863 = vmand %vm3848, %vm3860
      %vm3864 = vmand %vm3849, %vm3858
      %vm3865 = vmand %vm3849, %vm3859
      %vm3866 = vmand %vm3849, %vm3860
      %vm3867 = vmand %vm3850, %vm3858
      %vm3868 = vmand %vm3850, %vm3859
      %vm3869 = vmand %vm3850, %vm3860
      %vm3870 = vmand %vm3851, %vm3858
      %vm3871 = vmand %vm3851, %vm3859
      %vm3872 = vmand %vm3851, %vm3860
      %vm3873 = vmand %vm3852, %vm3858
      %vm3874 = vmand %vm3852, %vm3859
      %vm3875 = vmand %vm3852, %vm3860
      %vm3876 = vmand %vm3853, %vm3858
      %vm3877 = vmand %vm3853, %vm3859
      %vm3878 = vmand %vm3853, %vm3860
      %vm3879 = vmand %vm3854, %vm3858
      %vm3880 = vmand %vm3854, %vm3859
      %vm3881 = vmand %vm3854, %vm3860
      %vm3882 = vmand %vm3855, %vm3858
      %vm3883 = vmand %vm3855, %vm3859
      %vm3884 = vmand %vm3855, %vm3860
      %vm3885 = vmand %vm3856, %vm3858
      %vm3886 = vmand %vm3856, %vm3859
      %vm3887 = vmand %vm3856, %vm3860
      %vm3888 = vmand %vm3857, %vm3858
      %vm3889 = vmand %vm3857, %vm3859
      %vm3890 = vmand %vm3857, %vm3860
      %vm3891 = vcmp.lt.s32.totalorder %v3825, 17
      %vm3892 = vcmp.lt.s32.totalorder %v3826, 17
      %vm3893 = vcmp.lt.s32.totalorder %v3827, 17
      %vm3894 = vmand %vm3861, %vm3891
      %vm3895 = vmand %vm3862, %vm3892
      %vm3896 = vmand %vm3863, %vm3893
      %vm3897 = vmand %vm3864, %vm3891
      %vm3898 = vmand %vm3865, %vm3892
      %vm3899 = vmand %vm3866, %vm3893
      %vm3900 = vmand %vm3867, %vm3891
      %vm3901 = vmand %vm3868, %vm3892
      %vm3902 = vmand %vm3869, %vm3893
      %vm3903 = vmand %vm3870, %vm3891
      %vm3904 = vmand %vm3871, %vm3892
      %vm3905 = vmand %vm3872, %vm3893
      %vm3906 = vmand %vm3873, %vm3891
      %vm3907 = vmand %vm3874, %vm3892
      %vm3908 = vmand %vm3875, %vm3893
      %vm3909 = vmand %vm3876, %vm3891
      %vm3910 = vmand %vm3877, %vm3892
      %vm3911 = vmand %vm3878, %vm3893
      %vm3912 = vmand %vm3879, %vm3891
      %vm3913 = vmand %vm3880, %vm3892
      %vm3914 = vmand %vm3881, %vm3893
      %vm3915 = vmand %vm3882, %vm3891
      %vm3916 = vmand %vm3883, %vm3892
      %vm3917 = vmand %vm3884, %vm3893
      %vm3918 = vmand %vm3885, %vm3891
      %vm3919 = vmand %vm3886, %vm3892
      %vm3920 = vmand %vm3887, %vm3893
      %vm3921 = vmand %vm3888, %vm3891
      %vm3922 = vmand %vm3889, %vm3892
      %vm3923 = vmand %vm3890, %vm3893
      %v3924 = vld [vmem:[%s3] sm:$0x1]
      %v3926 = vperm.slane %v3924, 0
      %v3928 = vadd.f32 %v3782, %v3926
      %v3929 = vadd.f32 %v3783, %v3926
      %v3930 = vadd.f32 %v3784, %v3926
      %v3931 = vadd.f32 %v3785, %v3926
      %v3932 = vadd.f32 %v3786, %v3926
      %v3933 = vadd.f32 %v3787, %v3926
      %v3934 = vadd.f32 %v3788, %v3926
      %v3935 = vadd.f32 %v3789, %v3926
      %v3936 = vadd.f32 %v3790, %v3926
      %v3937 = vadd.f32 %v3791, %v3926
      %v3938 = vadd.f32 %v3792, %v3926
      %v3939 = vadd.f32 %v3793, %v3926
      %v3940 = vadd.f32 %v3794, %v3926
      %v3941 = vadd.f32 %v3795, %v3926
      %v3942 = vadd.f32 %v3796, %v3926
      %v3943 = vadd.f32 %v3797, %v3926
      %v3944 = vadd.f32 %v3798, %v3926
      %v3945 = vadd.f32 %v3799, %v3926
      %v3946 = vadd.f32 %v3800, %v3926
      %v3947 = vadd.f32 %v3801, %v3926
      %v3948 = vadd.f32 %v3802, %v3926
      %v3949 = vadd.f32 %v3803, %v3926
      %v3950 = vadd.f32 %v3804, %v3926
      %v3951 = vadd.f32 %v3805, %v3926
      %v3952 = vadd.f32 %v3806, %v3926
      %v3953 = vadd.f32 %v3807, %v3926
      %v3954 = vadd.f32 %v3808, %v3926
      %v3955 = vadd.f32 %v3809, %v3926
      %v3956 = vadd.f32 %v3810, %v3926
      %v3957 = vadd.f32 %v3811, %v3926
      %v3958 = vmax.f32 %v3928, 0.0
      %v3959 = vmax.f32 %v3929, 0.0
      %v3960 = vmax.f32 %v3930, 0.0
      %v3961 = vmax.f32 %v3931, 0.0
      %v3962 = vmax.f32 %v3932, 0.0
      %v3963 = vmax.f32 %v3933, 0.0
      %v3964 = vmax.f32 %v3934, 0.0
      %v3965 = vmax.f32 %v3935, 0.0
      %v3966 = vmax.f32 %v3936, 0.0
      %v3967 = vmax.f32 %v3937, 0.0
      %v3968 = vmax.f32 %v3938, 0.0
      %v3969 = vmax.f32 %v3939, 0.0
      %v3970 = vmax.f32 %v3940, 0.0
      %v3971 = vmax.f32 %v3941, 0.0
      %v3972 = vmax.f32 %v3942, 0.0
      %v3973 = vmax.f32 %v3943, 0.0
      %v3974 = vmax.f32 %v3944, 0.0
      %v3975 = vmax.f32 %v3945, 0.0
      %v3976 = vmax.f32 %v3946, 0.0
      %v3977 = vmax.f32 %v3947, 0.0
      %v3978 = vmax.f32 %v3948, 0.0
      %v3979 = vmax.f32 %v3949, 0.0
      %v3980 = vmax.f32 %v3950, 0.0
      %v3981 = vmax.f32 %v3951, 0.0
      %v3982 = vmax.f32 %v3952, 0.0
      %v3983 = vmax.f32 %v3953, 0.0
      %v3984 = vmax.f32 %v3954, 0.0
      %v3985 = vmax.f32 %v3955, 0.0
      %v3986 = vmax.f32 %v3956, 0.0
      %v3987 = vmax.f32 %v3957, 0.0
      %v3988 = vsel %vm3894, 1, 0
      %v3989 = vsel %vm3895, 1, 0
      %v3990 = vsel %vm3896, 1, 0
      %v3991 = vsel %vm3897, 1, 0
      %v3992 = vsel %vm3898, 1, 0
      %v3993 = vsel %vm3899, 1, 0
      %v3994 = vsel %vm3900, 1, 0
      %v3995 = vsel %vm3901, 1, 0
      %v3996 = vsel %vm3902, 1, 0
      %v3997 = vsel %vm3903, 1, 0
      %v3998 = vsel %vm3904, 1, 0
      %v3999 = vsel %vm3905, 1, 0
      %v4000 = vsel %vm3906, 1, 0
      %v4001 = vsel %vm3907, 1, 0
      %v4002 = vsel %vm3908, 1, 0
      %v4003 = vsel %vm3909, 1, 0
      %v4004 = vsel %vm3910, 1, 0
      %v4005 = vsel %vm3911, 1, 0
      %v4006 = vsel %vm3912, 1, 0
      %v4007 = vsel %vm3913, 1, 0
      %v4008 = vsel %vm3914, 1, 0
      %v4009 = vsel %vm3915, 1, 0
      %v4010 = vsel %vm3916, 1, 0
      %v4011 = vsel %vm3917, 1, 0
      %v4012 = vsel %vm3918, 1, 0
      %v4013 = vsel %vm3919, 1, 0
      %v4014 = vsel %vm3920, 1, 0
      %v4015 = vsel %vm3921, 1, 0
      %v4016 = vsel %vm3922, 1, 0
      %v4017 = vsel %vm3923, 1, 0
      %vm4018 = vcmp.eq.s32.totalorder %v3988, 1
      %vm4019 = vcmp.eq.s32.totalorder %v3989, 1
      %vm4020 = vcmp.eq.s32.totalorder %v3990, 1
      %vm4021 = vcmp.eq.s32.totalorder %v3991, 1
      %vm4022 = vcmp.eq.s32.totalorder %v3992, 1
      %vm4023 = vcmp.eq.s32.totalorder %v3993, 1
      %vm4024 = vcmp.eq.s32.totalorder %v3994, 1
      %vm4025 = vcmp.eq.s32.totalorder %v3995, 1
      %vm4026 = vcmp.eq.s32.totalorder %v3996, 1
      %vm4027 = vcmp.eq.s32.totalorder %v3997, 1
      %vm4028 = vcmp.eq.s32.totalorder %v3998, 1
      %vm4029 = vcmp.eq.s32.totalorder %v3999, 1
      %vm4030 = vcmp.eq.s32.totalorder %v4000, 1
      %vm4031 = vcmp.eq.s32.totalorder %v4001, 1
      %vm4032 = vcmp.eq.s32.totalorder %v4002, 1
      %vm4033 = vcmp.eq.s32.totalorder %v4003, 1
      %vm4034 = vcmp.eq.s32.totalorder %v4004, 1
      %vm4035 = vcmp.eq.s32.totalorder %v4005, 1
      %vm4036 = vcmp.eq.s32.totalorder %v4006, 1
      %vm4037 = vcmp.eq.s32.totalorder %v4007, 1
      %vm4038 = vcmp.eq.s32.totalorder %v4008, 1
      %vm4039 = vcmp.eq.s32.totalorder %v4009, 1
      %vm4040 = vcmp.eq.s32.totalorder %v4010, 1
      %vm4041 = vcmp.eq.s32.totalorder %v4011, 1
      %vm4042 = vcmp.eq.s32.totalorder %v4012, 1
      %vm4043 = vcmp.eq.s32.totalorder %v4013, 1
      %vm4044 = vcmp.eq.s32.totalorder %v4014, 1
      %vm4045 = vcmp.eq.s32.totalorder %v4015, 1
      %vm4046 = vcmp.eq.s32.totalorder %v4016, 1
      %vm4047 = vcmp.eq.s32.totalorder %v4017, 1
      %v4048 = vsel %vm4018, %v3958, 0.0
      %v4049 = vsel %vm4019, %v3959, 0.0
      %v4050 = vsel %vm4020, %v3960, 0.0
      %v4051 = vsel %vm4021, %v3961, 0.0
      %v4052 = vsel %vm4022, %v3962, 0.0
      %v4053 = vsel %vm4023, %v3963, 0.0
      %v4054 = vsel %vm4024, %v3964, 0.0
      %v4055 = vsel %vm4025, %v3965, 0.0
      %v4056 = vsel %vm4026, %v3966, 0.0
      %v4057 = vsel %vm4027, %v3967, 0.0
      %v4058 = vsel %vm4028, %v3968, 0.0
      %v4059 = vsel %vm4029, %v3969, 0.0
      %v4060 = vsel %vm4030, %v3970, 0.0
      %v4061 = vsel %vm4031, %v3971, 0.0
      %v4062 = vsel %vm4032, %v3972, 0.0
      %v4063 = vsel %vm4033, %v3973, 0.0
      %v4064 = vsel %vm4034, %v3974, 0.0
      %v4065 = vsel %vm4035, %v3975, 0.0
      %v4066 = vsel %vm4036, %v3976, 0.0
      %v4067 = vsel %vm4037, %v3977, 0.0
      %v4068 = vsel %vm4038, %v3978, 0.0
      %v4069 = vsel %vm4039, %v3979, 0.0
      %v4070 = vsel %vm4040, %v3980, 0.0
      %v4071 = vsel %vm4041, %v3981, 0.0
      %v4072 = vsel %vm4042, %v3982, 0.0
      %v4073 = vsel %vm4043, %v3983, 0.0
      %v4074 = vsel %vm4044, %v3984, 0.0
      %v4075 = vsel %vm4045, %v3985, 0.0
      %v4076 = vsel %vm4046, %v3986, 0.0
      %v4077 = vsel %vm4047, %v3987, 0.0
      %v4078 = vpack.c.bf16 %v4048, %v4048
      %v4079 = vpack.c.bf16 %v4049, %v4049
      %v4080 = vpack.c.bf16 %v4050, %v4050
      %v4081 = vpack.c.bf16 %v4051, %v4051
      %v4082 = vpack.c.bf16 %v4052, %v4052
      %v4083 = vpack.c.bf16 %v4053, %v4053
      %v4084 = vpack.c.bf16 %v4054, %v4054
      %v4085 = vpack.c.bf16 %v4055, %v4055
      %v4086 = vpack.c.bf16 %v4056, %v4056
      %v4087 = vpack.c.bf16 %v4057, %v4057
      %v4088 = vpack.c.bf16 %v4058, %v4058
      %v4089 = vpack.c.bf16 %v4059, %v4059
      %v4090 = vpack.c.bf16 %v4060, %v4060
      %v4091 = vpack.c.bf16 %v4061, %v4061
      %v4092 = vpack.c.bf16 %v4062, %v4062
      %v4093 = vpack.c.bf16 %v4063, %v4063
      %v4094 = vpack.c.bf16 %v4064, %v4064
      %v4095 = vpack.c.bf16 %v4065, %v4065
      %v4096 = vpack.c.bf16 %v4066, %v4066
      %v4097 = vpack.c.bf16 %v4067, %v4067
      %v4098 = vpack.c.bf16 %v4068, %v4068
      %v4099 = vpack.c.bf16 %v4069, %v4069
      %v4100 = vpack.c.bf16 %v4070, %v4070
      %v4101 = vpack.c.bf16 %v4071, %v4071
      %v4102 = vpack.c.bf16 %v4072, %v4072
      %v4103 = vpack.c.bf16 %v4073, %v4073
      %v4104 = vpack.c.bf16 %v4074, %v4074
      %v4105 = vpack.c.bf16 %v4075, %v4075
      %v4106 = vpack.c.bf16 %v4076, %v4076
      %v4107 = vpack.c.bf16 %v4077, %v4077
      %v4108 = vld [vmem:[%s2] sm:$0x3]
      %v4110 = vshrl.u32 %v4078, 16
      %v4112 = vrot.slane %v4110, 4
      %v4113 = vshll.u32 %v4078, 16
      %v4115 = vrot.slane %v4113, 5
      %v4116 = vor.u32 %v4112, %v4115
      %v4117 = vrot.slane %v4116, 4
      %v4119 = vshll.u32 %v4079, 16
      %v4121 = vrot.slane %v4119, 5
      %v4122 = vsel %vm305, %v4117, %v4121
      %v4123 = vshrl.u32 %v4079, 16
      %v4125 = vrot.slane %v4123, 4
      %v4126 = vor.u32 %v4125, %v4121
      %v4127 = vrot.slane %v4126, 4
      %v4129 = vshll.u32 %v4080, 16
      %v4131 = vrot.slane %v4129, 5
      %v4132 = vsel %vm305, %v4127, %v4131
      %v4134 = vshrl.u32 %v4081, 16
      %v4136 = vrot.slane %v4134, 4
      %v4137 = vshll.u32 %v4081, 16
      %v4139 = vrot.slane %v4137, 5
      %v4140 = vor.u32 %v4136, %v4139
      %v4141 = vrot.slane %v4140, 4
      %v4143 = vshll.u32 %v4082, 16
      %v4145 = vrot.slane %v4143, 5
      %v4146 = vsel %vm305, %v4141, %v4145
      %v4147 = vshrl.u32 %v4082, 16
      %v4149 = vrot.slane %v4147, 4
      %v4150 = vor.u32 %v4149, %v4145
      %v4151 = vrot.slane %v4150, 4
      %v4153 = vshll.u32 %v4083, 16
      %v4155 = vrot.slane %v4153, 5
      %v4156 = vsel %vm305, %v4151, %v4155
      %v4158 = vshrl.u32 %v4084, 16
      %v4160 = vrot.slane %v4158, 4
      %v4161 = vshll.u32 %v4084, 16
      %v4163 = vrot.slane %v4161, 5
      %v4164 = vor.u32 %v4160, %v4163
      %v4165 = vrot.slane %v4164, 4
      %v4167 = vshll.u32 %v4085, 16
      %v4169 = vrot.slane %v4167, 5
      %v4170 = vsel %vm305, %v4165, %v4169
      %v4171 = vshrl.u32 %v4085, 16
      %v4173 = vrot.slane %v4171, 4
      %v4174 = vor.u32 %v4173, %v4169
      %v4175 = vrot.slane %v4174, 4
      %v4177 = vshll.u32 %v4086, 16
      %v4179 = vrot.slane %v4177, 5
      %v4180 = vsel %vm305, %v4175, %v4179
      %v4182 = vshrl.u32 %v4087, 16
      %v4184 = vrot.slane %v4182, 4
      %v4185 = vshll.u32 %v4087, 16
      %v4187 = vrot.slane %v4185, 5
      %v4188 = vor.u32 %v4184, %v4187
      %v4189 = vrot.slane %v4188, 4
      %v4191 = vshll.u32 %v4088, 16
      %v4193 = vrot.slane %v4191, 5
      %v4194 = vsel %vm305, %v4189, %v4193
      %v4195 = vshrl.u32 %v4088, 16
      %v4197 = vrot.slane %v4195, 4
      %v4198 = vor.u32 %v4197, %v4193
      %v4199 = vrot.slane %v4198, 4
      %v4201 = vshll.u32 %v4089, 16
      %v4203 = vrot.slane %v4201, 5
      %v4204 = vsel %vm305, %v4199, %v4203
      %v4206 = vshrl.u32 %v4090, 16
      %v4208 = vrot.slane %v4206, 4
      %v4209 = vshll.u32 %v4090, 16
      %v4211 = vrot.slane %v4209, 5
      %v4212 = vor.u32 %v4208, %v4211
      %v4213 = vrot.slane %v4212, 4
      %v4215 = vshll.u32 %v4091, 16
      %v4217 = vrot.slane %v4215, 5
      %v4218 = vsel %vm305, %v4213, %v4217
      %v4219 = vshrl.u32 %v4091, 16
      %v4221 = vrot.slane %v4219, 4
      %v4222 = vor.u32 %v4221, %v4217
      %v4223 = vrot.slane %v4222, 4
      %v4225 = vshll.u32 %v4092, 16
      %v4227 = vrot.slane %v4225, 5
      %v4228 = vsel %vm305, %v4223, %v4227
      %v4230 = vshrl.u32 %v4093, 16
      %v4232 = vrot.slane %v4230, 4
      %v4233 = vshll.u32 %v4093, 16
      %v4235 = vrot.slane %v4233, 5
      %v4236 = vor.u32 %v4232, %v4235
      %v4237 = vrot.slane %v4236, 4
      %v4239 = vshll.u32 %v4094, 16
      %v4241 = vrot.slane %v4239, 5
      %v4242 = vsel %vm305, %v4237, %v4241
      %v4243 = vshrl.u32 %v4094, 16
      %v4245 = vrot.slane %v4243, 4
      %v4246 = vor.u32 %v4245, %v4241
      %v4247 = vrot.slane %v4246, 4
      %v4249 = vshll.u32 %v4095, 16
      %v4251 = vrot.slane %v4249, 5
      %v4252 = vsel %vm305, %v4247, %v4251
      %v4254 = vshrl.u32 %v4096, 16
      %v4256 = vrot.slane %v4254, 4
      %v4257 = vshll.u32 %v4096, 16
      %v4259 = vrot.slane %v4257, 5
      %v4260 = vor.u32 %v4256, %v4259
      %v4261 = vrot.slane %v4260, 4
      %v4263 = vshll.u32 %v4097, 16
      %v4265 = vrot.slane %v4263, 5
      %v4266 = vsel %vm305, %v4261, %v4265
      %v4267 = vshrl.u32 %v4097, 16
      %v4269 = vrot.slane %v4267, 4
      %v4270 = vor.u32 %v4269, %v4265
      %v4271 = vrot.slane %v4270, 4
      %v4273 = vshll.u32 %v4098, 16
      %v4275 = vrot.slane %v4273, 5
      %v4276 = vsel %vm305, %v4271, %v4275
      %v4278 = vshrl.u32 %v4099, 16
      %v4280 = vrot.slane %v4278, 4
      %v4281 = vshll.u32 %v4099, 16
      %v4283 = vrot.slane %v4281, 5
      %v4284 = vor.u32 %v4280, %v4283
      %v4285 = vrot.slane %v4284, 4
      %v4287 = vshll.u32 %v4100, 16
      %v4289 = vrot.slane %v4287, 5
      %v4290 = vsel %vm305, %v4285, %v4289
      %v4291 = vshrl.u32 %v4100, 16
      %v4293 = vrot.slane %v4291, 4
      %v4294 = vor.u32 %v4293, %v4289
      %v4295 = vrot.slane %v4294, 4
      %v4297 = vshll.u32 %v4101, 16
      %v4299 = vrot.slane %v4297, 5
      %v4300 = vsel %vm305, %v4295, %v4299
      %s4301 = scalar_lea.vmem %s2, 2
      %v4302 = vld [vmem:[%s4301] sm:$0x3]
      %v4303 = vunpack.c.l.b16 %v4122
      %v4304 = vunpack.c.l.b16 %v4132
      %v4305 = vunpack.c.l.b16 %v4146
      %v4306 = vunpack.c.l.b16 %v4156
      %v4307 = vunpack.c.l.b16 %v4170
      %v4308 = vunpack.c.l.b16 %v4180
      %v4309 = vunpack.c.l.b16 %v4194
      %v4310 = vunpack.c.l.b16 %v4204
      %v4311 = vunpack.c.l.b16 %v4218
      %v4312 = vunpack.c.l.b16 %v4228
      %v4313 = vunpack.c.l.b16 %v4242
      %v4314 = vunpack.c.l.b16 %v4252
      %v4315 = vunpack.c.l.b16 %v4266
      %v4316 = vunpack.c.l.b16 %v4276
      %v4317 = vunpack.c.l.b16 %v4290
      %v4318 = vunpack.c.l.b16 %v4300
      %v4319 = vpack.c.b16 %v4304, %v4303
      %v4320 = vpack.c.b16 %v4306, %v4305
      %v4321 = vpack.c.b16 %v4308, %v4307
      %v4322 = vpack.c.b16 %v4310, %v4309
      %v4323 = vpack.c.b16 %v4312, %v4311
      %v4324 = vpack.c.b16 %v4314, %v4313
      %v4325 = vpack.c.b16 %v4316, %v4315
      %v4326 = vpack.c.b16 %v4318, %v4317
      %v4328 = vsel %vm693, %v4319, 0
      %v4331 = vsel %vm693, %v4320, 0
      %v4334 = vsel %vm693, %v4321, 0
      %v4337 = vsel %vm693, %v4322, 0
      %v4340 = vsel %vm693, %v4323, 0
      %v4343 = vsel %vm693, %v4324, 0
      %v4346 = vsel %vm693, %v4325, 0
      %v4349 = vsel %vm693, %v4326, 0
      %v4352 = vsel %vm739, %v4302, 0
      %4354 = vmatpush.bf16.msra.mxu0 0
      %4355 = vmatpush.bf16.msra.mxu0 0
      %4356 = vmatpush.bf16.msra.mxu0 0
      %4357 = vmatpush.bf16.msra.mxu0 0
      %4358 = vmatpush.bf16.msra.mxu0 0
      %4359 = vmatpush.bf16.msra.mxu0 0
      %4360 = vmatpush.bf16.msra.mxu0 0
      %4361 = vmatpush.bf16.msra.mxu0 %v4352
      %4362 = vmatmul.bf16.gmra.mxu0 %v4328
      %v4363 = vpop.f32.mrf.mxu0
      %v4364 = vadd.f32 0.0, %v4363
      %v4365 = vpop.f32.mrf.mxu0
      %v4366 = vadd.f32 0.0, %v4365
      %4367 = vmatmul.bf16.gmra.mxu0 %v4331
      %v4368 = vpop.f32.mrf.mxu0
      %v4369 = vadd.f32 0.0, %v4368
      %v4370 = vpop.f32.mrf.mxu0
      %v4371 = vadd.f32 0.0, %v4370
      %4372 = vmatmul.bf16.gmra.mxu0 %v4334
      %v4373 = vpop.f32.mrf.mxu0
      %v4374 = vadd.f32 0.0, %v4373
      %v4375 = vpop.f32.mrf.mxu0
      %v4376 = vadd.f32 0.0, %v4375
      %4377 = vmatmul.bf16.gmra.mxu0 %v4337
      %v4378 = vpop.f32.mrf.mxu0
      %v4379 = vadd.f32 0.0, %v4378
      %v4380 = vpop.f32.mrf.mxu0
      %v4381 = vadd.f32 0.0, %v4380
      %4382 = vmatmul.bf16.gmra.mxu0 %v4340
      %v4383 = vpop.f32.mrf.mxu0
      %v4384 = vadd.f32 0.0, %v4383
      %v4385 = vpop.f32.mrf.mxu0
      %v4386 = vadd.f32 0.0, %v4385
      %4387 = vmatmul.bf16.gmra.mxu0 %v4343
      %v4388 = vpop.f32.mrf.mxu0
      %v4389 = vadd.f32 0.0, %v4388
      %v4390 = vpop.f32.mrf.mxu0
      %v4391 = vadd.f32 0.0, %v4390
      %4392 = vmatmul.bf16.gmra.mxu0 %v4346
      %v4393 = vpop.f32.mrf.mxu0
      %v4394 = vadd.f32 0.0, %v4393
      %v4395 = vpop.f32.mrf.mxu0
      %v4396 = vadd.f32 0.0, %v4395
      %4397 = vmatmul.bf16.gmra.mxu0 %v4349
      %v4398 = vpop.f32.mrf.mxu0
      %v4399 = vadd.f32 0.0, %v4398
      %v4400 = vpop.f32.mrf.mxu0
      %v4401 = vadd.f32 0.0, %v4400
      %4402 = vdwg.mxu0
      %v4419 = vunpack.c.l.b16 %v4078
      %v4420 = vunpack.c.l.b16 %v4079
      %v4421 = vunpack.c.l.b16 %v4081
      %v4422 = vunpack.c.l.b16 %v4082
      %v4423 = vunpack.c.l.b16 %v4084
      %v4424 = vunpack.c.l.b16 %v4085
      %v4425 = vunpack.c.l.b16 %v4087
      %v4426 = vunpack.c.l.b16 %v4088
      %v4427 = vunpack.c.l.b16 %v4090
      %v4428 = vunpack.c.l.b16 %v4091
      %v4429 = vunpack.c.l.b16 %v4093
      %v4430 = vunpack.c.l.b16 %v4094
      %v4431 = vunpack.c.l.b16 %v4096
      %v4432 = vunpack.c.l.b16 %v4097
      %v4433 = vunpack.c.l.b16 %v4099
      %v4434 = vunpack.c.l.b16 %v4100
      %v4435 = vpack.c.b16 %v4420, %v4419
      %v4436 = vpack.c.b16 %v4422, %v4421
      %v4437 = vpack.c.b16 %v4424, %v4423
      %v4438 = vpack.c.b16 %v4426, %v4425
      %v4439 = vpack.c.b16 %v4428, %v4427
      %v4440 = vpack.c.b16 %v4430, %v4429
      %v4441 = vpack.c.b16 %v4432, %v4431
      %v4442 = vpack.c.b16 %v4434, %v4433
      %v4444 = vsel %vm693, %v4435, 0
      %v4447 = vsel %vm693, %v4436, 0
      %v4450 = vsel %vm693, %v4437, 0
      %v4453 = vsel %vm693, %v4438, 0
      %v4456 = vsel %vm693, %v4439, 0
      %v4459 = vsel %vm693, %v4440, 0
      %v4462 = vsel %vm693, %v4441, 0
      %v4465 = vsel %vm693, %v4442, 0
      %v4468 = vsel %vm739, %v4108, 0
      %4470 = vmatpush.bf16.msra.mxu0 0
      %4471 = vmatpush.bf16.msra.mxu0 0
      %4472 = vmatpush.bf16.msra.mxu0 0
      %4473 = vmatpush.bf16.msra.mxu0 0
      %4474 = vmatpush.bf16.msra.mxu0 0
      %4475 = vmatpush.bf16.msra.mxu0 0
      %4476 = vmatpush.bf16.msra.mxu0 0
      %4477 = vmatpush.bf16.msra.mxu0 %v4468
      %4478 = vmatmul.bf16.gmra.mxu0 %v4444
      %v4479 = vpop.f32.mrf.mxu0
      %v4480 = vadd.f32 %v4364, %v4479
      %v4481 = vpop.f32.mrf.mxu0
      %v4482 = vadd.f32 %v4366, %v4481
      %4483 = vmatmul.bf16.gmra.mxu0 %v4447
      %v4484 = vpop.f32.mrf.mxu0
      %v4485 = vadd.f32 %v4369, %v4484
      %v4486 = vpop.f32.mrf.mxu0
      %v4487 = vadd.f32 %v4371, %v4486
      %4488 = vmatmul.bf16.gmra.mxu0 %v4450
      %v4489 = vpop.f32.mrf.mxu0
      %v4490 = vadd.f32 %v4374, %v4489
      %v4491 = vpop.f32.mrf.mxu0
      %v4492 = vadd.f32 %v4376, %v4491
      %4493 = vmatmul.bf16.gmra.mxu0 %v4453
      %v4494 = vpop.f32.mrf.mxu0
      %v4495 = vadd.f32 %v4379, %v4494
      %v4496 = vpop.f32.mrf.mxu0
      %v4497 = vadd.f32 %v4381, %v4496
      %4498 = vmatmul.bf16.gmra.mxu0 %v4456
      %v4499 = vpop.f32.mrf.mxu0
      %v4500 = vadd.f32 %v4384, %v4499
      %v4501 = vpop.f32.mrf.mxu0
      %v4502 = vadd.f32 %v4386, %v4501
      %4503 = vmatmul.bf16.gmra.mxu0 %v4459
      %v4504 = vpop.f32.mrf.mxu0
      %v4505 = vadd.f32 %v4389, %v4504
      %v4506 = vpop.f32.mrf.mxu0
      %v4507 = vadd.f32 %v4391, %v4506
      %4508 = vmatmul.bf16.gmra.mxu0 %v4462
      %v4509 = vpop.f32.mrf.mxu0
      %v4510 = vadd.f32 %v4394, %v4509
      %v4511 = vpop.f32.mrf.mxu0
      %v4512 = vadd.f32 %v4396, %v4511
      %4513 = vmatmul.bf16.gmra.mxu0 %v4465
      %v4514 = vpop.f32.mrf.mxu0
      %v4515 = vadd.f32 %v4399, %v4514
      %v4516 = vpop.f32.mrf.mxu0
      %v4517 = vadd.f32 %v4401, %v4516
      %4518 = vdwg.mxu0
      %v4527 = vrot.slane %v4078, 5
      %v4528 = vrot.slane %v4527, 4
      %v4529 = vrot.slane %v4079, 5
      %v4530 = vsel %vm1066, %v4528, %v4529
      %v4531 = vrot.slane %v4529, 4
      %v4532 = vrot.slane %v4080, 5
      %v4533 = vsel %vm1066, %v4531, %v4532
      %v4534 = vrot.slane %v4081, 5
      %v4535 = vrot.slane %v4534, 4
      %v4536 = vrot.slane %v4082, 5
      %v4537 = vsel %vm1066, %v4535, %v4536
      %v4538 = vrot.slane %v4536, 4
      %v4539 = vrot.slane %v4083, 5
      %v4540 = vsel %vm1066, %v4538, %v4539
      %v4541 = vrot.slane %v4084, 5
      %v4542 = vrot.slane %v4541, 4
      %v4543 = vrot.slane %v4085, 5
      %v4544 = vsel %vm1066, %v4542, %v4543
      %v4545 = vrot.slane %v4543, 4
      %v4546 = vrot.slane %v4086, 5
      %v4547 = vsel %vm1066, %v4545, %v4546
      %v4548 = vrot.slane %v4087, 5
      %v4549 = vrot.slane %v4548, 4
      %v4550 = vrot.slane %v4088, 5
      %v4551 = vsel %vm1066, %v4549, %v4550
      %v4552 = vrot.slane %v4550, 4
      %v4553 = vrot.slane %v4089, 5
      %v4554 = vsel %vm1066, %v4552, %v4553
      %v4555 = vrot.slane %v4090, 5
      %v4556 = vrot.slane %v4555, 4
      %v4557 = vrot.slane %v4091, 5
      %v4558 = vsel %vm1066, %v4556, %v4557
      %v4559 = vrot.slane %v4557, 4
      %v4560 = vrot.slane %v4092, 5
      %v4561 = vsel %vm1066, %v4559, %v4560
      %v4562 = vrot.slane %v4093, 5
      %v4563 = vrot.slane %v4562, 4
      %v4564 = vrot.slane %v4094, 5
      %v4565 = vsel %vm1066, %v4563, %v4564
      %v4566 = vrot.slane %v4564, 4
      %v4567 = vrot.slane %v4095, 5
      %v4568 = vsel %vm1066, %v4566, %v4567
      %v4569 = vrot.slane %v4096, 5
      %v4570 = vrot.slane %v4569, 4
      %v4571 = vrot.slane %v4097, 5
      %v4572 = vsel %vm1066, %v4570, %v4571
      %v4573 = vrot.slane %v4571, 4
      %v4574 = vrot.slane %v4098, 5
      %v4575 = vsel %vm1066, %v4573, %v4574
      %v4576 = vrot.slane %v4099, 5
      %v4577 = vrot.slane %v4576, 4
      %v4578 = vrot.slane %v4100, 5
      %v4579 = vsel %vm1066, %v4577, %v4578
      %v4580 = vrot.slane %v4578, 4
      %v4581 = vrot.slane %v4101, 5
      %v4582 = vsel %vm1066, %v4580, %v4581
      %s4583 = scalar_lea.vmem %s2, 4
      %v4584 = vld [vmem:[%s4583] sm:$0x3]
      %v4585 = vunpack.c.l.b16 %v4530
      %v4586 = vunpack.c.l.b16 %v4533
      %v4587 = vunpack.c.l.b16 %v4537
      %v4588 = vunpack.c.l.b16 %v4540
      %v4589 = vunpack.c.l.b16 %v4544
      %v4590 = vunpack.c.l.b16 %v4547
      %v4591 = vunpack.c.l.b16 %v4551
      %v4592 = vunpack.c.l.b16 %v4554
      %v4593 = vunpack.c.l.b16 %v4558
      %v4594 = vunpack.c.l.b16 %v4561
      %v4595 = vunpack.c.l.b16 %v4565
      %v4596 = vunpack.c.l.b16 %v4568
      %v4597 = vunpack.c.l.b16 %v4572
      %v4598 = vunpack.c.l.b16 %v4575
      %v4599 = vunpack.c.l.b16 %v4579
      %v4600 = vunpack.c.l.b16 %v4582
      %v4601 = vpack.c.b16 %v4586, %v4585
      %v4602 = vpack.c.b16 %v4588, %v4587
      %v4603 = vpack.c.b16 %v4590, %v4589
      %v4604 = vpack.c.b16 %v4592, %v4591
      %v4605 = vpack.c.b16 %v4594, %v4593
      %v4606 = vpack.c.b16 %v4596, %v4595
      %v4607 = vpack.c.b16 %v4598, %v4597
      %v4608 = vpack.c.b16 %v4600, %v4599
      %v4610 = vsel %vm693, %v4601, 0
      %v4613 = vsel %vm693, %v4602, 0
      %v4616 = vsel %vm693, %v4603, 0
      %v4619 = vsel %vm693, %v4604, 0
      %v4622 = vsel %vm693, %v4605, 0
      %v4625 = vsel %vm693, %v4606, 0
      %v4628 = vsel %vm693, %v4607, 0
      %v4631 = vsel %vm693, %v4608, 0
      %v4634 = vsel %vm739, %v4584, 0
      %4636 = vmatpush.bf16.msra.mxu0 0
      %4637 = vmatpush.bf16.msra.mxu0 0
      %4638 = vmatpush.bf16.msra.mxu0 0
      %4639 = vmatpush.bf16.msra.mxu0 0
      %4640 = vmatpush.bf16.msra.mxu0 0
      %4641 = vmatpush.bf16.msra.mxu0 0
      %4642 = vmatpush.bf16.msra.mxu0 0
      %4643 = vmatpush.bf16.msra.mxu0 %v4634
      %4644 = vmatmul.bf16.gmra.mxu0 %v4610
      %v4645 = vpop.f32.mrf.mxu0
      %v4646 = vadd.f32 0.0, %v4645
      %v4647 = vpop.f32.mrf.mxu0
      %v4648 = vadd.f32 0.0, %v4647
      %4649 = vmatmul.bf16.gmra.mxu0 %v4613
      %v4650 = vpop.f32.mrf.mxu0
      %v4651 = vadd.f32 0.0, %v4650
      %v4652 = vpop.f32.mrf.mxu0
      %v4653 = vadd.f32 0.0, %v4652
      %4654 = vmatmul.bf16.gmra.mxu0 %v4616
      %v4655 = vpop.f32.mrf.mxu0
      %v4656 = vadd.f32 0.0, %v4655
      %v4657 = vpop.f32.mrf.mxu0
      %v4658 = vadd.f32 0.0, %v4657
      %4659 = vmatmul.bf16.gmra.mxu0 %v4619
      %v4660 = vpop.f32.mrf.mxu0
      %v4661 = vadd.f32 0.0, %v4660
      %v4662 = vpop.f32.mrf.mxu0
      %v4663 = vadd.f32 0.0, %v4662
      %4664 = vmatmul.bf16.gmra.mxu0 %v4622
      %v4665 = vpop.f32.mrf.mxu0
      %v4666 = vadd.f32 0.0, %v4665
      %v4667 = vpop.f32.mrf.mxu0
      %v4668 = vadd.f32 0.0, %v4667
      %4669 = vmatmul.bf16.gmra.mxu0 %v4625
      %v4670 = vpop.f32.mrf.mxu0
      %v4671 = vadd.f32 0.0, %v4670
      %v4672 = vpop.f32.mrf.mxu0
      %v4673 = vadd.f32 0.0, %v4672
      %4674 = vmatmul.bf16.gmra.mxu0 %v4628
      %v4675 = vpop.f32.mrf.mxu0
      %v4676 = vadd.f32 0.0, %v4675
      %v4677 = vpop.f32.mrf.mxu0
      %v4678 = vadd.f32 0.0, %v4677
      %4679 = vmatmul.bf16.gmra.mxu0 %v4631
      %v4680 = vpop.f32.mrf.mxu0
      %v4681 = vadd.f32 0.0, %v4680
      %v4682 = vpop.f32.mrf.mxu0
      %v4683 = vadd.f32 0.0, %v4682
      %4684 = vdwg.mxu0
      %v4685 = vadd.f32 %v4480, %v4646
      %v4686 = vadd.f32 %v4482, %v4648
      %v4687 = vadd.f32 %v4485, %v4651
      %v4688 = vadd.f32 %v4487, %v4653
      %v4689 = vadd.f32 %v4490, %v4656
      %v4690 = vadd.f32 %v4492, %v4658
      %v4691 = vadd.f32 %v4495, %v4661
      %v4692 = vadd.f32 %v4497, %v4663
      %v4693 = vadd.f32 %v4500, %v4666
      %v4694 = vadd.f32 %v4502, %v4668
      %v4695 = vadd.f32 %v4505, %v4671
      %v4696 = vadd.f32 %v4507, %v4673
      %v4697 = vadd.f32 %v4510, %v4676
      %v4698 = vadd.f32 %v4512, %v4678
      %v4699 = vadd.f32 %v4515, %v4681
      %v4700 = vadd.f32 %v4517, %v4683
      %s4701 = scalar_lea.vmem %s2, 6
      %v4702 = vld [vmem:[%s4701] sm:$0x3]
      %v4705 = vunpack.c.l.b16 %v4102
      %v4706 = vunpack.c.l.b16 %v4103
      %v4707 = vpack.c.b16 %v4706, %v4705
      %v4709 = vsel %vm693, %v4707, 0
      %v4712 = vsel %vm739, %v4702, 0
      %4714 = vmatpush.bf16.msra.mxu0 0
      %4715 = vmatpush.bf16.msra.mxu0 0
      %4716 = vmatpush.bf16.msra.mxu0 0
      %4717 = vmatpush.bf16.msra.mxu0 0
      %4718 = vmatpush.bf16.msra.mxu0 0
      %4719 = vmatpush.bf16.msra.mxu0 0
      %4720 = vmatpush.bf16.msra.mxu0 0
      %4721 = vmatpush.bf16.msra.mxu0 %v4712
      %4722 = vmatmul.bf16.gmra.mxu0 %v4447
      %v4723 = vpop.f32.mrf.mxu0
      %v4724 = vadd.f32 0.0, %v4723
      %v4725 = vpop.f32.mrf.mxu0
      %v4726 = vadd.f32 0.0, %v4725
      %4727 = vmatmul.bf16.gmra.mxu0 %v4450
      %v4728 = vpop.f32.mrf.mxu0
      %v4729 = vadd.f32 0.0, %v4728
      %v4730 = vpop.f32.mrf.mxu0
      %v4731 = vadd.f32 0.0, %v4730
      %4732 = vmatmul.bf16.gmra.mxu0 %v4453
      %v4733 = vpop.f32.mrf.mxu0
      %v4734 = vadd.f32 0.0, %v4733
      %v4735 = vpop.f32.mrf.mxu0
      %v4736 = vadd.f32 0.0, %v4735
      %4737 = vmatmul.bf16.gmra.mxu0 %v4456
      %v4738 = vpop.f32.mrf.mxu0
      %v4739 = vadd.f32 0.0, %v4738
      %v4740 = vpop.f32.mrf.mxu0
      %v4741 = vadd.f32 0.0, %v4740
      %4742 = vmatmul.bf16.gmra.mxu0 %v4459
      %v4743 = vpop.f32.mrf.mxu0
      %v4744 = vadd.f32 0.0, %v4743
      %v4745 = vpop.f32.mrf.mxu0
      %v4746 = vadd.f32 0.0, %v4745
      %4747 = vmatmul.bf16.gmra.mxu0 %v4462
      %v4748 = vpop.f32.mrf.mxu0
      %v4749 = vadd.f32 0.0, %v4748
      %v4750 = vpop.f32.mrf.mxu0
      %v4751 = vadd.f32 0.0, %v4750
      %4752 = vmatmul.bf16.gmra.mxu0 %v4465
      %v4753 = vpop.f32.mrf.mxu0
      %v4754 = vadd.f32 0.0, %v4753
      %v4755 = vpop.f32.mrf.mxu0
      %v4756 = vadd.f32 0.0, %v4755
      %4757 = vmatmul.bf16.gmra.mxu0 %v4709
      %v4758 = vpop.f32.mrf.mxu0
      %v4759 = vadd.f32 0.0, %v4758
      %v4760 = vpop.f32.mrf.mxu0
      %v4761 = vadd.f32 0.0, %v4760
      %4762 = vdwg.mxu0
      %v4763 = vadd.f32 %v4685, %v4724
      %v4764 = vadd.f32 %v4686, %v4726
      %v4765 = vadd.f32 %v4687, %v4729
      %v4766 = vadd.f32 %v4688, %v4731
      %v4767 = vadd.f32 %v4689, %v4734
      %v4768 = vadd.f32 %v4690, %v4736
      %v4769 = vadd.f32 %v4691, %v4739
      %v4770 = vadd.f32 %v4692, %v4741
      %v4771 = vadd.f32 %v4693, %v4744
      %v4772 = vadd.f32 %v4694, %v4746
      %v4773 = vadd.f32 %v4695, %v4749
      %v4774 = vadd.f32 %v4696, %v4751
      %v4775 = vadd.f32 %v4697, %v4754
      %v4776 = vadd.f32 %v4698, %v4756
      %v4777 = vadd.f32 %v4699, %v4759
      %v4778 = vadd.f32 %v4700, %v4761
      %v4780 = vshrl.u32 %v4102, 16
      %v4782 = vrot.slane %v4780, 4
      %v4783 = vshll.u32 %v4102, 16
      %v4785 = vrot.slane %v4783, 5
      %v4786 = vor.u32 %v4782, %v4785
      %v4787 = vrot.slane %v4786, 4
      %v4789 = vshll.u32 %v4103, 16
      %v4791 = vrot.slane %v4789, 5
      %v4792 = vsel %vm305, %v4787, %v4791
      %v4793 = vshrl.u32 %v4103, 16
      %v4795 = vrot.slane %v4793, 4
      %v4796 = vor.u32 %v4795, %v4791
      %v4797 = vrot.slane %v4796, 4
      %v4799 = vshll.u32 %v4104, 16
      %v4801 = vrot.slane %v4799, 5
      %v4802 = vsel %vm305, %v4797, %v4801
      %s4803 = scalar_lea.vmem %s2, 8
      %v4804 = vld [vmem:[%s4803] sm:$0x3]
      %v4805 = vunpack.c.l.b16 %v4792
      %v4806 = vunpack.c.l.b16 %v4802
      %v4807 = vpack.c.b16 %v4806, %v4805
      %v4809 = vsel %vm693, %v4807, 0
      %v4812 = vsel %vm739, %v4804, 0
      %4814 = vmatpush.bf16.msra.mxu0 0
      %4815 = vmatpush.bf16.msra.mxu0 0
      %4816 = vmatpush.bf16.msra.mxu0 0
      %4817 = vmatpush.bf16.msra.mxu0 0
      %4818 = vmatpush.bf16.msra.mxu0 0
      %4819 = vmatpush.bf16.msra.mxu0 0
      %4820 = vmatpush.bf16.msra.mxu0 0
      %4821 = vmatpush.bf16.msra.mxu0 %v4812
      %4822 = vmatmul.bf16.gmra.mxu0 %v4331
      %v4823 = vpop.f32.mrf.mxu0
      %v4824 = vadd.f32 0.0, %v4823
      %v4825 = vpop.f32.mrf.mxu0
      %v4826 = vadd.f32 0.0, %v4825
      %4827 = vmatmul.bf16.gmra.mxu0 %v4334
      %v4828 = vpop.f32.mrf.mxu0
      %v4829 = vadd.f32 0.0, %v4828
      %v4830 = vpop.f32.mrf.mxu0
      %v4831 = vadd.f32 0.0, %v4830
      %4832 = vmatmul.bf16.gmra.mxu0 %v4337
      %v4833 = vpop.f32.mrf.mxu0
      %v4834 = vadd.f32 0.0, %v4833
      %v4835 = vpop.f32.mrf.mxu0
      %v4836 = vadd.f32 0.0, %v4835
      %4837 = vmatmul.bf16.gmra.mxu0 %v4340
      %v4838 = vpop.f32.mrf.mxu0
      %v4839 = vadd.f32 0.0, %v4838
      %v4840 = vpop.f32.mrf.mxu0
      %v4841 = vadd.f32 0.0, %v4840
      %4842 = vmatmul.bf16.gmra.mxu0 %v4343
      %v4843 = vpop.f32.mrf.mxu0
      %v4844 = vadd.f32 0.0, %v4843
      %v4845 = vpop.f32.mrf.mxu0
      %v4846 = vadd.f32 0.0, %v4845
      %4847 = vmatmul.bf16.gmra.mxu0 %v4346
      %v4848 = vpop.f32.mrf.mxu0
      %v4849 = vadd.f32 0.0, %v4848
      %v4850 = vpop.f32.mrf.mxu0
      %v4851 = vadd.f32 0.0, %v4850
      %4852 = vmatmul.bf16.gmra.mxu0 %v4349
      %v4853 = vpop.f32.mrf.mxu0
      %v4854 = vadd.f32 0.0, %v4853
      %v4855 = vpop.f32.mrf.mxu0
      %v4856 = vadd.f32 0.0, %v4855
      %4857 = vmatmul.bf16.gmra.mxu0 %v4809
      %v4858 = vpop.f32.mrf.mxu0
      %v4859 = vadd.f32 0.0, %v4858
      %v4860 = vpop.f32.mrf.mxu0
      %v4861 = vadd.f32 0.0, %v4860
      %4862 = vdwg.mxu0
      %v4863 = vadd.f32 %v4763, %v4824
      %v4864 = vadd.f32 %v4764, %v4826
      %v4865 = vadd.f32 %v4765, %v4829
      %v4866 = vadd.f32 %v4766, %v4831
      %v4867 = vadd.f32 %v4767, %v4834
      %v4868 = vadd.f32 %v4768, %v4836
      %v4869 = vadd.f32 %v4769, %v4839
      %v4870 = vadd.f32 %v4770, %v4841
      %v4871 = vadd.f32 %v4771, %v4844
      %v4872 = vadd.f32 %v4772, %v4846
      %v4873 = vadd.f32 %v4773, %v4849
      %v4874 = vadd.f32 %v4774, %v4851
      %v4875 = vadd.f32 %v4775, %v4854
      %v4876 = vadd.f32 %v4776, %v4856
      %v4877 = vadd.f32 %v4777, %v4859
      %v4878 = vadd.f32 %v4778, %v4861
      %v4880 = vrot.slane %v4102, 5
      %v4881 = vrot.slane %v4880, 4
      %v4882 = vrot.slane %v4103, 5
      %v4883 = vsel %vm1066, %v4881, %v4882
      %v4884 = vrot.slane %v4882, 4
      %v4885 = vrot.slane %v4104, 5
      %v4886 = vsel %vm1066, %v4884, %v4885
      %s4887 = scalar_lea.vmem %s2, 10
      %v4888 = vld [vmem:[%s4887] sm:$0x3]
      %v4889 = vunpack.c.l.b16 %v4883
      %v4890 = vunpack.c.l.b16 %v4886
      %v4891 = vpack.c.b16 %v4890, %v4889
      %v4893 = vsel %vm693, %v4891, 0
      %v4896 = vsel %vm739, %v4888, 0
      %4898 = vmatpush.bf16.msra.mxu0 0
      %4899 = vmatpush.bf16.msra.mxu0 0
      %4900 = vmatpush.bf16.msra.mxu0 0
      %4901 = vmatpush.bf16.msra.mxu0 0
      %4902 = vmatpush.bf16.msra.mxu0 0
      %4903 = vmatpush.bf16.msra.mxu0 0
      %4904 = vmatpush.bf16.msra.mxu0 0
      %4905 = vmatpush.bf16.msra.mxu0 %v4896
      %4906 = vmatmul.bf16.gmra.mxu0 %v4613
      %v4907 = vpop.f32.mrf.mxu0
      %v4908 = vadd.f32 0.0, %v4907
      %v4909 = vpop.f32.mrf.mxu0
      %v4910 = vadd.f32 0.0, %v4909
      %4911 = vmatmul.bf16.gmra.mxu0 %v4616
      %v4912 = vpop.f32.mrf.mxu0
      %v4913 = vadd.f32 0.0, %v4912
      %v4914 = vpop.f32.mrf.mxu0
      %v4915 = vadd.f32 0.0, %v4914
      %4916 = vmatmul.bf16.gmra.mxu0 %v4619
      %v4917 = vpop.f32.mrf.mxu0
      %v4918 = vadd.f32 0.0, %v4917
      %v4919 = vpop.f32.mrf.mxu0
      %v4920 = vadd.f32 0.0, %v4919
      %4921 = vmatmul.bf16.gmra.mxu0 %v4622
      %v4922 = vpop.f32.mrf.mxu0
      %v4923 = vadd.f32 0.0, %v4922
      %v4924 = vpop.f32.mrf.mxu0
      %v4925 = vadd.f32 0.0, %v4924
      %4926 = vmatmul.bf16.gmra.mxu0 %v4625
      %v4927 = vpop.f32.mrf.mxu0
      %v4928 = vadd.f32 0.0, %v4927
      %v4929 = vpop.f32.mrf.mxu0
      %v4930 = vadd.f32 0.0, %v4929
      %4931 = vmatmul.bf16.gmra.mxu0 %v4628
      %v4932 = vpop.f32.mrf.mxu0
      %v4933 = vadd.f32 0.0, %v4932
      %v4934 = vpop.f32.mrf.mxu0
      %v4935 = vadd.f32 0.0, %v4934
      %4936 = vmatmul.bf16.gmra.mxu0 %v4631
      %v4937 = vpop.f32.mrf.mxu0
      %v4938 = vadd.f32 0.0, %v4937
      %v4939 = vpop.f32.mrf.mxu0
      %v4940 = vadd.f32 0.0, %v4939
      %4941 = vmatmul.bf16.gmra.mxu0 %v4893
      %v4942 = vpop.f32.mrf.mxu0
      %v4943 = vadd.f32 0.0, %v4942
      %v4944 = vpop.f32.mrf.mxu0
      %v4945 = vadd.f32 0.0, %v4944
      %4946 = vdwg.mxu0
      %v4947 = vadd.f32 %v4863, %v4908
      %v4948 = vadd.f32 %v4864, %v4910
      %v4949 = vadd.f32 %v4865, %v4913
      %v4950 = vadd.f32 %v4866, %v4915
      %v4951 = vadd.f32 %v4867, %v4918
      %v4952 = vadd.f32 %v4868, %v4920
      %v4953 = vadd.f32 %v4869, %v4923
      %v4954 = vadd.f32 %v4870, %v4925
      %v4955 = vadd.f32 %v4871, %v4928
      %v4956 = vadd.f32 %v4872, %v4930
      %v4957 = vadd.f32 %v4873, %v4933
      %v4958 = vadd.f32 %v4874, %v4935
      %v4959 = vadd.f32 %v4875, %v4938
      %v4960 = vadd.f32 %v4876, %v4940
      %v4961 = vadd.f32 %v4877, %v4943
      %v4962 = vadd.f32 %v4878, %v4945
      %s4963 = scalar_lea.vmem %s2, 12
      %v4964 = vld [vmem:[%s4963] sm:$0x3]
      %v4967 = vunpack.c.l.b16 %v4105
      %v4968 = vunpack.c.l.b16 %v4106
      %v4969 = vpack.c.b16 %v4968, %v4967
      %v4971 = vsel %vm693, %v4969, 0
      %v4974 = vsel %vm739, %v4964, 0
      %4976 = vmatpush.bf16.msra.mxu0 0
      %4977 = vmatpush.bf16.msra.mxu0 0
      %4978 = vmatpush.bf16.msra.mxu0 0
      %4979 = vmatpush.bf16.msra.mxu0 0
      %4980 = vmatpush.bf16.msra.mxu0 0
      %4981 = vmatpush.bf16.msra.mxu0 0
      %4982 = vmatpush.bf16.msra.mxu0 0
      %4983 = vmatpush.bf16.msra.mxu0 %v4974
      %4984 = vmatmul.bf16.gmra.mxu0 %v4450
      %v4985 = vpop.f32.mrf.mxu0
      %v4986 = vadd.f32 0.0, %v4985
      %v4987 = vpop.f32.mrf.mxu0
      %v4988 = vadd.f32 0.0, %v4987
      %4989 = vmatmul.bf16.gmra.mxu0 %v4453
      %v4990 = vpop.f32.mrf.mxu0
      %v4991 = vadd.f32 0.0, %v4990
      %v4992 = vpop.f32.mrf.mxu0
      %v4993 = vadd.f32 0.0, %v4992
      %4994 = vmatmul.bf16.gmra.mxu0 %v4456
      %v4995 = vpop.f32.mrf.mxu0
      %v4996 = vadd.f32 0.0, %v4995
      %v4997 = vpop.f32.mrf.mxu0
      %v4998 = vadd.f32 0.0, %v4997
      %4999 = vmatmul.bf16.gmra.mxu0 %v4459
      %v5000 = vpop.f32.mrf.mxu0
      %v5001 = vadd.f32 0.0, %v5000
      %v5002 = vpop.f32.mrf.mxu0
      %v5003 = vadd.f32 0.0, %v5002
      %5004 = vmatmul.bf16.gmra.mxu0 %v4462
      %v5005 = vpop.f32.mrf.mxu0
      %v5006 = vadd.f32 0.0, %v5005
      %v5007 = vpop.f32.mrf.mxu0
      %v5008 = vadd.f32 0.0, %v5007
      %5009 = vmatmul.bf16.gmra.mxu0 %v4465
      %v5010 = vpop.f32.mrf.mxu0
      %v5011 = vadd.f32 0.0, %v5010
      %v5012 = vpop.f32.mrf.mxu0
      %v5013 = vadd.f32 0.0, %v5012
      %5014 = vmatmul.bf16.gmra.mxu0 %v4709
      %v5015 = vpop.f32.mrf.mxu0
      %v5016 = vadd.f32 0.0, %v5015
      %v5017 = vpop.f32.mrf.mxu0
      %v5018 = vadd.f32 0.0, %v5017
      %5019 = vmatmul.bf16.gmra.mxu0 %v4971
      %v5020 = vpop.f32.mrf.mxu0
      %v5021 = vadd.f32 0.0, %v5020
      %v5022 = vpop.f32.mrf.mxu0
      %v5023 = vadd.f32 0.0, %v5022
      %5024 = vdwg.mxu0
      %v5025 = vadd.f32 %v4947, %v4986
      %v5026 = vadd.f32 %v4948, %v4988
      %v5027 = vadd.f32 %v4949, %v4991
      %v5028 = vadd.f32 %v4950, %v4993
      %v5029 = vadd.f32 %v4951, %v4996
      %v5030 = vadd.f32 %v4952, %v4998
      %v5031 = vadd.f32 %v4953, %v5001
      %v5032 = vadd.f32 %v4954, %v5003
      %v5033 = vadd.f32 %v4955, %v5006
      %v5034 = vadd.f32 %v4956, %v5008
      %v5035 = vadd.f32 %v4957, %v5011
      %v5036 = vadd.f32 %v4958, %v5013
      %v5037 = vadd.f32 %v4959, %v5016
      %v5038 = vadd.f32 %v4960, %v5018
      %v5039 = vadd.f32 %v4961, %v5021
      %v5040 = vadd.f32 %v4962, %v5023
      %v5042 = vshrl.u32 %v4105, 16
      %v5044 = vrot.slane %v5042, 4
      %v5045 = vshll.u32 %v4105, 16
      %v5047 = vrot.slane %v5045, 5
      %v5048 = vor.u32 %v5044, %v5047
      %v5049 = vrot.slane %v5048, 4
      %v5051 = vshll.u32 %v4106, 16
      %v5053 = vrot.slane %v5051, 5
      %v5054 = vsel %vm305, %v5049, %v5053
      %v5055 = vshrl.u32 %v4106, 16
      %v5057 = vrot.slane %v5055, 4
      %v5058 = vor.u32 %v5057, %v5053
      %v5059 = vrot.slane %v5058, 4
      %v5061 = vshll.u32 %v4107, 16
      %v5063 = vrot.slane %v5061, 5
      %v5064 = vsel %vm305, %v5059, %v5063
      %s5065 = scalar_lea.vmem %s2, 14
      %v5066 = vld [vmem:[%s5065] sm:$0x3]
      %v5067 = vunpack.c.l.b16 %v5054
      %v5068 = vunpack.c.l.b16 %v5064
      %v5069 = vpack.c.b16 %v5068, %v5067
      %v5071 = vsel %vm693, %v5069, 0
      %v5074 = vsel %vm739, %v5066, 0
      %5076 = vmatpush.bf16.msra.mxu0 0
      %5077 = vmatpush.bf16.msra.mxu0 0
      %5078 = vmatpush.bf16.msra.mxu0 0
      %5079 = vmatpush.bf16.msra.mxu0 0
      %5080 = vmatpush.bf16.msra.mxu0 0
      %5081 = vmatpush.bf16.msra.mxu0 0
      %5082 = vmatpush.bf16.msra.mxu0 0
      %5083 = vmatpush.bf16.msra.mxu0 %v5074
      %5084 = vmatmul.bf16.gmra.mxu0 %v4334
      %v5085 = vpop.f32.mrf.mxu0
      %v5086 = vadd.f32 0.0, %v5085
      %v5087 = vpop.f32.mrf.mxu0
      %v5088 = vadd.f32 0.0, %v5087
      %5089 = vmatmul.bf16.gmra.mxu0 %v4337
      %v5090 = vpop.f32.mrf.mxu0
      %v5091 = vadd.f32 0.0, %v5090
      %v5092 = vpop.f32.mrf.mxu0
      %v5093 = vadd.f32 0.0, %v5092
      %5094 = vmatmul.bf16.gmra.mxu0 %v4340
      %v5095 = vpop.f32.mrf.mxu0
      %v5096 = vadd.f32 0.0, %v5095
      %v5097 = vpop.f32.mrf.mxu0
      %v5098 = vadd.f32 0.0, %v5097
      %5099 = vmatmul.bf16.gmra.mxu0 %v4343
      %v5100 = vpop.f32.mrf.mxu0
      %v5101 = vadd.f32 0.0, %v5100
      %v5102 = vpop.f32.mrf.mxu0
      %v5103 = vadd.f32 0.0, %v5102
      %5104 = vmatmul.bf16.gmra.mxu0 %v4346
      %v5105 = vpop.f32.mrf.mxu0
      %v5106 = vadd.f32 0.0, %v5105
      %v5107 = vpop.f32.mrf.mxu0
      %v5108 = vadd.f32 0.0, %v5107
      %5109 = vmatmul.bf16.gmra.mxu0 %v4349
      %v5110 = vpop.f32.mrf.mxu0
      %v5111 = vadd.f32 0.0, %v5110
      %v5112 = vpop.f32.mrf.mxu0
      %v5113 = vadd.f32 0.0, %v5112
      %5114 = vmatmul.bf16.gmra.mxu0 %v4809
      %v5115 = vpop.f32.mrf.mxu0
      %v5116 = vadd.f32 0.0, %v5115
      %v5117 = vpop.f32.mrf.mxu0
      %v5118 = vadd.f32 0.0, %v5117
      %5119 = vmatmul.bf16.gmra.mxu0 %v5071
      %v5120 = vpop.f32.mrf.mxu0
      %v5121 = vadd.f32 0.0, %v5120
      %v5122 = vpop.f32.mrf.mxu0
      %v5123 = vadd.f32 0.0, %v5122
      %5124 = vdwg.mxu0
      %v5125 = vadd.f32 %v5025, %v5086
      %v5126 = vadd.f32 %v5026, %v5088
      %v5127 = vadd.f32 %v5027, %v5091
      %v5128 = vadd.f32 %v5028, %v5093
      %v5129 = vadd.f32 %v5029, %v5096
      %v5130 = vadd.f32 %v5030, %v5098
      %v5131 = vadd.f32 %v5031, %v5101
      %v5132 = vadd.f32 %v5032, %v5103
      %v5133 = vadd.f32 %v5033, %v5106
      %v5134 = vadd.f32 %v5034, %v5108
      %v5135 = vadd.f32 %v5035, %v5111
      %v5136 = vadd.f32 %v5036, %v5113
      %v5137 = vadd.f32 %v5037, %v5116
      %v5138 = vadd.f32 %v5038, %v5118
      %v5139 = vadd.f32 %v5039, %v5121
      %v5140 = vadd.f32 %v5040, %v5123
      %v5142 = vrot.slane %v4105, 5
      %v5143 = vrot.slane %v5142, 4
      %v5144 = vrot.slane %v4106, 5
      %v5145 = vsel %vm1066, %v5143, %v5144
      %v5146 = vrot.slane %v5144, 4
      %v5147 = vrot.slane %v4107, 5
      %v5148 = vsel %vm1066, %v5146, %v5147
      %s5149 = scalar_lea.vmem %s2, 16
      %v5150 = vld [vmem:[%s5149] sm:$0x3]
      %v5151 = vunpack.c.l.b16 %v5145
      %v5152 = vunpack.c.l.b16 %v5148
      %v5153 = vpack.c.b16 %v5152, %v5151
      %v5155 = vsel %vm693, %v5153, 0
      %v5158 = vsel %vm739, %v5150, 0
      %5160 = vmatpush.bf16.msra.mxu0 0
      %5161 = vmatpush.bf16.msra.mxu0 0
      %5162 = vmatpush.bf16.msra.mxu0 0
      %5163 = vmatpush.bf16.msra.mxu0 0
      %5164 = vmatpush.bf16.msra.mxu0 0
      %5165 = vmatpush.bf16.msra.mxu0 0
      %5166 = vmatpush.bf16.msra.mxu0 0
      %5167 = vmatpush.bf16.msra.mxu0 %v5158
      %5168 = vmatmul.bf16.gmra.mxu0 %v4616
      %v5169 = vpop.f32.mrf.mxu0
      %v5170 = vadd.f32 0.0, %v5169
      %v5171 = vpop.f32.mrf.mxu0
      %v5172 = vadd.f32 0.0, %v5171
      %5173 = vmatmul.bf16.gmra.mxu0 %v4619
      %v5174 = vpop.f32.mrf.mxu0
      %v5175 = vadd.f32 0.0, %v5174
      %v5176 = vpop.f32.mrf.mxu0
      %v5177 = vadd.f32 0.0, %v5176
      %5178 = vmatmul.bf16.gmra.mxu0 %v4622
      %v5179 = vpop.f32.mrf.mxu0
      %v5180 = vadd.f32 0.0, %v5179
      %v5181 = vpop.f32.mrf.mxu0
      %v5182 = vadd.f32 0.0, %v5181
      %5183 = vmatmul.bf16.gmra.mxu0 %v4625
      %v5184 = vpop.f32.mrf.mxu0
      %v5185 = vadd.f32 0.0, %v5184
      %v5186 = vpop.f32.mrf.mxu0
      %v5187 = vadd.f32 0.0, %v5186
      %5188 = vmatmul.bf16.gmra.mxu0 %v4628
      %v5189 = vpop.f32.mrf.mxu0
      %v5190 = vadd.f32 0.0, %v5189
      %v5191 = vpop.f32.mrf.mxu0
      %v5192 = vadd.f32 0.0, %v5191
      %5193 = vmatmul.bf16.gmra.mxu0 %v4631
      %v5194 = vpop.f32.mrf.mxu0
      %v5195 = vadd.f32 0.0, %v5194
      %v5196 = vpop.f32.mrf.mxu0
      %v5197 = vadd.f32 0.0, %v5196
      %5198 = vmatmul.bf16.gmra.mxu0 %v4893
      %v5199 = vpop.f32.mrf.mxu0
      %v5200 = vadd.f32 0.0, %v5199
      %v5201 = vpop.f32.mrf.mxu0
      %v5202 = vadd.f32 0.0, %v5201
      %5203 = vmatmul.bf16.gmra.mxu0 %v5155
      %v5204 = vpop.f32.mrf.mxu0
      %v5205 = vadd.f32 0.0, %v5204
      %v5206 = vpop.f32.mrf.mxu0
      %v5207 = vadd.f32 0.0, %v5206
      %5208 = vdwg.mxu0
      %v5209 = vadd.f32 %v5125, %v5170
      %v5210 = vadd.f32 %v5126, %v5172
      %v5211 = vadd.f32 %v5127, %v5175
      %v5212 = vadd.f32 %v5128, %v5177
      %v5213 = vadd.f32 %v5129, %v5180
      %v5214 = vadd.f32 %v5130, %v5182
      %v5215 = vadd.f32 %v5131, %v5185
      %v5216 = vadd.f32 %v5132, %v5187
      %v5217 = vadd.f32 %v5133, %v5190
      %v5218 = vadd.f32 %v5134, %v5192
      %v5219 = vadd.f32 %v5135, %v5195
      %v5220 = vadd.f32 %v5136, %v5197
      %v5221 = vadd.f32 %v5137, %v5200
      %v5222 = vadd.f32 %v5138, %v5202
      %v5223 = vadd.f32 %v5139, %v5205
      %v5224 = vadd.f32 %v5140, %v5207
      %v5225 = vld [vmem:[%s2594] sm:$0xe]
      %v5226 = vld [vmem:[%s2594 + $0x4] sm:$0xf]
      %v5227 = vld [vmem:[%s2594 + $0x8] sm:$0x1]
      %v5228 = vld [vmem:[%s2594 + $0x10] sm:$0xe]
      %v5229 = vld [vmem:[%s2594 + $0x14] sm:$0xf]
      %v5230 = vld [vmem:[%s2594 + $0x18] sm:$0x1]
      %v5231 = vld [vmem:[%s2594 + $0x20] sm:$0xe]
      %v5232 = vld [vmem:[%s2594 + $0x24] sm:$0xf]
      %v5233 = vld [vmem:[%s2594 + $0x28] sm:$0x1]
      %v5234 = vld [vmem:[%s2594 + $0x30] sm:$0xe]
      %v5235 = vld [vmem:[%s2594 + $0x34] sm:$0xf]
      %v5236 = vld [vmem:[%s2594 + $0x38] sm:$0x1]
      %v5237 = vld [vmem:[%s2594 + $0x40] sm:$0xe]
      %v5238 = vld [vmem:[%s2594 + $0x44] sm:$0xf]
      %v5239 = vld [vmem:[%s2594 + $0x48] sm:$0x1]
      %v5240 = vld [vmem:[%s2594 + $0x50] sm:$0xe]
      %v5241 = vld [vmem:[%s2594 + $0x54] sm:$0xf]
      %v5242 = vld [vmem:[%s2594 + $0x58] sm:$0x1]
      %v5243 = vld [vmem:[%s2594 + $0x60] sm:$0xe]
      %v5244 = vld [vmem:[%s2594 + $0x64] sm:$0xf]
      %v5245 = vld [vmem:[%s2594 + $0x68] sm:$0x1]
      %v5246 = vld [vmem:[%s2594 + $0x70] sm:$0xe]
      %v5247 = vld [vmem:[%s2594 + $0x74] sm:$0xf]
      %v5248 = vld [vmem:[%s2594 + $0x78] sm:$0x1]
      %v5273 = vrot.slane %v5225, 5
      %v5274 = vrot.slane %v5273, 4
      %v5275 = vrot.slane %v5226, 5
      %v5276 = vsel %vm1066, %v5274, %v5275
      %v5277 = vrot.slane %v5275, 4
      %v5278 = vrot.slane %v5227, 5
      %v5279 = vsel %vm1066, %v5277, %v5278
      %v5280 = vrot.slane %v5228, 5
      %v5281 = vrot.slane %v5280, 4
      %v5282 = vrot.slane %v5229, 5
      %v5283 = vsel %vm1066, %v5281, %v5282
      %v5284 = vrot.slane %v5282, 4
      %v5285 = vrot.slane %v5230, 5
      %v5286 = vsel %vm1066, %v5284, %v5285
      %v5287 = vrot.slane %v5231, 5
      %v5288 = vrot.slane %v5287, 4
      %v5289 = vrot.slane %v5232, 5
      %v5290 = vsel %vm1066, %v5288, %v5289
      %v5291 = vrot.slane %v5289, 4
      %v5292 = vrot.slane %v5233, 5
      %v5293 = vsel %vm1066, %v5291, %v5292
      %v5294 = vrot.slane %v5234, 5
      %v5295 = vrot.slane %v5294, 4
      %v5296 = vrot.slane %v5235, 5
      %v5297 = vsel %vm1066, %v5295, %v5296
      %v5298 = vrot.slane %v5296, 4
      %v5299 = vrot.slane %v5236, 5
      %v5300 = vsel %vm1066, %v5298, %v5299
      %v5301 = vrot.slane %v5237, 5
      %v5302 = vrot.slane %v5301, 4
      %v5303 = vrot.slane %v5238, 5
      %v5304 = vsel %vm1066, %v5302, %v5303
      %v5305 = vrot.slane %v5303, 4
      %v5306 = vrot.slane %v5239, 5
      %v5307 = vsel %vm1066, %v5305, %v5306
      %v5308 = vrot.slane %v5240, 5
      %v5309 = vrot.slane %v5308, 4
      %v5310 = vrot.slane %v5241, 5
      %v5311 = vsel %vm1066, %v5309, %v5310
      %v5312 = vrot.slane %v5310, 4
      %v5313 = vrot.slane %v5242, 5
      %v5314 = vsel %vm1066, %v5312, %v5313
      %v5315 = vrot.slane %v5243, 5
      %v5316 = vrot.slane %v5315, 4
      %v5317 = vrot.slane %v5244, 5
      %v5318 = vsel %vm1066, %v5316, %v5317
      %v5319 = vrot.slane %v5317, 4
      %v5320 = vrot.slane %v5245, 5
      %v5321 = vsel %vm1066, %v5319, %v5320
      %v5322 = vrot.slane %v5246, 5
      %v5323 = vrot.slane %v5322, 4
      %v5324 = vrot.slane %v5247, 5
      %v5325 = vsel %vm1066, %v5323, %v5324
      %v5326 = vrot.slane %v5324, 4
      %v5327 = vrot.slane %v5248, 5
      %v5328 = vsel %vm1066, %v5326, %v5327
      %v5345 = vunpack.c.l.bf16 %v5276
      %v5346 = vunpack.c.l.bf16 %v5279
      %v5347 = vunpack.c.l.bf16 %v5283
      %v5348 = vunpack.c.l.bf16 %v5286
      %v5349 = vunpack.c.l.bf16 %v5290
      %v5350 = vunpack.c.l.bf16 %v5293
      %v5351 = vunpack.c.l.bf16 %v5297
      %v5352 = vunpack.c.l.bf16 %v5300
      %v5353 = vunpack.c.l.bf16 %v5304
      %v5354 = vunpack.c.l.bf16 %v5307
      %v5355 = vunpack.c.l.bf16 %v5311
      %v5356 = vunpack.c.l.bf16 %v5314
      %v5357 = vunpack.c.l.bf16 %v5318
      %v5358 = vunpack.c.l.bf16 %v5321
      %v5359 = vunpack.c.l.bf16 %v5325
      %v5360 = vunpack.c.l.bf16 %v5328
      %v5361 = vld [vmem:[%s4] sm:$0x1]
      %v5363 = vperm.slane %v5361, 0
      %v5365 = vadd.f32 %v5209, %v5363
      %v5366 = vadd.f32 %v5210, %v5363
      %v5367 = vadd.f32 %v5211, %v5363
      %v5368 = vadd.f32 %v5212, %v5363
      %v5369 = vadd.f32 %v5213, %v5363
      %v5370 = vadd.f32 %v5214, %v5363
      %v5371 = vadd.f32 %v5215, %v5363
      %v5372 = vadd.f32 %v5216, %v5363
      %v5373 = vadd.f32 %v5217, %v5363
      %v5374 = vadd.f32 %v5218, %v5363
      %v5375 = vadd.f32 %v5219, %v5363
      %v5376 = vadd.f32 %v5220, %v5363
      %v5377 = vadd.f32 %v5221, %v5363
      %v5378 = vadd.f32 %v5222, %v5363
      %v5379 = vadd.f32 %v5223, %v5363
      %v5380 = vadd.f32 %v5224, %v5363
      %v5381 = vadd.f32 %v5365, %v5345
      %v5382 = vadd.f32 %v5366, %v5346
      %v5383 = vadd.f32 %v5367, %v5347
      %v5384 = vadd.f32 %v5368, %v5348
      %v5385 = vadd.f32 %v5369, %v5349
      %v5386 = vadd.f32 %v5370, %v5350
      %v5387 = vadd.f32 %v5371, %v5351
      %v5388 = vadd.f32 %v5372, %v5352
      %v5389 = vadd.f32 %v5373, %v5353
      %v5390 = vadd.f32 %v5374, %v5354
      %v5391 = vadd.f32 %v5375, %v5355
      %v5392 = vadd.f32 %v5376, %v5356
      %v5393 = vadd.f32 %v5377, %v5357
      %v5394 = vadd.f32 %v5378, %v5358
      %v5395 = vadd.f32 %v5379, %v5359
      %v5396 = vadd.f32 %v5380, %v5360
      %v5397 = vmax.f32 %v5381, 0.0
      %v5398 = vmax.f32 %v5382, 0.0
      %v5399 = vmax.f32 %v5383, 0.0
      %v5400 = vmax.f32 %v5384, 0.0
      %v5401 = vmax.f32 %v5385, 0.0
      %v5402 = vmax.f32 %v5386, 0.0
      %v5403 = vmax.f32 %v5387, 0.0
      %v5404 = vmax.f32 %v5388, 0.0
      %v5405 = vmax.f32 %v5389, 0.0
      %v5406 = vmax.f32 %v5390, 0.0
      %v5407 = vmax.f32 %v5391, 0.0
      %v5408 = vmax.f32 %v5392, 0.0
      %v5409 = vmax.f32 %v5393, 0.0
      %v5410 = vmax.f32 %v5394, 0.0
      %v5411 = vmax.f32 %v5395, 0.0
      %v5412 = vmax.f32 %v5396, 0.0
      %v5413 = vpack.c.bf16 %v5397, %v5397
      %v5414 = vpack.c.bf16 %v5398, %v5398
      %v5415 = vpack.c.bf16 %v5399, %v5399
      %v5416 = vpack.c.bf16 %v5400, %v5400
      %v5417 = vpack.c.bf16 %v5401, %v5401
      %v5418 = vpack.c.bf16 %v5402, %v5402
      %v5419 = vpack.c.bf16 %v5403, %v5403
      %v5420 = vpack.c.bf16 %v5404, %v5404
      %v5421 = vpack.c.bf16 %v5405, %v5405
      %v5422 = vpack.c.bf16 %v5406, %v5406
      %v5423 = vpack.c.bf16 %v5407, %v5407
      %v5424 = vpack.c.bf16 %v5408, %v5408
      %v5425 = vpack.c.bf16 %v5409, %v5409
      %v5426 = vpack.c.bf16 %v5410, %v5410
      %v5427 = vpack.c.bf16 %v5411, %v5411
      %v5428 = vpack.c.bf16 %v5412, %v5412
      %vm5429 = vcmask 27648
      %5430 = vst.msk [vmem:[%s258] sm:$0xf] %vm5429, %v5413
      %5431 = vst.msk [vmem:[%s258 + $0x4] sm:$0xf] %vm5429, %v5414
      %5432 = vst.msk [vmem:[%s258 + $0x8] sm:$0xf] %vm5429, %v5415
      %5433 = vst.msk [vmem:[%s258 + $0xc] sm:$0xf] %vm5429, %v5416
      %5434 = vst.msk [vmem:[%s258 + $0x10] sm:$0xf] %vm5429, %v5417
      %5435 = vst.msk [vmem:[%s258 + $0x14] sm:$0xf] %vm5429, %v5418
      %5436 = vst.msk [vmem:[%s258 + $0x18] sm:$0xf] %vm5429, %v5419
      %5437 = vst.msk [vmem:[%s258 + $0x1c] sm:$0xf] %vm5429, %v5420
      %5438 = vst.msk [vmem:[%s258 + $0x20] sm:$0xf] %vm5429, %v5421
      %5439 = vst.msk [vmem:[%s258 + $0x24] sm:$0xf] %vm5429, %v5422
      %5440 = vst.msk [vmem:[%s258 + $0x28] sm:$0xf] %vm5429, %v5423
      %5441 = vst.msk [vmem:[%s258 + $0x2c] sm:$0xf] %vm5429, %v5424
      %5442 = vst.msk [vmem:[%s258 + $0x30] sm:$0xf] %vm5429, %v5425
      %5443 = vst.msk [vmem:[%s258 + $0x34] sm:$0xf] %vm5429, %v5426
      %5444 = vst.msk [vmem:[%s258 + $0x38] sm:$0xf] %vm5429, %v5427
      %5445 = vst.msk [vmem:[%s258 + $0x3c] sm:$0xf] %vm5429, %v5428
      %s5446 = smul.u32 %s20, 2
      %s5447 = sadd.s32 %s5446, %s21
      %p5448 = scmp.lt.s32.totalorder %s5447, 3
      %s5449 = scalar_select %p5448, %s5447, 3
      %s5450 = smul.addr %s5449, 16
      %s5451 = smul.addr %s5450, 4
      %s5452 = scalar_lea.vmem %s5, %s5451
      // Predicated region
      $region41: #{tpu_custom_call.1} parent=39 // pred_check
        %p5453 = pneg %p164
      $region42: #{tpu_custom_call.1} parent=39 // pred_check_branch
        %5455 = sbr.rel (%p5453) target = $region44
      $region43: #{tpu_custom_call.1} parent=39 // pred_region
        %s5456 = smul.u32 %s20, 2
        %s5457 = sadd.s32 %s5456, %s21
      $region44: #{tpu_custom_call.1} parent=39 // pred_fallthru
        _
    $region40: #{tpu_custom_call.1} parent=5 // pred_fallthru
      _
    %p5458 = scmp.le.s32.totalorder 2, %s11
    // Predicated region
    $region45: #{tpu_custom_call.1} parent=5 // pred_check
      %p5459 = pneg %p5458
    $region46: #{tpu_custom_call.1} parent=5 // pred_check_branch
      %5461 = sbr.rel (%p5459) target = $region48
    $region47: #{tpu_custom_call.1} parent=5 // pred_region
      %s5462 = ssub.s32 %s11, 2
      // Predicated region
      $region49: #{tpu_custom_call.1} parent=47 // pred_check
        %p5463 = pneg %p170
      $region50: #{tpu_custom_call.1} parent=47 // pred_check_branch
        %5465 = sbr.rel (%p5463) target = $region52
      $region51: #{tpu_custom_call.1} parent=47 // pred_region
        %s5466 = smul.u32 %s22, 2
        %s5467 = sadd.s32 %s5466, %s23
        %p5468 = scmp.lt.s32.totalorder %s5467, 3
        %s5469 = scalar_select %p5468, %s5467, 3
        %s5470 = smul.addr %s5469, 16
        %s5471 = smul.addr %s5470, 4
        %s5472 = scalar_lea.vmem %s5, %s5471
      $region52: #{tpu_custom_call.1} parent=47 // pred_fallthru
        _
    $region48: #{tpu_custom_call.1} parent=5 // pred_fallthru
      _
  $region6: #{tpu_custom_call.1} parent=0 // loop_footer
    %s15 = sadd.s32 1, %s11
  $region7: #{tpu_custom_call.1} parent=0 // loop_footer_branch
    %10 = sbr.rel target = $region3
  $region8: #{tpu_custom_call.1} parent=0 // loop_exit
    _

</llo_original>
